<compile_context>
chip_gen: v7x
topology: tpu7x:2x2x1
jax: 0.10.0
libtpu: 0.0.40
codegen_flags: <defaults>
</compile_context>

<pallas_src>
import jax
import jax.numpy as jnp
from jax import lax
from jax.experimental import pallas as pl
from jax.experimental.pallas import tpu as pltpu

H = W = 32            # spatial size implied by fc in_features = 16*32*32
C_OUT = 16            # conv out channels
KK = 9                # 3x3 taps (single input channel)
NUM_CLASSES = 2
FC_ROWS = 8           # pad 2 classes -> 8 sublanes (clean (8,128) tiles / MXU M dim)
B_TILE = 128          # images per grid step (batch on lanes)
HW = H * W            # 1024
K_FEAT = C_OUT * HW   # 16384


# ------------- Fused kernel: conv3x3 + bias + ReLU + flatten + FC -------------

def fused_kernel(x_ref, fcw_ref, fcb_ref, cw_ref, cb_ref, o_ref, act_ref):
    # x_ref   : (34, 34, B)   zero-padded images, batch on lanes (VMEM)
    # fcw_ref : (8, 16384)    fc weights, rows 0..1 real, PyTorch (C,H,W) K-order (VMEM)
    # fcb_ref : (8, B)        fc bias pre-broadcast across lanes, rows 2..7 zero (VMEM)
    # cw_ref  : (144,)        conv weights [c*9 + di*3 + dj] (SMEM scalars)
    # cb_ref  : (16,)         conv bias (SMEM)
    # o_ref   : (8, B)        logits tile (rows 0..1 real)
    # act_ref : (16384, B)    relu(conv) activations, PyTorch flatten order (VMEM scratch)

    def row_body(h, carry):
        # three padded input rows needed for output row h (15 vregs)
        r0 = x_ref[h]
        r1 = x_ref[h + 1]
        r2 = x_ref[h + 2]
        # 9 stencil taps, each a lane-dense (32, B) operand
        taps = []
        for r in (r0, r1, r2):
            for dj in range(3):
                taps.append(r[dj:dj + W, :])
        for c in range(C_OUT):
            acc = taps[0] * cw_ref[c * KK]
            for k in range(1, KK):
                acc = acc + taps[k] * cw_ref[c * KK + k]
            acc = jnp.maximum(acc + cb_ref[c], 0.0)            # bias + ReLU
            start = pl.multiple_of(c * HW + h * W, W)          # 32-aligned sublane offset
            act_ref[pl.ds(start, W), :] = acc
        return carry

    lax.fori_loop(0, H, row_body, 0)

    # FC on the MXU: logits(8, B) = fcw(8, 16384) @ act(16384, B) + bias,
    # accumulated over 16 K-chunks of 1024 (standard tile sizes).
    logits = fcb_ref[...]
    for c in range(C_OUT):
        logits = logits + jnp.dot(
            fcw_ref[:, c * HW:(c + 1) * HW],
            act_ref[c * HW:(c + 1) * HW, :],
            preferred_element_type=jnp.float32)
    o_ref[...] = logits


# ------------------------------ Forward pass ----------------------------------

@jax.jit
def simple_nn_forward(x, conv_w, conv_b, fc_w, fc_b):
    # x: (N, 1, 32, 32) float32 NCHW (same as the PyTorch module)
    N = x.shape[0]
    num_tiles = -(-N // B_TILE)
    NP = num_tiles * B_TILE

    # One relayout pass: batch -> lanes plus the 1-pixel halo (pad + transpose is a
    # single HBM->HBM copy under XLA).
    xp = jnp.pad(x[:, 0].astype(jnp.float32), ((0, NP - N), (1, 1), (1, 1)))
    xT = jnp.transpose(xp, (1, 2, 0))                          # (34, 34, NP)

    cw = conv_w.reshape(C_OUT * KK).astype(jnp.float32)        # (144,) 1-D SMEM table
    cb = conv_b.astype(jnp.float32)                            # (16,)
    # fc_w columns are already in PyTorch (C,H,W) flatten order; pad classes 2 -> 8.
    fcw8 = jnp.zeros((FC_ROWS, K_FEAT), jnp.float32).at[:NUM_CLASSES].set(
        fc_w.astype(jnp.float32))
    fcb8 = jnp.zeros((FC_ROWS, B_TILE), jnp.float32).at[:NUM_CLASSES].set(
        jnp.broadcast_to(fc_b.astype(jnp.float32)[:, None], (NUM_CLASSES, B_TILE)))

    out = pl.pallas_call(
        fused_kernel,
        out_shape=jax.ShapeDtypeStruct((FC_ROWS, NP), jnp.float32),
        grid=(num_tiles,),
        in_specs=[
            pl.BlockSpec((H + 2, W + 2, B_TILE), lambda i: (0, 0, i)),
            pl.BlockSpec((FC_ROWS, K_FEAT), lambda i: (0, 0)),   # resident (constant map)
            pl.BlockSpec((FC_ROWS, B_TILE), lambda i: (0, 0)),
            pl.BlockSpec(memory_space=pltpu.MemorySpace.SMEM),
            pl.BlockSpec(memory_space=pltpu.MemorySpace.SMEM),
        ],
        out_specs=pl.BlockSpec((FC_ROWS, B_TILE), lambda i: (0, i)),
        scratch_shapes=[pltpu.VMEM((K_FEAT, B_TILE), jnp.float32)],
        compiler_params=pltpu.CompilerParams(
            dimension_semantics=("parallel",)),
    )(xT, fcw8, fcb8, cw, cb)

    return out[:NUM_CLASSES, :N].T                             # (N, 2)


# ---------------- Pure-JAX reference (correctness check) ----------------------

def reference_forward(x, conv_w, conv_b, fc_w, fc_b):
    y = lax.conv_general_dilated(
        x, conv_w, window_strides=(1, 1), padding=((1, 1), (1, 1)),
        dimension_numbers=("NCHW", "OIHW", "NCHW"),
        precision=lax.Precision.HIGHEST)
    y = jnp.maximum(y + conv_b.reshape(1, C_OUT, 1, 1), 0.0)
    y = y.reshape(x.shape[0], -1)
    return jnp.dot(y, fc_w.T, precision=lax.Precision.HIGHEST) + fc_b


if __name__ == "__main__":
    key = jax.random.PRNGKey(0)
    k_x, k_cw, k_cb, k_fw, k_fb = jax.random.split(key, 5)

    # Deterministic synthetic parameters (shapes from SimpleNN.__init__).
    conv_w = jax.random.normal(k_cw, (C_OUT, 1, 3, 3), jnp.float32) * 0.1
    conv_b = jax.random.normal(k_cb, (C_OUT,), jnp.float32) * 0.1
    fc_w = jax.random.normal(k_fw, (NUM_CLASSES, K_FEAT), jnp.float32) * 0.01
    fc_b = jax.random.normal(k_fb, (NUM_CLASSES,), jnp.float32) * 0.01

    # Input: small batch, single channel, 32x32 (size required by fc in_features).
    x = jax.random.normal(k_x, (2, 1, H, W), jnp.float32)

    out = simple_nn_forward(x, conv_w, conv_b, fc_w, fc_b)
    out = jax.block_until_ready(out)

    ref = reference_forward(x, conv_w, conv_b, fc_w, fc_b)
    assert out.shape == (2, NUM_CLASSES)
    assert jnp.allclose(out, ref, atol=2e-3, rtol=2e-3), "mismatch vs reference"

    print("KERNEL_OK")
</pallas_src>

<mosaic_0001>
module attributes {stable_mosaic.version = 11 : i64} {
  func.func @fused_kernel(%arg0: i32, %arg1: memref<34x34x128xf32, #tpu.memory_space<vmem>>, %arg2: memref<8x16384xf32, #tpu.memory_space<vmem>>, %arg3: memref<8x128xf32, #tpu.memory_space<vmem>>, %arg4: memref<144xf32, #tpu.memory_space<smem>>, %arg5: memref<16xf32, #tpu.memory_space<smem>>, %arg6: memref<8x128xf32, #tpu.memory_space<vmem>>, %arg7: memref<16384x128xf32, #tpu.memory_space<vmem>>) attributes {dimension_semantics = [#tpu.dimension_semantics<parallel>], iteration_bounds = array<i64: 1>, scalar_prefetch = 0 : i64, scratch_operands = 1 : i64, tpu.core_type = #tpu.core_type<tc>, window_params = [{transform_indices = @transform_0, window_bounds = array<i64: 34, 34, 128>}, {pipeline_mode = #tpu.pipeline_mode<synchronous>, transform_indices = @transform_1, window_bounds = array<i64: 8, 16384>}, {pipeline_mode = #tpu.pipeline_mode<synchronous>, transform_indices = @transform_2, window_bounds = array<i64: 8, 128>}, {transform_indices = @transform_3, window_bounds = array<i64: 144>}, {transform_indices = @transform_4, window_bounds = array<i64: 16>}, {transform_indices = @transform_5, window_bounds = array<i64: 8, 128>}]} {
    %c0_i32 = arith.constant 0 : i32
    %c32_i32 = arith.constant 32 : i32
    %0 = arith.addi %c0_i32, %c32_i32 : i32
    %c1_i32 = arith.constant 1 : i32
    scf.for %arg8 = %c0_i32 to %0 step %c1_i32  : i32 {
      %67 = arith.index_cast %arg8 : i32 to index
      %c0_68 = arith.constant 0 : index
      %c0_69 = arith.constant 0 : index
      %68 = vector.load %arg1[%67, %c0_68, %c0_69] : memref<34x34x128xf32, #tpu.memory_space<vmem>>, vector<1x34x128xf32>
      %69 = vector.shape_cast %68 : vector<1x34x128xf32> to vector<34x128xf32>
      %c1_i32_70 = arith.constant 1 : i32
      %70 = arith.addi %arg8, %c1_i32_70 : i32
      %71 = arith.index_cast %70 : i32 to index
      %c0_71 = arith.constant 0 : index
      %c0_72 = arith.constant 0 : index
      %72 = vector.load %arg1[%71, %c0_71, %c0_72] : memref<34x34x128xf32, #tpu.memory_space<vmem>>, vector<1x34x128xf32>
      %73 = vector.shape_cast %72 : vector<1x34x128xf32> to vector<34x128xf32>
      %c2_i32 = arith.constant 2 : i32
      %74 = arith.addi %arg8, %c2_i32 : i32
      %75 = arith.index_cast %74 : i32 to index
      %c0_73 = arith.constant 0 : index
      %c0_74 = arith.constant 0 : index
      %76 = vector.load %arg1[%75, %c0_73, %c0_74] : memref<34x34x128xf32, #tpu.memory_space<vmem>>, vector<1x34x128xf32>
      %77 = vector.shape_cast %76 : vector<1x34x128xf32> to vector<34x128xf32>
      %78 = vector.extract_strided_slice %69 {offsets = [0, 0], sizes = [32, 128], strides = [1, 1]} : vector<34x128xf32> to vector<32x128xf32>
      %79 = vector.extract_strided_slice %69 {offsets = [1, 0], sizes = [32, 128], strides = [1, 1]} : vector<34x128xf32> to vector<32x128xf32>
      %80 = vector.extract_strided_slice %69 {offsets = [2, 0], sizes = [32, 128], strides = [1, 1]} : vector<34x128xf32> to vector<32x128xf32>
      %81 = vector.extract_strided_slice %73 {offsets = [0, 0], sizes = [32, 128], strides = [1, 1]} : vector<34x128xf32> to vector<32x128xf32>
      %82 = vector.extract_strided_slice %73 {offsets = [1, 0], sizes = [32, 128], strides = [1, 1]} : vector<34x128xf32> to vector<32x128xf32>
      %83 = vector.extract_strided_slice %73 {offsets = [2, 0], sizes = [32, 128], strides = [1, 1]} : vector<34x128xf32> to vector<32x128xf32>
      %84 = vector.extract_strided_slice %77 {offsets = [0, 0], sizes = [32, 128], strides = [1, 1]} : vector<34x128xf32> to vector<32x128xf32>
      %85 = vector.extract_strided_slice %77 {offsets = [1, 0], sizes = [32, 128], strides = [1, 1]} : vector<34x128xf32> to vector<32x128xf32>
      %86 = vector.extract_strided_slice %77 {offsets = [2, 0], sizes = [32, 128], strides = [1, 1]} : vector<34x128xf32> to vector<32x128xf32>
      %c0_75 = arith.constant 0 : index
      %87 = memref.load %arg4[%c0_75] : memref<144xf32, #tpu.memory_space<smem>>
      %88 = vector.broadcast %87 : f32 to vector<32x128xf32>
      %89 = arith.mulf %78, %88 : vector<32x128xf32>
      %c1 = arith.constant 1 : index
      %90 = memref.load %arg4[%c1] : memref<144xf32, #tpu.memory_space<smem>>
      %91 = vector.broadcast %90 : f32 to vector<32x128xf32>
      %92 = arith.mulf %79, %91 : vector<32x128xf32>
      %93 = arith.addf %89, %92 : vector<32x128xf32>
      %c2 = arith.constant 2 : index
      %94 = memref.load %arg4[%c2] : memref<144xf32, #tpu.memory_space<smem>>
      %95 = vector.broadcast %94 : f32 to vector<32x128xf32>
      %96 = arith.mulf %80, %95 : vector<32x128xf32>
      %97 = arith.addf %93, %96 : vector<32x128xf32>
      %c3 = arith.constant 3 : index
      %98 = memref.load %arg4[%c3] : memref<144xf32, #tpu.memory_space<smem>>
      %99 = vector.broadcast %98 : f32 to vector<32x128xf32>
      %100 = arith.mulf %81, %99 : vector<32x128xf32>
      %101 = arith.addf %97, %100 : vector<32x128xf32>
      %c4 = arith.constant 4 : index
      %102 = memref.load %arg4[%c4] : memref<144xf32, #tpu.memory_space<smem>>
      %103 = vector.broadcast %102 : f32 to vector<32x128xf32>
      %104 = arith.mulf %82, %103 : vector<32x128xf32>
      %105 = arith.addf %101, %104 : vector<32x128xf32>
      %c5 = arith.constant 5 : index
      %106 = memref.load %arg4[%c5] : memref<144xf32, #tpu.memory_space<smem>>
      %107 = vector.broadcast %106 : f32 to vector<32x128xf32>
      %108 = arith.mulf %83, %107 : vector<32x128xf32>
      %109 = arith.addf %105, %108 : vector<32x128xf32>
      %c6 = arith.constant 6 : index
      %110 = memref.load %arg4[%c6] : memref<144xf32, #tpu.memory_space<smem>>
      %111 = vector.broadcast %110 : f32 to vector<32x128xf32>
      %112 = arith.mulf %84, %111 : vector<32x128xf32>
      %113 = arith.addf %109, %112 : vector<32x128xf32>
      %c7 = arith.constant 7 : index
      %114 = memref.load %arg4[%c7] : memref<144xf32, #tpu.memory_space<smem>>
      %115 = vector.broadcast %114 : f32 to vector<32x128xf32>
      %116 = arith.mulf %85, %115 : vector<32x128xf32>
      %117 = arith.addf %113, %116 : vector<32x128xf32>
      %c8 = arith.constant 8 : index
      %118 = memref.load %arg4[%c8] : memref<144xf32, #tpu.memory_space<smem>>
      %119 = vector.broadcast %118 : f32 to vector<32x128xf32>
      %120 = arith.mulf %86, %119 : vector<32x128xf32>
      %121 = arith.addf %117, %120 : vector<32x128xf32>
      %c0_76 = arith.constant 0 : index
      %122 = memref.load %arg5[%c0_76] : memref<16xf32, #tpu.memory_space<smem>>
      %123 = vector.broadcast %122 : f32 to vector<32x128xf32>
      %124 = arith.addf %121, %123 : vector<32x128xf32>
      %cst_77 = arith.constant 0.000000e+00 : f32
      %125 = vector.broadcast %cst_77 : f32 to vector<32x128xf32>
      %126 = arith.maximumf %124, %125 : vector<32x128xf32>
      %c32_i32_78 = arith.constant 32 : i32
      %127 = arith.muli %arg8, %c32_i32_78 : i32
      %c0_i32_79 = arith.constant 0 : i32
      %128 = arith.addi %c0_i32_79, %127 : i32
      %129 = tpu.assume_multiple %128, 32 : i32
      %130 = arith.index_cast %129 : i32 to index
      %c0_80 = arith.constant 0 : index
      %131 = vector.load %arg7[%130, %c0_80] : memref<16384x128xf32, #tpu.memory_space<vmem>>, vector<32x128xf32>
      tpu.vector_store %arg7[%130, %c0_80], %126 {strides = array<i32>} : memref<16384x128xf32, #tpu.memory_space<vmem>>, vector<32x128xf32>,
      %c9 = arith.constant 9 : index
      %132 = memref.load %arg4[%c9] : memref<144xf32, #tpu.memory_space<smem>>
      %133 = vector.broadcast %132 : f32 to vector<32x128xf32>
      %134 = arith.mulf %78, %133 : vector<32x128xf32>
      %c10 = arith.constant 10 : index
      %135 = memref.load %arg4[%c10] : memref<144xf32, #tpu.memory_space<smem>>
      %136 = vector.broadcast %135 : f32 to vector<32x128xf32>
      %137 = arith.mulf %79, %136 : vector<32x128xf32>
      %138 = arith.addf %134, %137 : vector<32x128xf32>
      %c11 = arith.constant 11 : index
      %139 = memref.load %arg4[%c11] : memref<144xf32, #tpu.memory_space<smem>>
      %140 = vector.broadcast %139 : f32 to vector<32x128xf32>
      %141 = arith.mulf %80, %140 : vector<32x128xf32>
      %142 = arith.addf %138, %141 : vector<32x128xf32>
      %c12 = arith.constant 12 : index
      %143 = memref.load %arg4[%c12] : memref<144xf32, #tpu.memory_space<smem>>
      %144 = vector.broadcast %143 : f32 to vector<32x128xf32>
      %145 = arith.mulf %81, %144 : vector<32x128xf32>
      %146 = arith.addf %142, %145 : vector<32x128xf32>
      %c13 = arith.constant 13 : index
      %147 = memref.load %arg4[%c13] : memref<144xf32, #tpu.memory_space<smem>>
      %148 = vector.broadcast %147 : f32 to vector<32x128xf32>
      %149 = arith.mulf %82, %148 : vector<32x128xf32>
      %150 = arith.addf %146, %149 : vector<32x128xf32>
      %c14 = arith.constant 14 : index
      %151 = memref.load %arg4[%c14] : memref<144xf32, #tpu.memory_space<smem>>
      %152 = vector.broadcast %151 : f32 to vector<32x128xf32>
      %153 = arith.mulf %83, %152 : vector<32x128xf32>
      %154 = arith.addf %150, %153 : vector<32x128xf32>
      %c15 = arith.constant 15 : index
      %155 = memref.load %arg4[%c15] : memref<144xf32, #tpu.memory_space<smem>>
      %156 = vector.broadcast %155 : f32 to vector<32x128xf32>
      %157 = arith.mulf %84, %156 : vector<32x128xf32>
      %158 = arith.addf %154, %157 : vector<32x128xf32>
      %c16 = arith.constant 16 : index
      %159 = memref.load %arg4[%c16] : memref<144xf32, #tpu.memory_space<smem>>
      %160 = vector.broadcast %159 : f32 to vector<32x128xf32>
      %161 = arith.mulf %85, %160 : vector<32x128xf32>
      %162 = arith.addf %158, %161 : vector<32x128xf32>
      %c17 = arith.constant 17 : index
      %163 = memref.load %arg4[%c17] : memref<144xf32, #tpu.memory_space<smem>>
      %164 = vector.broadcast %163 : f32 to vector<32x128xf32>
      %165 = arith.mulf %86, %164 : vector<32x128xf32>
      %166 = arith.addf %162, %165 : vector<32x128xf32>
      %c1_81 = arith.constant 1 : index
      %167 = memref.load %arg5[%c1_81] : memref<16xf32, #tpu.memory_space<smem>>
      %168 = vector.broadcast %167 : f32 to vector<32x128xf32>
      %169 = arith.addf %166, %168 : vector<32x128xf32>
      %cst_82 = arith.constant 0.000000e+00 : f32
      %170 = vector.broadcast %cst_82 : f32 to vector<32x128xf32>
      %171 = arith.maximumf %169, %170 : vector<32x128xf32>
      %c32_i32_83 = arith.constant 32 : i32
      %172 = arith.muli %arg8, %c32_i32_83 : i32
      %c1024_i32 = arith.constant 1024 : i32
      %173 = arith.addi %c1024_i32, %172 : i32
      %174 = tpu.assume_multiple %173, 32 : i32
      %175 = arith.index_cast %174 : i32 to index
      %c0_84 = arith.constant 0 : index
      %176 = vector.load %arg7[%175, %c0_84] : memref<16384x128xf32, #tpu.memory_space<vmem>>, vector<32x128xf32>
      tpu.vector_store %arg7[%175, %c0_84], %171 {strides = array<i32>} : memref<16384x128xf32, #tpu.memory_space<vmem>>, vector<32x128xf32>,
      %c18 = arith.constant 18 : index
      %177 = memref.load %arg4[%c18] : memref<144xf32, #tpu.memory_space<smem>>
      %178 = vector.broadcast %177 : f32 to vector<32x128xf32>
      %179 = arith.mulf %78, %178 : vector<32x128xf32>
      %c19 = arith.constant 19 : index
      %180 = memref.load %arg4[%c19] : memref<144xf32, #tpu.memory_space<smem>>
      %181 = vector.broadcast %180 : f32 to vector<32x128xf32>
      %182 = arith.mulf %79, %181 : vector<32x128xf32>
      %183 = arith.addf %179, %182 : vector<32x128xf32>
      %c20 = arith.constant 20 : index
      %184 = memref.load %arg4[%c20] : memref<144xf32, #tpu.memory_space<smem>>
      %185 = vector.broadcast %184 : f32 to vector<32x128xf32>
      %186 = arith.mulf %80, %185 : vector<32x128xf32>
      %187 = arith.addf %183, %186 : vector<32x128xf32>
      %c21 = arith.constant 21 : index
      %188 = memref.load %arg4[%c21] : memref<144xf32, #tpu.memory_space<smem>>
      %189 = vector.broadcast %188 : f32 to vector<32x128xf32>
      %190 = arith.mulf %81, %189 : vector<32x128xf32>
      %191 = arith.addf %187, %190 : vector<32x128xf32>
      %c22 = arith.constant 22 : index
      %192 = memref.load %arg4[%c22] : memref<144xf32, #tpu.memory_space<smem>>
      %193 = vector.broadcast %192 : f32 to vector<32x128xf32>
      %194 = arith.mulf %82, %193 : vector<32x128xf32>
      %195 = arith.addf %191, %194 : vector<32x128xf32>
      %c23 = arith.constant 23 : index
      %196 = memref.load %arg4[%c23] : memref<144xf32, #tpu.memory_space<smem>>
      %197 = vector.broadcast %196 : f32 to vector<32x128xf32>
      %198 = arith.mulf %83, %197 : vector<32x128xf32>
      %199 = arith.addf %195, %198 : vector<32x128xf32>
      %c24 = arith.constant 24 : index
      %200 = memref.load %arg4[%c24] : memref<144xf32, #tpu.memory_space<smem>>
      %201 = vector.broadcast %200 : f32 to vector<32x128xf32>
      %202 = arith.mulf %84, %201 : vector<32x128xf32>
      %203 = arith.addf %199, %202 : vector<32x128xf32>
      %c25 = arith.constant 25 : index
      %204 = memref.load %arg4[%c25] : memref<144xf32, #tpu.memory_space<smem>>
      %205 = vector.broadcast %204 : f32 to vector<32x128xf32>
      %206 = arith.mulf %85, %205 : vector<32x128xf32>
      %207 = arith.addf %203, %206 : vector<32x128xf32>
      %c26 = arith.constant 26 : index
      %208 = memref.load %arg4[%c26] : memref<144xf32, #tpu.memory_space<smem>>
      %209 = vector.broadcast %208 : f32 to vector<32x128xf32>
      %210 = arith.mulf %86, %209 : vector<32x128xf32>
      %211 = arith.addf %207, %210 : vector<32x128xf32>
      %c2_85 = arith.constant 2 : index
      %212 = memref.load %arg5[%c2_85] : memref<16xf32, #tpu.memory_space<smem>>
      %213 = vector.broadcast %212 : f32 to vector<32x128xf32>
      %214 = arith.addf %211, %213 : vector<32x128xf32>
      %cst_86 = arith.constant 0.000000e+00 : f32
      %215 = vector.broadcast %cst_86 : f32 to vector<32x128xf32>
      %216 = arith.maximumf %214, %215 : vector<32x128xf32>
      %c32_i32_87 = arith.constant 32 : i32
      %217 = arith.muli %arg8, %c32_i32_87 : i32
      %c2048_i32 = arith.constant 2048 : i32
      %218 = arith.addi %c2048_i32, %217 : i32
      %219 = tpu.assume_multiple %218, 32 : i32
      %220 = arith.index_cast %219 : i32 to index
      %c0_88 = arith.constant 0 : index
      %221 = vector.load %arg7[%220, %c0_88] : memref<16384x128xf32, #tpu.memory_space<vmem>>, vector<32x128xf32>
      tpu.vector_store %arg7[%220, %c0_88], %216 {strides = array<i32>} : memref<16384x128xf32, #tpu.memory_space<vmem>>, vector<32x128xf32>,
      %c27 = arith.constant 27 : index
      %222 = memref.load %arg4[%c27] : memref<144xf32, #tpu.memory_space<smem>>
      %223 = vector.broadcast %222 : f32 to vector<32x128xf32>
      %224 = arith.mulf %78, %223 : vector<32x128xf32>
      %c28 = arith.constant 28 : index
      %225 = memref.load %arg4[%c28] : memref<144xf32, #tpu.memory_space<smem>>
      %226 = vector.broadcast %225 : f32 to vector<32x128xf32>
      %227 = arith.mulf %79, %226 : vector<32x128xf32>
      %228 = arith.addf %224, %227 : vector<32x128xf32>
      %c29 = arith.constant 29 : index
      %229 = memref.load %arg4[%c29] : memref<144xf32, #tpu.memory_space<smem>>
      %230 = vector.broadcast %229 : f32 to vector<32x128xf32>
      %231 = arith.mulf %80, %230 : vector<32x128xf32>
      %232 = arith.addf %228, %231 : vector<32x128xf32>
      %c30 = arith.constant 30 : index
      %233 = memref.load %arg4[%c30] : memref<144xf32, #tpu.memory_space<smem>>
      %234 = vector.broadcast %233 : f32 to vector<32x128xf32>
      %235 = arith.mulf %81, %234 : vector<32x128xf32>
      %236 = arith.addf %232, %235 : vector<32x128xf32>
      %c31 = arith.constant 31 : index
      %237 = memref.load %arg4[%c31] : memref<144xf32, #tpu.memory_space<smem>>
      %238 = vector.broadcast %237 : f32 to vector<32x128xf32>
      %239 = arith.mulf %82, %238 : vector<32x128xf32>
      %240 = arith.addf %236, %239 : vector<32x128xf32>
      %c32 = arith.constant 32 : index
      %241 = memref.load %arg4[%c32] : memref<144xf32, #tpu.memory_space<smem>>
      %242 = vector.broadcast %241 : f32 to vector<32x128xf32>
      %243 = arith.mulf %83, %242 : vector<32x128xf32>
      %244 = arith.addf %240, %243 : vector<32x128xf32>
      %c33 = arith.constant 33 : index
      %245 = memref.load %arg4[%c33] : memref<144xf32, #tpu.memory_space<smem>>
      %246 = vector.broadcast %245 : f32 to vector<32x128xf32>
      %247 = arith.mulf %84, %246 : vector<32x128xf32>
      %248 = arith.addf %244, %247 : vector<32x128xf32>
      %c34 = arith.constant 34 : index
      %249 = memref.load %arg4[%c34] : memref<144xf32, #tpu.memory_space<smem>>
      %250 = vector.broadcast %249 : f32 to vector<32x128xf32>
      %251 = arith.mulf %85, %250 : vector<32x128xf32>
      %252 = arith.addf %248, %251 : vector<32x128xf32>
      %c35 = arith.constant 35 : index
      %253 = memref.load %arg4[%c35] : memref<144xf32, #tpu.memory_space<smem>>
      %254 = vector.broadcast %253 : f32 to vector<32x128xf32>
      %255 = arith.mulf %86, %254 : vector<32x128xf32>
      %256 = arith.addf %252, %255 : vector<32x128xf32>
      %c3_89 = arith.constant 3 : index
      %257 = memref.load %arg5[%c3_89] : memref<16xf32, #tpu.memory_space<smem>>
      %258 = vector.broadcast %257 : f32 to vector<32x128xf32>
      %259 = arith.addf %256, %258 : vector<32x128xf32>
      %cst_90 = arith.constant 0.000000e+00 : f32
      %260 = vector.broadcast %cst_90 : f32 to vector<32x128xf32>
      %261 = arith.maximumf %259, %260 : vector<32x128xf32>
      %c32_i32_91 = arith.constant 32 : i32
      %262 = arith.muli %arg8, %c32_i32_91 : i32
      %c3072_i32 = arith.constant 3072 : i32
      %263 = arith.addi %c3072_i32, %262 : i32
      %264 = tpu.assume_multiple %263, 32 : i32
      %265 = arith.index_cast %264 : i32 to index
      %c0_92 = arith.constant 0 : index
      %266 = vector.load %arg7[%265, %c0_92] : memref<16384x128xf32, #tpu.memory_space<vmem>>, vector<32x128xf32>
      tpu.vector_store %arg7[%265, %c0_92], %261 {strides = array<i32>} : memref<16384x128xf32, #tpu.memory_space<vmem>>, vector<32x128xf32>,
      %c36 = arith.constant 36 : index
      %267 = memref.load %arg4[%c36] : memref<144xf32, #tpu.memory_space<smem>>
      %268 = vector.broadcast %267 : f32 to vector<32x128xf32>
      %269 = arith.mulf %78, %268 : vector<32x128xf32>
      %c37 = arith.constant 37 : index
      %270 = memref.load %arg4[%c37] : memref<144xf32, #tpu.memory_space<smem>>
      %271 = vector.broadcast %270 : f32 to vector<32x128xf32>
      %272 = arith.mulf %79, %271 : vector<32x128xf32>
      %273 = arith.addf %269, %272 : vector<32x128xf32>
      %c38 = arith.constant 38 : index
      %274 = memref.load %arg4[%c38] : memref<144xf32, #tpu.memory_space<smem>>
      %275 = vector.broadcast %274 : f32 to vector<32x128xf32>
      %276 = arith.mulf %80, %275 : vector<32x128xf32>
      %277 = arith.addf %273, %276 : vector<32x128xf32>
      %c39 = arith.constant 39 : index
      %278 = memref.load %arg4[%c39] : memref<144xf32, #tpu.memory_space<smem>>
      %279 = vector.broadcast %278 : f32 to vector<32x128xf32>
      %280 = arith.mulf %81, %279 : vector<32x128xf32>
      %281 = arith.addf %277, %280 : vector<32x128xf32>
      %c40 = arith.constant 40 : index
      %282 = memref.load %arg4[%c40] : memref<144xf32, #tpu.memory_space<smem>>
      %283 = vector.broadcast %282 : f32 to vector<32x128xf32>
      %284 = arith.mulf %82, %283 : vector<32x128xf32>
      %285 = arith.addf %281, %284 : vector<32x128xf32>
      %c41 = arith.constant 41 : index
      %286 = memref.load %arg4[%c41] : memref<144xf32, #tpu.memory_space<smem>>
      %287 = vector.broadcast %286 : f32 to vector<32x128xf32>
      %288 = arith.mulf %83, %287 : vector<32x128xf32>
      %289 = arith.addf %285, %288 : vector<32x128xf32>
      %c42 = arith.constant 42 : index
      %290 = memref.load %arg4[%c42] : memref<144xf32, #tpu.memory_space<smem>>
      %291 = vector.broadcast %290 : f32 to vector<32x128xf32>
      %292 = arith.mulf %84, %291 : vector<32x128xf32>
      %293 = arith.addf %289, %292 : vector<32x128xf32>
      %c43 = arith.constant 43 : index
      %294 = memref.load %arg4[%c43] : memref<144xf32, #tpu.memory_space<smem>>
      %295 = vector.broadcast %294 : f32 to vector<32x128xf32>
      %296 = arith.mulf %85, %295 : vector<32x128xf32>
      %297 = arith.addf %293, %296 : vector<32x128xf32>
      %c44 = arith.constant 44 : index
      %298 = memref.load %arg4[%c44] : memref<144xf32, #tpu.memory_space<smem>>
      %299 = vector.broadcast %298 : f32 to vector<32x128xf32>
      %300 = arith.mulf %86, %299 : vector<32x128xf32>
      %301 = arith.addf %297, %300 : vector<32x128xf32>
      %c4_93 = arith.constant 4 : index
      %302 = memref.load %arg5[%c4_93] : memref<16xf32, #tpu.memory_space<smem>>
      %303 = vector.broadcast %302 : f32 to vector<32x128xf32>
      %304 = arith.addf %301, %303 : vector<32x128xf32>
      %cst_94 = arith.constant 0.000000e+00 : f32
      %305 = vector.broadcast %cst_94 : f32 to vector<32x128xf32>
      %306 = arith.maximumf %304, %305 : vector<32x128xf32>
      %c32_i32_95 = arith.constant 32 : i32
      %307 = arith.muli %arg8, %c32_i32_95 : i32
      %c4096_i32 = arith.constant 4096 : i32
      %308 = arith.addi %c4096_i32, %307 : i32
      %309 = tpu.assume_multiple %308, 32 : i32
      %310 = arith.index_cast %309 : i32 to index
      %c0_96 = arith.constant 0 : index
      %311 = vector.load %arg7[%310, %c0_96] : memref<16384x128xf32, #tpu.memory_space<vmem>>, vector<32x128xf32>
      tpu.vector_store %arg7[%310, %c0_96], %306 {strides = array<i32>} : memref<16384x128xf32, #tpu.memory_space<vmem>>, vector<32x128xf32>,
      %c45 = arith.constant 45 : index
      %312 = memref.load %arg4[%c45] : memref<144xf32, #tpu.memory_space<smem>>
      %313 = vector.broadcast %312 : f32 to vector<32x128xf32>
      %314 = arith.mulf %78, %313 : vector<32x128xf32>
      %c46 = arith.constant 46 : index
      %315 = memref.load %arg4[%c46] : memref<144xf32, #tpu.memory_space<smem>>
      %316 = vector.broadcast %315 : f32 to vector<32x128xf32>
      %317 = arith.mulf %79, %316 : vector<32x128xf32>
      %318 = arith.addf %314, %317 : vector<32x128xf32>
      %c47 = arith.constant 47 : index
      %319 = memref.load %arg4[%c47] : memref<144xf32, #tpu.memory_space<smem>>
      %320 = vector.broadcast %319 : f32 to vector<32x128xf32>
      %321 = arith.mulf %80, %320 : vector<32x128xf32>
      %322 = arith.addf %318, %321 : vector<32x128xf32>
      %c48 = arith.constant 48 : index
      %323 = memref.load %arg4[%c48] : memref<144xf32, #tpu.memory_space<smem>>
      %324 = vector.broadcast %323 : f32 to vector<32x128xf32>
      %325 = arith.mulf %81, %324 : vector<32x128xf32>
      %326 = arith.addf %322, %325 : vector<32x128xf32>
      %c49 = arith.constant 49 : index
      %327 = memref.load %arg4[%c49] : memref<144xf32, #tpu.memory_space<smem>>
      %328 = vector.broadcast %327 : f32 to vector<32x128xf32>
      %329 = arith.mulf %82, %328 : vector<32x128xf32>
      %330 = arith.addf %326, %329 : vector<32x128xf32>
      %c50 = arith.constant 50 : index
      %331 = memref.load %arg4[%c50] : memref<144xf32, #tpu.memory_space<smem>>
      %332 = vector.broadcast %331 : f32 to vector<32x128xf32>
      %333 = arith.mulf %83, %332 : vector<32x128xf32>
      %334 = arith.addf %330, %333 : vector<32x128xf32>
      %c51 = arith.constant 51 : index
      %335 = memref.load %arg4[%c51] : memref<144xf32, #tpu.memory_space<smem>>
      %336 = vector.broadcast %335 : f32 to vector<32x128xf32>
      %337 = arith.mulf %84, %336 : vector<32x128xf32>
      %338 = arith.addf %334, %337 : vector<32x128xf32>
      %c52 = arith.constant 52 : index
      %339 = memref.load %arg4[%c52] : memref<144xf32, #tpu.memory_space<smem>>
      %340 = vector.broadcast %339 : f32 to vector<32x128xf32>
      %341 = arith.mulf %85, %340 : vector<32x128xf32>
      %342 = arith.addf %338, %341 : vector<32x128xf32>
      %c53 = arith.constant 53 : index
      %343 = memref.load %arg4[%c53] : memref<144xf32, #tpu.memory_space<smem>>
      %344 = vector.broadcast %343 : f32 to vector<32x128xf32>
      %345 = arith.mulf %86, %344 : vector<32x128xf32>
      %346 = arith.addf %342, %345 : vector<32x128xf32>
      %c5_97 = arith.constant 5 : index
      %347 = memref.load %arg5[%c5_97] : memref<16xf32, #tpu.memory_space<smem>>
      %348 = vector.broadcast %347 : f32 to vector<32x128xf32>
      %349 = arith.addf %346, %348 : vector<32x128xf32>
      %cst_98 = arith.constant 0.000000e+00 : f32
      %350 = vector.broadcast %cst_98 : f32 to vector<32x128xf32>
      %351 = arith.maximumf %349, %350 : vector<32x128xf32>
      %c32_i32_99 = arith.constant 32 : i32
      %352 = arith.muli %arg8, %c32_i32_99 : i32
      %c5120_i32 = arith.constant 5120 : i32
      %353 = arith.addi %c5120_i32, %352 : i32
      %354 = tpu.assume_multiple %353, 32 : i32
      %355 = arith.index_cast %354 : i32 to index
      %c0_100 = arith.constant 0 : index
      %356 = vector.load %arg7[%355, %c0_100] : memref<16384x128xf32, #tpu.memory_space<vmem>>, vector<32x128xf32>
      tpu.vector_store %arg7[%355, %c0_100], %351 {strides = array<i32>} : memref<16384x128xf32, #tpu.memory_space<vmem>>, vector<32x128xf32>,
      %c54 = arith.constant 54 : index
      %357 = memref.load %arg4[%c54] : memref<144xf32, #tpu.memory_space<smem>>
      %358 = vector.broadcast %357 : f32 to vector<32x128xf32>
      %359 = arith.mulf %78, %358 : vector<32x128xf32>
      %c55 = arith.constant 55 : index
      %360 = memref.load %arg4[%c55] : memref<144xf32, #tpu.memory_space<smem>>
      %361 = vector.broadcast %360 : f32 to vector<32x128xf32>
      %362 = arith.mulf %79, %361 : vector<32x128xf32>
      %363 = arith.addf %359, %362 : vector<32x128xf32>
      %c56 = arith.constant 56 : index
      %364 = memref.load %arg4[%c56] : memref<144xf32, #tpu.memory_space<smem>>
      %365 = vector.broadcast %364 : f32 to vector<32x128xf32>
      %366 = arith.mulf %80, %365 : vector<32x128xf32>
      %367 = arith.addf %363, %366 : vector<32x128xf32>
      %c57 = arith.constant 57 : index
      %368 = memref.load %arg4[%c57] : memref<144xf32, #tpu.memory_space<smem>>
      %369 = vector.broadcast %368 : f32 to vector<32x128xf32>
      %370 = arith.mulf %81, %369 : vector<32x128xf32>
      %371 = arith.addf %367, %370 : vector<32x128xf32>
      %c58 = arith.constant 58 : index
      %372 = memref.load %arg4[%c58] : memref<144xf32, #tpu.memory_space<smem>>
      %373 = vector.broadcast %372 : f32 to vector<32x128xf32>
      %374 = arith.mulf %82, %373 : vector<32x128xf32>
      %375 = arith.addf %371, %374 : vector<32x128xf32>
      %c59 = arith.constant 59 : index
      %376 = memref.load %arg4[%c59] : memref<144xf32, #tpu.memory_space<smem>>
      %377 = vector.broadcast %376 : f32 to vector<32x128xf32>
      %378 = arith.mulf %83, %377 : vector<32x128xf32>
      %379 = arith.addf %375, %378 : vector<32x128xf32>
      %c60 = arith.constant 60 : index
      %380 = memref.load %arg4[%c60] : memref<144xf32, #tpu.memory_space<smem>>
      %381 = vector.broadcast %380 : f32 to vector<32x128xf32>
      %382 = arith.mulf %84, %381 : vector<32x128xf32>
      %383 = arith.addf %379, %382 : vector<32x128xf32>
      %c61 = arith.constant 61 : index
      %384 = memref.load %arg4[%c61] : memref<144xf32, #tpu.memory_space<smem>>
      %385 = vector.broadcast %384 : f32 to vector<32x128xf32>
      %386 = arith.mulf %85, %385 : vector<32x128xf32>
      %387 = arith.addf %383, %386 : vector<32x128xf32>
      %c62 = arith.constant 62 : index
      %388 = memref.load %arg4[%c62] : memref<144xf32, #tpu.memory_space<smem>>
      %389 = vector.broadcast %388 : f32 to vector<32x128xf32>
      %390 = arith.mulf %86, %389 : vector<32x128xf32>
      %391 = arith.addf %387, %390 : vector<32x128xf32>
      %c6_101 = arith.constant 6 : index
      %392 = memref.load %arg5[%c6_101] : memref<16xf32, #tpu.memory_space<smem>>
      %393 = vector.broadcast %392 : f32 to vector<32x128xf32>
      %394 = arith.addf %391, %393 : vector<32x128xf32>
      %cst_102 = arith.constant 0.000000e+00 : f32
      %395 = vector.broadcast %cst_102 : f32 to vector<32x128xf32>
      %396 = arith.maximumf %394, %395 : vector<32x128xf32>
      %c32_i32_103 = arith.constant 32 : i32
      %397 = arith.muli %arg8, %c32_i32_103 : i32
      %c6144_i32 = arith.constant 6144 : i32
      %398 = arith.addi %c6144_i32, %397 : i32
      %399 = tpu.assume_multiple %398, 32 : i32
      %400 = arith.index_cast %399 : i32 to index
      %c0_104 = arith.constant 0 : index
      %401 = vector.load %arg7[%400, %c0_104] : memref<16384x128xf32, #tpu.memory_space<vmem>>, vector<32x128xf32>
      tpu.vector_store %arg7[%400, %c0_104], %396 {strides = array<i32>} : memref<16384x128xf32, #tpu.memory_space<vmem>>, vector<32x128xf32>,
      %c63 = arith.constant 63 : index
      %402 = memref.load %arg4[%c63] : memref<144xf32, #tpu.memory_space<smem>>
      %403 = vector.broadcast %402 : f32 to vector<32x128xf32>
      %404 = arith.mulf %78, %403 : vector<32x128xf32>
      %c64 = arith.constant 64 : index
      %405 = memref.load %arg4[%c64] : memref<144xf32, #tpu.memory_space<smem>>
      %406 = vector.broadcast %405 : f32 to vector<32x128xf32>
      %407 = arith.mulf %79, %406 : vector<32x128xf32>
      %408 = arith.addf %404, %407 : vector<32x128xf32>
      %c65 = arith.constant 65 : index
      %409 = memref.load %arg4[%c65] : memref<144xf32, #tpu.memory_space<smem>>
      %410 = vector.broadcast %409 : f32 to vector<32x128xf32>
      %411 = arith.mulf %80, %410 : vector<32x128xf32>
      %412 = arith.addf %408, %411 : vector<32x128xf32>
      %c66 = arith.constant 66 : index
      %413 = memref.load %arg4[%c66] : memref<144xf32, #tpu.memory_space<smem>>
      %414 = vector.broadcast %413 : f32 to vector<32x128xf32>
      %415 = arith.mulf %81, %414 : vector<32x128xf32>
      %416 = arith.addf %412, %415 : vector<32x128xf32>
      %c67 = arith.constant 67 : index
      %417 = memref.load %arg4[%c67] : memref<144xf32, #tpu.memory_space<smem>>
      %418 = vector.broadcast %417 : f32 to vector<32x128xf32>
      %419 = arith.mulf %82, %418 : vector<32x128xf32>
      %420 = arith.addf %416, %419 : vector<32x128xf32>
      %c68 = arith.constant 68 : index
      %421 = memref.load %arg4[%c68] : memref<144xf32, #tpu.memory_space<smem>>
      %422 = vector.broadcast %421 : f32 to vector<32x128xf32>
      %423 = arith.mulf %83, %422 : vector<32x128xf32>
      %424 = arith.addf %420, %423 : vector<32x128xf32>
      %c69 = arith.constant 69 : index
      %425 = memref.load %arg4[%c69] : memref<144xf32, #tpu.memory_space<smem>>
      %426 = vector.broadcast %425 : f32 to vector<32x128xf32>
      %427 = arith.mulf %84, %426 : vector<32x128xf32>
      %428 = arith.addf %424, %427 : vector<32x128xf32>
      %c70 = arith.constant 70 : index
      %429 = memref.load %arg4[%c70] : memref<144xf32, #tpu.memory_space<smem>>
      %430 = vector.broadcast %429 : f32 to vector<32x128xf32>
      %431 = arith.mulf %85, %430 : vector<32x128xf32>
      %432 = arith.addf %428, %431 : vector<32x128xf32>
      %c71 = arith.constant 71 : index
      %433 = memref.load %arg4[%c71] : memref<144xf32, #tpu.memory_space<smem>>
      %434 = vector.broadcast %433 : f32 to vector<32x128xf32>
      %435 = arith.mulf %86, %434 : vector<32x128xf32>
      %436 = arith.addf %432, %435 : vector<32x128xf32>
      %c7_105 = arith.constant 7 : index
      %437 = memref.load %arg5[%c7_105] : memref<16xf32, #tpu.memory_space<smem>>
      %438 = vector.broadcast %437 : f32 to vector<32x128xf32>
      %439 = arith.addf %436, %438 : vector<32x128xf32>
      %cst_106 = arith.constant 0.000000e+00 : f32
      %440 = vector.broadcast %cst_106 : f32 to vector<32x128xf32>
      %441 = arith.maximumf %439, %440 : vector<32x128xf32>
      %c32_i32_107 = arith.constant 32 : i32
      %442 = arith.muli %arg8, %c32_i32_107 : i32
      %c7168_i32 = arith.constant 7168 : i32
      %443 = arith.addi %c7168_i32, %442 : i32
      %444 = tpu.assume_multiple %443, 32 : i32
      %445 = arith.index_cast %444 : i32 to index
      %c0_108 = arith.constant 0 : index
      %446 = vector.load %arg7[%445, %c0_108] : memref<16384x128xf32, #tpu.memory_space<vmem>>, vector<32x128xf32>
      tpu.vector_store %arg7[%445, %c0_108], %441 {strides = array<i32>} : memref<16384x128xf32, #tpu.memory_space<vmem>>, vector<32x128xf32>,
      %c72 = arith.constant 72 : index
      %447 = memref.load %arg4[%c72] : memref<144xf32, #tpu.memory_space<smem>>
      %448 = vector.broadcast %447 : f32 to vector<32x128xf32>
      %449 = arith.mulf %78, %448 : vector<32x128xf32>
      %c73 = arith.constant 73 : index
      %450 = memref.load %arg4[%c73] : memref<144xf32, #tpu.memory_space<smem>>
      %451 = vector.broadcast %450 : f32 to vector<32x128xf32>
      %452 = arith.mulf %79, %451 : vector<32x128xf32>
      %453 = arith.addf %449, %452 : vector<32x128xf32>
      %c74 = arith.constant 74 : index
      %454 = memref.load %arg4[%c74] : memref<144xf32, #tpu.memory_space<smem>>
      %455 = vector.broadcast %454 : f32 to vector<32x128xf32>
      %456 = arith.mulf %80, %455 : vector<32x128xf32>
      %457 = arith.addf %453, %456 : vector<32x128xf32>
      %c75 = arith.constant 75 : index
      %458 = memref.load %arg4[%c75] : memref<144xf32, #tpu.memory_space<smem>>
      %459 = vector.broadcast %458 : f32 to vector<32x128xf32>
      %460 = arith.mulf %81, %459 : vector<32x128xf32>
      %461 = arith.addf %457, %460 : vector<32x128xf32>
      %c76 = arith.constant 76 : index
      %462 = memref.load %arg4[%c76] : memref<144xf32, #tpu.memory_space<smem>>
      %463 = vector.broadcast %462 : f32 to vector<32x128xf32>
      %464 = arith.mulf %82, %463 : vector<32x128xf32>
      %465 = arith.addf %461, %464 : vector<32x128xf32>
      %c77 = arith.constant 77 : index
      %466 = memref.load %arg4[%c77] : memref<144xf32, #tpu.memory_space<smem>>
      %467 = vector.broadcast %466 : f32 to vector<32x128xf32>
      %468 = arith.mulf %83, %467 : vector<32x128xf32>
      %469 = arith.addf %465, %468 : vector<32x128xf32>
      %c78 = arith.constant 78 : index
      %470 = memref.load %arg4[%c78] : memref<144xf32, #tpu.memory_space<smem>>
      %471 = vector.broadcast %470 : f32 to vector<32x128xf32>
      %472 = arith.mulf %84, %471 : vector<32x128xf32>
      %473 = arith.addf %469, %472 : vector<32x128xf32>
      %c79 = arith.constant 79 : index
      %474 = memref.load %arg4[%c79] : memref<144xf32, #tpu.memory_space<smem>>
      %475 = vector.broadcast %474 : f32 to vector<32x128xf32>
      %476 = arith.mulf %85, %475 : vector<32x128xf32>
      %477 = arith.addf %473, %476 : vector<32x128xf32>
      %c80 = arith.constant 80 : index
      %478 = memref.load %arg4[%c80] : memref<144xf32, #tpu.memory_space<smem>>
      %479 = vector.broadcast %478 : f32 to vector<32x128xf32>
      %480 = arith.mulf %86, %479 : vector<32x128xf32>
      %481 = arith.addf %477, %480 : vector<32x128xf32>
      %c8_109 = arith.constant 8 : index
      %482 = memref.load %arg5[%c8_109] : memref<16xf32, #tpu.memory_space<smem>>
      %483 = vector.broadcast %482 : f32 to vector<32x128xf32>
      %484 = arith.addf %481, %483 : vector<32x128xf32>
      %cst_110 = arith.constant 0.000000e+00 : f32
      %485 = vector.broadcast %cst_110 : f32 to vector<32x128xf32>
      %486 = arith.maximumf %484, %485 : vector<32x128xf32>
      %c32_i32_111 = arith.constant 32 : i32
      %487 = arith.muli %arg8, %c32_i32_111 : i32
      %c8192_i32 = arith.constant 8192 : i32
      %488 = arith.addi %c8192_i32, %487 : i32
      %489 = tpu.assume_multiple %488, 32 : i32
      %490 = arith.index_cast %489 : i32 to index
      %c0_112 = arith.constant 0 : index
      %491 = vector.load %arg7[%490, %c0_112] : memref<16384x128xf32, #tpu.memory_space<vmem>>, vector<32x128xf32>
      tpu.vector_store %arg7[%490, %c0_112], %486 {strides = array<i32>} : memref<16384x128xf32, #tpu.memory_space<vmem>>, vector<32x128xf32>,
      %c81 = arith.constant 81 : index
      %492 = memref.load %arg4[%c81] : memref<144xf32, #tpu.memory_space<smem>>
      %493 = vector.broadcast %492 : f32 to vector<32x128xf32>
      %494 = arith.mulf %78, %493 : vector<32x128xf32>
      %c82 = arith.constant 82 : index
      %495 = memref.load %arg4[%c82] : memref<144xf32, #tpu.memory_space<smem>>
      %496 = vector.broadcast %495 : f32 to vector<32x128xf32>
      %497 = arith.mulf %79, %496 : vector<32x128xf32>
      %498 = arith.addf %494, %497 : vector<32x128xf32>
      %c83 = arith.constant 83 : index
      %499 = memref.load %arg4[%c83] : memref<144xf32, #tpu.memory_space<smem>>
      %500 = vector.broadcast %499 : f32 to vector<32x128xf32>
      %501 = arith.mulf %80, %500 : vector<32x128xf32>
      %502 = arith.addf %498, %501 : vector<32x128xf32>
      %c84 = arith.constant 84 : index
      %503 = memref.load %arg4[%c84] : memref<144xf32, #tpu.memory_space<smem>>
      %504 = vector.broadcast %503 : f32 to vector<32x128xf32>
      %505 = arith.mulf %81, %504 : vector<32x128xf32>
      %506 = arith.addf %502, %505 : vector<32x128xf32>
      %c85 = arith.constant 85 : index
      %507 = memref.load %arg4[%c85] : memref<144xf32, #tpu.memory_space<smem>>
      %508 = vector.broadcast %507 : f32 to vector<32x128xf32>
      %509 = arith.mulf %82, %508 : vector<32x128xf32>
      %510 = arith.addf %506, %509 : vector<32x128xf32>
      %c86 = arith.constant 86 : index
      %511 = memref.load %arg4[%c86] : memref<144xf32, #tpu.memory_space<smem>>
      %512 = vector.broadcast %511 : f32 to vector<32x128xf32>
      %513 = arith.mulf %83, %512 : vector<32x128xf32>
      %514 = arith.addf %510, %513 : vector<32x128xf32>
      %c87 = arith.constant 87 : index
      %515 = memref.load %arg4[%c87] : memref<144xf32, #tpu.memory_space<smem>>
      %516 = vector.broadcast %515 : f32 to vector<32x128xf32>
      %517 = arith.mulf %84, %516 : vector<32x128xf32>
      %518 = arith.addf %514, %517 : vector<32x128xf32>
      %c88 = arith.constant 88 : index
      %519 = memref.load %arg4[%c88] : memref<144xf32, #tpu.memory_space<smem>>
      %520 = vector.broadcast %519 : f32 to vector<32x128xf32>
      %521 = arith.mulf %85, %520 : vector<32x128xf32>
      %522 = arith.addf %518, %521 : vector<32x128xf32>
      %c89 = arith.constant 89 : index
      %523 = memref.load %arg4[%c89] : memref<144xf32, #tpu.memory_space<smem>>
      %524 = vector.broadcast %523 : f32 to vector<32x128xf32>
      %525 = arith.mulf %86, %524 : vector<32x128xf32>
      %526 = arith.addf %522, %525 : vector<32x128xf32>
      %c9_113 = arith.constant 9 : index
      %527 = memref.load %arg5[%c9_113] : memref<16xf32, #tpu.memory_space<smem>>
      %528 = vector.broadcast %527 : f32 to vector<32x128xf32>
      %529 = arith.addf %526, %528 : vector<32x128xf32>
      %cst_114 = arith.constant 0.000000e+00 : f32
      %530 = vector.broadcast %cst_114 : f32 to vector<32x128xf32>
      %531 = arith.maximumf %529, %530 : vector<32x128xf32>
      %c32_i32_115 = arith.constant 32 : i32
      %532 = arith.muli %arg8, %c32_i32_115 : i32
      %c9216_i32 = arith.constant 9216 : i32
      %533 = arith.addi %c9216_i32, %532 : i32
      %534 = tpu.assume_multiple %533, 32 : i32
      %535 = arith.index_cast %534 : i32 to index
      %c0_116 = arith.constant 0 : index
      %536 = vector.load %arg7[%535, %c0_116] : memref<16384x128xf32, #tpu.memory_space<vmem>>, vector<32x128xf32>
      tpu.vector_store %arg7[%535, %c0_116], %531 {strides = array<i32>} : memref<16384x128xf32, #tpu.memory_space<vmem>>, vector<32x128xf32>,
      %c90 = arith.constant 90 : index
      %537 = memref.load %arg4[%c90] : memref<144xf32, #tpu.memory_space<smem>>
      %538 = vector.broadcast %537 : f32 to vector<32x128xf32>
      %539 = arith.mulf %78, %538 : vector<32x128xf32>
      %c91 = arith.constant 91 : index
      %540 = memref.load %arg4[%c91] : memref<144xf32, #tpu.memory_space<smem>>
      %541 = vector.broadcast %540 : f32 to vector<32x128xf32>
      %542 = arith.mulf %79, %541 : vector<32x128xf32>
      %543 = arith.addf %539, %542 : vector<32x128xf32>
      %c92 = arith.constant 92 : index
      %544 = memref.load %arg4[%c92] : memref<144xf32, #tpu.memory_space<smem>>
      %545 = vector.broadcast %544 : f32 to vector<32x128xf32>
      %546 = arith.mulf %80, %545 : vector<32x128xf32>
      %547 = arith.addf %543, %546 : vector<32x128xf32>
      %c93 = arith.constant 93 : index
      %548 = memref.load %arg4[%c93] : memref<144xf32, #tpu.memory_space<smem>>
      %549 = vector.broadcast %548 : f32 to vector<32x128xf32>
      %550 = arith.mulf %81, %549 : vector<32x128xf32>
      %551 = arith.addf %547, %550 : vector<32x128xf32>
      %c94 = arith.constant 94 : index
      %552 = memref.load %arg4[%c94] : memref<144xf32, #tpu.memory_space<smem>>
      %553 = vector.broadcast %552 : f32 to vector<32x128xf32>
      %554 = arith.mulf %82, %553 : vector<32x128xf32>
      %555 = arith.addf %551, %554 : vector<32x128xf32>
      %c95 = arith.constant 95 : index
      %556 = memref.load %arg4[%c95] : memref<144xf32, #tpu.memory_space<smem>>
      %557 = vector.broadcast %556 : f32 to vector<32x128xf32>
      %558 = arith.mulf %83, %557 : vector<32x128xf32>
      %559 = arith.addf %555, %558 : vector<32x128xf32>
      %c96 = arith.constant 96 : index
      %560 = memref.load %arg4[%c96] : memref<144xf32, #tpu.memory_space<smem>>
      %561 = vector.broadcast %560 : f32 to vector<32x128xf32>
      %562 = arith.mulf %84, %561 : vector<32x128xf32>
      %563 = arith.addf %559, %562 : vector<32x128xf32>
      %c97 = arith.constant 97 : index
      %564 = memref.load %arg4[%c97] : memref<144xf32, #tpu.memory_space<smem>>
      %565 = vector.broadcast %564 : f32 to vector<32x128xf32>
      %566 = arith.mulf %85, %565 : vector<32x128xf32>
      %567 = arith.addf %563, %566 : vector<32x128xf32>
      %c98 = arith.constant 98 : index
      %568 = memref.load %arg4[%c98] : memref<144xf32, #tpu.memory_space<smem>>
      %569 = vector.broadcast %568 : f32 to vector<32x128xf32>
      %570 = arith.mulf %86, %569 : vector<32x128xf32>
      %571 = arith.addf %567, %570 : vector<32x128xf32>
      %c10_117 = arith.constant 10 : index
      %572 = memref.load %arg5[%c10_117] : memref<16xf32, #tpu.memory_space<smem>>
      %573 = vector.broadcast %572 : f32 to vector<32x128xf32>
      %574 = arith.addf %571, %573 : vector<32x128xf32>
      %cst_118 = arith.constant 0.000000e+00 : f32
      %575 = vector.broadcast %cst_118 : f32 to vector<32x128xf32>
      %576 = arith.maximumf %574, %575 : vector<32x128xf32>
      %c32_i32_119 = arith.constant 32 : i32
      %577 = arith.muli %arg8, %c32_i32_119 : i32
      %c10240_i32 = arith.constant 10240 : i32
      %578 = arith.addi %c10240_i32, %577 : i32
      %579 = tpu.assume_multiple %578, 32 : i32
      %580 = arith.index_cast %579 : i32 to index
      %c0_120 = arith.constant 0 : index
      %581 = vector.load %arg7[%580, %c0_120] : memref<16384x128xf32, #tpu.memory_space<vmem>>, vector<32x128xf32>
      tpu.vector_store %arg7[%580, %c0_120], %576 {strides = array<i32>} : memref<16384x128xf32, #tpu.memory_space<vmem>>, vector<32x128xf32>,
      %c99 = arith.constant 99 : index
      %582 = memref.load %arg4[%c99] : memref<144xf32, #tpu.memory_space<smem>>
      %583 = vector.broadcast %582 : f32 to vector<32x128xf32>
      %584 = arith.mulf %78, %583 : vector<32x128xf32>
      %c100 = arith.constant 100 : index
      %585 = memref.load %arg4[%c100] : memref<144xf32, #tpu.memory_space<smem>>
      %586 = vector.broadcast %585 : f32 to vector<32x128xf32>
      %587 = arith.mulf %79, %586 : vector<32x128xf32>
      %588 = arith.addf %584, %587 : vector<32x128xf32>
      %c101 = arith.constant 101 : index
      %589 = memref.load %arg4[%c101] : memref<144xf32, #tpu.memory_space<smem>>
      %590 = vector.broadcast %589 : f32 to vector<32x128xf32>
      %591 = arith.mulf %80, %590 : vector<32x128xf32>
      %592 = arith.addf %588, %591 : vector<32x128xf32>
      %c102 = arith.constant 102 : index
      %593 = memref.load %arg4[%c102] : memref<144xf32, #tpu.memory_space<smem>>
      %594 = vector.broadcast %593 : f32 to vector<32x128xf32>
      %595 = arith.mulf %81, %594 : vector<32x128xf32>
      %596 = arith.addf %592, %595 : vector<32x128xf32>
      %c103 = arith.constant 103 : index
      %597 = memref.load %arg4[%c103] : memref<144xf32, #tpu.memory_space<smem>>
      %598 = vector.broadcast %597 : f32 to vector<32x128xf32>
      %599 = arith.mulf %82, %598 : vector<32x128xf32>
      %600 = arith.addf %596, %599 : vector<32x128xf32>
      %c104 = arith.constant 104 : index
      %601 = memref.load %arg4[%c104] : memref<144xf32, #tpu.memory_space<smem>>
      %602 = vector.broadcast %601 : f32 to vector<32x128xf32>
      %603 = arith.mulf %83, %602 : vector<32x128xf32>
      %604 = arith.addf %600, %603 : vector<32x128xf32>
      %c105 = arith.constant 105 : index
      %605 = memref.load %arg4[%c105] : memref<144xf32, #tpu.memory_space<smem>>
      %606 = vector.broadcast %605 : f32 to vector<32x128xf32>
      %607 = arith.mulf %84, %606 : vector<32x128xf32>
      %608 = arith.addf %604, %607 : vector<32x128xf32>
      %c106 = arith.constant 106 : index
      %609 = memref.load %arg4[%c106] : memref<144xf32, #tpu.memory_space<smem>>
      %610 = vector.broadcast %609 : f32 to vector<32x128xf32>
      %611 = arith.mulf %85, %610 : vector<32x128xf32>
      %612 = arith.addf %608, %611 : vector<32x128xf32>
      %c107 = arith.constant 107 : index
      %613 = memref.load %arg4[%c107] : memref<144xf32, #tpu.memory_space<smem>>
      %614 = vector.broadcast %613 : f32 to vector<32x128xf32>
      %615 = arith.mulf %86, %614 : vector<32x128xf32>
      %616 = arith.addf %612, %615 : vector<32x128xf32>
      %c11_121 = arith.constant 11 : index
      %617 = memref.load %arg5[%c11_121] : memref<16xf32, #tpu.memory_space<smem>>
      %618 = vector.broadcast %617 : f32 to vector<32x128xf32>
      %619 = arith.addf %616, %618 : vector<32x128xf32>
      %cst_122 = arith.constant 0.000000e+00 : f32
      %620 = vector.broadcast %cst_122 : f32 to vector<32x128xf32>
      %621 = arith.maximumf %619, %620 : vector<32x128xf32>
      %c32_i32_123 = arith.constant 32 : i32
      %622 = arith.muli %arg8, %c32_i32_123 : i32
      %c11264_i32 = arith.constant 11264 : i32
      %623 = arith.addi %c11264_i32, %622 : i32
      %624 = tpu.assume_multiple %623, 32 : i32
      %625 = arith.index_cast %624 : i32 to index
      %c0_124 = arith.constant 0 : index
      %626 = vector.load %arg7[%625, %c0_124] : memref<16384x128xf32, #tpu.memory_space<vmem>>, vector<32x128xf32>
      tpu.vector_store %arg7[%625, %c0_124], %621 {strides = array<i32>} : memref<16384x128xf32, #tpu.memory_space<vmem>>, vector<32x128xf32>,
      %c108 = arith.constant 108 : index
      %627 = memref.load %arg4[%c108] : memref<144xf32, #tpu.memory_space<smem>>
      %628 = vector.broadcast %627 : f32 to vector<32x128xf32>
      %629 = arith.mulf %78, %628 : vector<32x128xf32>
      %c109 = arith.constant 109 : index
      %630 = memref.load %arg4[%c109] : memref<144xf32, #tpu.memory_space<smem>>
      %631 = vector.broadcast %630 : f32 to vector<32x128xf32>
      %632 = arith.mulf %79, %631 : vector<32x128xf32>
      %633 = arith.addf %629, %632 : vector<32x128xf32>
      %c110 = arith.constant 110 : index
      %634 = memref.load %arg4[%c110] : memref<144xf32, #tpu.memory_space<smem>>
      %635 = vector.broadcast %634 : f32 to vector<32x128xf32>
      %636 = arith.mulf %80, %635 : vector<32x128xf32>
      %637 = arith.addf %633, %636 : vector<32x128xf32>
      %c111 = arith.constant 111 : index
      %638 = memref.load %arg4[%c111] : memref<144xf32, #tpu.memory_space<smem>>
      %639 = vector.broadcast %638 : f32 to vector<32x128xf32>
      %640 = arith.mulf %81, %639 : vector<32x128xf32>
      %641 = arith.addf %637, %640 : vector<32x128xf32>
      %c112 = arith.constant 112 : index
      %642 = memref.load %arg4[%c112] : memref<144xf32, #tpu.memory_space<smem>>
      %643 = vector.broadcast %642 : f32 to vector<32x128xf32>
      %644 = arith.mulf %82, %643 : vector<32x128xf32>
      %645 = arith.addf %641, %644 : vector<32x128xf32>
      %c113 = arith.constant 113 : index
      %646 = memref.load %arg4[%c113] : memref<144xf32, #tpu.memory_space<smem>>
      %647 = vector.broadcast %646 : f32 to vector<32x128xf32>
      %648 = arith.mulf %83, %647 : vector<32x128xf32>
      %649 = arith.addf %645, %648 : vector<32x128xf32>
      %c114 = arith.constant 114 : index
      %650 = memref.load %arg4[%c114] : memref<144xf32, #tpu.memory_space<smem>>
      %651 = vector.broadcast %650 : f32 to vector<32x128xf32>
      %652 = arith.mulf %84, %651 : vector<32x128xf32>
      %653 = arith.addf %649, %652 : vector<32x128xf32>
      %c115 = arith.constant 115 : index
      %654 = memref.load %arg4[%c115] : memref<144xf32, #tpu.memory_space<smem>>
      %655 = vector.broadcast %654 : f32 to vector<32x128xf32>
      %656 = arith.mulf %85, %655 : vector<32x128xf32>
      %657 = arith.addf %653, %656 : vector<32x128xf32>
      %c116 = arith.constant 116 : index
      %658 = memref.load %arg4[%c116] : memref<144xf32, #tpu.memory_space<smem>>
      %659 = vector.broadcast %658 : f32 to vector<32x128xf32>
      %660 = arith.mulf %86, %659 : vector<32x128xf32>
      %661 = arith.addf %657, %660 : vector<32x128xf32>
      %c12_125 = arith.constant 12 : index
      %662 = memref.load %arg5[%c12_125] : memref<16xf32, #tpu.memory_space<smem>>
      %663 = vector.broadcast %662 : f32 to vector<32x128xf32>
      %664 = arith.addf %661, %663 : vector<32x128xf32>
      %cst_126 = arith.constant 0.000000e+00 : f32
      %665 = vector.broadcast %cst_126 : f32 to vector<32x128xf32>
      %666 = arith.maximumf %664, %665 : vector<32x128xf32>
      %c32_i32_127 = arith.constant 32 : i32
      %667 = arith.muli %arg8, %c32_i32_127 : i32
      %c12288_i32 = arith.constant 12288 : i32
      %668 = arith.addi %c12288_i32, %667 : i32
      %669 = tpu.assume_multiple %668, 32 : i32
      %670 = arith.index_cast %669 : i32 to index
      %c0_128 = arith.constant 0 : index
      %671 = vector.load %arg7[%670, %c0_128] : memref<16384x128xf32, #tpu.memory_space<vmem>>, vector<32x128xf32>
      tpu.vector_store %arg7[%670, %c0_128], %666 {strides = array<i32>} : memref<16384x128xf32, #tpu.memory_space<vmem>>, vector<32x128xf32>,
      %c117 = arith.constant 117 : index
      %672 = memref.load %arg4[%c117] : memref<144xf32, #tpu.memory_space<smem>>
      %673 = vector.broadcast %672 : f32 to vector<32x128xf32>
      %674 = arith.mulf %78, %673 : vector<32x128xf32>
      %c118 = arith.constant 118 : index
      %675 = memref.load %arg4[%c118] : memref<144xf32, #tpu.memory_space<smem>>
      %676 = vector.broadcast %675 : f32 to vector<32x128xf32>
      %677 = arith.mulf %79, %676 : vector<32x128xf32>
      %678 = arith.addf %674, %677 : vector<32x128xf32>
      %c119 = arith.constant 119 : index
      %679 = memref.load %arg4[%c119] : memref<144xf32, #tpu.memory_space<smem>>
      %680 = vector.broadcast %679 : f32 to vector<32x128xf32>
      %681 = arith.mulf %80, %680 : vector<32x128xf32>
      %682 = arith.addf %678, %681 : vector<32x128xf32>
      %c120 = arith.constant 120 : index
      %683 = memref.load %arg4[%c120] : memref<144xf32, #tpu.memory_space<smem>>
      %684 = vector.broadcast %683 : f32 to vector<32x128xf32>
      %685 = arith.mulf %81, %684 : vector<32x128xf32>
      %686 = arith.addf %682, %685 : vector<32x128xf32>
      %c121 = arith.constant 121 : index
      %687 = memref.load %arg4[%c121] : memref<144xf32, #tpu.memory_space<smem>>
      %688 = vector.broadcast %687 : f32 to vector<32x128xf32>
      %689 = arith.mulf %82, %688 : vector<32x128xf32>
      %690 = arith.addf %686, %689 : vector<32x128xf32>
      %c122 = arith.constant 122 : index
      %691 = memref.load %arg4[%c122] : memref<144xf32, #tpu.memory_space<smem>>
      %692 = vector.broadcast %691 : f32 to vector<32x128xf32>
      %693 = arith.mulf %83, %692 : vector<32x128xf32>
      %694 = arith.addf %690, %693 : vector<32x128xf32>
      %c123 = arith.constant 123 : index
      %695 = memref.load %arg4[%c123] : memref<144xf32, #tpu.memory_space<smem>>
      %696 = vector.broadcast %695 : f32 to vector<32x128xf32>
      %697 = arith.mulf %84, %696 : vector<32x128xf32>
      %698 = arith.addf %694, %697 : vector<32x128xf32>
      %c124 = arith.constant 124 : index
      %699 = memref.load %arg4[%c124] : memref<144xf32, #tpu.memory_space<smem>>
      %700 = vector.broadcast %699 : f32 to vector<32x128xf32>
      %701 = arith.mulf %85, %700 : vector<32x128xf32>
      %702 = arith.addf %698, %701 : vector<32x128xf32>
      %c125 = arith.constant 125 : index
      %703 = memref.load %arg4[%c125] : memref<144xf32, #tpu.memory_space<smem>>
      %704 = vector.broadcast %703 : f32 to vector<32x128xf32>
      %705 = arith.mulf %86, %704 : vector<32x128xf32>
      %706 = arith.addf %702, %705 : vector<32x128xf32>
      %c13_129 = arith.constant 13 : index
      %707 = memref.load %arg5[%c13_129] : memref<16xf32, #tpu.memory_space<smem>>
      %708 = vector.broadcast %707 : f32 to vector<32x128xf32>
      %709 = arith.addf %706, %708 : vector<32x128xf32>
      %cst_130 = arith.constant 0.000000e+00 : f32
      %710 = vector.broadcast %cst_130 : f32 to vector<32x128xf32>
      %711 = arith.maximumf %709, %710 : vector<32x128xf32>
      %c32_i32_131 = arith.constant 32 : i32
      %712 = arith.muli %arg8, %c32_i32_131 : i32
      %c13312_i32 = arith.constant 13312 : i32
      %713 = arith.addi %c13312_i32, %712 : i32
      %714 = tpu.assume_multiple %713, 32 : i32
      %715 = arith.index_cast %714 : i32 to index
      %c0_132 = arith.constant 0 : index
      %716 = vector.load %arg7[%715, %c0_132] : memref<16384x128xf32, #tpu.memory_space<vmem>>, vector<32x128xf32>
      tpu.vector_store %arg7[%715, %c0_132], %711 {strides = array<i32>} : memref<16384x128xf32, #tpu.memory_space<vmem>>, vector<32x128xf32>,
      %c126 = arith.constant 126 : index
      %717 = memref.load %arg4[%c126] : memref<144xf32, #tpu.memory_space<smem>>
      %718 = vector.broadcast %717 : f32 to vector<32x128xf32>
      %719 = arith.mulf %78, %718 : vector<32x128xf32>
      %c127 = arith.constant 127 : index
      %720 = memref.load %arg4[%c127] : memref<144xf32, #tpu.memory_space<smem>>
      %721 = vector.broadcast %720 : f32 to vector<32x128xf32>
      %722 = arith.mulf %79, %721 : vector<32x128xf32>
      %723 = arith.addf %719, %722 : vector<32x128xf32>
      %c128 = arith.constant 128 : index
      %724 = memref.load %arg4[%c128] : memref<144xf32, #tpu.memory_space<smem>>
      %725 = vector.broadcast %724 : f32 to vector<32x128xf32>
      %726 = arith.mulf %80, %725 : vector<32x128xf32>
      %727 = arith.addf %723, %726 : vector<32x128xf32>
      %c129 = arith.constant 129 : index
      %728 = memref.load %arg4[%c129] : memref<144xf32, #tpu.memory_space<smem>>
      %729 = vector.broadcast %728 : f32 to vector<32x128xf32>
      %730 = arith.mulf %81, %729 : vector<32x128xf32>
      %731 = arith.addf %727, %730 : vector<32x128xf32>
      %c130 = arith.constant 130 : index
      %732 = memref.load %arg4[%c130] : memref<144xf32, #tpu.memory_space<smem>>
      %733 = vector.broadcast %732 : f32 to vector<32x128xf32>
      %734 = arith.mulf %82, %733 : vector<32x128xf32>
      %735 = arith.addf %731, %734 : vector<32x128xf32>
      %c131 = arith.constant 131 : index
      %736 = memref.load %arg4[%c131] : memref<144xf32, #tpu.memory_space<smem>>
      %737 = vector.broadcast %736 : f32 to vector<32x128xf32>
      %738 = arith.mulf %83, %737 : vector<32x128xf32>
      %739 = arith.addf %735, %738 : vector<32x128xf32>
      %c132 = arith.constant 132 : index
      %740 = memref.load %arg4[%c132] : memref<144xf32, #tpu.memory_space<smem>>
      %741 = vector.broadcast %740 : f32 to vector<32x128xf32>
      %742 = arith.mulf %84, %741 : vector<32x128xf32>
      %743 = arith.addf %739, %742 : vector<32x128xf32>
      %c133 = arith.constant 133 : index
      %744 = memref.load %arg4[%c133] : memref<144xf32, #tpu.memory_space<smem>>
      %745 = vector.broadcast %744 : f32 to vector<32x128xf32>
      %746 = arith.mulf %85, %745 : vector<32x128xf32>
      %747 = arith.addf %743, %746 : vector<32x128xf32>
      %c134 = arith.constant 134 : index
      %748 = memref.load %arg4[%c134] : memref<144xf32, #tpu.memory_space<smem>>
      %749 = vector.broadcast %748 : f32 to vector<32x128xf32>
      %750 = arith.mulf %86, %749 : vector<32x128xf32>
      %751 = arith.addf %747, %750 : vector<32x128xf32>
      %c14_133 = arith.constant 14 : index
      %752 = memref.load %arg5[%c14_133] : memref<16xf32, #tpu.memory_space<smem>>
      %753 = vector.broadcast %752 : f32 to vector<32x128xf32>
      %754 = arith.addf %751, %753 : vector<32x128xf32>
      %cst_134 = arith.constant 0.000000e+00 : f32
      %755 = vector.broadcast %cst_134 : f32 to vector<32x128xf32>
      %756 = arith.maximumf %754, %755 : vector<32x128xf32>
      %c32_i32_135 = arith.constant 32 : i32
      %757 = arith.muli %arg8, %c32_i32_135 : i32
      %c14336_i32 = arith.constant 14336 : i32
      %758 = arith.addi %c14336_i32, %757 : i32
      %759 = tpu.assume_multiple %758, 32 : i32
      %760 = arith.index_cast %759 : i32 to index
      %c0_136 = arith.constant 0 : index
      %761 = vector.load %arg7[%760, %c0_136] : memref<16384x128xf32, #tpu.memory_space<vmem>>, vector<32x128xf32>
      tpu.vector_store %arg7[%760, %c0_136], %756 {strides = array<i32>} : memref<16384x128xf32, #tpu.memory_space<vmem>>, vector<32x128xf32>,
      %c135 = arith.constant 135 : index
      %762 = memref.load %arg4[%c135] : memref<144xf32, #tpu.memory_space<smem>>
      %763 = vector.broadcast %762 : f32 to vector<32x128xf32>
      %764 = arith.mulf %78, %763 : vector<32x128xf32>
      %c136 = arith.constant 136 : index
      %765 = memref.load %arg4[%c136] : memref<144xf32, #tpu.memory_space<smem>>
      %766 = vector.broadcast %765 : f32 to vector<32x128xf32>
      %767 = arith.mulf %79, %766 : vector<32x128xf32>
      %768 = arith.addf %764, %767 : vector<32x128xf32>
      %c137 = arith.constant 137 : index
      %769 = memref.load %arg4[%c137] : memref<144xf32, #tpu.memory_space<smem>>
      %770 = vector.broadcast %769 : f32 to vector<32x128xf32>
      %771 = arith.mulf %80, %770 : vector<32x128xf32>
      %772 = arith.addf %768, %771 : vector<32x128xf32>
      %c138 = arith.constant 138 : index
      %773 = memref.load %arg4[%c138] : memref<144xf32, #tpu.memory_space<smem>>
      %774 = vector.broadcast %773 : f32 to vector<32x128xf32>
      %775 = arith.mulf %81, %774 : vector<32x128xf32>
      %776 = arith.addf %772, %775 : vector<32x128xf32>
      %c139 = arith.constant 139 : index
      %777 = memref.load %arg4[%c139] : memref<144xf32, #tpu.memory_space<smem>>
      %778 = vector.broadcast %777 : f32 to vector<32x128xf32>
      %779 = arith.mulf %82, %778 : vector<32x128xf32>
      %780 = arith.addf %776, %779 : vector<32x128xf32>
      %c140 = arith.constant 140 : index
      %781 = memref.load %arg4[%c140] : memref<144xf32, #tpu.memory_space<smem>>
      %782 = vector.broadcast %781 : f32 to vector<32x128xf32>
      %783 = arith.mulf %83, %782 : vector<32x128xf32>
      %784 = arith.addf %780, %783 : vector<32x128xf32>
      %c141 = arith.constant 141 : index
      %785 = memref.load %arg4[%c141] : memref<144xf32, #tpu.memory_space<smem>>
      %786 = vector.broadcast %785 : f32 to vector<32x128xf32>
      %787 = arith.mulf %84, %786 : vector<32x128xf32>
      %788 = arith.addf %784, %787 : vector<32x128xf32>
      %c142 = arith.constant 142 : index
      %789 = memref.load %arg4[%c142] : memref<144xf32, #tpu.memory_space<smem>>
      %790 = vector.broadcast %789 : f32 to vector<32x128xf32>
      %791 = arith.mulf %85, %790 : vector<32x128xf32>
      %792 = arith.addf %788, %791 : vector<32x128xf32>
      %c143 = arith.constant 143 : index
      %793 = memref.load %arg4[%c143] : memref<144xf32, #tpu.memory_space<smem>>
      %794 = vector.broadcast %793 : f32 to vector<32x128xf32>
      %795 = arith.mulf %86, %794 : vector<32x128xf32>
      %796 = arith.addf %792, %795 : vector<32x128xf32>
      %c15_137 = arith.constant 15 : index
      %797 = memref.load %arg5[%c15_137] : memref<16xf32, #tpu.memory_space<smem>>
      %798 = vector.broadcast %797 : f32 to vector<32x128xf32>
      %799 = arith.addf %796, %798 : vector<32x128xf32>
      %cst_138 = arith.constant 0.000000e+00 : f32
      %800 = vector.broadcast %cst_138 : f32 to vector<32x128xf32>
      %801 = arith.maximumf %799, %800 : vector<32x128xf32>
      %c32_i32_139 = arith.constant 32 : i32
      %802 = arith.muli %arg8, %c32_i32_139 : i32
      %c15360_i32 = arith.constant 15360 : i32
      %803 = arith.addi %c15360_i32, %802 : i32
      %804 = tpu.assume_multiple %803, 32 : i32
      %805 = arith.index_cast %804 : i32 to index
      %c0_140 = arith.constant 0 : index
      %806 = vector.load %arg7[%805, %c0_140] : memref<16384x128xf32, #tpu.memory_space<vmem>>, vector<32x128xf32>
      tpu.vector_store %arg7[%805, %c0_140], %801 {strides = array<i32>} : memref<16384x128xf32, #tpu.memory_space<vmem>>, vector<32x128xf32>,
    }
    %c32_i32_0 = arith.constant 32 : i32
    %c0 = arith.constant 0 : index
    %c0_1 = arith.constant 0 : index
    %1 = vector.load %arg3[%c0, %c0_1] : memref<8x128xf32, #tpu.memory_space<vmem>>, vector<8x128xf32>
    %c0_2 = arith.constant 0 : index
    %c0_3 = arith.constant 0 : index
    %2 = vector.load %arg2[%c0_2, %c0_3] : memref<8x16384xf32, #tpu.memory_space<vmem>>, vector<8x1024xf32>
    %c0_4 = arith.constant 0 : index
    %c0_5 = arith.constant 0 : index
    %3 = vector.load %arg7[%c0_4, %c0_5] : memref<16384x128xf32, #tpu.memory_space<vmem>>, vector<1024x128xf32>
    %cst = arith.constant dense<0.000000e+00> : vector<8x128xf32>
    %4 = tpu.matmul %2, %3, %cst {dimension_numbers = #tpu.dot_dimension_numbers<[1], [0], [0], [1], [0, 0, 1, 1], [], []>} : vector<8x1024xf32>, vector<1024x128xf32>, vector<8x128xf32> -> vector<8x128xf32>
    %5 = arith.addf %1, %4 : vector<8x128xf32>
    %c0_6 = arith.constant 0 : index
    %c1024 = arith.constant 1024 : index
    %6 = vector.load %arg2[%c0_6, %c1024] : memref<8x16384xf32, #tpu.memory_space<vmem>>, vector<8x1024xf32>
    %c1024_7 = arith.constant 1024 : index
    %c0_8 = arith.constant 0 : index
    %7 = vector.load %arg7[%c1024_7, %c0_8] : memref<16384x128xf32, #tpu.memory_space<vmem>>, vector<1024x128xf32>
    %cst_9 = arith.constant dense<0.000000e+00> : vector<8x128xf32>
    %8 = tpu.matmul %6, %7, %cst_9 {dimension_numbers = #tpu.dot_dimension_numbers<[1], [0], [0], [1], [0, 0, 1, 1], [], []>} : vector<8x1024xf32>, vector<1024x128xf32>, vector<8x128xf32> -> vector<8x128xf32>
    %9 = arith.addf %5, %8 : vector<8x128xf32>
    %c0_10 = arith.constant 0 : index
    %c2048 = arith.constant 2048 : index
    %10 = vector.load %arg2[%c0_10, %c2048] : memref<8x16384xf32, #tpu.memory_space<vmem>>, vector<8x1024xf32>
    %c2048_11 = arith.constant 2048 : index
    %c0_12 = arith.constant 0 : index
    %11 = vector.load %arg7[%c2048_11, %c0_12] : memref<16384x128xf32, #tpu.memory_space<vmem>>, vector<1024x128xf32>
    %cst_13 = arith.constant dense<0.000000e+00> : vector<8x128xf32>
    %12 = tpu.matmul %10, %11, %cst_13 {dimension_numbers = #tpu.dot_dimension_numbers<[1], [0], [0], [1], [0, 0, 1, 1], [], []>} : vector<8x1024xf32>, vector<1024x128xf32>, vector<8x128xf32> -> vector<8x128xf32>
    %13 = arith.addf %9, %12 : vector<8x128xf32>
    %c0_14 = arith.constant 0 : index
    %c3072 = arith.constant 3072 : index
    %14 = vector.load %arg2[%c0_14, %c3072] : memref<8x16384xf32, #tpu.memory_space<vmem>>, vector<8x1024xf32>
    %c3072_15 = arith.constant 3072 : index
    %c0_16 = arith.constant 0 : index
    %15 = vector.load %arg7[%c3072_15, %c0_16] : memref<16384x128xf32, #tpu.memory_space<vmem>>, vector<1024x128xf32>
    %cst_17 = arith.constant dense<0.000000e+00> : vector<8x128xf32>
    %16 = tpu.matmul %14, %15, %cst_17 {dimension_numbers = #tpu.dot_dimension_numbers<[1], [0], [0], [1], [0, 0, 1, 1], [], []>} : vector<8x1024xf32>, vector<1024x128xf32>, vector<8x128xf32> -> vector<8x128xf32>
    %17 = arith.addf %13, %16 : vector<8x128xf32>
    %c0_18 = arith.constant 0 : index
    %c4096 = arith.constant 4096 : index
    %18 = vector.load %arg2[%c0_18, %c4096] : memref<8x16384xf32, #tpu.memory_space<vmem>>, vector<8x1024xf32>
    %c4096_19 = arith.constant 4096 : index
    %c0_20 = arith.constant 0 : index
    %19 = vector.load %arg7[%c4096_19, %c0_20] : memref<16384x128xf32, #tpu.memory_space<vmem>>, vector<1024x128xf32>
    %cst_21 = arith.constant dense<0.000000e+00> : vector<8x128xf32>
    %20 = tpu.matmul %18, %19, %cst_21 {dimension_numbers = #tpu.dot_dimension_numbers<[1], [0], [0], [1], [0, 0, 1, 1], [], []>} : vector<8x1024xf32>, vector<1024x128xf32>, vector<8x128xf32> -> vector<8x128xf32>
    %21 = arith.addf %17, %20 : vector<8x128xf32>
    %c0_22 = arith.constant 0 : index
    %c5120 = arith.constant 5120 : index
    %22 = vector.load %arg2[%c0_22, %c5120] : memref<8x16384xf32, #tpu.memory_space<vmem>>, vector<8x1024xf32>
    %c5120_23 = arith.constant 5120 : index
    %c0_24 = arith.constant 0 : index
    %23 = vector.load %arg7[%c5120_23, %c0_24] : memref<16384x128xf32, #tpu.memory_space<vmem>>, vector<1024x128xf32>
    %cst_25 = arith.constant dense<0.000000e+00> : vector<8x128xf32>
    %24 = tpu.matmul %22, %23, %cst_25 {dimension_numbers = #tpu.dot_dimension_numbers<[1], [0], [0], [1], [0, 0, 1, 1], [], []>} : vector<8x1024xf32>, vector<1024x128xf32>, vector<8x128xf32> -> vector<8x128xf32>
    %25 = arith.addf %21, %24 : vector<8x128xf32>
    %c0_26 = arith.constant 0 : index
    %c6144 = arith.constant 6144 : index
    %26 = vector.load %arg2[%c0_26, %c6144] : memref<8x16384xf32, #tpu.memory_space<vmem>>, vector<8x1024xf32>
    %c6144_27 = arith.constant 6144 : index
    %c0_28 = arith.constant 0 : index
    %27 = vector.load %arg7[%c6144_27, %c0_28] : memref<16384x128xf32, #tpu.memory_space<vmem>>, vector<1024x128xf32>
    %cst_29 = arith.constant dense<0.000000e+00> : vector<8x128xf32>
    %28 = tpu.matmul %26, %27, %cst_29 {dimension_numbers = #tpu.dot_dimension_numbers<[1], [0], [0], [1], [0, 0, 1, 1], [], []>} : vector<8x1024xf32>, vector<1024x128xf32>, vector<8x128xf32> -> vector<8x128xf32>
    %29 = arith.addf %25, %28 : vector<8x128xf32>
    %c0_30 = arith.constant 0 : index
    %c7168 = arith.constant 7168 : index
    %30 = vector.load %arg2[%c0_30, %c7168] : memref<8x16384xf32, #tpu.memory_space<vmem>>, vector<8x1024xf32>
    %c7168_31 = arith.constant 7168 : index
    %c0_32 = arith.constant 0 : index
    %31 = vector.load %arg7[%c7168_31, %c0_32] : memref<16384x128xf32, #tpu.memory_space<vmem>>, vector<1024x128xf32>
    %cst_33 = arith.constant dense<0.000000e+00> : vector<8x128xf32>
    %32 = tpu.matmul %30, %31, %cst_33 {dimension_numbers = #tpu.dot_dimension_numbers<[1], [0], [0], [1], [0, 0, 1, 1], [], []>} : vector<8x1024xf32>, vector<1024x128xf32>, vector<8x128xf32> -> vector<8x128xf32>
    %33 = arith.addf %29, %32 : vector<8x128xf32>
    %c0_34 = arith.constant 0 : index
    %c8192 = arith.constant 8192 : index
    %34 = vector.load %arg2[%c0_34, %c8192] : memref<8x16384xf32, #tpu.memory_space<vmem>>, vector<8x1024xf32>
    %c8192_35 = arith.constant 8192 : index
    %c0_36 = arith.constant 0 : index
    %35 = vector.load %arg7[%c8192_35, %c0_36] : memref<16384x128xf32, #tpu.memory_space<vmem>>, vector<1024x128xf32>
    %cst_37 = arith.constant dense<0.000000e+00> : vector<8x128xf32>
    %36 = tpu.matmul %34, %35, %cst_37 {dimension_numbers = #tpu.dot_dimension_numbers<[1], [0], [0], [1], [0, 0, 1, 1], [], []>} : vector<8x1024xf32>, vector<1024x128xf32>, vector<8x128xf32> -> vector<8x128xf32>
    %37 = arith.addf %33, %36 : vector<8x128xf32>
    %c0_38 = arith.constant 0 : index
    %c9216 = arith.constant 9216 : index
    %38 = vector.load %arg2[%c0_38, %c9216] : memref<8x16384xf32, #tpu.memory_space<vmem>>, vector<8x1024xf32>
    %c9216_39 = arith.constant 9216 : index
    %c0_40 = arith.constant 0 : index
    %39 = vector.load %arg7[%c9216_39, %c0_40] : memref<16384x128xf32, #tpu.memory_space<vmem>>, vector<1024x128xf32>
    %cst_41 = arith.constant dense<0.000000e+00> : vector<8x128xf32>
    %40 = tpu.matmul %38, %39, %cst_41 {dimension_numbers = #tpu.dot_dimension_numbers<[1], [0], [0], [1], [0, 0, 1, 1], [], []>} : vector<8x1024xf32>, vector<1024x128xf32>, vector<8x128xf32> -> vector<8x128xf32>
    %41 = arith.addf %37, %40 : vector<8x128xf32>
    %c0_42 = arith.constant 0 : index
    %c10240 = arith.constant 10240 : index
    %42 = vector.load %arg2[%c0_42, %c10240] : memref<8x16384xf32, #tpu.memory_space<vmem>>, vector<8x1024xf32>
    %c10240_43 = arith.constant 10240 : index
    %c0_44 = arith.constant 0 : index
    %43 = vector.load %arg7[%c10240_43, %c0_44] : memref<16384x128xf32, #tpu.memory_space<vmem>>, vector<1024x128xf32>
    %cst_45 = arith.constant dense<0.000000e+00> : vector<8x128xf32>
    %44 = tpu.matmul %42, %43, %cst_45 {dimension_numbers = #tpu.dot_dimension_numbers<[1], [0], [0], [1], [0, 0, 1, 1], [], []>} : vector<8x1024xf32>, vector<1024x128xf32>, vector<8x128xf32> -> vector<8x128xf32>
    %45 = arith.addf %41, %44 : vector<8x128xf32>
    %c0_46 = arith.constant 0 : index
    %c11264 = arith.constant 11264 : index
    %46 = vector.load %arg2[%c0_46, %c11264] : memref<8x16384xf32, #tpu.memory_space<vmem>>, vector<8x1024xf32>
    %c11264_47 = arith.constant 11264 : index
    %c0_48 = arith.constant 0 : index
    %47 = vector.load %arg7[%c11264_47, %c0_48] : memref<16384x128xf32, #tpu.memory_space<vmem>>, vector<1024x128xf32>
    %cst_49 = arith.constant dense<0.000000e+00> : vector<8x128xf32>
    %48 = tpu.matmul %46, %47, %cst_49 {dimension_numbers = #tpu.dot_dimension_numbers<[1], [0], [0], [1], [0, 0, 1, 1], [], []>} : vector<8x1024xf32>, vector<1024x128xf32>, vector<8x128xf32> -> vector<8x128xf32>
    %49 = arith.addf %45, %48 : vector<8x128xf32>
    %c0_50 = arith.constant 0 : index
    %c12288 = arith.constant 12288 : index
    %50 = vector.load %arg2[%c0_50, %c12288] : memref<8x16384xf32, #tpu.memory_space<vmem>>, vector<8x1024xf32>
    %c12288_51 = arith.constant 12288 : index
    %c0_52 = arith.constant 0 : index
    %51 = vector.load %arg7[%c12288_51, %c0_52] : memref<16384x128xf32, #tpu.memory_space<vmem>>, vector<1024x128xf32>
    %cst_53 = arith.constant dense<0.000000e+00> : vector<8x128xf32>
    %52 = tpu.matmul %50, %51, %cst_53 {dimension_numbers = #tpu.dot_dimension_numbers<[1], [0], [0], [1], [0, 0, 1, 1], [], []>} : vector<8x1024xf32>, vector<1024x128xf32>, vector<8x128xf32> -> vector<8x128xf32>
    %53 = arith.addf %49, %52 : vector<8x128xf32>
    %c0_54 = arith.constant 0 : index
    %c13312 = arith.constant 13312 : index
    %54 = vector.load %arg2[%c0_54, %c13312] : memref<8x16384xf32, #tpu.memory_space<vmem>>, vector<8x1024xf32>
    %c13312_55 = arith.constant 13312 : index
    %c0_56 = arith.constant 0 : index
    %55 = vector.load %arg7[%c13312_55, %c0_56] : memref<16384x128xf32, #tpu.memory_space<vmem>>, vector<1024x128xf32>
    %cst_57 = arith.constant dense<0.000000e+00> : vector<8x128xf32>
    %56 = tpu.matmul %54, %55, %cst_57 {dimension_numbers = #tpu.dot_dimension_numbers<[1], [0], [0], [1], [0, 0, 1, 1], [], []>} : vector<8x1024xf32>, vector<1024x128xf32>, vector<8x128xf32> -> vector<8x128xf32>
    %57 = arith.addf %53, %56 : vector<8x128xf32>
    %c0_58 = arith.constant 0 : index
    %c14336 = arith.constant 14336 : index
    %58 = vector.load %arg2[%c0_58, %c14336] : memref<8x16384xf32, #tpu.memory_space<vmem>>, vector<8x1024xf32>
    %c14336_59 = arith.constant 14336 : index
    %c0_60 = arith.constant 0 : index
    %59 = vector.load %arg7[%c14336_59, %c0_60] : memref<16384x128xf32, #tpu.memory_space<vmem>>, vector<1024x128xf32>
    %cst_61 = arith.constant dense<0.000000e+00> : vector<8x128xf32>
    %60 = tpu.matmul %58, %59, %cst_61 {dimension_numbers = #tpu.dot_dimension_numbers<[1], [0], [0], [1], [0, 0, 1, 1], [], []>} : vector<8x1024xf32>, vector<1024x128xf32>, vector<8x128xf32> -> vector<8x128xf32>
    %61 = arith.addf %57, %60 : vector<8x128xf32>
    %c0_62 = arith.constant 0 : index
    %c15360 = arith.constant 15360 : index
    %62 = vector.load %arg2[%c0_62, %c15360] : memref<8x16384xf32, #tpu.memory_space<vmem>>, vector<8x1024xf32>
    %c15360_63 = arith.constant 15360 : index
    %c0_64 = arith.constant 0 : index
    %63 = vector.load %arg7[%c15360_63, %c0_64] : memref<16384x128xf32, #tpu.memory_space<vmem>>, vector<1024x128xf32>
    %cst_65 = arith.constant dense<0.000000e+00> : vector<8x128xf32>
    %64 = tpu.matmul %62, %63, %cst_65 {dimension_numbers = #tpu.dot_dimension_numbers<[1], [0], [0], [1], [0, 0, 1, 1], [], []>} : vector<8x1024xf32>, vector<1024x128xf32>, vector<8x128xf32> -> vector<8x128xf32>
    %65 = arith.addf %61, %64 : vector<8x128xf32>
    %c0_66 = arith.constant 0 : index
    %c0_67 = arith.constant 0 : index
    %66 = vector.load %arg6[%c0_66, %c0_67] : memref<8x128xf32, #tpu.memory_space<vmem>>, vector<8x128xf32>
    tpu.vector_store %arg6[%c0_66, %c0_67], %65 {strides = array<i32>} : memref<8x128xf32, #tpu.memory_space<vmem>>, vector<8x128xf32>,
    return
  }
  func.func @transform_0(%arg0: i32) -> (i32, i32, i32) {
    %c0_i32 = arith.constant 0 : i32
    %c0_i32_0 = arith.constant 0 : i32
    %c0_i32_1 = arith.constant 0 : i32
    return %c0_i32, %c0_i32_0, %arg0 : i32, i32, i32
  }
  func.func @transform_1(%arg0: i32) -> (i32, i32) {
    %c0_i32 = arith.constant 0 : i32
    %c0_i32_0 = arith.constant 0 : i32
    %c0_i32_1 = arith.constant 0 : i32
    return %c0_i32, %c0_i32_0 : i32, i32
  }
  func.func @transform_2(%arg0: i32) -> (i32, i32) {
    %c0_i32 = arith.constant 0 : i32
    %c0_i32_0 = arith.constant 0 : i32
    %c0_i32_1 = arith.constant 0 : i32
    return %c0_i32, %c0_i32_0 : i32, i32
  }
  func.func @transform_3(%arg0: i32) -> i32 {
    %c0_i32 = arith.constant 0 : i32
    %c0_i32_0 = arith.constant 0 : i32
    return %c0_i32 : i32
  }
  func.func @transform_4(%arg0: i32) -> i32 {
    %c0_i32 = arith.constant 0 : i32
    %c0_i32_0 = arith.constant 0 : i32
    return %c0_i32 : i32
  }
  func.func @transform_5(%arg0: i32) -> (i32, i32) {
    %c0_i32 = arith.constant 0 : i32
    %c0_i32_0 = arith.constant 0 : i32
    return %c0_i32, %arg0 : i32, i32
  }
}

</mosaic_0001>

<llo_original>
// kernel: simple_nn_forward.1
$region0: #{simple_nn_forward.1}
  #allocation0 [shape = 'u32[]', space=smem, size = 0x4, offset = 0x4, fixed_abs, tag = 'smem constant byte address 0x4 - core index']
  #allocation1 [shape = 'u32[144,128]{1,0:T(1,128)}', space=vmem, size = 0x12000, scoped, tag = 'internal scratch']
  #allocation2 [shape = 'f32[16384,128]{1,0:T(8,128)}', space=vmem, size = 0x800000, scoped, tag = 'scratch operand']
  %s0 = inlined_call_operand.vmem [shape: f32[34,34,128], index: 0, kind: input, shape index: {}]
  %s1 = inlined_call_operand.vmem [shape: f32[8,16384], index: 1, kind: input, shape index: {}]
  %s2 = inlined_call_operand.vmem [shape: f32[8,128], index: 2, kind: input, shape index: {}]
  %s3 = inlined_call_operand.vmem [shape: f32[144], index: 3, kind: input, shape index: {}]
  %s4 = inlined_call_operand.vmem [shape: f32[16], index: 4, kind: input, shape index: {}]
  %s5 = inlined_call_operand.vmem [shape: f32[8,128], index: 5, kind: output, shape index: {}]
  %s6 = sld [smem:[#allocation0]]
  $region45: #{simple_nn_forward.1} parent=0
    _
  %s8 = ssub.s32 1, %s6
  %s9 = scalar_select 0, %s8, %s6
  $region1: #{simple_nn_forward.1} parent=0
    #allocation3 [shape = 'u8[1024]{0}', space=smem, size = 0x400, scoped, tag = 'input window, operand 3, single buffered']
    #allocation4 [shape = 's32[1]{0}', space=sflag, size = 0x4, scoped, tag = 'scoped memory for simple_nn_forward.1']
    #allocation5 [shape = 'u8[512]{0}', space=smem, size = 0x200, scoped, tag = 'input window, operand 4, single buffered']
    #allocation6 [shape = 's32[1]{0}', space=sflag, size = 0x4, scoped, tag = 'scoped memory for simple_nn_forward.1']
    %10 = vsyncpa [#allocation4], 0
    %11 = vsyncpa [#allocation6], 0
    // Predicated region
    $region2: #{simple_nn_forward.1} parent=1 // pred_check
      _
    $region3: #{simple_nn_forward.1} parent=1 // pred_check_branch
      %13 = sbr.rel (0) target = $region5
    $region4: #{simple_nn_forward.1} parent=1 // pred_region
      _
    $region5: #{simple_nn_forward.1} parent=1 // pred_fallthru
      _
    // Predicated region
    $region6: #{simple_nn_forward.1} parent=1 // pred_check
      _
    $region7: #{simple_nn_forward.1} parent=1 // pred_check_branch
      %15 = sbr.rel (0) target = $region9
    $region8: #{simple_nn_forward.1} parent=1 // pred_region
      _
    $region9: #{simple_nn_forward.1} parent=1 // pred_fallthru
      _
    // Predicated region
    $region10: #{simple_nn_forward.1} parent=1 // pred_check
      _
    $region11: #{simple_nn_forward.1} parent=1 // pred_check_branch
      %17 = sbr.rel (0) target = $region13
    $region12: #{simple_nn_forward.1} parent=1 // pred_region
      _
    $region13: #{simple_nn_forward.1} parent=1 // pred_fallthru
      _
    // Predicated region
    $region14: #{simple_nn_forward.1} parent=1 // pred_check
      _
    $region15: #{simple_nn_forward.1} parent=1 // pred_check_branch
      %19 = sbr.rel (0) target = $region17
    $region16: #{simple_nn_forward.1} parent=1 // pred_region
      %s21 = ssub.s32 32, 32
      %22 = vsyncadd [#allocation4], %s21
      %s24 = sshll.u32 %s3, 4
      %s25 = int_to_ptr.vmem [resolvable:$true] %s24
      %27 = dma.vmem_to_smem %s25, 32, [#allocation3], [#allocation4]
    $region17: #{simple_nn_forward.1} parent=1 // pred_fallthru
      _
    // Predicated region
    $region18: #{simple_nn_forward.1} parent=1 // pred_check
      _
    $region19: #{simple_nn_forward.1} parent=1 // pred_check_branch
      %29 = sbr.rel (0) target = $region21
    $region20: #{simple_nn_forward.1} parent=1 // pred_region
      %s31 = ssub.s32 16, 16
      %32 = vsyncadd [#allocation6], %s31
      %s34 = sshll.u32 %s4, 4
      %s35 = int_to_ptr.vmem [resolvable:$true] %s34
      %37 = dma.vmem_to_smem %s35, 16, [#allocation5], [#allocation6]
    $region21: #{simple_nn_forward.1} parent=1 // pred_fallthru
      _
    // Predicated region
    $region22: #{simple_nn_forward.1} parent=1 // pred_check
      _
    $region23: #{simple_nn_forward.1} parent=1 // pred_check_branch
      %39 = sbr.rel (0) target = $region25
    $region24: #{simple_nn_forward.1} parent=1 // pred_region
      %40 = dma.done [#allocation4], 32
    $region25: #{simple_nn_forward.1} parent=1 // pred_fallthru
      _
    // Predicated region
    $region26: #{simple_nn_forward.1} parent=1 // pred_check
      _
    $region27: #{simple_nn_forward.1} parent=1 // pred_check_branch
      %42 = sbr.rel (0) target = $region29
    $region28: #{simple_nn_forward.1} parent=1 // pred_region
      %43 = dma.done [#allocation6], 16
    $region29: #{simple_nn_forward.1} parent=1 // pred_fallthru
      _
    %44 = sfence
    loop: start=0, step=1, limit=32
    $region30: #{simple_nn_forward.1} parent=1 // loop_pre_header
      _
    $region31: #{simple_nn_forward.1} parent=1 // loop_header
      %s46 = sphi 0, %s50
      %p47 = scmp.ge.s32.totalorder %s46, 32
    $region32: #{simple_nn_forward.1} parent=1 // loop_header_branch
      %49 = sbr.rel (%p47) target = $region36
    $region33: #{simple_nn_forward.1} parent=1 // loop_body
      %s51 = smul.u32 %s46, 40
      %s52 = scalar_lea.vmem %s0, %s51
      %v53 = vld [vmem:[%s52] sm:$0xff]
      %v54 = vld [vmem:[%s52 + $0x8] sm:$0xff]
      %v55 = vld [vmem:[%s52 + $0x10] sm:$0xff]
      %v56 = vld [vmem:[%s52 + $0x18] sm:$0xff]
      %v57 = vld [vmem:[%s52 + $0x20] sm:$0x3]
      %s58 = sadd.s32 %s46, 1
      %s59 = smul.u32 %s58, 40
      %s60 = scalar_lea.vmem %s0, %s59
      %v61 = vld [vmem:[%s60] sm:$0xff]
      %v62 = vld [vmem:[%s60 + $0x8] sm:$0xff]
      %v63 = vld [vmem:[%s60 + $0x10] sm:$0xff]
      %v64 = vld [vmem:[%s60 + $0x18] sm:$0xff]
      %v65 = vld [vmem:[%s60 + $0x20] sm:$0x3]
      %s66 = sadd.s32 %s46, 2
      %s67 = smul.u32 %s66, 40
      %s68 = scalar_lea.vmem %s0, %s67
      %v69 = vld [vmem:[%s68] sm:$0xff]
      %v70 = vld [vmem:[%s68 + $0x8] sm:$0xff]
      %v71 = vld [vmem:[%s68 + $0x10] sm:$0xff]
      %v72 = vld [vmem:[%s68 + $0x18] sm:$0xff]
      %v73 = vld [vmem:[%s68 + $0x20] sm:$0x3]
      %s74 = sld [smem:[#allocation3]]
      %v75 = vstv %s74
      %v76 = vmul.f32 %v53, %v75
      %v77 = vmul.f32 %v54, %v75
      %v78 = vmul.f32 %v55, %v75
      %v79 = vmul.f32 %v56, %v75
      %s80 = sld [smem:[#allocation3 + $0x1]]
      %v81 = vstv %s80
      %v82 = vmul.f32 %v53, %v81
      %v83 = vmul.f32 %v54, %v81
      %v84 = vmul.f32 %v55, %v81
      %v85 = vmul.f32 %v56, %v81
      %v86 = vmul.f32 %v57, %v81
      %vm92 = vcmask 1046528
      %v93 = vrot.slane %v82, 1
      %v94 = vrot.slane %v83, 1
      %v95 = vsel %vm92, %v93, %v94
      %v96 = vrot.slane %v84, 1
      %v97 = vsel %vm92, %v94, %v96
      %v98 = vrot.slane %v85, 1
      %v99 = vsel %vm92, %v96, %v98
      %v100 = vrot.slane %v86, 1
      %v101 = vsel %vm92, %v98, %v100
      %v106 = vadd.f32 %v76, %v95
      %v107 = vadd.f32 %v77, %v97
      %v108 = vadd.f32 %v78, %v99
      %v109 = vadd.f32 %v79, %v101
      %s110 = sld [smem:[#allocation3 + $0x2]]
      %v111 = vstv %s110
      %v112 = vmul.f32 %v53, %v111
      %v113 = vmul.f32 %v54, %v111
      %v114 = vmul.f32 %v55, %v111
      %v115 = vmul.f32 %v56, %v111
      %v116 = vmul.f32 %v57, %v111
      %vm122 = vcmask 1045504
      %v123 = vrot.slane %v112, 2
      %v124 = vrot.slane %v113, 2
      %v125 = vsel %vm122, %v123, %v124
      %v126 = vrot.slane %v114, 2
      %v127 = vsel %vm122, %v124, %v126
      %v128 = vrot.slane %v115, 2
      %v129 = vsel %vm122, %v126, %v128
      %v130 = vrot.slane %v116, 2
      %v131 = vsel %vm122, %v128, %v130
      %v136 = vadd.f32 %v106, %v125
      %v137 = vadd.f32 %v107, %v127
      %v138 = vadd.f32 %v108, %v129
      %v139 = vadd.f32 %v109, %v131
      %s140 = sld [smem:[#allocation3 + $0x3]]
      %v141 = vstv %s140
      %v142 = vmul.f32 %v61, %v141
      %v143 = vmul.f32 %v62, %v141
      %v144 = vmul.f32 %v63, %v141
      %v145 = vmul.f32 %v64, %v141
      %v146 = vadd.f32 %v136, %v142
      %v147 = vadd.f32 %v137, %v143
      %v148 = vadd.f32 %v138, %v144
      %v149 = vadd.f32 %v139, %v145
      %s150 = sld [smem:[#allocation3 + $0x4]]
      %v151 = vstv %s150
      %v152 = vmul.f32 %v61, %v151
      %v153 = vmul.f32 %v62, %v151
      %v154 = vmul.f32 %v63, %v151
      %v155 = vmul.f32 %v64, %v151
      %v156 = vmul.f32 %v65, %v151
      %v162 = vrot.slane %v152, 1
      %v163 = vrot.slane %v153, 1
      %v164 = vsel %vm92, %v162, %v163
      %v165 = vrot.slane %v154, 1
      %v166 = vsel %vm92, %v163, %v165
      %v167 = vrot.slane %v155, 1
      %v168 = vsel %vm92, %v165, %v167
      %v169 = vrot.slane %v156, 1
      %v170 = vsel %vm92, %v167, %v169
      %v175 = vadd.f32 %v146, %v164
      %v176 = vadd.f32 %v147, %v166
      %v177 = vadd.f32 %v148, %v168
      %v178 = vadd.f32 %v149, %v170
      %s179 = sld [smem:[#allocation3 + $0x5]]
      %v180 = vstv %s179
      %v181 = vmul.f32 %v61, %v180
      %v182 = vmul.f32 %v62, %v180
      %v183 = vmul.f32 %v63, %v180
      %v184 = vmul.f32 %v64, %v180
      %v185 = vmul.f32 %v65, %v180
      %v191 = vrot.slane %v181, 2
      %v192 = vrot.slane %v182, 2
      %v193 = vsel %vm122, %v191, %v192
      %v194 = vrot.slane %v183, 2
      %v195 = vsel %vm122, %v192, %v194
      %v196 = vrot.slane %v184, 2
      %v197 = vsel %vm122, %v194, %v196
      %v198 = vrot.slane %v185, 2
      %v199 = vsel %vm122, %v196, %v198
      %v204 = vadd.f32 %v175, %v193
      %v205 = vadd.f32 %v176, %v195
      %v206 = vadd.f32 %v177, %v197
      %v207 = vadd.f32 %v178, %v199
      %s208 = sld [smem:[#allocation3 + $0x6]]
      %v209 = vstv %s208
      %v210 = vmul.f32 %v69, %v209
      %v211 = vmul.f32 %v70, %v209
      %v212 = vmul.f32 %v71, %v209
      %v213 = vmul.f32 %v72, %v209
      %v214 = vadd.f32 %v204, %v210
      %v215 = vadd.f32 %v205, %v211
      %v216 = vadd.f32 %v206, %v212
      %v217 = vadd.f32 %v207, %v213
      %s218 = sld [smem:[#allocation3 + $0x7]]
      %v219 = vstv %s218
      %v220 = vmul.f32 %v69, %v219
      %v221 = vmul.f32 %v70, %v219
      %v222 = vmul.f32 %v71, %v219
      %v223 = vmul.f32 %v72, %v219
      %v224 = vmul.f32 %v73, %v219
      %v230 = vrot.slane %v220, 1
      %v231 = vrot.slane %v221, 1
      %v232 = vsel %vm92, %v230, %v231
      %v233 = vrot.slane %v222, 1
      %v234 = vsel %vm92, %v231, %v233
      %v235 = vrot.slane %v223, 1
      %v236 = vsel %vm92, %v233, %v235
      %v237 = vrot.slane %v224, 1
      %v238 = vsel %vm92, %v235, %v237
      %v243 = vadd.f32 %v214, %v232
      %v244 = vadd.f32 %v215, %v234
      %v245 = vadd.f32 %v216, %v236
      %v246 = vadd.f32 %v217, %v238
      %s247 = sld [smem:[#allocation3 + $0x8]]
      %v248 = vstv %s247
      %v249 = vmul.f32 %v69, %v248
      %v250 = vmul.f32 %v70, %v248
      %v251 = vmul.f32 %v71, %v248
      %v252 = vmul.f32 %v72, %v248
      %v253 = vmul.f32 %v73, %v248
      %v259 = vrot.slane %v249, 2
      %v260 = vrot.slane %v250, 2
      %v261 = vsel %vm122, %v259, %v260
      %v262 = vrot.slane %v251, 2
      %v263 = vsel %vm122, %v260, %v262
      %v264 = vrot.slane %v252, 2
      %v265 = vsel %vm122, %v262, %v264
      %v266 = vrot.slane %v253, 2
      %v267 = vsel %vm122, %v264, %v266
      %v272 = vadd.f32 %v243, %v261
      %v273 = vadd.f32 %v244, %v263
      %v274 = vadd.f32 %v245, %v265
      %v275 = vadd.f32 %v246, %v267
      %s276 = sld [smem:[#allocation5]]
      %v277 = vstv %s276
      %v278 = vadd.f32 %v272, %v277
      %v279 = vadd.f32 %v273, %v277
      %v280 = vadd.f32 %v274, %v277
      %v281 = vadd.f32 %v275, %v277
      %v282 = vmax.f32 %v278, 0.0
      %v283 = vmax.f32 %v279, 0.0
      %v284 = vmax.f32 %v280, 0.0
      %v285 = vmax.f32 %v281, 0.0
      %s286 = smul.u32 %s46, 32
      %s287 = scalar_lea.vmem [#allocation2], %s286
      %288 = vst [vmem:[%s287] sm:$0xff] %v282
      %289 = vst [vmem:[%s287 + $0x8] sm:$0xff] %v283
      %290 = vst [vmem:[%s287 + $0x10] sm:$0xff] %v284
      %291 = vst [vmem:[%s287 + $0x18] sm:$0xff] %v285
      %s292 = sld [smem:[#allocation3 + $0x9]]
      %v293 = vstv %s292
      %v294 = vmul.f32 %v53, %v293
      %v295 = vmul.f32 %v54, %v293
      %v296 = vmul.f32 %v55, %v293
      %v297 = vmul.f32 %v56, %v293
      %s298 = sld [smem:[#allocation3 + $0xa]]
      %v299 = vstv %s298
      %v300 = vmul.f32 %v53, %v299
      %v301 = vmul.f32 %v54, %v299
      %v302 = vmul.f32 %v55, %v299
      %v303 = vmul.f32 %v56, %v299
      %v304 = vmul.f32 %v57, %v299
      %v310 = vrot.slane %v300, 1
      %v311 = vrot.slane %v301, 1
      %v312 = vsel %vm92, %v310, %v311
      %v313 = vrot.slane %v302, 1
      %v314 = vsel %vm92, %v311, %v313
      %v315 = vrot.slane %v303, 1
      %v316 = vsel %vm92, %v313, %v315
      %v317 = vrot.slane %v304, 1
      %v318 = vsel %vm92, %v315, %v317
      %v323 = vadd.f32 %v294, %v312
      %v324 = vadd.f32 %v295, %v314
      %v325 = vadd.f32 %v296, %v316
      %v326 = vadd.f32 %v297, %v318
      %s327 = sld [smem:[#allocation3 + $0xb]]
      %v328 = vstv %s327
      %v329 = vmul.f32 %v53, %v328
      %v330 = vmul.f32 %v54, %v328
      %v331 = vmul.f32 %v55, %v328
      %v332 = vmul.f32 %v56, %v328
      %v333 = vmul.f32 %v57, %v328
      %v339 = vrot.slane %v329, 2
      %v340 = vrot.slane %v330, 2
      %v341 = vsel %vm122, %v339, %v340
      %v342 = vrot.slane %v331, 2
      %v343 = vsel %vm122, %v340, %v342
      %v344 = vrot.slane %v332, 2
      %v345 = vsel %vm122, %v342, %v344
      %v346 = vrot.slane %v333, 2
      %v347 = vsel %vm122, %v344, %v346
      %v352 = vadd.f32 %v323, %v341
      %v353 = vadd.f32 %v324, %v343
      %v354 = vadd.f32 %v325, %v345
      %v355 = vadd.f32 %v326, %v347
      %s356 = sld [smem:[#allocation3 + $0xc]]
      %v357 = vstv %s356
      %v358 = vmul.f32 %v61, %v357
      %v359 = vmul.f32 %v62, %v357
      %v360 = vmul.f32 %v63, %v357
      %v361 = vmul.f32 %v64, %v357
      %v362 = vadd.f32 %v352, %v358
      %v363 = vadd.f32 %v353, %v359
      %v364 = vadd.f32 %v354, %v360
      %v365 = vadd.f32 %v355, %v361
      %s366 = sld [smem:[#allocation3 + $0xd]]
      %v367 = vstv %s366
      %v368 = vmul.f32 %v61, %v367
      %v369 = vmul.f32 %v62, %v367
      %v370 = vmul.f32 %v63, %v367
      %v371 = vmul.f32 %v64, %v367
      %v372 = vmul.f32 %v65, %v367
      %v378 = vrot.slane %v368, 1
      %v379 = vrot.slane %v369, 1
      %v380 = vsel %vm92, %v378, %v379
      %v381 = vrot.slane %v370, 1
      %v382 = vsel %vm92, %v379, %v381
      %v383 = vrot.slane %v371, 1
      %v384 = vsel %vm92, %v381, %v383
      %v385 = vrot.slane %v372, 1
      %v386 = vsel %vm92, %v383, %v385
      %v391 = vadd.f32 %v362, %v380
      %v392 = vadd.f32 %v363, %v382
      %v393 = vadd.f32 %v364, %v384
      %v394 = vadd.f32 %v365, %v386
      %s395 = sld [smem:[#allocation3 + $0xe]]
      %v396 = vstv %s395
      %v397 = vmul.f32 %v61, %v396
      %v398 = vmul.f32 %v62, %v396
      %v399 = vmul.f32 %v63, %v396
      %v400 = vmul.f32 %v64, %v396
      %v401 = vmul.f32 %v65, %v396
      %v407 = vrot.slane %v397, 2
      %v408 = vrot.slane %v398, 2
      %v409 = vsel %vm122, %v407, %v408
      %v410 = vrot.slane %v399, 2
      %v411 = vsel %vm122, %v408, %v410
      %v412 = vrot.slane %v400, 2
      %v413 = vsel %vm122, %v410, %v412
      %v414 = vrot.slane %v401, 2
      %v415 = vsel %vm122, %v412, %v414
      %v420 = vadd.f32 %v391, %v409
      %v421 = vadd.f32 %v392, %v411
      %v422 = vadd.f32 %v393, %v413
      %v423 = vadd.f32 %v394, %v415
      %s424 = sld [smem:[#allocation3 + $0xf]]
      %v425 = vstv %s424
      %v426 = vmul.f32 %v69, %v425
      %v427 = vmul.f32 %v70, %v425
      %v428 = vmul.f32 %v71, %v425
      %v429 = vmul.f32 %v72, %v425
      %v430 = vadd.f32 %v420, %v426
      %v431 = vadd.f32 %v421, %v427
      %v432 = vadd.f32 %v422, %v428
      %v433 = vadd.f32 %v423, %v429
      %s434 = sld [smem:[#allocation3 + $0x10]]
      %v435 = vstv %s434
      %v436 = vmul.f32 %v69, %v435
      %v437 = vmul.f32 %v70, %v435
      %v438 = vmul.f32 %v71, %v435
      %v439 = vmul.f32 %v72, %v435
      %v440 = vmul.f32 %v73, %v435
      %v446 = vrot.slane %v436, 1
      %v447 = vrot.slane %v437, 1
      %v448 = vsel %vm92, %v446, %v447
      %v449 = vrot.slane %v438, 1
      %v450 = vsel %vm92, %v447, %v449
      %v451 = vrot.slane %v439, 1
      %v452 = vsel %vm92, %v449, %v451
      %v453 = vrot.slane %v440, 1
      %v454 = vsel %vm92, %v451, %v453
      %v459 = vadd.f32 %v430, %v448
      %v460 = vadd.f32 %v431, %v450
      %v461 = vadd.f32 %v432, %v452
      %v462 = vadd.f32 %v433, %v454
      %s463 = sld [smem:[#allocation3 + $0x11]]
      %v464 = vstv %s463
      %v465 = vmul.f32 %v69, %v464
      %v466 = vmul.f32 %v70, %v464
      %v467 = vmul.f32 %v71, %v464
      %v468 = vmul.f32 %v72, %v464
      %v469 = vmul.f32 %v73, %v464
      %v475 = vrot.slane %v465, 2
      %v476 = vrot.slane %v466, 2
      %v477 = vsel %vm122, %v475, %v476
      %v478 = vrot.slane %v467, 2
      %v479 = vsel %vm122, %v476, %v478
      %v480 = vrot.slane %v468, 2
      %v481 = vsel %vm122, %v478, %v480
      %v482 = vrot.slane %v469, 2
      %v483 = vsel %vm122, %v480, %v482
      %v488 = vadd.f32 %v459, %v477
      %v489 = vadd.f32 %v460, %v479
      %v490 = vadd.f32 %v461, %v481
      %v491 = vadd.f32 %v462, %v483
      %s492 = sld [smem:[#allocation5 + $0x1]]
      %v493 = vstv %s492
      %v494 = vadd.f32 %v488, %v493
      %v495 = vadd.f32 %v489, %v493
      %v496 = vadd.f32 %v490, %v493
      %v497 = vadd.f32 %v491, %v493
      %v498 = vmax.f32 %v494, 0.0
      %v499 = vmax.f32 %v495, 0.0
      %v500 = vmax.f32 %v496, 0.0
      %v501 = vmax.f32 %v497, 0.0
      %s502 = sadd.s32 %s286, 1024
      %s503 = scalar_lea.vmem [#allocation2], %s502
      %504 = vst [vmem:[%s503] sm:$0xff] %v498
      %505 = vst [vmem:[%s503 + $0x8] sm:$0xff] %v499
      %506 = vst [vmem:[%s503 + $0x10] sm:$0xff] %v500
      %507 = vst [vmem:[%s503 + $0x18] sm:$0xff] %v501
      %s508 = sld [smem:[#allocation3 + $0x12]]
      %v509 = vstv %s508
      %v510 = vmul.f32 %v53, %v509
      %v511 = vmul.f32 %v54, %v509
      %v512 = vmul.f32 %v55, %v509
      %v513 = vmul.f32 %v56, %v509
      %s514 = sld [smem:[#allocation3 + $0x13]]
      %v515 = vstv %s514
      %v516 = vmul.f32 %v53, %v515
      %v517 = vmul.f32 %v54, %v515
      %v518 = vmul.f32 %v55, %v515
      %v519 = vmul.f32 %v56, %v515
      %v520 = vmul.f32 %v57, %v515
      %v526 = vrot.slane %v516, 1
      %v527 = vrot.slane %v517, 1
      %v528 = vsel %vm92, %v526, %v527
      %v529 = vrot.slane %v518, 1
      %v530 = vsel %vm92, %v527, %v529
      %v531 = vrot.slane %v519, 1
      %v532 = vsel %vm92, %v529, %v531
      %v533 = vrot.slane %v520, 1
      %v534 = vsel %vm92, %v531, %v533
      %v539 = vadd.f32 %v510, %v528
      %v540 = vadd.f32 %v511, %v530
      %v541 = vadd.f32 %v512, %v532
      %v542 = vadd.f32 %v513, %v534
      %s543 = sld [smem:[#allocation3 + $0x14]]
      %v544 = vstv %s543
      %v545 = vmul.f32 %v53, %v544
      %v546 = vmul.f32 %v54, %v544
      %v547 = vmul.f32 %v55, %v544
      %v548 = vmul.f32 %v56, %v544
      %v549 = vmul.f32 %v57, %v544
      %v555 = vrot.slane %v545, 2
      %v556 = vrot.slane %v546, 2
      %v557 = vsel %vm122, %v555, %v556
      %v558 = vrot.slane %v547, 2
      %v559 = vsel %vm122, %v556, %v558
      %v560 = vrot.slane %v548, 2
      %v561 = vsel %vm122, %v558, %v560
      %v562 = vrot.slane %v549, 2
      %v563 = vsel %vm122, %v560, %v562
      %v568 = vadd.f32 %v539, %v557
      %v569 = vadd.f32 %v540, %v559
      %v570 = vadd.f32 %v541, %v561
      %v571 = vadd.f32 %v542, %v563
      %s572 = sld [smem:[#allocation3 + $0x15]]
      %v573 = vstv %s572
      %v574 = vmul.f32 %v61, %v573
      %v575 = vmul.f32 %v62, %v573
      %v576 = vmul.f32 %v63, %v573
      %v577 = vmul.f32 %v64, %v573
      %v578 = vadd.f32 %v568, %v574
      %v579 = vadd.f32 %v569, %v575
      %v580 = vadd.f32 %v570, %v576
      %v581 = vadd.f32 %v571, %v577
      %s582 = sld [smem:[#allocation3 + $0x16]]
      %v583 = vstv %s582
      %v584 = vmul.f32 %v61, %v583
      %v585 = vmul.f32 %v62, %v583
      %v586 = vmul.f32 %v63, %v583
      %v587 = vmul.f32 %v64, %v583
      %v588 = vmul.f32 %v65, %v583
      %v594 = vrot.slane %v584, 1
      %v595 = vrot.slane %v585, 1
      %v596 = vsel %vm92, %v594, %v595
      %v597 = vrot.slane %v586, 1
      %v598 = vsel %vm92, %v595, %v597
      %v599 = vrot.slane %v587, 1
      %v600 = vsel %vm92, %v597, %v599
      %v601 = vrot.slane %v588, 1
      %v602 = vsel %vm92, %v599, %v601
      %v607 = vadd.f32 %v578, %v596
      %v608 = vadd.f32 %v579, %v598
      %v609 = vadd.f32 %v580, %v600
      %v610 = vadd.f32 %v581, %v602
      %s611 = sld [smem:[#allocation3 + $0x17]]
      %v612 = vstv %s611
      %v613 = vmul.f32 %v61, %v612
      %v614 = vmul.f32 %v62, %v612
      %v615 = vmul.f32 %v63, %v612
      %v616 = vmul.f32 %v64, %v612
      %v617 = vmul.f32 %v65, %v612
      %v623 = vrot.slane %v613, 2
      %v624 = vrot.slane %v614, 2
      %v625 = vsel %vm122, %v623, %v624
      %v626 = vrot.slane %v615, 2
      %v627 = vsel %vm122, %v624, %v626
      %v628 = vrot.slane %v616, 2
      %v629 = vsel %vm122, %v626, %v628
      %v630 = vrot.slane %v617, 2
      %v631 = vsel %vm122, %v628, %v630
      %v636 = vadd.f32 %v607, %v625
      %v637 = vadd.f32 %v608, %v627
      %v638 = vadd.f32 %v609, %v629
      %v639 = vadd.f32 %v610, %v631
      %s640 = sld [smem:[#allocation3 + $0x18]]
      %v641 = vstv %s640
      %v642 = vmul.f32 %v69, %v641
      %v643 = vmul.f32 %v70, %v641
      %v644 = vmul.f32 %v71, %v641
      %v645 = vmul.f32 %v72, %v641
      %v646 = vadd.f32 %v636, %v642
      %v647 = vadd.f32 %v637, %v643
      %v648 = vadd.f32 %v638, %v644
      %v649 = vadd.f32 %v639, %v645
      %s650 = sld [smem:[#allocation3 + $0x19]]
      %v651 = vstv %s650
      %v652 = vmul.f32 %v69, %v651
      %v653 = vmul.f32 %v70, %v651
      %v654 = vmul.f32 %v71, %v651
      %v655 = vmul.f32 %v72, %v651
      %v656 = vmul.f32 %v73, %v651
      %v662 = vrot.slane %v652, 1
      %v663 = vrot.slane %v653, 1
      %v664 = vsel %vm92, %v662, %v663
      %v665 = vrot.slane %v654, 1
      %v666 = vsel %vm92, %v663, %v665
      %v667 = vrot.slane %v655, 1
      %v668 = vsel %vm92, %v665, %v667
      %v669 = vrot.slane %v656, 1
      %v670 = vsel %vm92, %v667, %v669
      %v675 = vadd.f32 %v646, %v664
      %v676 = vadd.f32 %v647, %v666
      %v677 = vadd.f32 %v648, %v668
      %v678 = vadd.f32 %v649, %v670
      %s679 = sld [smem:[#allocation3 + $0x1a]]
      %v680 = vstv %s679
      %v681 = vmul.f32 %v69, %v680
      %v682 = vmul.f32 %v70, %v680
      %v683 = vmul.f32 %v71, %v680
      %v684 = vmul.f32 %v72, %v680
      %v685 = vmul.f32 %v73, %v680
      %v691 = vrot.slane %v681, 2
      %v692 = vrot.slane %v682, 2
      %v693 = vsel %vm122, %v691, %v692
      %v694 = vrot.slane %v683, 2
      %v695 = vsel %vm122, %v692, %v694
      %v696 = vrot.slane %v684, 2
      %v697 = vsel %vm122, %v694, %v696
      %v698 = vrot.slane %v685, 2
      %v699 = vsel %vm122, %v696, %v698
      %v704 = vadd.f32 %v675, %v693
      %v705 = vadd.f32 %v676, %v695
      %v706 = vadd.f32 %v677, %v697
      %v707 = vadd.f32 %v678, %v699
      %s708 = sld [smem:[#allocation5 + $0x2]]
      %v709 = vstv %s708
      %v710 = vadd.f32 %v704, %v709
      %v711 = vadd.f32 %v705, %v709
      %v712 = vadd.f32 %v706, %v709
      %v713 = vadd.f32 %v707, %v709
      %v714 = vmax.f32 %v710, 0.0
      %v715 = vmax.f32 %v711, 0.0
      %v716 = vmax.f32 %v712, 0.0
      %v717 = vmax.f32 %v713, 0.0
      %s718 = sadd.s32 %s286, 2048
      %s719 = scalar_lea.vmem [#allocation2], %s718
      %720 = vst [vmem:[%s719] sm:$0xff] %v714
      %721 = vst [vmem:[%s719 + $0x8] sm:$0xff] %v715
      %722 = vst [vmem:[%s719 + $0x10] sm:$0xff] %v716
      %723 = vst [vmem:[%s719 + $0x18] sm:$0xff] %v717
      %s724 = sld [smem:[#allocation3 + $0x1b]]
      %v725 = vstv %s724
      %v726 = vmul.f32 %v53, %v725
      %v727 = vmul.f32 %v54, %v725
      %v728 = vmul.f32 %v55, %v725
      %v729 = vmul.f32 %v56, %v725
      %s730 = sld [smem:[#allocation3 + $0x1c]]
      %v731 = vstv %s730
      %v732 = vmul.f32 %v53, %v731
      %v733 = vmul.f32 %v54, %v731
      %v734 = vmul.f32 %v55, %v731
      %v735 = vmul.f32 %v56, %v731
      %v736 = vmul.f32 %v57, %v731
      %v742 = vrot.slane %v732, 1
      %v743 = vrot.slane %v733, 1
      %v744 = vsel %vm92, %v742, %v743
      %v745 = vrot.slane %v734, 1
      %v746 = vsel %vm92, %v743, %v745
      %v747 = vrot.slane %v735, 1
      %v748 = vsel %vm92, %v745, %v747
      %v749 = vrot.slane %v736, 1
      %v750 = vsel %vm92, %v747, %v749
      %v755 = vadd.f32 %v726, %v744
      %v756 = vadd.f32 %v727, %v746
      %v757 = vadd.f32 %v728, %v748
      %v758 = vadd.f32 %v729, %v750
      %s759 = sld [smem:[#allocation3 + $0x1d]]
      %v760 = vstv %s759
      %v761 = vmul.f32 %v53, %v760
      %v762 = vmul.f32 %v54, %v760
      %v763 = vmul.f32 %v55, %v760
      %v764 = vmul.f32 %v56, %v760
      %v765 = vmul.f32 %v57, %v760
      %v771 = vrot.slane %v761, 2
      %v772 = vrot.slane %v762, 2
      %v773 = vsel %vm122, %v771, %v772
      %v774 = vrot.slane %v763, 2
      %v775 = vsel %vm122, %v772, %v774
      %v776 = vrot.slane %v764, 2
      %v777 = vsel %vm122, %v774, %v776
      %v778 = vrot.slane %v765, 2
      %v779 = vsel %vm122, %v776, %v778
      %v784 = vadd.f32 %v755, %v773
      %v785 = vadd.f32 %v756, %v775
      %v786 = vadd.f32 %v757, %v777
      %v787 = vadd.f32 %v758, %v779
      %s788 = sld [smem:[#allocation3 + $0x1e]]
      %v789 = vstv %s788
      %v790 = vmul.f32 %v61, %v789
      %v791 = vmul.f32 %v62, %v789
      %v792 = vmul.f32 %v63, %v789
      %v793 = vmul.f32 %v64, %v789
      %v794 = vadd.f32 %v784, %v790
      %v795 = vadd.f32 %v785, %v791
      %v796 = vadd.f32 %v786, %v792
      %v797 = vadd.f32 %v787, %v793
      %s798 = sld [smem:[#allocation3 + $0x1f]]
      %v799 = vstv %s798
      %v800 = vmul.f32 %v61, %v799
      %v801 = vmul.f32 %v62, %v799
      %v802 = vmul.f32 %v63, %v799
      %v803 = vmul.f32 %v64, %v799
      %v804 = vmul.f32 %v65, %v799
      %v810 = vrot.slane %v800, 1
      %v811 = vrot.slane %v801, 1
      %v812 = vsel %vm92, %v810, %v811
      %v813 = vrot.slane %v802, 1
      %v814 = vsel %vm92, %v811, %v813
      %v815 = vrot.slane %v803, 1
      %v816 = vsel %vm92, %v813, %v815
      %v817 = vrot.slane %v804, 1
      %v818 = vsel %vm92, %v815, %v817
      %v823 = vadd.f32 %v794, %v812
      %v824 = vadd.f32 %v795, %v814
      %v825 = vadd.f32 %v796, %v816
      %v826 = vadd.f32 %v797, %v818
      %s827 = sld [smem:[#allocation3 + $0x20]]
      %v828 = vstv %s827
      %v829 = vmul.f32 %v61, %v828
      %v830 = vmul.f32 %v62, %v828
      %v831 = vmul.f32 %v63, %v828
      %v832 = vmul.f32 %v64, %v828
      %v833 = vmul.f32 %v65, %v828
      %v839 = vrot.slane %v829, 2
      %v840 = vrot.slane %v830, 2
      %v841 = vsel %vm122, %v839, %v840
      %v842 = vrot.slane %v831, 2
      %v843 = vsel %vm122, %v840, %v842
      %v844 = vrot.slane %v832, 2
      %v845 = vsel %vm122, %v842, %v844
      %v846 = vrot.slane %v833, 2
      %v847 = vsel %vm122, %v844, %v846
      %v852 = vadd.f32 %v823, %v841
      %v853 = vadd.f32 %v824, %v843
      %v854 = vadd.f32 %v825, %v845
      %v855 = vadd.f32 %v826, %v847
      %s856 = sld [smem:[#allocation3 + $0x21]]
      %v857 = vstv %s856
      %v858 = vmul.f32 %v69, %v857
      %v859 = vmul.f32 %v70, %v857
      %v860 = vmul.f32 %v71, %v857
      %v861 = vmul.f32 %v72, %v857
      %v862 = vadd.f32 %v852, %v858
      %v863 = vadd.f32 %v853, %v859
      %v864 = vadd.f32 %v854, %v860
      %v865 = vadd.f32 %v855, %v861
      %s866 = sld [smem:[#allocation3 + $0x22]]
      %v867 = vstv %s866
      %v868 = vmul.f32 %v69, %v867
      %v869 = vmul.f32 %v70, %v867
      %v870 = vmul.f32 %v71, %v867
      %v871 = vmul.f32 %v72, %v867
      %v872 = vmul.f32 %v73, %v867
      %v878 = vrot.slane %v868, 1
      %v879 = vrot.slane %v869, 1
      %v880 = vsel %vm92, %v878, %v879
      %v881 = vrot.slane %v870, 1
      %v882 = vsel %vm92, %v879, %v881
      %v883 = vrot.slane %v871, 1
      %v884 = vsel %vm92, %v881, %v883
      %v885 = vrot.slane %v872, 1
      %v886 = vsel %vm92, %v883, %v885
      %v891 = vadd.f32 %v862, %v880
      %v892 = vadd.f32 %v863, %v882
      %v893 = vadd.f32 %v864, %v884
      %v894 = vadd.f32 %v865, %v886
      %s895 = sld [smem:[#allocation3 + $0x23]]
      %v896 = vstv %s895
      %v897 = vmul.f32 %v69, %v896
      %v898 = vmul.f32 %v70, %v896
      %v899 = vmul.f32 %v71, %v896
      %v900 = vmul.f32 %v72, %v896
      %v901 = vmul.f32 %v73, %v896
      %v907 = vrot.slane %v897, 2
      %v908 = vrot.slane %v898, 2
      %v909 = vsel %vm122, %v907, %v908
      %v910 = vrot.slane %v899, 2
      %v911 = vsel %vm122, %v908, %v910
      %v912 = vrot.slane %v900, 2
      %v913 = vsel %vm122, %v910, %v912
      %v914 = vrot.slane %v901, 2
      %v915 = vsel %vm122, %v912, %v914
      %v920 = vadd.f32 %v891, %v909
      %v921 = vadd.f32 %v892, %v911
      %v922 = vadd.f32 %v893, %v913
      %v923 = vadd.f32 %v894, %v915
      %s924 = sld [smem:[#allocation5 + $0x3]]
      %v925 = vstv %s924
      %v926 = vadd.f32 %v920, %v925
      %v927 = vadd.f32 %v921, %v925
      %v928 = vadd.f32 %v922, %v925
      %v929 = vadd.f32 %v923, %v925
      %v930 = vmax.f32 %v926, 0.0
      %v931 = vmax.f32 %v927, 0.0
      %v932 = vmax.f32 %v928, 0.0
      %v933 = vmax.f32 %v929, 0.0
      %s934 = sadd.s32 %s286, 3072
      %s935 = scalar_lea.vmem [#allocation2], %s934
      %936 = vst [vmem:[%s935] sm:$0xff] %v930
      %937 = vst [vmem:[%s935 + $0x8] sm:$0xff] %v931
      %938 = vst [vmem:[%s935 + $0x10] sm:$0xff] %v932
      %939 = vst [vmem:[%s935 + $0x18] sm:$0xff] %v933
      %s940 = sld [smem:[#allocation3 + $0x24]]
      %v941 = vstv %s940
      %v942 = vmul.f32 %v53, %v941
      %v943 = vmul.f32 %v54, %v941
      %v944 = vmul.f32 %v55, %v941
      %v945 = vmul.f32 %v56, %v941
      %s946 = sld [smem:[#allocation3 + $0x25]]
      %v947 = vstv %s946
      %v948 = vmul.f32 %v53, %v947
      %v949 = vmul.f32 %v54, %v947
      %v950 = vmul.f32 %v55, %v947
      %v951 = vmul.f32 %v56, %v947
      %v952 = vmul.f32 %v57, %v947
      %v958 = vrot.slane %v948, 1
      %v959 = vrot.slane %v949, 1
      %v960 = vsel %vm92, %v958, %v959
      %v961 = vrot.slane %v950, 1
      %v962 = vsel %vm92, %v959, %v961
      %v963 = vrot.slane %v951, 1
      %v964 = vsel %vm92, %v961, %v963
      %v965 = vrot.slane %v952, 1
      %v966 = vsel %vm92, %v963, %v965
      %v971 = vadd.f32 %v942, %v960
      %v972 = vadd.f32 %v943, %v962
      %v973 = vadd.f32 %v944, %v964
      %v974 = vadd.f32 %v945, %v966
      %s975 = sld [smem:[#allocation3 + $0x26]]
      %v976 = vstv %s975
      %v977 = vmul.f32 %v53, %v976
      %v978 = vmul.f32 %v54, %v976
      %v979 = vmul.f32 %v55, %v976
      %v980 = vmul.f32 %v56, %v976
      %v981 = vmul.f32 %v57, %v976
      %v987 = vrot.slane %v977, 2
      %v988 = vrot.slane %v978, 2
      %v989 = vsel %vm122, %v987, %v988
      %v990 = vrot.slane %v979, 2
      %v991 = vsel %vm122, %v988, %v990
      %v992 = vrot.slane %v980, 2
      %v993 = vsel %vm122, %v990, %v992
      %v994 = vrot.slane %v981, 2
      %v995 = vsel %vm122, %v992, %v994
      %v1000 = vadd.f32 %v971, %v989
      %v1001 = vadd.f32 %v972, %v991
      %v1002 = vadd.f32 %v973, %v993
      %v1003 = vadd.f32 %v974, %v995
      %s1004 = sld [smem:[#allocation3 + $0x27]]
      %v1005 = vstv %s1004
      %v1006 = vmul.f32 %v61, %v1005
      %v1007 = vmul.f32 %v62, %v1005
      %v1008 = vmul.f32 %v63, %v1005
      %v1009 = vmul.f32 %v64, %v1005
      %v1010 = vadd.f32 %v1000, %v1006
      %v1011 = vadd.f32 %v1001, %v1007
      %v1012 = vadd.f32 %v1002, %v1008
      %v1013 = vadd.f32 %v1003, %v1009
      %s1014 = sld [smem:[#allocation3 + $0x28]]
      %v1015 = vstv %s1014
      %v1016 = vmul.f32 %v61, %v1015
      %v1017 = vmul.f32 %v62, %v1015
      %v1018 = vmul.f32 %v63, %v1015
      %v1019 = vmul.f32 %v64, %v1015
      %v1020 = vmul.f32 %v65, %v1015
      %v1026 = vrot.slane %v1016, 1
      %v1027 = vrot.slane %v1017, 1
      %v1028 = vsel %vm92, %v1026, %v1027
      %v1029 = vrot.slane %v1018, 1
      %v1030 = vsel %vm92, %v1027, %v1029
      %v1031 = vrot.slane %v1019, 1
      %v1032 = vsel %vm92, %v1029, %v1031
      %v1033 = vrot.slane %v1020, 1
      %v1034 = vsel %vm92, %v1031, %v1033
      %v1039 = vadd.f32 %v1010, %v1028
      %v1040 = vadd.f32 %v1011, %v1030
      %v1041 = vadd.f32 %v1012, %v1032
      %v1042 = vadd.f32 %v1013, %v1034
      %s1043 = sld [smem:[#allocation3 + $0x29]]
      %v1044 = vstv %s1043
      %v1045 = vmul.f32 %v61, %v1044
      %v1046 = vmul.f32 %v62, %v1044
      %v1047 = vmul.f32 %v63, %v1044
      %v1048 = vmul.f32 %v64, %v1044
      %v1049 = vmul.f32 %v65, %v1044
      %v1055 = vrot.slane %v1045, 2
      %v1056 = vrot.slane %v1046, 2
      %v1057 = vsel %vm122, %v1055, %v1056
      %v1058 = vrot.slane %v1047, 2
      %v1059 = vsel %vm122, %v1056, %v1058
      %v1060 = vrot.slane %v1048, 2
      %v1061 = vsel %vm122, %v1058, %v1060
      %v1062 = vrot.slane %v1049, 2
      %v1063 = vsel %vm122, %v1060, %v1062
      %v1068 = vadd.f32 %v1039, %v1057
      %v1069 = vadd.f32 %v1040, %v1059
      %v1070 = vadd.f32 %v1041, %v1061
      %v1071 = vadd.f32 %v1042, %v1063
      %s1072 = sld [smem:[#allocation3 + $0x2a]]
      %v1073 = vstv %s1072
      %v1074 = vmul.f32 %v69, %v1073
      %v1075 = vmul.f32 %v70, %v1073
      %v1076 = vmul.f32 %v71, %v1073
      %v1077 = vmul.f32 %v72, %v1073
      %v1078 = vadd.f32 %v1068, %v1074
      %v1079 = vadd.f32 %v1069, %v1075
      %v1080 = vadd.f32 %v1070, %v1076
      %v1081 = vadd.f32 %v1071, %v1077
      %s1082 = sld [smem:[#allocation3 + $0x2b]]
      %v1083 = vstv %s1082
      %v1084 = vmul.f32 %v69, %v1083
      %v1085 = vmul.f32 %v70, %v1083
      %v1086 = vmul.f32 %v71, %v1083
      %v1087 = vmul.f32 %v72, %v1083
      %v1088 = vmul.f32 %v73, %v1083
      %v1094 = vrot.slane %v1084, 1
      %v1095 = vrot.slane %v1085, 1
      %v1096 = vsel %vm92, %v1094, %v1095
      %v1097 = vrot.slane %v1086, 1
      %v1098 = vsel %vm92, %v1095, %v1097
      %v1099 = vrot.slane %v1087, 1
      %v1100 = vsel %vm92, %v1097, %v1099
      %v1101 = vrot.slane %v1088, 1
      %v1102 = vsel %vm92, %v1099, %v1101
      %v1107 = vadd.f32 %v1078, %v1096
      %v1108 = vadd.f32 %v1079, %v1098
      %v1109 = vadd.f32 %v1080, %v1100
      %v1110 = vadd.f32 %v1081, %v1102
      %s1111 = sld [smem:[#allocation3 + $0x2c]]
      %v1112 = vstv %s1111
      %v1113 = vmul.f32 %v69, %v1112
      %v1114 = vmul.f32 %v70, %v1112
      %v1115 = vmul.f32 %v71, %v1112
      %v1116 = vmul.f32 %v72, %v1112
      %v1117 = vmul.f32 %v73, %v1112
      %v1123 = vrot.slane %v1113, 2
      %v1124 = vrot.slane %v1114, 2
      %v1125 = vsel %vm122, %v1123, %v1124
      %v1126 = vrot.slane %v1115, 2
      %v1127 = vsel %vm122, %v1124, %v1126
      %v1128 = vrot.slane %v1116, 2
      %v1129 = vsel %vm122, %v1126, %v1128
      %v1130 = vrot.slane %v1117, 2
      %v1131 = vsel %vm122, %v1128, %v1130
      %v1136 = vadd.f32 %v1107, %v1125
      %v1137 = vadd.f32 %v1108, %v1127
      %v1138 = vadd.f32 %v1109, %v1129
      %v1139 = vadd.f32 %v1110, %v1131
      %s1140 = sld [smem:[#allocation5 + $0x4]]
      %v1141 = vstv %s1140
      %v1142 = vadd.f32 %v1136, %v1141
      %v1143 = vadd.f32 %v1137, %v1141
      %v1144 = vadd.f32 %v1138, %v1141
      %v1145 = vadd.f32 %v1139, %v1141
      %v1146 = vmax.f32 %v1142, 0.0
      %v1147 = vmax.f32 %v1143, 0.0
      %v1148 = vmax.f32 %v1144, 0.0
      %v1149 = vmax.f32 %v1145, 0.0
      %s1150 = sadd.s32 %s286, 4096
      %s1151 = scalar_lea.vmem [#allocation2], %s1150
      %1152 = vst [vmem:[%s1151] sm:$0xff] %v1146
      %1153 = vst [vmem:[%s1151 + $0x8] sm:$0xff] %v1147
      %1154 = vst [vmem:[%s1151 + $0x10] sm:$0xff] %v1148
      %1155 = vst [vmem:[%s1151 + $0x18] sm:$0xff] %v1149
      %s1156 = sld [smem:[#allocation3 + $0x2d]]
      %v1157 = vstv %s1156
      %v1158 = vmul.f32 %v53, %v1157
      %v1159 = vmul.f32 %v54, %v1157
      %v1160 = vmul.f32 %v55, %v1157
      %v1161 = vmul.f32 %v56, %v1157
      %s1162 = sld [smem:[#allocation3 + $0x2e]]
      %v1163 = vstv %s1162
      %v1164 = vmul.f32 %v53, %v1163
      %v1165 = vmul.f32 %v54, %v1163
      %v1166 = vmul.f32 %v55, %v1163
      %v1167 = vmul.f32 %v56, %v1163
      %v1168 = vmul.f32 %v57, %v1163
      %v1174 = vrot.slane %v1164, 1
      %v1175 = vrot.slane %v1165, 1
      %v1176 = vsel %vm92, %v1174, %v1175
      %v1177 = vrot.slane %v1166, 1
      %v1178 = vsel %vm92, %v1175, %v1177
      %v1179 = vrot.slane %v1167, 1
      %v1180 = vsel %vm92, %v1177, %v1179
      %v1181 = vrot.slane %v1168, 1
      %v1182 = vsel %vm92, %v1179, %v1181
      %v1187 = vadd.f32 %v1158, %v1176
      %v1188 = vadd.f32 %v1159, %v1178
      %v1189 = vadd.f32 %v1160, %v1180
      %v1190 = vadd.f32 %v1161, %v1182
      %s1191 = sld [smem:[#allocation3 + $0x2f]]
      %v1192 = vstv %s1191
      %v1193 = vmul.f32 %v53, %v1192
      %v1194 = vmul.f32 %v54, %v1192
      %v1195 = vmul.f32 %v55, %v1192
      %v1196 = vmul.f32 %v56, %v1192
      %v1197 = vmul.f32 %v57, %v1192
      %v1203 = vrot.slane %v1193, 2
      %v1204 = vrot.slane %v1194, 2
      %v1205 = vsel %vm122, %v1203, %v1204
      %v1206 = vrot.slane %v1195, 2
      %v1207 = vsel %vm122, %v1204, %v1206
      %v1208 = vrot.slane %v1196, 2
      %v1209 = vsel %vm122, %v1206, %v1208
      %v1210 = vrot.slane %v1197, 2
      %v1211 = vsel %vm122, %v1208, %v1210
      %v1216 = vadd.f32 %v1187, %v1205
      %v1217 = vadd.f32 %v1188, %v1207
      %v1218 = vadd.f32 %v1189, %v1209
      %v1219 = vadd.f32 %v1190, %v1211
      %s1220 = sld [smem:[#allocation3 + $0x30]]
      %v1221 = vstv %s1220
      %v1222 = vmul.f32 %v61, %v1221
      %v1223 = vmul.f32 %v62, %v1221
      %v1224 = vmul.f32 %v63, %v1221
      %v1225 = vmul.f32 %v64, %v1221
      %v1226 = vadd.f32 %v1216, %v1222
      %v1227 = vadd.f32 %v1217, %v1223
      %v1228 = vadd.f32 %v1218, %v1224
      %v1229 = vadd.f32 %v1219, %v1225
      %s1230 = sld [smem:[#allocation3 + $0x31]]
      %v1231 = vstv %s1230
      %v1232 = vmul.f32 %v61, %v1231
      %v1233 = vmul.f32 %v62, %v1231
      %v1234 = vmul.f32 %v63, %v1231
      %v1235 = vmul.f32 %v64, %v1231
      %v1236 = vmul.f32 %v65, %v1231
      %v1242 = vrot.slane %v1232, 1
      %v1243 = vrot.slane %v1233, 1
      %v1244 = vsel %vm92, %v1242, %v1243
      %v1245 = vrot.slane %v1234, 1
      %v1246 = vsel %vm92, %v1243, %v1245
      %v1247 = vrot.slane %v1235, 1
      %v1248 = vsel %vm92, %v1245, %v1247
      %v1249 = vrot.slane %v1236, 1
      %v1250 = vsel %vm92, %v1247, %v1249
      %v1255 = vadd.f32 %v1226, %v1244
      %v1256 = vadd.f32 %v1227, %v1246
      %v1257 = vadd.f32 %v1228, %v1248
      %v1258 = vadd.f32 %v1229, %v1250
      %s1259 = sld [smem:[#allocation3 + $0x32]]
      %v1260 = vstv %s1259
      %v1261 = vmul.f32 %v61, %v1260
      %v1262 = vmul.f32 %v62, %v1260
      %v1263 = vmul.f32 %v63, %v1260
      %v1264 = vmul.f32 %v64, %v1260
      %v1265 = vmul.f32 %v65, %v1260
      %v1271 = vrot.slane %v1261, 2
      %v1272 = vrot.slane %v1262, 2
      %v1273 = vsel %vm122, %v1271, %v1272
      %v1274 = vrot.slane %v1263, 2
      %v1275 = vsel %vm122, %v1272, %v1274
      %v1276 = vrot.slane %v1264, 2
      %v1277 = vsel %vm122, %v1274, %v1276
      %v1278 = vrot.slane %v1265, 2
      %v1279 = vsel %vm122, %v1276, %v1278
      %v1284 = vadd.f32 %v1255, %v1273
      %v1285 = vadd.f32 %v1256, %v1275
      %v1286 = vadd.f32 %v1257, %v1277
      %v1287 = vadd.f32 %v1258, %v1279
      %s1288 = sld [smem:[#allocation3 + $0x33]]
      %v1289 = vstv %s1288
      %v1290 = vmul.f32 %v69, %v1289
      %v1291 = vmul.f32 %v70, %v1289
      %v1292 = vmul.f32 %v71, %v1289
      %v1293 = vmul.f32 %v72, %v1289
      %v1294 = vadd.f32 %v1284, %v1290
      %v1295 = vadd.f32 %v1285, %v1291
      %v1296 = vadd.f32 %v1286, %v1292
      %v1297 = vadd.f32 %v1287, %v1293
      %s1298 = sld [smem:[#allocation3 + $0x34]]
      %v1299 = vstv %s1298
      %v1300 = vmul.f32 %v69, %v1299
      %v1301 = vmul.f32 %v70, %v1299
      %v1302 = vmul.f32 %v71, %v1299
      %v1303 = vmul.f32 %v72, %v1299
      %v1304 = vmul.f32 %v73, %v1299
      %v1310 = vrot.slane %v1300, 1
      %v1311 = vrot.slane %v1301, 1
      %v1312 = vsel %vm92, %v1310, %v1311
      %v1313 = vrot.slane %v1302, 1
      %v1314 = vsel %vm92, %v1311, %v1313
      %v1315 = vrot.slane %v1303, 1
      %v1316 = vsel %vm92, %v1313, %v1315
      %v1317 = vrot.slane %v1304, 1
      %v1318 = vsel %vm92, %v1315, %v1317
      %v1323 = vadd.f32 %v1294, %v1312
      %v1324 = vadd.f32 %v1295, %v1314
      %v1325 = vadd.f32 %v1296, %v1316
      %v1326 = vadd.f32 %v1297, %v1318
      %s1327 = sld [smem:[#allocation3 + $0x35]]
      %v1328 = vstv %s1327
      %v1329 = vmul.f32 %v69, %v1328
      %v1330 = vmul.f32 %v70, %v1328
      %v1331 = vmul.f32 %v71, %v1328
      %v1332 = vmul.f32 %v72, %v1328
      %v1333 = vmul.f32 %v73, %v1328
      %v1339 = vrot.slane %v1329, 2
      %v1340 = vrot.slane %v1330, 2
      %v1341 = vsel %vm122, %v1339, %v1340
      %v1342 = vrot.slane %v1331, 2
      %v1343 = vsel %vm122, %v1340, %v1342
      %v1344 = vrot.slane %v1332, 2
      %v1345 = vsel %vm122, %v1342, %v1344
      %v1346 = vrot.slane %v1333, 2
      %v1347 = vsel %vm122, %v1344, %v1346
      %v1352 = vadd.f32 %v1323, %v1341
      %v1353 = vadd.f32 %v1324, %v1343
      %v1354 = vadd.f32 %v1325, %v1345
      %v1355 = vadd.f32 %v1326, %v1347
      %s1356 = sld [smem:[#allocation5 + $0x5]]
      %v1357 = vstv %s1356
      %v1358 = vadd.f32 %v1352, %v1357
      %v1359 = vadd.f32 %v1353, %v1357
      %v1360 = vadd.f32 %v1354, %v1357
      %v1361 = vadd.f32 %v1355, %v1357
      %v1362 = vmax.f32 %v1358, 0.0
      %v1363 = vmax.f32 %v1359, 0.0
      %v1364 = vmax.f32 %v1360, 0.0
      %v1365 = vmax.f32 %v1361, 0.0
      %s1366 = sadd.s32 %s286, 5120
      %s1367 = scalar_lea.vmem [#allocation2], %s1366
      %1368 = vst [vmem:[%s1367] sm:$0xff] %v1362
      %1369 = vst [vmem:[%s1367 + $0x8] sm:$0xff] %v1363
      %1370 = vst [vmem:[%s1367 + $0x10] sm:$0xff] %v1364
      %1371 = vst [vmem:[%s1367 + $0x18] sm:$0xff] %v1365
      %s1372 = sld [smem:[#allocation3 + $0x36]]
      %v1373 = vstv %s1372
      %v1374 = vmul.f32 %v53, %v1373
      %v1375 = vmul.f32 %v54, %v1373
      %v1376 = vmul.f32 %v55, %v1373
      %v1377 = vmul.f32 %v56, %v1373
      %s1378 = sld [smem:[#allocation3 + $0x37]]
      %v1379 = vstv %s1378
      %v1380 = vmul.f32 %v53, %v1379
      %v1381 = vmul.f32 %v54, %v1379
      %v1382 = vmul.f32 %v55, %v1379
      %v1383 = vmul.f32 %v56, %v1379
      %v1384 = vmul.f32 %v57, %v1379
      %v1390 = vrot.slane %v1380, 1
      %v1391 = vrot.slane %v1381, 1
      %v1392 = vsel %vm92, %v1390, %v1391
      %v1393 = vrot.slane %v1382, 1
      %v1394 = vsel %vm92, %v1391, %v1393
      %v1395 = vrot.slane %v1383, 1
      %v1396 = vsel %vm92, %v1393, %v1395
      %v1397 = vrot.slane %v1384, 1
      %v1398 = vsel %vm92, %v1395, %v1397
      %v1403 = vadd.f32 %v1374, %v1392
      %v1404 = vadd.f32 %v1375, %v1394
      %v1405 = vadd.f32 %v1376, %v1396
      %v1406 = vadd.f32 %v1377, %v1398
      %s1407 = sld [smem:[#allocation3 + $0x38]]
      %v1408 = vstv %s1407
      %v1409 = vmul.f32 %v53, %v1408
      %v1410 = vmul.f32 %v54, %v1408
      %v1411 = vmul.f32 %v55, %v1408
      %v1412 = vmul.f32 %v56, %v1408
      %v1413 = vmul.f32 %v57, %v1408
      %v1419 = vrot.slane %v1409, 2
      %v1420 = vrot.slane %v1410, 2
      %v1421 = vsel %vm122, %v1419, %v1420
      %v1422 = vrot.slane %v1411, 2
      %v1423 = vsel %vm122, %v1420, %v1422
      %v1424 = vrot.slane %v1412, 2
      %v1425 = vsel %vm122, %v1422, %v1424
      %v1426 = vrot.slane %v1413, 2
      %v1427 = vsel %vm122, %v1424, %v1426
      %v1432 = vadd.f32 %v1403, %v1421
      %v1433 = vadd.f32 %v1404, %v1423
      %v1434 = vadd.f32 %v1405, %v1425
      %v1435 = vadd.f32 %v1406, %v1427
      %s1436 = sld [smem:[#allocation3 + $0x39]]
      %v1437 = vstv %s1436
      %v1438 = vmul.f32 %v61, %v1437
      %v1439 = vmul.f32 %v62, %v1437
      %v1440 = vmul.f32 %v63, %v1437
      %v1441 = vmul.f32 %v64, %v1437
      %v1442 = vadd.f32 %v1432, %v1438
      %v1443 = vadd.f32 %v1433, %v1439
      %v1444 = vadd.f32 %v1434, %v1440
      %v1445 = vadd.f32 %v1435, %v1441
      %s1446 = sld [smem:[#allocation3 + $0x3a]]
      %v1447 = vstv %s1446
      %v1448 = vmul.f32 %v61, %v1447
      %v1449 = vmul.f32 %v62, %v1447
      %v1450 = vmul.f32 %v63, %v1447
      %v1451 = vmul.f32 %v64, %v1447
      %v1452 = vmul.f32 %v65, %v1447
      %v1458 = vrot.slane %v1448, 1
      %v1459 = vrot.slane %v1449, 1
      %v1460 = vsel %vm92, %v1458, %v1459
      %v1461 = vrot.slane %v1450, 1
      %v1462 = vsel %vm92, %v1459, %v1461
      %v1463 = vrot.slane %v1451, 1
      %v1464 = vsel %vm92, %v1461, %v1463
      %v1465 = vrot.slane %v1452, 1
      %v1466 = vsel %vm92, %v1463, %v1465
      %v1471 = vadd.f32 %v1442, %v1460
      %v1472 = vadd.f32 %v1443, %v1462
      %v1473 = vadd.f32 %v1444, %v1464
      %v1474 = vadd.f32 %v1445, %v1466
      %s1475 = sld [smem:[#allocation3 + $0x3b]]
      %v1476 = vstv %s1475
      %v1477 = vmul.f32 %v61, %v1476
      %v1478 = vmul.f32 %v62, %v1476
      %v1479 = vmul.f32 %v63, %v1476
      %v1480 = vmul.f32 %v64, %v1476
      %v1481 = vmul.f32 %v65, %v1476
      %v1487 = vrot.slane %v1477, 2
      %v1488 = vrot.slane %v1478, 2
      %v1489 = vsel %vm122, %v1487, %v1488
      %v1490 = vrot.slane %v1479, 2
      %v1491 = vsel %vm122, %v1488, %v1490
      %v1492 = vrot.slane %v1480, 2
      %v1493 = vsel %vm122, %v1490, %v1492
      %v1494 = vrot.slane %v1481, 2
      %v1495 = vsel %vm122, %v1492, %v1494
      %v1500 = vadd.f32 %v1471, %v1489
      %v1501 = vadd.f32 %v1472, %v1491
      %v1502 = vadd.f32 %v1473, %v1493
      %v1503 = vadd.f32 %v1474, %v1495
      %s1504 = sld [smem:[#allocation3 + $0x3c]]
      %v1505 = vstv %s1504
      %v1506 = vmul.f32 %v69, %v1505
      %v1507 = vmul.f32 %v70, %v1505
      %v1508 = vmul.f32 %v71, %v1505
      %v1509 = vmul.f32 %v72, %v1505
      %v1510 = vadd.f32 %v1500, %v1506
      %v1511 = vadd.f32 %v1501, %v1507
      %v1512 = vadd.f32 %v1502, %v1508
      %v1513 = vadd.f32 %v1503, %v1509
      %s1514 = sld [smem:[#allocation3 + $0x3d]]
      %v1515 = vstv %s1514
      %v1516 = vmul.f32 %v69, %v1515
      %v1517 = vmul.f32 %v70, %v1515
      %v1518 = vmul.f32 %v71, %v1515
      %v1519 = vmul.f32 %v72, %v1515
      %v1520 = vmul.f32 %v73, %v1515
      %v1526 = vrot.slane %v1516, 1
      %v1527 = vrot.slane %v1517, 1
      %v1528 = vsel %vm92, %v1526, %v1527
      %v1529 = vrot.slane %v1518, 1
      %v1530 = vsel %vm92, %v1527, %v1529
      %v1531 = vrot.slane %v1519, 1
      %v1532 = vsel %vm92, %v1529, %v1531
      %v1533 = vrot.slane %v1520, 1
      %v1534 = vsel %vm92, %v1531, %v1533
      %v1539 = vadd.f32 %v1510, %v1528
      %v1540 = vadd.f32 %v1511, %v1530
      %v1541 = vadd.f32 %v1512, %v1532
      %v1542 = vadd.f32 %v1513, %v1534
      %s1543 = sld [smem:[#allocation3 + $0x3e]]
      %v1544 = vstv %s1543
      %v1545 = vmul.f32 %v69, %v1544
      %v1546 = vmul.f32 %v70, %v1544
      %v1547 = vmul.f32 %v71, %v1544
      %v1548 = vmul.f32 %v72, %v1544
      %v1549 = vmul.f32 %v73, %v1544
      %v1555 = vrot.slane %v1545, 2
      %v1556 = vrot.slane %v1546, 2
      %v1557 = vsel %vm122, %v1555, %v1556
      %v1558 = vrot.slane %v1547, 2
      %v1559 = vsel %vm122, %v1556, %v1558
      %v1560 = vrot.slane %v1548, 2
      %v1561 = vsel %vm122, %v1558, %v1560
      %v1562 = vrot.slane %v1549, 2
      %v1563 = vsel %vm122, %v1560, %v1562
      %v1568 = vadd.f32 %v1539, %v1557
      %v1569 = vadd.f32 %v1540, %v1559
      %v1570 = vadd.f32 %v1541, %v1561
      %v1571 = vadd.f32 %v1542, %v1563
      %s1572 = sld [smem:[#allocation5 + $0x6]]
      %v1573 = vstv %s1572
      %v1574 = vadd.f32 %v1568, %v1573
      %v1575 = vadd.f32 %v1569, %v1573
      %v1576 = vadd.f32 %v1570, %v1573
      %v1577 = vadd.f32 %v1571, %v1573
      %v1578 = vmax.f32 %v1574, 0.0
      %v1579 = vmax.f32 %v1575, 0.0
      %v1580 = vmax.f32 %v1576, 0.0
      %v1581 = vmax.f32 %v1577, 0.0
      %s1582 = sadd.s32 %s286, 6144
      %s1583 = scalar_lea.vmem [#allocation2], %s1582
      %1584 = vst [vmem:[%s1583] sm:$0xff] %v1578
      %1585 = vst [vmem:[%s1583 + $0x8] sm:$0xff] %v1579
      %1586 = vst [vmem:[%s1583 + $0x10] sm:$0xff] %v1580
      %1587 = vst [vmem:[%s1583 + $0x18] sm:$0xff] %v1581
      %s1588 = sld [smem:[#allocation3 + $0x3f]]
      %v1589 = vstv %s1588
      %v1590 = vmul.f32 %v53, %v1589
      %v1591 = vmul.f32 %v54, %v1589
      %v1592 = vmul.f32 %v55, %v1589
      %v1593 = vmul.f32 %v56, %v1589
      %s1594 = sld [smem:[#allocation3 + $0x40]]
      %v1595 = vstv %s1594
      %v1596 = vmul.f32 %v53, %v1595
      %v1597 = vmul.f32 %v54, %v1595
      %v1598 = vmul.f32 %v55, %v1595
      %v1599 = vmul.f32 %v56, %v1595
      %v1600 = vmul.f32 %v57, %v1595
      %v1606 = vrot.slane %v1596, 1
      %v1607 = vrot.slane %v1597, 1
      %v1608 = vsel %vm92, %v1606, %v1607
      %v1609 = vrot.slane %v1598, 1
      %v1610 = vsel %vm92, %v1607, %v1609
      %v1611 = vrot.slane %v1599, 1
      %v1612 = vsel %vm92, %v1609, %v1611
      %v1613 = vrot.slane %v1600, 1
      %v1614 = vsel %vm92, %v1611, %v1613
      %v1619 = vadd.f32 %v1590, %v1608
      %v1620 = vadd.f32 %v1591, %v1610
      %v1621 = vadd.f32 %v1592, %v1612
      %v1622 = vadd.f32 %v1593, %v1614
      %s1623 = sld [smem:[#allocation3 + $0x41]]
      %v1624 = vstv %s1623
      %v1625 = vmul.f32 %v53, %v1624
      %v1626 = vmul.f32 %v54, %v1624
      %v1627 = vmul.f32 %v55, %v1624
      %v1628 = vmul.f32 %v56, %v1624
      %v1629 = vmul.f32 %v57, %v1624
      %v1635 = vrot.slane %v1625, 2
      %v1636 = vrot.slane %v1626, 2
      %v1637 = vsel %vm122, %v1635, %v1636
      %v1638 = vrot.slane %v1627, 2
      %v1639 = vsel %vm122, %v1636, %v1638
      %v1640 = vrot.slane %v1628, 2
      %v1641 = vsel %vm122, %v1638, %v1640
      %v1642 = vrot.slane %v1629, 2
      %v1643 = vsel %vm122, %v1640, %v1642
      %v1648 = vadd.f32 %v1619, %v1637
      %v1649 = vadd.f32 %v1620, %v1639
      %v1650 = vadd.f32 %v1621, %v1641
      %v1651 = vadd.f32 %v1622, %v1643
      %s1652 = sld [smem:[#allocation3 + $0x42]]
      %v1653 = vstv %s1652
      %v1654 = vmul.f32 %v61, %v1653
      %v1655 = vmul.f32 %v62, %v1653
      %v1656 = vmul.f32 %v63, %v1653
      %v1657 = vmul.f32 %v64, %v1653
      %v1658 = vadd.f32 %v1648, %v1654
      %v1659 = vadd.f32 %v1649, %v1655
      %v1660 = vadd.f32 %v1650, %v1656
      %v1661 = vadd.f32 %v1651, %v1657
      %s1662 = sld [smem:[#allocation3 + $0x43]]
      %v1663 = vstv %s1662
      %v1664 = vmul.f32 %v61, %v1663
      %v1665 = vmul.f32 %v62, %v1663
      %v1666 = vmul.f32 %v63, %v1663
      %v1667 = vmul.f32 %v64, %v1663
      %v1668 = vmul.f32 %v65, %v1663
      %v1674 = vrot.slane %v1664, 1
      %v1675 = vrot.slane %v1665, 1
      %v1676 = vsel %vm92, %v1674, %v1675
      %v1677 = vrot.slane %v1666, 1
      %v1678 = vsel %vm92, %v1675, %v1677
      %v1679 = vrot.slane %v1667, 1
      %v1680 = vsel %vm92, %v1677, %v1679
      %v1681 = vrot.slane %v1668, 1
      %v1682 = vsel %vm92, %v1679, %v1681
      %v1687 = vadd.f32 %v1658, %v1676
      %v1688 = vadd.f32 %v1659, %v1678
      %v1689 = vadd.f32 %v1660, %v1680
      %v1690 = vadd.f32 %v1661, %v1682
      %s1691 = sld [smem:[#allocation3 + $0x44]]
      %v1692 = vstv %s1691
      %v1693 = vmul.f32 %v61, %v1692
      %v1694 = vmul.f32 %v62, %v1692
      %v1695 = vmul.f32 %v63, %v1692
      %v1696 = vmul.f32 %v64, %v1692
      %v1697 = vmul.f32 %v65, %v1692
      %v1703 = vrot.slane %v1693, 2
      %v1704 = vrot.slane %v1694, 2
      %v1705 = vsel %vm122, %v1703, %v1704
      %v1706 = vrot.slane %v1695, 2
      %v1707 = vsel %vm122, %v1704, %v1706
      %v1708 = vrot.slane %v1696, 2
      %v1709 = vsel %vm122, %v1706, %v1708
      %v1710 = vrot.slane %v1697, 2
      %v1711 = vsel %vm122, %v1708, %v1710
      %v1716 = vadd.f32 %v1687, %v1705
      %v1717 = vadd.f32 %v1688, %v1707
      %v1718 = vadd.f32 %v1689, %v1709
      %v1719 = vadd.f32 %v1690, %v1711
      %s1720 = sld [smem:[#allocation3 + $0x45]]
      %v1721 = vstv %s1720
      %v1722 = vmul.f32 %v69, %v1721
      %v1723 = vmul.f32 %v70, %v1721
      %v1724 = vmul.f32 %v71, %v1721
      %v1725 = vmul.f32 %v72, %v1721
      %v1726 = vadd.f32 %v1716, %v1722
      %v1727 = vadd.f32 %v1717, %v1723
      %v1728 = vadd.f32 %v1718, %v1724
      %v1729 = vadd.f32 %v1719, %v1725
      %s1730 = sld [smem:[#allocation3 + $0x46]]
      %v1731 = vstv %s1730
      %v1732 = vmul.f32 %v69, %v1731
      %v1733 = vmul.f32 %v70, %v1731
      %v1734 = vmul.f32 %v71, %v1731
      %v1735 = vmul.f32 %v72, %v1731
      %v1736 = vmul.f32 %v73, %v1731
      %v1742 = vrot.slane %v1732, 1
      %v1743 = vrot.slane %v1733, 1
      %v1744 = vsel %vm92, %v1742, %v1743
      %v1745 = vrot.slane %v1734, 1
      %v1746 = vsel %vm92, %v1743, %v1745
      %v1747 = vrot.slane %v1735, 1
      %v1748 = vsel %vm92, %v1745, %v1747
      %v1749 = vrot.slane %v1736, 1
      %v1750 = vsel %vm92, %v1747, %v1749
      %v1755 = vadd.f32 %v1726, %v1744
      %v1756 = vadd.f32 %v1727, %v1746
      %v1757 = vadd.f32 %v1728, %v1748
      %v1758 = vadd.f32 %v1729, %v1750
      %s1759 = sld [smem:[#allocation3 + $0x47]]
      %v1760 = vstv %s1759
      %v1761 = vmul.f32 %v69, %v1760
      %v1762 = vmul.f32 %v70, %v1760
      %v1763 = vmul.f32 %v71, %v1760
      %v1764 = vmul.f32 %v72, %v1760
      %v1765 = vmul.f32 %v73, %v1760
      %v1771 = vrot.slane %v1761, 2
      %v1772 = vrot.slane %v1762, 2
      %v1773 = vsel %vm122, %v1771, %v1772
      %v1774 = vrot.slane %v1763, 2
      %v1775 = vsel %vm122, %v1772, %v1774
      %v1776 = vrot.slane %v1764, 2
      %v1777 = vsel %vm122, %v1774, %v1776
      %v1778 = vrot.slane %v1765, 2
      %v1779 = vsel %vm122, %v1776, %v1778
      %v1784 = vadd.f32 %v1755, %v1773
      %v1785 = vadd.f32 %v1756, %v1775
      %v1786 = vadd.f32 %v1757, %v1777
      %v1787 = vadd.f32 %v1758, %v1779
      %s1788 = sld [smem:[#allocation5 + $0x7]]
      %v1789 = vstv %s1788
      %v1790 = vadd.f32 %v1784, %v1789
      %v1791 = vadd.f32 %v1785, %v1789
      %v1792 = vadd.f32 %v1786, %v1789
      %v1793 = vadd.f32 %v1787, %v1789
      %v1794 = vmax.f32 %v1790, 0.0
      %v1795 = vmax.f32 %v1791, 0.0
      %v1796 = vmax.f32 %v1792, 0.0
      %v1797 = vmax.f32 %v1793, 0.0
      %s1798 = sadd.s32 %s286, 7168
      %s1799 = scalar_lea.vmem [#allocation2], %s1798
      %1800 = vst [vmem:[%s1799] sm:$0xff] %v1794
      %1801 = vst [vmem:[%s1799 + $0x8] sm:$0xff] %v1795
      %1802 = vst [vmem:[%s1799 + $0x10] sm:$0xff] %v1796
      %1803 = vst [vmem:[%s1799 + $0x18] sm:$0xff] %v1797
      %s1804 = sld [smem:[#allocation3 + $0x48]]
      %v1805 = vstv %s1804
      %v1806 = vmul.f32 %v53, %v1805
      %v1807 = vmul.f32 %v54, %v1805
      %v1808 = vmul.f32 %v55, %v1805
      %v1809 = vmul.f32 %v56, %v1805
      %s1810 = sld [smem:[#allocation3 + $0x49]]
      %v1811 = vstv %s1810
      %v1812 = vmul.f32 %v53, %v1811
      %v1813 = vmul.f32 %v54, %v1811
      %v1814 = vmul.f32 %v55, %v1811
      %v1815 = vmul.f32 %v56, %v1811
      %v1816 = vmul.f32 %v57, %v1811
      %v1822 = vrot.slane %v1812, 1
      %v1823 = vrot.slane %v1813, 1
      %v1824 = vsel %vm92, %v1822, %v1823
      %v1825 = vrot.slane %v1814, 1
      %v1826 = vsel %vm92, %v1823, %v1825
      %v1827 = vrot.slane %v1815, 1
      %v1828 = vsel %vm92, %v1825, %v1827
      %v1829 = vrot.slane %v1816, 1
      %v1830 = vsel %vm92, %v1827, %v1829
      %v1835 = vadd.f32 %v1806, %v1824
      %v1836 = vadd.f32 %v1807, %v1826
      %v1837 = vadd.f32 %v1808, %v1828
      %v1838 = vadd.f32 %v1809, %v1830
      %s1839 = sld [smem:[#allocation3 + $0x4a]]
      %v1840 = vstv %s1839
      %v1841 = vmul.f32 %v53, %v1840
      %v1842 = vmul.f32 %v54, %v1840
      %v1843 = vmul.f32 %v55, %v1840
      %v1844 = vmul.f32 %v56, %v1840
      %v1845 = vmul.f32 %v57, %v1840
      %v1851 = vrot.slane %v1841, 2
      %v1852 = vrot.slane %v1842, 2
      %v1853 = vsel %vm122, %v1851, %v1852
      %v1854 = vrot.slane %v1843, 2
      %v1855 = vsel %vm122, %v1852, %v1854
      %v1856 = vrot.slane %v1844, 2
      %v1857 = vsel %vm122, %v1854, %v1856
      %v1858 = vrot.slane %v1845, 2
      %v1859 = vsel %vm122, %v1856, %v1858
      %v1864 = vadd.f32 %v1835, %v1853
      %v1865 = vadd.f32 %v1836, %v1855
      %v1866 = vadd.f32 %v1837, %v1857
      %v1867 = vadd.f32 %v1838, %v1859
      %s1868 = sld [smem:[#allocation3 + $0x4b]]
      %v1869 = vstv %s1868
      %v1870 = vmul.f32 %v61, %v1869
      %v1871 = vmul.f32 %v62, %v1869
      %v1872 = vmul.f32 %v63, %v1869
      %v1873 = vmul.f32 %v64, %v1869
      %v1874 = vadd.f32 %v1864, %v1870
      %v1875 = vadd.f32 %v1865, %v1871
      %v1876 = vadd.f32 %v1866, %v1872
      %v1877 = vadd.f32 %v1867, %v1873
      %s1878 = sld [smem:[#allocation3 + $0x4c]]
      %v1879 = vstv %s1878
      %v1880 = vmul.f32 %v61, %v1879
      %v1881 = vmul.f32 %v62, %v1879
      %v1882 = vmul.f32 %v63, %v1879
      %v1883 = vmul.f32 %v64, %v1879
      %v1884 = vmul.f32 %v65, %v1879
      %v1890 = vrot.slane %v1880, 1
      %v1891 = vrot.slane %v1881, 1
      %v1892 = vsel %vm92, %v1890, %v1891
      %v1893 = vrot.slane %v1882, 1
      %v1894 = vsel %vm92, %v1891, %v1893
      %v1895 = vrot.slane %v1883, 1
      %v1896 = vsel %vm92, %v1893, %v1895
      %v1897 = vrot.slane %v1884, 1
      %v1898 = vsel %vm92, %v1895, %v1897
      %v1903 = vadd.f32 %v1874, %v1892
      %v1904 = vadd.f32 %v1875, %v1894
      %v1905 = vadd.f32 %v1876, %v1896
      %v1906 = vadd.f32 %v1877, %v1898
      %s1907 = sld [smem:[#allocation3 + $0x4d]]
      %v1908 = vstv %s1907
      %v1909 = vmul.f32 %v61, %v1908
      %v1910 = vmul.f32 %v62, %v1908
      %v1911 = vmul.f32 %v63, %v1908
      %v1912 = vmul.f32 %v64, %v1908
      %v1913 = vmul.f32 %v65, %v1908
      %v1919 = vrot.slane %v1909, 2
      %v1920 = vrot.slane %v1910, 2
      %v1921 = vsel %vm122, %v1919, %v1920
      %v1922 = vrot.slane %v1911, 2
      %v1923 = vsel %vm122, %v1920, %v1922
      %v1924 = vrot.slane %v1912, 2
      %v1925 = vsel %vm122, %v1922, %v1924
      %v1926 = vrot.slane %v1913, 2
      %v1927 = vsel %vm122, %v1924, %v1926
      %v1932 = vadd.f32 %v1903, %v1921
      %v1933 = vadd.f32 %v1904, %v1923
      %v1934 = vadd.f32 %v1905, %v1925
      %v1935 = vadd.f32 %v1906, %v1927
      %s1936 = sld [smem:[#allocation3 + $0x4e]]
      %v1937 = vstv %s1936
      %v1938 = vmul.f32 %v69, %v1937
      %v1939 = vmul.f32 %v70, %v1937
      %v1940 = vmul.f32 %v71, %v1937
      %v1941 = vmul.f32 %v72, %v1937
      %v1942 = vadd.f32 %v1932, %v1938
      %v1943 = vadd.f32 %v1933, %v1939
      %v1944 = vadd.f32 %v1934, %v1940
      %v1945 = vadd.f32 %v1935, %v1941
      %s1946 = sld [smem:[#allocation3 + $0x4f]]
      %v1947 = vstv %s1946
      %v1948 = vmul.f32 %v69, %v1947
      %v1949 = vmul.f32 %v70, %v1947
      %v1950 = vmul.f32 %v71, %v1947
      %v1951 = vmul.f32 %v72, %v1947
      %v1952 = vmul.f32 %v73, %v1947
      %v1958 = vrot.slane %v1948, 1
      %v1959 = vrot.slane %v1949, 1
      %v1960 = vsel %vm92, %v1958, %v1959
      %v1961 = vrot.slane %v1950, 1
      %v1962 = vsel %vm92, %v1959, %v1961
      %v1963 = vrot.slane %v1951, 1
      %v1964 = vsel %vm92, %v1961, %v1963
      %v1965 = vrot.slane %v1952, 1
      %v1966 = vsel %vm92, %v1963, %v1965
      %v1971 = vadd.f32 %v1942, %v1960
      %v1972 = vadd.f32 %v1943, %v1962
      %v1973 = vadd.f32 %v1944, %v1964
      %v1974 = vadd.f32 %v1945, %v1966
      %s1975 = sld [smem:[#allocation3 + $0x50]]
      %v1976 = vstv %s1975
      %v1977 = vmul.f32 %v69, %v1976
      %v1978 = vmul.f32 %v70, %v1976
      %v1979 = vmul.f32 %v71, %v1976
      %v1980 = vmul.f32 %v72, %v1976
      %v1981 = vmul.f32 %v73, %v1976
      %v1987 = vrot.slane %v1977, 2
      %v1988 = vrot.slane %v1978, 2
      %v1989 = vsel %vm122, %v1987, %v1988
      %v1990 = vrot.slane %v1979, 2
      %v1991 = vsel %vm122, %v1988, %v1990
      %v1992 = vrot.slane %v1980, 2
      %v1993 = vsel %vm122, %v1990, %v1992
      %v1994 = vrot.slane %v1981, 2
      %v1995 = vsel %vm122, %v1992, %v1994
      %v2000 = vadd.f32 %v1971, %v1989
      %v2001 = vadd.f32 %v1972, %v1991
      %v2002 = vadd.f32 %v1973, %v1993
      %v2003 = vadd.f32 %v1974, %v1995
      %s2004 = sld [smem:[#allocation5 + $0x8]]
      %v2005 = vstv %s2004
      %v2006 = vadd.f32 %v2000, %v2005
      %v2007 = vadd.f32 %v2001, %v2005
      %v2008 = vadd.f32 %v2002, %v2005
      %v2009 = vadd.f32 %v2003, %v2005
      %v2010 = vmax.f32 %v2006, 0.0
      %v2011 = vmax.f32 %v2007, 0.0
      %v2012 = vmax.f32 %v2008, 0.0
      %v2013 = vmax.f32 %v2009, 0.0
      %s2014 = sadd.s32 %s286, 8192
      %s2015 = scalar_lea.vmem [#allocation2], %s2014
      %2016 = vst [vmem:[%s2015] sm:$0xff] %v2010
      %2017 = vst [vmem:[%s2015 + $0x8] sm:$0xff] %v2011
      %2018 = vst [vmem:[%s2015 + $0x10] sm:$0xff] %v2012
      %2019 = vst [vmem:[%s2015 + $0x18] sm:$0xff] %v2013
      %s2020 = sld [smem:[#allocation3 + $0x51]]
      %v2021 = vstv %s2020
      %v2022 = vmul.f32 %v53, %v2021
      %v2023 = vmul.f32 %v54, %v2021
      %v2024 = vmul.f32 %v55, %v2021
      %v2025 = vmul.f32 %v56, %v2021
      %s2026 = sld [smem:[#allocation3 + $0x52]]
      %v2027 = vstv %s2026
      %v2028 = vmul.f32 %v53, %v2027
      %v2029 = vmul.f32 %v54, %v2027
      %v2030 = vmul.f32 %v55, %v2027
      %v2031 = vmul.f32 %v56, %v2027
      %v2032 = vmul.f32 %v57, %v2027
      %v2038 = vrot.slane %v2028, 1
      %v2039 = vrot.slane %v2029, 1
      %v2040 = vsel %vm92, %v2038, %v2039
      %v2041 = vrot.slane %v2030, 1
      %v2042 = vsel %vm92, %v2039, %v2041
      %v2043 = vrot.slane %v2031, 1
      %v2044 = vsel %vm92, %v2041, %v2043
      %v2045 = vrot.slane %v2032, 1
      %v2046 = vsel %vm92, %v2043, %v2045
      %v2051 = vadd.f32 %v2022, %v2040
      %v2052 = vadd.f32 %v2023, %v2042
      %v2053 = vadd.f32 %v2024, %v2044
      %v2054 = vadd.f32 %v2025, %v2046
      %s2055 = sld [smem:[#allocation3 + $0x53]]
      %v2056 = vstv %s2055
      %v2057 = vmul.f32 %v53, %v2056
      %v2058 = vmul.f32 %v54, %v2056
      %v2059 = vmul.f32 %v55, %v2056
      %v2060 = vmul.f32 %v56, %v2056
      %v2061 = vmul.f32 %v57, %v2056
      %v2067 = vrot.slane %v2057, 2
      %v2068 = vrot.slane %v2058, 2
      %v2069 = vsel %vm122, %v2067, %v2068
      %v2070 = vrot.slane %v2059, 2
      %v2071 = vsel %vm122, %v2068, %v2070
      %v2072 = vrot.slane %v2060, 2
      %v2073 = vsel %vm122, %v2070, %v2072
      %v2074 = vrot.slane %v2061, 2
      %v2075 = vsel %vm122, %v2072, %v2074
      %v2080 = vadd.f32 %v2051, %v2069
      %v2081 = vadd.f32 %v2052, %v2071
      %v2082 = vadd.f32 %v2053, %v2073
      %v2083 = vadd.f32 %v2054, %v2075
      %s2084 = sld [smem:[#allocation3 + $0x54]]
      %v2085 = vstv %s2084
      %v2086 = vmul.f32 %v61, %v2085
      %v2087 = vmul.f32 %v62, %v2085
      %v2088 = vmul.f32 %v63, %v2085
      %v2089 = vmul.f32 %v64, %v2085
      %v2090 = vadd.f32 %v2080, %v2086
      %v2091 = vadd.f32 %v2081, %v2087
      %v2092 = vadd.f32 %v2082, %v2088
      %v2093 = vadd.f32 %v2083, %v2089
      %s2094 = sld [smem:[#allocation3 + $0x55]]
      %v2095 = vstv %s2094
      %v2096 = vmul.f32 %v61, %v2095
      %v2097 = vmul.f32 %v62, %v2095
      %v2098 = vmul.f32 %v63, %v2095
      %v2099 = vmul.f32 %v64, %v2095
      %v2100 = vmul.f32 %v65, %v2095
      %v2106 = vrot.slane %v2096, 1
      %v2107 = vrot.slane %v2097, 1
      %v2108 = vsel %vm92, %v2106, %v2107
      %v2109 = vrot.slane %v2098, 1
      %v2110 = vsel %vm92, %v2107, %v2109
      %v2111 = vrot.slane %v2099, 1
      %v2112 = vsel %vm92, %v2109, %v2111
      %v2113 = vrot.slane %v2100, 1
      %v2114 = vsel %vm92, %v2111, %v2113
      %v2119 = vadd.f32 %v2090, %v2108
      %v2120 = vadd.f32 %v2091, %v2110
      %v2121 = vadd.f32 %v2092, %v2112
      %v2122 = vadd.f32 %v2093, %v2114
      %s2123 = sld [smem:[#allocation3 + $0x56]]
      %v2124 = vstv %s2123
      %v2125 = vmul.f32 %v61, %v2124
      %v2126 = vmul.f32 %v62, %v2124
      %v2127 = vmul.f32 %v63, %v2124
      %v2128 = vmul.f32 %v64, %v2124
      %v2129 = vmul.f32 %v65, %v2124
      %v2135 = vrot.slane %v2125, 2
      %v2136 = vrot.slane %v2126, 2
      %v2137 = vsel %vm122, %v2135, %v2136
      %v2138 = vrot.slane %v2127, 2
      %v2139 = vsel %vm122, %v2136, %v2138
      %v2140 = vrot.slane %v2128, 2
      %v2141 = vsel %vm122, %v2138, %v2140
      %v2142 = vrot.slane %v2129, 2
      %v2143 = vsel %vm122, %v2140, %v2142
      %v2148 = vadd.f32 %v2119, %v2137
      %v2149 = vadd.f32 %v2120, %v2139
      %v2150 = vadd.f32 %v2121, %v2141
      %v2151 = vadd.f32 %v2122, %v2143
      %s2152 = sld [smem:[#allocation3 + $0x57]]
      %v2153 = vstv %s2152
      %v2154 = vmul.f32 %v69, %v2153
      %v2155 = vmul.f32 %v70, %v2153
      %v2156 = vmul.f32 %v71, %v2153
      %v2157 = vmul.f32 %v72, %v2153
      %v2158 = vadd.f32 %v2148, %v2154
      %v2159 = vadd.f32 %v2149, %v2155
      %v2160 = vadd.f32 %v2150, %v2156
      %v2161 = vadd.f32 %v2151, %v2157
      %s2162 = sld [smem:[#allocation3 + $0x58]]
      %v2163 = vstv %s2162
      %v2164 = vmul.f32 %v69, %v2163
      %v2165 = vmul.f32 %v70, %v2163
      %v2166 = vmul.f32 %v71, %v2163
      %v2167 = vmul.f32 %v72, %v2163
      %v2168 = vmul.f32 %v73, %v2163
      %v2174 = vrot.slane %v2164, 1
      %v2175 = vrot.slane %v2165, 1
      %v2176 = vsel %vm92, %v2174, %v2175
      %v2177 = vrot.slane %v2166, 1
      %v2178 = vsel %vm92, %v2175, %v2177
      %v2179 = vrot.slane %v2167, 1
      %v2180 = vsel %vm92, %v2177, %v2179
      %v2181 = vrot.slane %v2168, 1
      %v2182 = vsel %vm92, %v2179, %v2181
      %v2187 = vadd.f32 %v2158, %v2176
      %v2188 = vadd.f32 %v2159, %v2178
      %v2189 = vadd.f32 %v2160, %v2180
      %v2190 = vadd.f32 %v2161, %v2182
      %s2191 = sld [smem:[#allocation3 + $0x59]]
      %v2192 = vstv %s2191
      %v2193 = vmul.f32 %v69, %v2192
      %v2194 = vmul.f32 %v70, %v2192
      %v2195 = vmul.f32 %v71, %v2192
      %v2196 = vmul.f32 %v72, %v2192
      %v2197 = vmul.f32 %v73, %v2192
      %v2203 = vrot.slane %v2193, 2
      %v2204 = vrot.slane %v2194, 2
      %v2205 = vsel %vm122, %v2203, %v2204
      %v2206 = vrot.slane %v2195, 2
      %v2207 = vsel %vm122, %v2204, %v2206
      %v2208 = vrot.slane %v2196, 2
      %v2209 = vsel %vm122, %v2206, %v2208
      %v2210 = vrot.slane %v2197, 2
      %v2211 = vsel %vm122, %v2208, %v2210
      %v2216 = vadd.f32 %v2187, %v2205
      %v2217 = vadd.f32 %v2188, %v2207
      %v2218 = vadd.f32 %v2189, %v2209
      %v2219 = vadd.f32 %v2190, %v2211
      %s2220 = sld [smem:[#allocation5 + $0x9]]
      %v2221 = vstv %s2220
      %v2222 = vadd.f32 %v2216, %v2221
      %v2223 = vadd.f32 %v2217, %v2221
      %v2224 = vadd.f32 %v2218, %v2221
      %v2225 = vadd.f32 %v2219, %v2221
      %v2226 = vmax.f32 %v2222, 0.0
      %v2227 = vmax.f32 %v2223, 0.0
      %v2228 = vmax.f32 %v2224, 0.0
      %v2229 = vmax.f32 %v2225, 0.0
      %s2230 = sadd.s32 %s286, 9216
      %s2231 = scalar_lea.vmem [#allocation2], %s2230
      %2232 = vst [vmem:[%s2231] sm:$0xff] %v2226
      %2233 = vst [vmem:[%s2231 + $0x8] sm:$0xff] %v2227
      %2234 = vst [vmem:[%s2231 + $0x10] sm:$0xff] %v2228
      %2235 = vst [vmem:[%s2231 + $0x18] sm:$0xff] %v2229
      %s2236 = sld [smem:[#allocation3 + $0x5a]]
      %v2237 = vstv %s2236
      %v2238 = vmul.f32 %v53, %v2237
      %v2239 = vmul.f32 %v54, %v2237
      %v2240 = vmul.f32 %v55, %v2237
      %v2241 = vmul.f32 %v56, %v2237
      %s2242 = sld [smem:[#allocation3 + $0x5b]]
      %v2243 = vstv %s2242
      %v2244 = vmul.f32 %v53, %v2243
      %v2245 = vmul.f32 %v54, %v2243
      %v2246 = vmul.f32 %v55, %v2243
      %v2247 = vmul.f32 %v56, %v2243
      %v2248 = vmul.f32 %v57, %v2243
      %v2254 = vrot.slane %v2244, 1
      %v2255 = vrot.slane %v2245, 1
      %v2256 = vsel %vm92, %v2254, %v2255
      %v2257 = vrot.slane %v2246, 1
      %v2258 = vsel %vm92, %v2255, %v2257
      %v2259 = vrot.slane %v2247, 1
      %v2260 = vsel %vm92, %v2257, %v2259
      %v2261 = vrot.slane %v2248, 1
      %v2262 = vsel %vm92, %v2259, %v2261
      %v2267 = vadd.f32 %v2238, %v2256
      %v2268 = vadd.f32 %v2239, %v2258
      %v2269 = vadd.f32 %v2240, %v2260
      %v2270 = vadd.f32 %v2241, %v2262
      %s2271 = sld [smem:[#allocation3 + $0x5c]]
      %v2272 = vstv %s2271
      %v2273 = vmul.f32 %v53, %v2272
      %v2274 = vmul.f32 %v54, %v2272
      %v2275 = vmul.f32 %v55, %v2272
      %v2276 = vmul.f32 %v56, %v2272
      %v2277 = vmul.f32 %v57, %v2272
      %v2283 = vrot.slane %v2273, 2
      %v2284 = vrot.slane %v2274, 2
      %v2285 = vsel %vm122, %v2283, %v2284
      %v2286 = vrot.slane %v2275, 2
      %v2287 = vsel %vm122, %v2284, %v2286
      %v2288 = vrot.slane %v2276, 2
      %v2289 = vsel %vm122, %v2286, %v2288
      %v2290 = vrot.slane %v2277, 2
      %v2291 = vsel %vm122, %v2288, %v2290
      %v2296 = vadd.f32 %v2267, %v2285
      %v2297 = vadd.f32 %v2268, %v2287
      %v2298 = vadd.f32 %v2269, %v2289
      %v2299 = vadd.f32 %v2270, %v2291
      %s2300 = sld [smem:[#allocation3 + $0x5d]]
      %v2301 = vstv %s2300
      %v2302 = vmul.f32 %v61, %v2301
      %v2303 = vmul.f32 %v62, %v2301
      %v2304 = vmul.f32 %v63, %v2301
      %v2305 = vmul.f32 %v64, %v2301
      %v2306 = vadd.f32 %v2296, %v2302
      %v2307 = vadd.f32 %v2297, %v2303
      %v2308 = vadd.f32 %v2298, %v2304
      %v2309 = vadd.f32 %v2299, %v2305
      %s2310 = sld [smem:[#allocation3 + $0x5e]]
      %v2311 = vstv %s2310
      %v2312 = vmul.f32 %v61, %v2311
      %v2313 = vmul.f32 %v62, %v2311
      %v2314 = vmul.f32 %v63, %v2311
      %v2315 = vmul.f32 %v64, %v2311
      %v2316 = vmul.f32 %v65, %v2311
      %v2322 = vrot.slane %v2312, 1
      %v2323 = vrot.slane %v2313, 1
      %v2324 = vsel %vm92, %v2322, %v2323
      %v2325 = vrot.slane %v2314, 1
      %v2326 = vsel %vm92, %v2323, %v2325
      %v2327 = vrot.slane %v2315, 1
      %v2328 = vsel %vm92, %v2325, %v2327
      %v2329 = vrot.slane %v2316, 1
      %v2330 = vsel %vm92, %v2327, %v2329
      %v2335 = vadd.f32 %v2306, %v2324
      %v2336 = vadd.f32 %v2307, %v2326
      %v2337 = vadd.f32 %v2308, %v2328
      %v2338 = vadd.f32 %v2309, %v2330
      %s2339 = sld [smem:[#allocation3 + $0x5f]]
      %v2340 = vstv %s2339
      %v2341 = vmul.f32 %v61, %v2340
      %v2342 = vmul.f32 %v62, %v2340
      %v2343 = vmul.f32 %v63, %v2340
      %v2344 = vmul.f32 %v64, %v2340
      %v2345 = vmul.f32 %v65, %v2340
      %v2351 = vrot.slane %v2341, 2
      %v2352 = vrot.slane %v2342, 2
      %v2353 = vsel %vm122, %v2351, %v2352
      %v2354 = vrot.slane %v2343, 2
      %v2355 = vsel %vm122, %v2352, %v2354
      %v2356 = vrot.slane %v2344, 2
      %v2357 = vsel %vm122, %v2354, %v2356
      %v2358 = vrot.slane %v2345, 2
      %v2359 = vsel %vm122, %v2356, %v2358
      %v2364 = vadd.f32 %v2335, %v2353
      %v2365 = vadd.f32 %v2336, %v2355
      %v2366 = vadd.f32 %v2337, %v2357
      %v2367 = vadd.f32 %v2338, %v2359
      %s2368 = sld [smem:[#allocation3 + $0x60]]
      %v2369 = vstv %s2368
      %v2370 = vmul.f32 %v69, %v2369
      %v2371 = vmul.f32 %v70, %v2369
      %v2372 = vmul.f32 %v71, %v2369
      %v2373 = vmul.f32 %v72, %v2369
      %v2374 = vadd.f32 %v2364, %v2370
      %v2375 = vadd.f32 %v2365, %v2371
      %v2376 = vadd.f32 %v2366, %v2372
      %v2377 = vadd.f32 %v2367, %v2373
      %s2378 = sld [smem:[#allocation3 + $0x61]]
      %v2379 = vstv %s2378
      %v2380 = vmul.f32 %v69, %v2379
      %v2381 = vmul.f32 %v70, %v2379
      %v2382 = vmul.f32 %v71, %v2379
      %v2383 = vmul.f32 %v72, %v2379
      %v2384 = vmul.f32 %v73, %v2379
      %v2390 = vrot.slane %v2380, 1
      %v2391 = vrot.slane %v2381, 1
      %v2392 = vsel %vm92, %v2390, %v2391
      %v2393 = vrot.slane %v2382, 1
      %v2394 = vsel %vm92, %v2391, %v2393
      %v2395 = vrot.slane %v2383, 1
      %v2396 = vsel %vm92, %v2393, %v2395
      %v2397 = vrot.slane %v2384, 1
      %v2398 = vsel %vm92, %v2395, %v2397
      %v2403 = vadd.f32 %v2374, %v2392
      %v2404 = vadd.f32 %v2375, %v2394
      %v2405 = vadd.f32 %v2376, %v2396
      %v2406 = vadd.f32 %v2377, %v2398
      %s2407 = sld [smem:[#allocation3 + $0x62]]
      %v2408 = vstv %s2407
      %v2409 = vmul.f32 %v69, %v2408
      %v2410 = vmul.f32 %v70, %v2408
      %v2411 = vmul.f32 %v71, %v2408
      %v2412 = vmul.f32 %v72, %v2408
      %v2413 = vmul.f32 %v73, %v2408
      %v2419 = vrot.slane %v2409, 2
      %v2420 = vrot.slane %v2410, 2
      %v2421 = vsel %vm122, %v2419, %v2420
      %v2422 = vrot.slane %v2411, 2
      %v2423 = vsel %vm122, %v2420, %v2422
      %v2424 = vrot.slane %v2412, 2
      %v2425 = vsel %vm122, %v2422, %v2424
      %v2426 = vrot.slane %v2413, 2
      %v2427 = vsel %vm122, %v2424, %v2426
      %v2432 = vadd.f32 %v2403, %v2421
      %v2433 = vadd.f32 %v2404, %v2423
      %v2434 = vadd.f32 %v2405, %v2425
      %v2435 = vadd.f32 %v2406, %v2427
      %s2436 = sld [smem:[#allocation5 + $0xa]]
      %v2437 = vstv %s2436
      %v2438 = vadd.f32 %v2432, %v2437
      %v2439 = vadd.f32 %v2433, %v2437
      %v2440 = vadd.f32 %v2434, %v2437
      %v2441 = vadd.f32 %v2435, %v2437
      %v2442 = vmax.f32 %v2438, 0.0
      %v2443 = vmax.f32 %v2439, 0.0
      %v2444 = vmax.f32 %v2440, 0.0
      %v2445 = vmax.f32 %v2441, 0.0
      %s2446 = sadd.s32 %s286, 10240
      %s2447 = scalar_lea.vmem [#allocation2], %s2446
      %2448 = vst [vmem:[%s2447] sm:$0xff] %v2442
      %2449 = vst [vmem:[%s2447 + $0x8] sm:$0xff] %v2443
      %2450 = vst [vmem:[%s2447 + $0x10] sm:$0xff] %v2444
      %2451 = vst [vmem:[%s2447 + $0x18] sm:$0xff] %v2445
      %s2452 = sld [smem:[#allocation3 + $0x63]]
      %v2453 = vstv %s2452
      %v2454 = vmul.f32 %v53, %v2453
      %v2455 = vmul.f32 %v54, %v2453
      %v2456 = vmul.f32 %v55, %v2453
      %v2457 = vmul.f32 %v56, %v2453
      %s2458 = sld [smem:[#allocation3 + $0x64]]
      %v2459 = vstv %s2458
      %v2460 = vmul.f32 %v53, %v2459
      %v2461 = vmul.f32 %v54, %v2459
      %v2462 = vmul.f32 %v55, %v2459
      %v2463 = vmul.f32 %v56, %v2459
      %v2464 = vmul.f32 %v57, %v2459
      %v2470 = vrot.slane %v2460, 1
      %v2471 = vrot.slane %v2461, 1
      %v2472 = vsel %vm92, %v2470, %v2471
      %v2473 = vrot.slane %v2462, 1
      %v2474 = vsel %vm92, %v2471, %v2473
      %v2475 = vrot.slane %v2463, 1
      %v2476 = vsel %vm92, %v2473, %v2475
      %v2477 = vrot.slane %v2464, 1
      %v2478 = vsel %vm92, %v2475, %v2477
      %v2483 = vadd.f32 %v2454, %v2472
      %v2484 = vadd.f32 %v2455, %v2474
      %v2485 = vadd.f32 %v2456, %v2476
      %v2486 = vadd.f32 %v2457, %v2478
      %s2487 = sld [smem:[#allocation3 + $0x65]]
      %v2488 = vstv %s2487
      %v2489 = vmul.f32 %v53, %v2488
      %v2490 = vmul.f32 %v54, %v2488
      %v2491 = vmul.f32 %v55, %v2488
      %v2492 = vmul.f32 %v56, %v2488
      %v2493 = vmul.f32 %v57, %v2488
      %v2499 = vrot.slane %v2489, 2
      %v2500 = vrot.slane %v2490, 2
      %v2501 = vsel %vm122, %v2499, %v2500
      %v2502 = vrot.slane %v2491, 2
      %v2503 = vsel %vm122, %v2500, %v2502
      %v2504 = vrot.slane %v2492, 2
      %v2505 = vsel %vm122, %v2502, %v2504
      %v2506 = vrot.slane %v2493, 2
      %v2507 = vsel %vm122, %v2504, %v2506
      %v2512 = vadd.f32 %v2483, %v2501
      %v2513 = vadd.f32 %v2484, %v2503
      %v2514 = vadd.f32 %v2485, %v2505
      %v2515 = vadd.f32 %v2486, %v2507
      %s2516 = sld [smem:[#allocation3 + $0x66]]
      %v2517 = vstv %s2516
      %v2518 = vmul.f32 %v61, %v2517
      %v2519 = vmul.f32 %v62, %v2517
      %v2520 = vmul.f32 %v63, %v2517
      %v2521 = vmul.f32 %v64, %v2517
      %v2522 = vadd.f32 %v2512, %v2518
      %v2523 = vadd.f32 %v2513, %v2519
      %v2524 = vadd.f32 %v2514, %v2520
      %v2525 = vadd.f32 %v2515, %v2521
      %s2526 = sld [smem:[#allocation3 + $0x67]]
      %v2527 = vstv %s2526
      %v2528 = vmul.f32 %v61, %v2527
      %v2529 = vmul.f32 %v62, %v2527
      %v2530 = vmul.f32 %v63, %v2527
      %v2531 = vmul.f32 %v64, %v2527
      %v2532 = vmul.f32 %v65, %v2527
      %v2538 = vrot.slane %v2528, 1
      %v2539 = vrot.slane %v2529, 1
      %v2540 = vsel %vm92, %v2538, %v2539
      %v2541 = vrot.slane %v2530, 1
      %v2542 = vsel %vm92, %v2539, %v2541
      %v2543 = vrot.slane %v2531, 1
      %v2544 = vsel %vm92, %v2541, %v2543
      %v2545 = vrot.slane %v2532, 1
      %v2546 = vsel %vm92, %v2543, %v2545
      %v2551 = vadd.f32 %v2522, %v2540
      %v2552 = vadd.f32 %v2523, %v2542
      %v2553 = vadd.f32 %v2524, %v2544
      %v2554 = vadd.f32 %v2525, %v2546
      %s2555 = sld [smem:[#allocation3 + $0x68]]
      %v2556 = vstv %s2555
      %v2557 = vmul.f32 %v61, %v2556
      %v2558 = vmul.f32 %v62, %v2556
      %v2559 = vmul.f32 %v63, %v2556
      %v2560 = vmul.f32 %v64, %v2556
      %v2561 = vmul.f32 %v65, %v2556
      %v2567 = vrot.slane %v2557, 2
      %v2568 = vrot.slane %v2558, 2
      %v2569 = vsel %vm122, %v2567, %v2568
      %v2570 = vrot.slane %v2559, 2
      %v2571 = vsel %vm122, %v2568, %v2570
      %v2572 = vrot.slane %v2560, 2
      %v2573 = vsel %vm122, %v2570, %v2572
      %v2574 = vrot.slane %v2561, 2
      %v2575 = vsel %vm122, %v2572, %v2574
      %v2580 = vadd.f32 %v2551, %v2569
      %v2581 = vadd.f32 %v2552, %v2571
      %v2582 = vadd.f32 %v2553, %v2573
      %v2583 = vadd.f32 %v2554, %v2575
      %s2584 = sld [smem:[#allocation3 + $0x69]]
      %v2585 = vstv %s2584
      %v2586 = vmul.f32 %v69, %v2585
      %v2587 = vmul.f32 %v70, %v2585
      %v2588 = vmul.f32 %v71, %v2585
      %v2589 = vmul.f32 %v72, %v2585
      %v2590 = vadd.f32 %v2580, %v2586
      %v2591 = vadd.f32 %v2581, %v2587
      %v2592 = vadd.f32 %v2582, %v2588
      %v2593 = vadd.f32 %v2583, %v2589
      %s2594 = sld [smem:[#allocation3 + $0x6a]]
      %v2595 = vstv %s2594
      %v2596 = vmul.f32 %v69, %v2595
      %v2597 = vmul.f32 %v70, %v2595
      %v2598 = vmul.f32 %v71, %v2595
      %v2599 = vmul.f32 %v72, %v2595
      %v2600 = vmul.f32 %v73, %v2595
      %v2606 = vrot.slane %v2596, 1
      %v2607 = vrot.slane %v2597, 1
      %v2608 = vsel %vm92, %v2606, %v2607
      %v2609 = vrot.slane %v2598, 1
      %v2610 = vsel %vm92, %v2607, %v2609
      %v2611 = vrot.slane %v2599, 1
      %v2612 = vsel %vm92, %v2609, %v2611
      %v2613 = vrot.slane %v2600, 1
      %v2614 = vsel %vm92, %v2611, %v2613
      %v2619 = vadd.f32 %v2590, %v2608
      %v2620 = vadd.f32 %v2591, %v2610
      %v2621 = vadd.f32 %v2592, %v2612
      %v2622 = vadd.f32 %v2593, %v2614
      %s2623 = sld [smem:[#allocation3 + $0x6b]]
      %v2624 = vstv %s2623
      %v2625 = vmul.f32 %v69, %v2624
      %v2626 = vmul.f32 %v70, %v2624
      %v2627 = vmul.f32 %v71, %v2624
      %v2628 = vmul.f32 %v72, %v2624
      %v2629 = vmul.f32 %v73, %v2624
      %v2635 = vrot.slane %v2625, 2
      %v2636 = vrot.slane %v2626, 2
      %v2637 = vsel %vm122, %v2635, %v2636
      %v2638 = vrot.slane %v2627, 2
      %v2639 = vsel %vm122, %v2636, %v2638
      %v2640 = vrot.slane %v2628, 2
      %v2641 = vsel %vm122, %v2638, %v2640
      %v2642 = vrot.slane %v2629, 2
      %v2643 = vsel %vm122, %v2640, %v2642
      %v2648 = vadd.f32 %v2619, %v2637
      %v2649 = vadd.f32 %v2620, %v2639
      %v2650 = vadd.f32 %v2621, %v2641
      %v2651 = vadd.f32 %v2622, %v2643
      %s2652 = sld [smem:[#allocation5 + $0xb]]
      %v2653 = vstv %s2652
      %v2654 = vadd.f32 %v2648, %v2653
      %v2655 = vadd.f32 %v2649, %v2653
      %v2656 = vadd.f32 %v2650, %v2653
      %v2657 = vadd.f32 %v2651, %v2653
      %v2658 = vmax.f32 %v2654, 0.0
      %v2659 = vmax.f32 %v2655, 0.0
      %v2660 = vmax.f32 %v2656, 0.0
      %v2661 = vmax.f32 %v2657, 0.0
      %s2662 = sadd.s32 %s286, 11264
      %s2663 = scalar_lea.vmem [#allocation2], %s2662
      %2664 = vst [vmem:[%s2663] sm:$0xff] %v2658
      %2665 = vst [vmem:[%s2663 + $0x8] sm:$0xff] %v2659
      %2666 = vst [vmem:[%s2663 + $0x10] sm:$0xff] %v2660
      %2667 = vst [vmem:[%s2663 + $0x18] sm:$0xff] %v2661
      %s2668 = sld [smem:[#allocation3 + $0x6c]]
      %v2669 = vstv %s2668
      %v2670 = vmul.f32 %v53, %v2669
      %v2671 = vmul.f32 %v54, %v2669
      %v2672 = vmul.f32 %v55, %v2669
      %v2673 = vmul.f32 %v56, %v2669
      %s2674 = sld [smem:[#allocation3 + $0x6d]]
      %v2675 = vstv %s2674
      %v2676 = vmul.f32 %v53, %v2675
      %v2677 = vmul.f32 %v54, %v2675
      %v2678 = vmul.f32 %v55, %v2675
      %v2679 = vmul.f32 %v56, %v2675
      %v2680 = vmul.f32 %v57, %v2675
      %v2686 = vrot.slane %v2676, 1
      %v2687 = vrot.slane %v2677, 1
      %v2688 = vsel %vm92, %v2686, %v2687
      %v2689 = vrot.slane %v2678, 1
      %v2690 = vsel %vm92, %v2687, %v2689
      %v2691 = vrot.slane %v2679, 1
      %v2692 = vsel %vm92, %v2689, %v2691
      %v2693 = vrot.slane %v2680, 1
      %v2694 = vsel %vm92, %v2691, %v2693
      %v2699 = vadd.f32 %v2670, %v2688
      %v2700 = vadd.f32 %v2671, %v2690
      %v2701 = vadd.f32 %v2672, %v2692
      %v2702 = vadd.f32 %v2673, %v2694
      %s2703 = sld [smem:[#allocation3 + $0x6e]]
      %v2704 = vstv %s2703
      %v2705 = vmul.f32 %v53, %v2704
      %v2706 = vmul.f32 %v54, %v2704
      %v2707 = vmul.f32 %v55, %v2704
      %v2708 = vmul.f32 %v56, %v2704
      %v2709 = vmul.f32 %v57, %v2704
      %v2715 = vrot.slane %v2705, 2
      %v2716 = vrot.slane %v2706, 2
      %v2717 = vsel %vm122, %v2715, %v2716
      %v2718 = vrot.slane %v2707, 2
      %v2719 = vsel %vm122, %v2716, %v2718
      %v2720 = vrot.slane %v2708, 2
      %v2721 = vsel %vm122, %v2718, %v2720
      %v2722 = vrot.slane %v2709, 2
      %v2723 = vsel %vm122, %v2720, %v2722
      %v2728 = vadd.f32 %v2699, %v2717
      %v2729 = vadd.f32 %v2700, %v2719
      %v2730 = vadd.f32 %v2701, %v2721
      %v2731 = vadd.f32 %v2702, %v2723
      %s2732 = sld [smem:[#allocation3 + $0x6f]]
      %v2733 = vstv %s2732
      %v2734 = vmul.f32 %v61, %v2733
      %v2735 = vmul.f32 %v62, %v2733
      %v2736 = vmul.f32 %v63, %v2733
      %v2737 = vmul.f32 %v64, %v2733
      %v2738 = vadd.f32 %v2728, %v2734
      %v2739 = vadd.f32 %v2729, %v2735
      %v2740 = vadd.f32 %v2730, %v2736
      %v2741 = vadd.f32 %v2731, %v2737
      %s2742 = sld [smem:[#allocation3 + $0x70]]
      %v2743 = vstv %s2742
      %v2744 = vmul.f32 %v61, %v2743
      %v2745 = vmul.f32 %v62, %v2743
      %v2746 = vmul.f32 %v63, %v2743
      %v2747 = vmul.f32 %v64, %v2743
      %v2748 = vmul.f32 %v65, %v2743
      %v2754 = vrot.slane %v2744, 1
      %v2755 = vrot.slane %v2745, 1
      %v2756 = vsel %vm92, %v2754, %v2755
      %v2757 = vrot.slane %v2746, 1
      %v2758 = vsel %vm92, %v2755, %v2757
      %v2759 = vrot.slane %v2747, 1
      %v2760 = vsel %vm92, %v2757, %v2759
      %v2761 = vrot.slane %v2748, 1
      %v2762 = vsel %vm92, %v2759, %v2761
      %v2767 = vadd.f32 %v2738, %v2756
      %v2768 = vadd.f32 %v2739, %v2758
      %v2769 = vadd.f32 %v2740, %v2760
      %v2770 = vadd.f32 %v2741, %v2762
      %s2771 = sld [smem:[#allocation3 + $0x71]]
      %v2772 = vstv %s2771
      %v2773 = vmul.f32 %v61, %v2772
      %v2774 = vmul.f32 %v62, %v2772
      %v2775 = vmul.f32 %v63, %v2772
      %v2776 = vmul.f32 %v64, %v2772
      %v2777 = vmul.f32 %v65, %v2772
      %v2783 = vrot.slane %v2773, 2
      %v2784 = vrot.slane %v2774, 2
      %v2785 = vsel %vm122, %v2783, %v2784
      %v2786 = vrot.slane %v2775, 2
      %v2787 = vsel %vm122, %v2784, %v2786
      %v2788 = vrot.slane %v2776, 2
      %v2789 = vsel %vm122, %v2786, %v2788
      %v2790 = vrot.slane %v2777, 2
      %v2791 = vsel %vm122, %v2788, %v2790
      %v2796 = vadd.f32 %v2767, %v2785
      %v2797 = vadd.f32 %v2768, %v2787
      %v2798 = vadd.f32 %v2769, %v2789
      %v2799 = vadd.f32 %v2770, %v2791
      %s2800 = sld [smem:[#allocation3 + $0x72]]
      %v2801 = vstv %s2800
      %v2802 = vmul.f32 %v69, %v2801
      %v2803 = vmul.f32 %v70, %v2801
      %v2804 = vmul.f32 %v71, %v2801
      %v2805 = vmul.f32 %v72, %v2801
      %v2806 = vadd.f32 %v2796, %v2802
      %v2807 = vadd.f32 %v2797, %v2803
      %v2808 = vadd.f32 %v2798, %v2804
      %v2809 = vadd.f32 %v2799, %v2805
      %s2810 = sld [smem:[#allocation3 + $0x73]]
      %v2811 = vstv %s2810
      %v2812 = vmul.f32 %v69, %v2811
      %v2813 = vmul.f32 %v70, %v2811
      %v2814 = vmul.f32 %v71, %v2811
      %v2815 = vmul.f32 %v72, %v2811
      %v2816 = vmul.f32 %v73, %v2811
      %v2822 = vrot.slane %v2812, 1
      %v2823 = vrot.slane %v2813, 1
      %v2824 = vsel %vm92, %v2822, %v2823
      %v2825 = vrot.slane %v2814, 1
      %v2826 = vsel %vm92, %v2823, %v2825
      %v2827 = vrot.slane %v2815, 1
      %v2828 = vsel %vm92, %v2825, %v2827
      %v2829 = vrot.slane %v2816, 1
      %v2830 = vsel %vm92, %v2827, %v2829
      %v2835 = vadd.f32 %v2806, %v2824
      %v2836 = vadd.f32 %v2807, %v2826
      %v2837 = vadd.f32 %v2808, %v2828
      %v2838 = vadd.f32 %v2809, %v2830
      %s2839 = sld [smem:[#allocation3 + $0x74]]
      %v2840 = vstv %s2839
      %v2841 = vmul.f32 %v69, %v2840
      %v2842 = vmul.f32 %v70, %v2840
      %v2843 = vmul.f32 %v71, %v2840
      %v2844 = vmul.f32 %v72, %v2840
      %v2845 = vmul.f32 %v73, %v2840
      %v2851 = vrot.slane %v2841, 2
      %v2852 = vrot.slane %v2842, 2
      %v2853 = vsel %vm122, %v2851, %v2852
      %v2854 = vrot.slane %v2843, 2
      %v2855 = vsel %vm122, %v2852, %v2854
      %v2856 = vrot.slane %v2844, 2
      %v2857 = vsel %vm122, %v2854, %v2856
      %v2858 = vrot.slane %v2845, 2
      %v2859 = vsel %vm122, %v2856, %v2858
      %v2864 = vadd.f32 %v2835, %v2853
      %v2865 = vadd.f32 %v2836, %v2855
      %v2866 = vadd.f32 %v2837, %v2857
      %v2867 = vadd.f32 %v2838, %v2859
      %s2868 = sld [smem:[#allocation5 + $0xc]]
      %v2869 = vstv %s2868
      %v2870 = vadd.f32 %v2864, %v2869
      %v2871 = vadd.f32 %v2865, %v2869
      %v2872 = vadd.f32 %v2866, %v2869
      %v2873 = vadd.f32 %v2867, %v2869
      %v2874 = vmax.f32 %v2870, 0.0
      %v2875 = vmax.f32 %v2871, 0.0
      %v2876 = vmax.f32 %v2872, 0.0
      %v2877 = vmax.f32 %v2873, 0.0
      %s2878 = sadd.s32 %s286, 12288
      %s2879 = scalar_lea.vmem [#allocation2], %s2878
      %2880 = vst [vmem:[%s2879] sm:$0xff] %v2874
      %2881 = vst [vmem:[%s2879 + $0x8] sm:$0xff] %v2875
      %2882 = vst [vmem:[%s2879 + $0x10] sm:$0xff] %v2876
      %2883 = vst [vmem:[%s2879 + $0x18] sm:$0xff] %v2877
      %s2884 = sld [smem:[#allocation3 + $0x75]]
      %v2885 = vstv %s2884
      %v2886 = vmul.f32 %v53, %v2885
      %v2887 = vmul.f32 %v54, %v2885
      %v2888 = vmul.f32 %v55, %v2885
      %v2889 = vmul.f32 %v56, %v2885
      %s2890 = sld [smem:[#allocation3 + $0x76]]
      %v2891 = vstv %s2890
      %v2892 = vmul.f32 %v53, %v2891
      %v2893 = vmul.f32 %v54, %v2891
      %v2894 = vmul.f32 %v55, %v2891
      %v2895 = vmul.f32 %v56, %v2891
      %v2896 = vmul.f32 %v57, %v2891
      %v2902 = vrot.slane %v2892, 1
      %v2903 = vrot.slane %v2893, 1
      %v2904 = vsel %vm92, %v2902, %v2903
      %v2905 = vrot.slane %v2894, 1
      %v2906 = vsel %vm92, %v2903, %v2905
      %v2907 = vrot.slane %v2895, 1
      %v2908 = vsel %vm92, %v2905, %v2907
      %v2909 = vrot.slane %v2896, 1
      %v2910 = vsel %vm92, %v2907, %v2909
      %v2915 = vadd.f32 %v2886, %v2904
      %v2916 = vadd.f32 %v2887, %v2906
      %v2917 = vadd.f32 %v2888, %v2908
      %v2918 = vadd.f32 %v2889, %v2910
      %s2919 = sld [smem:[#allocation3 + $0x77]]
      %v2920 = vstv %s2919
      %v2921 = vmul.f32 %v53, %v2920
      %v2922 = vmul.f32 %v54, %v2920
      %v2923 = vmul.f32 %v55, %v2920
      %v2924 = vmul.f32 %v56, %v2920
      %v2925 = vmul.f32 %v57, %v2920
      %v2931 = vrot.slane %v2921, 2
      %v2932 = vrot.slane %v2922, 2
      %v2933 = vsel %vm122, %v2931, %v2932
      %v2934 = vrot.slane %v2923, 2
      %v2935 = vsel %vm122, %v2932, %v2934
      %v2936 = vrot.slane %v2924, 2
      %v2937 = vsel %vm122, %v2934, %v2936
      %v2938 = vrot.slane %v2925, 2
      %v2939 = vsel %vm122, %v2936, %v2938
      %v2944 = vadd.f32 %v2915, %v2933
      %v2945 = vadd.f32 %v2916, %v2935
      %v2946 = vadd.f32 %v2917, %v2937
      %v2947 = vadd.f32 %v2918, %v2939
      %s2948 = sld [smem:[#allocation3 + $0x78]]
      %v2949 = vstv %s2948
      %v2950 = vmul.f32 %v61, %v2949
      %v2951 = vmul.f32 %v62, %v2949
      %v2952 = vmul.f32 %v63, %v2949
      %v2953 = vmul.f32 %v64, %v2949
      %v2954 = vadd.f32 %v2944, %v2950
      %v2955 = vadd.f32 %v2945, %v2951
      %v2956 = vadd.f32 %v2946, %v2952
      %v2957 = vadd.f32 %v2947, %v2953
      %s2958 = sld [smem:[#allocation3 + $0x79]]
      %v2959 = vstv %s2958
      %v2960 = vmul.f32 %v61, %v2959
      %v2961 = vmul.f32 %v62, %v2959
      %v2962 = vmul.f32 %v63, %v2959
      %v2963 = vmul.f32 %v64, %v2959
      %v2964 = vmul.f32 %v65, %v2959
      %v2970 = vrot.slane %v2960, 1
      %v2971 = vrot.slane %v2961, 1
      %v2972 = vsel %vm92, %v2970, %v2971
      %v2973 = vrot.slane %v2962, 1
      %v2974 = vsel %vm92, %v2971, %v2973
      %v2975 = vrot.slane %v2963, 1
      %v2976 = vsel %vm92, %v2973, %v2975
      %v2977 = vrot.slane %v2964, 1
      %v2978 = vsel %vm92, %v2975, %v2977
      %v2983 = vadd.f32 %v2954, %v2972
      %v2984 = vadd.f32 %v2955, %v2974
      %v2985 = vadd.f32 %v2956, %v2976
      %v2986 = vadd.f32 %v2957, %v2978
      %s2987 = sld [smem:[#allocation3 + $0x7a]]
      %v2988 = vstv %s2987
      %v2989 = vmul.f32 %v61, %v2988
      %v2990 = vmul.f32 %v62, %v2988
      %v2991 = vmul.f32 %v63, %v2988
      %v2992 = vmul.f32 %v64, %v2988
      %v2993 = vmul.f32 %v65, %v2988
      %v2999 = vrot.slane %v2989, 2
      %v3000 = vrot.slane %v2990, 2
      %v3001 = vsel %vm122, %v2999, %v3000
      %v3002 = vrot.slane %v2991, 2
      %v3003 = vsel %vm122, %v3000, %v3002
      %v3004 = vrot.slane %v2992, 2
      %v3005 = vsel %vm122, %v3002, %v3004
      %v3006 = vrot.slane %v2993, 2
      %v3007 = vsel %vm122, %v3004, %v3006
      %v3012 = vadd.f32 %v2983, %v3001
      %v3013 = vadd.f32 %v2984, %v3003
      %v3014 = vadd.f32 %v2985, %v3005
      %v3015 = vadd.f32 %v2986, %v3007
      %s3016 = sld [smem:[#allocation3 + $0x7b]]
      %v3017 = vstv %s3016
      %v3018 = vmul.f32 %v69, %v3017
      %v3019 = vmul.f32 %v70, %v3017
      %v3020 = vmul.f32 %v71, %v3017
      %v3021 = vmul.f32 %v72, %v3017
      %v3022 = vadd.f32 %v3012, %v3018
      %v3023 = vadd.f32 %v3013, %v3019
      %v3024 = vadd.f32 %v3014, %v3020
      %v3025 = vadd.f32 %v3015, %v3021
      %s3026 = sld [smem:[#allocation3 + $0x7c]]
      %v3027 = vstv %s3026
      %v3028 = vmul.f32 %v69, %v3027
      %v3029 = vmul.f32 %v70, %v3027
      %v3030 = vmul.f32 %v71, %v3027
      %v3031 = vmul.f32 %v72, %v3027
      %v3032 = vmul.f32 %v73, %v3027
      %v3038 = vrot.slane %v3028, 1
      %v3039 = vrot.slane %v3029, 1
      %v3040 = vsel %vm92, %v3038, %v3039
      %v3041 = vrot.slane %v3030, 1
      %v3042 = vsel %vm92, %v3039, %v3041
      %v3043 = vrot.slane %v3031, 1
      %v3044 = vsel %vm92, %v3041, %v3043
      %v3045 = vrot.slane %v3032, 1
      %v3046 = vsel %vm92, %v3043, %v3045
      %v3051 = vadd.f32 %v3022, %v3040
      %v3052 = vadd.f32 %v3023, %v3042
      %v3053 = vadd.f32 %v3024, %v3044
      %v3054 = vadd.f32 %v3025, %v3046
      %s3055 = sld [smem:[#allocation3 + $0x7d]]
      %v3056 = vstv %s3055
      %v3057 = vmul.f32 %v69, %v3056
      %v3058 = vmul.f32 %v70, %v3056
      %v3059 = vmul.f32 %v71, %v3056
      %v3060 = vmul.f32 %v72, %v3056
      %v3061 = vmul.f32 %v73, %v3056
      %v3067 = vrot.slane %v3057, 2
      %v3068 = vrot.slane %v3058, 2
      %v3069 = vsel %vm122, %v3067, %v3068
      %v3070 = vrot.slane %v3059, 2
      %v3071 = vsel %vm122, %v3068, %v3070
      %v3072 = vrot.slane %v3060, 2
      %v3073 = vsel %vm122, %v3070, %v3072
      %v3074 = vrot.slane %v3061, 2
      %v3075 = vsel %vm122, %v3072, %v3074
      %v3080 = vadd.f32 %v3051, %v3069
      %v3081 = vadd.f32 %v3052, %v3071
      %v3082 = vadd.f32 %v3053, %v3073
      %v3083 = vadd.f32 %v3054, %v3075
      %s3084 = sld [smem:[#allocation5 + $0xd]]
      %v3085 = vstv %s3084
      %v3086 = vadd.f32 %v3080, %v3085
      %v3087 = vadd.f32 %v3081, %v3085
      %v3088 = vadd.f32 %v3082, %v3085
      %v3089 = vadd.f32 %v3083, %v3085
      %v3090 = vmax.f32 %v3086, 0.0
      %v3091 = vmax.f32 %v3087, 0.0
      %v3092 = vmax.f32 %v3088, 0.0
      %v3093 = vmax.f32 %v3089, 0.0
      %s3094 = sadd.s32 %s286, 13312
      %s3095 = scalar_lea.vmem [#allocation2], %s3094
      %3096 = vst [vmem:[%s3095] sm:$0xff] %v3090
      %3097 = vst [vmem:[%s3095 + $0x8] sm:$0xff] %v3091
      %3098 = vst [vmem:[%s3095 + $0x10] sm:$0xff] %v3092
      %3099 = vst [vmem:[%s3095 + $0x18] sm:$0xff] %v3093
      %s3100 = sld [smem:[#allocation3 + $0x7e]]
      %v3101 = vstv %s3100
      %v3102 = vmul.f32 %v53, %v3101
      %v3103 = vmul.f32 %v54, %v3101
      %v3104 = vmul.f32 %v55, %v3101
      %v3105 = vmul.f32 %v56, %v3101
      %s3106 = sld [smem:[#allocation3 + $0x7f]]
      %v3107 = vstv %s3106
      %v3108 = vmul.f32 %v53, %v3107
      %v3109 = vmul.f32 %v54, %v3107
      %v3110 = vmul.f32 %v55, %v3107
      %v3111 = vmul.f32 %v56, %v3107
      %v3112 = vmul.f32 %v57, %v3107
      %v3118 = vrot.slane %v3108, 1
      %v3119 = vrot.slane %v3109, 1
      %v3120 = vsel %vm92, %v3118, %v3119
      %v3121 = vrot.slane %v3110, 1
      %v3122 = vsel %vm92, %v3119, %v3121
      %v3123 = vrot.slane %v3111, 1
      %v3124 = vsel %vm92, %v3121, %v3123
      %v3125 = vrot.slane %v3112, 1
      %v3126 = vsel %vm92, %v3123, %v3125
      %v3131 = vadd.f32 %v3102, %v3120
      %v3132 = vadd.f32 %v3103, %v3122
      %v3133 = vadd.f32 %v3104, %v3124
      %v3134 = vadd.f32 %v3105, %v3126
      %s3135 = sld [smem:[#allocation3 + $0x80]]
      %v3136 = vstv %s3135
      %v3137 = vmul.f32 %v53, %v3136
      %v3138 = vmul.f32 %v54, %v3136
      %v3139 = vmul.f32 %v55, %v3136
      %v3140 = vmul.f32 %v56, %v3136
      %v3141 = vmul.f32 %v57, %v3136
      %v3147 = vrot.slane %v3137, 2
      %v3148 = vrot.slane %v3138, 2
      %v3149 = vsel %vm122, %v3147, %v3148
      %v3150 = vrot.slane %v3139, 2
      %v3151 = vsel %vm122, %v3148, %v3150
      %v3152 = vrot.slane %v3140, 2
      %v3153 = vsel %vm122, %v3150, %v3152
      %v3154 = vrot.slane %v3141, 2
      %v3155 = vsel %vm122, %v3152, %v3154
      %v3160 = vadd.f32 %v3131, %v3149
      %v3161 = vadd.f32 %v3132, %v3151
      %v3162 = vadd.f32 %v3133, %v3153
      %v3163 = vadd.f32 %v3134, %v3155
      %s3164 = sld [smem:[#allocation3 + $0x81]]
      %v3165 = vstv %s3164
      %v3166 = vmul.f32 %v61, %v3165
      %v3167 = vmul.f32 %v62, %v3165
      %v3168 = vmul.f32 %v63, %v3165
      %v3169 = vmul.f32 %v64, %v3165
      %v3170 = vadd.f32 %v3160, %v3166
      %v3171 = vadd.f32 %v3161, %v3167
      %v3172 = vadd.f32 %v3162, %v3168
      %v3173 = vadd.f32 %v3163, %v3169
      %s3174 = sld [smem:[#allocation3 + $0x82]]
      %v3175 = vstv %s3174
      %v3176 = vmul.f32 %v61, %v3175
      %v3177 = vmul.f32 %v62, %v3175
      %v3178 = vmul.f32 %v63, %v3175
      %v3179 = vmul.f32 %v64, %v3175
      %v3180 = vmul.f32 %v65, %v3175
      %v3186 = vrot.slane %v3176, 1
      %v3187 = vrot.slane %v3177, 1
      %v3188 = vsel %vm92, %v3186, %v3187
      %v3189 = vrot.slane %v3178, 1
      %v3190 = vsel %vm92, %v3187, %v3189
      %v3191 = vrot.slane %v3179, 1
      %v3192 = vsel %vm92, %v3189, %v3191
      %v3193 = vrot.slane %v3180, 1
      %v3194 = vsel %vm92, %v3191, %v3193
      %v3199 = vadd.f32 %v3170, %v3188
      %v3200 = vadd.f32 %v3171, %v3190
      %v3201 = vadd.f32 %v3172, %v3192
      %v3202 = vadd.f32 %v3173, %v3194
      %s3203 = sld [smem:[#allocation3 + $0x83]]
      %v3204 = vstv %s3203
      %v3205 = vmul.f32 %v61, %v3204
      %v3206 = vmul.f32 %v62, %v3204
      %v3207 = vmul.f32 %v63, %v3204
      %v3208 = vmul.f32 %v64, %v3204
      %v3209 = vmul.f32 %v65, %v3204
      %v3215 = vrot.slane %v3205, 2
      %v3216 = vrot.slane %v3206, 2
      %v3217 = vsel %vm122, %v3215, %v3216
      %v3218 = vrot.slane %v3207, 2
      %v3219 = vsel %vm122, %v3216, %v3218
      %v3220 = vrot.slane %v3208, 2
      %v3221 = vsel %vm122, %v3218, %v3220
      %v3222 = vrot.slane %v3209, 2
      %v3223 = vsel %vm122, %v3220, %v3222
      %v3228 = vadd.f32 %v3199, %v3217
      %v3229 = vadd.f32 %v3200, %v3219
      %v3230 = vadd.f32 %v3201, %v3221
      %v3231 = vadd.f32 %v3202, %v3223
      %s3232 = sld [smem:[#allocation3 + $0x84]]
      %v3233 = vstv %s3232
      %v3234 = vmul.f32 %v69, %v3233
      %v3235 = vmul.f32 %v70, %v3233
      %v3236 = vmul.f32 %v71, %v3233
      %v3237 = vmul.f32 %v72, %v3233
      %v3238 = vadd.f32 %v3228, %v3234
      %v3239 = vadd.f32 %v3229, %v3235
      %v3240 = vadd.f32 %v3230, %v3236
      %v3241 = vadd.f32 %v3231, %v3237
      %s3242 = sld [smem:[#allocation3 + $0x85]]
      %v3243 = vstv %s3242
      %v3244 = vmul.f32 %v69, %v3243
      %v3245 = vmul.f32 %v70, %v3243
      %v3246 = vmul.f32 %v71, %v3243
      %v3247 = vmul.f32 %v72, %v3243
      %v3248 = vmul.f32 %v73, %v3243
      %v3254 = vrot.slane %v3244, 1
      %v3255 = vrot.slane %v3245, 1
      %v3256 = vsel %vm92, %v3254, %v3255
      %v3257 = vrot.slane %v3246, 1
      %v3258 = vsel %vm92, %v3255, %v3257
      %v3259 = vrot.slane %v3247, 1
      %v3260 = vsel %vm92, %v3257, %v3259
      %v3261 = vrot.slane %v3248, 1
      %v3262 = vsel %vm92, %v3259, %v3261
      %v3267 = vadd.f32 %v3238, %v3256
      %v3268 = vadd.f32 %v3239, %v3258
      %v3269 = vadd.f32 %v3240, %v3260
      %v3270 = vadd.f32 %v3241, %v3262
      %s3271 = sld [smem:[#allocation3 + $0x86]]
      %v3272 = vstv %s3271
      %v3273 = vmul.f32 %v69, %v3272
      %v3274 = vmul.f32 %v70, %v3272
      %v3275 = vmul.f32 %v71, %v3272
      %v3276 = vmul.f32 %v72, %v3272
      %v3277 = vmul.f32 %v73, %v3272
      %v3283 = vrot.slane %v3273, 2
      %v3284 = vrot.slane %v3274, 2
      %v3285 = vsel %vm122, %v3283, %v3284
      %v3286 = vrot.slane %v3275, 2
      %v3287 = vsel %vm122, %v3284, %v3286
      %v3288 = vrot.slane %v3276, 2
      %v3289 = vsel %vm122, %v3286, %v3288
      %v3290 = vrot.slane %v3277, 2
      %v3291 = vsel %vm122, %v3288, %v3290
      %v3296 = vadd.f32 %v3267, %v3285
      %v3297 = vadd.f32 %v3268, %v3287
      %v3298 = vadd.f32 %v3269, %v3289
      %v3299 = vadd.f32 %v3270, %v3291
      %s3300 = sld [smem:[#allocation5 + $0xe]]
      %v3301 = vstv %s3300
      %v3302 = vadd.f32 %v3296, %v3301
      %v3303 = vadd.f32 %v3297, %v3301
      %v3304 = vadd.f32 %v3298, %v3301
      %v3305 = vadd.f32 %v3299, %v3301
      %v3306 = vmax.f32 %v3302, 0.0
      %v3307 = vmax.f32 %v3303, 0.0
      %v3308 = vmax.f32 %v3304, 0.0
      %v3309 = vmax.f32 %v3305, 0.0
      %s3310 = sadd.s32 %s286, 14336
      %s3311 = scalar_lea.vmem [#allocation2], %s3310
      %3312 = vst [vmem:[%s3311] sm:$0xff] %v3306
      %3313 = vst [vmem:[%s3311 + $0x8] sm:$0xff] %v3307
      %3314 = vst [vmem:[%s3311 + $0x10] sm:$0xff] %v3308
      %3315 = vst [vmem:[%s3311 + $0x18] sm:$0xff] %v3309
      %s3316 = sld [smem:[#allocation3 + $0x87]]
      %v3317 = vstv %s3316
      %v3318 = vmul.f32 %v53, %v3317
      %v3319 = vmul.f32 %v54, %v3317
      %v3320 = vmul.f32 %v55, %v3317
      %v3321 = vmul.f32 %v56, %v3317
      %s3322 = sld [smem:[#allocation3 + $0x88]]
      %v3323 = vstv %s3322
      %v3324 = vmul.f32 %v53, %v3323
      %v3325 = vmul.f32 %v54, %v3323
      %v3326 = vmul.f32 %v55, %v3323
      %v3327 = vmul.f32 %v56, %v3323
      %v3328 = vmul.f32 %v57, %v3323
      %v3334 = vrot.slane %v3324, 1
      %v3335 = vrot.slane %v3325, 1
      %v3336 = vsel %vm92, %v3334, %v3335
      %v3337 = vrot.slane %v3326, 1
      %v3338 = vsel %vm92, %v3335, %v3337
      %v3339 = vrot.slane %v3327, 1
      %v3340 = vsel %vm92, %v3337, %v3339
      %v3341 = vrot.slane %v3328, 1
      %v3342 = vsel %vm92, %v3339, %v3341
      %v3347 = vadd.f32 %v3318, %v3336
      %v3348 = vadd.f32 %v3319, %v3338
      %v3349 = vadd.f32 %v3320, %v3340
      %v3350 = vadd.f32 %v3321, %v3342
      %s3351 = sld [smem:[#allocation3 + $0x89]]
      %v3352 = vstv %s3351
      %v3353 = vmul.f32 %v53, %v3352
      %v3354 = vmul.f32 %v54, %v3352
      %v3355 = vmul.f32 %v55, %v3352
      %v3356 = vmul.f32 %v56, %v3352
      %v3357 = vmul.f32 %v57, %v3352
      %v3363 = vrot.slane %v3353, 2
      %v3364 = vrot.slane %v3354, 2
      %v3365 = vsel %vm122, %v3363, %v3364
      %v3366 = vrot.slane %v3355, 2
      %v3367 = vsel %vm122, %v3364, %v3366
      %v3368 = vrot.slane %v3356, 2
      %v3369 = vsel %vm122, %v3366, %v3368
      %v3370 = vrot.slane %v3357, 2
      %v3371 = vsel %vm122, %v3368, %v3370
      %v3376 = vadd.f32 %v3347, %v3365
      %v3377 = vadd.f32 %v3348, %v3367
      %v3378 = vadd.f32 %v3349, %v3369
      %v3379 = vadd.f32 %v3350, %v3371
      %s3380 = sld [smem:[#allocation3 + $0x8a]]
      %v3381 = vstv %s3380
      %v3382 = vmul.f32 %v61, %v3381
      %v3383 = vmul.f32 %v62, %v3381
      %v3384 = vmul.f32 %v63, %v3381
      %v3385 = vmul.f32 %v64, %v3381
      %v3386 = vadd.f32 %v3376, %v3382
      %v3387 = vadd.f32 %v3377, %v3383
      %v3388 = vadd.f32 %v3378, %v3384
      %v3389 = vadd.f32 %v3379, %v3385
      %s3390 = sld [smem:[#allocation3 + $0x8b]]
      %v3391 = vstv %s3390
      %v3392 = vmul.f32 %v61, %v3391
      %v3393 = vmul.f32 %v62, %v3391
      %v3394 = vmul.f32 %v63, %v3391
      %v3395 = vmul.f32 %v64, %v3391
      %v3396 = vmul.f32 %v65, %v3391
      %v3402 = vrot.slane %v3392, 1
      %v3403 = vrot.slane %v3393, 1
      %v3404 = vsel %vm92, %v3402, %v3403
      %v3405 = vrot.slane %v3394, 1
      %v3406 = vsel %vm92, %v3403, %v3405
      %v3407 = vrot.slane %v3395, 1
      %v3408 = vsel %vm92, %v3405, %v3407
      %v3409 = vrot.slane %v3396, 1
      %v3410 = vsel %vm92, %v3407, %v3409
      %v3415 = vadd.f32 %v3386, %v3404
      %v3416 = vadd.f32 %v3387, %v3406
      %v3417 = vadd.f32 %v3388, %v3408
      %v3418 = vadd.f32 %v3389, %v3410
      %s3419 = sld [smem:[#allocation3 + $0x8c]]
      %v3420 = vstv %s3419
      %v3421 = vmul.f32 %v61, %v3420
      %v3422 = vmul.f32 %v62, %v3420
      %v3423 = vmul.f32 %v63, %v3420
      %v3424 = vmul.f32 %v64, %v3420
      %v3425 = vmul.f32 %v65, %v3420
      %v3431 = vrot.slane %v3421, 2
      %v3432 = vrot.slane %v3422, 2
      %v3433 = vsel %vm122, %v3431, %v3432
      %v3434 = vrot.slane %v3423, 2
      %v3435 = vsel %vm122, %v3432, %v3434
      %v3436 = vrot.slane %v3424, 2
      %v3437 = vsel %vm122, %v3434, %v3436
      %v3438 = vrot.slane %v3425, 2
      %v3439 = vsel %vm122, %v3436, %v3438
      %v3444 = vadd.f32 %v3415, %v3433
      %v3445 = vadd.f32 %v3416, %v3435
      %v3446 = vadd.f32 %v3417, %v3437
      %v3447 = vadd.f32 %v3418, %v3439
      %s3448 = sld [smem:[#allocation3 + $0x8d]]
      %v3449 = vstv %s3448
      %v3450 = vmul.f32 %v69, %v3449
      %v3451 = vmul.f32 %v70, %v3449
      %v3452 = vmul.f32 %v71, %v3449
      %v3453 = vmul.f32 %v72, %v3449
      %v3454 = vadd.f32 %v3444, %v3450
      %v3455 = vadd.f32 %v3445, %v3451
      %v3456 = vadd.f32 %v3446, %v3452
      %v3457 = vadd.f32 %v3447, %v3453
      %s3458 = sld [smem:[#allocation3 + $0x8e]]
      %v3459 = vstv %s3458
      %v3460 = vmul.f32 %v69, %v3459
      %v3461 = vmul.f32 %v70, %v3459
      %v3462 = vmul.f32 %v71, %v3459
      %v3463 = vmul.f32 %v72, %v3459
      %v3464 = vmul.f32 %v73, %v3459
      %v3470 = vrot.slane %v3460, 1
      %v3471 = vrot.slane %v3461, 1
      %v3472 = vsel %vm92, %v3470, %v3471
      %v3473 = vrot.slane %v3462, 1
      %v3474 = vsel %vm92, %v3471, %v3473
      %v3475 = vrot.slane %v3463, 1
      %v3476 = vsel %vm92, %v3473, %v3475
      %v3477 = vrot.slane %v3464, 1
      %v3478 = vsel %vm92, %v3475, %v3477
      %v3483 = vadd.f32 %v3454, %v3472
      %v3484 = vadd.f32 %v3455, %v3474
      %v3485 = vadd.f32 %v3456, %v3476
      %v3486 = vadd.f32 %v3457, %v3478
      %s3487 = sld [smem:[#allocation3 + $0x8f]]
      %v3488 = vstv %s3487
      %v3489 = vmul.f32 %v69, %v3488
      %v3490 = vmul.f32 %v70, %v3488
      %v3491 = vmul.f32 %v71, %v3488
      %v3492 = vmul.f32 %v72, %v3488
      %v3493 = vmul.f32 %v73, %v3488
      %v3499 = vrot.slane %v3489, 2
      %v3500 = vrot.slane %v3490, 2
      %v3501 = vsel %vm122, %v3499, %v3500
      %v3502 = vrot.slane %v3491, 2
      %v3503 = vsel %vm122, %v3500, %v3502
      %v3504 = vrot.slane %v3492, 2
      %v3505 = vsel %vm122, %v3502, %v3504
      %v3506 = vrot.slane %v3493, 2
      %v3507 = vsel %vm122, %v3504, %v3506
      %v3512 = vadd.f32 %v3483, %v3501
      %v3513 = vadd.f32 %v3484, %v3503
      %v3514 = vadd.f32 %v3485, %v3505
      %v3515 = vadd.f32 %v3486, %v3507
      %s3516 = sld [smem:[#allocation5 + $0xf]]
      %v3517 = vstv %s3516
      %v3518 = vadd.f32 %v3512, %v3517
      %v3519 = vadd.f32 %v3513, %v3517
      %v3520 = vadd.f32 %v3514, %v3517
      %v3521 = vadd.f32 %v3515, %v3517
      %v3522 = vmax.f32 %v3518, 0.0
      %v3523 = vmax.f32 %v3519, 0.0
      %v3524 = vmax.f32 %v3520, 0.0
      %v3525 = vmax.f32 %v3521, 0.0
      %s3526 = sadd.s32 %s286, 15360
      %s3527 = scalar_lea.vmem [#allocation2], %s3526
      %3528 = vst [vmem:[%s3527] sm:$0xff] %v3522
      %3529 = vst [vmem:[%s3527 + $0x8] sm:$0xff] %v3523
      %3530 = vst [vmem:[%s3527 + $0x10] sm:$0xff] %v3524
      %3531 = vst [vmem:[%s3527 + $0x18] sm:$0xff] %v3525
    $region34: #{simple_nn_forward.1} parent=1 // loop_footer
      %s50 = sadd.s32 1, %s46
    $region35: #{simple_nn_forward.1} parent=1 // loop_footer_branch
      %45 = sbr.rel target = $region31
    $region36: #{simple_nn_forward.1} parent=1 // loop_exit
      _
    %v3532 = vld [vmem:[%s2] sm:$0xff]
    %v3533 = vld [vmem:[%s1] sm:$0xff]
    %v3534 = vld [vmem:[%s1 + $0x8] sm:$0xff]
    %v3535 = vld [vmem:[%s1 + $0x10] sm:$0xff]
    %v3536 = vld [vmem:[%s1 + $0x18] sm:$0xff]
    %v3537 = vld [vmem:[%s1 + $0x20] sm:$0xff]
    %v3538 = vld [vmem:[%s1 + $0x28] sm:$0xff]
    %v3539 = vld [vmem:[%s1 + $0x30] sm:$0xff]
    %v3540 = vld [vmem:[%s1 + $0x38] sm:$0xff]
    %v3541 = vld [vmem:[#allocation2] sm:$0xff]
    %v3542 = vld [vmem:[#allocation2 + $0x8] sm:$0xff]
    %v3543 = vld [vmem:[#allocation2 + $0x10] sm:$0xff]
    %v3544 = vld [vmem:[#allocation2 + $0x18] sm:$0xff]
    %v3545 = vld [vmem:[#allocation2 + $0x20] sm:$0xff]
    %v3546 = vld [vmem:[#allocation2 + $0x28] sm:$0xff]
    %v3547 = vld [vmem:[#allocation2 + $0x30] sm:$0xff]
    %v3548 = vld [vmem:[#allocation2 + $0x38] sm:$0xff]
    %v3549 = vld [vmem:[#allocation2 + $0x40] sm:$0xff]
    %v3550 = vld [vmem:[#allocation2 + $0x48] sm:$0xff]
    %v3551 = vld [vmem:[#allocation2 + $0x50] sm:$0xff]
    %v3552 = vld [vmem:[#allocation2 + $0x58] sm:$0xff]
    %v3553 = vld [vmem:[#allocation2 + $0x60] sm:$0xff]
    %v3554 = vld [vmem:[#allocation2 + $0x68] sm:$0xff]
    %v3555 = vld [vmem:[#allocation2 + $0x70] sm:$0xff]
    %v3556 = vld [vmem:[#allocation2 + $0x78] sm:$0xff]
    %v3557 = vld [vmem:[#allocation2 + $0x80] sm:$0xff]
    %v3558 = vld [vmem:[#allocation2 + $0x88] sm:$0xff]
    %v3559 = vld [vmem:[#allocation2 + $0x90] sm:$0xff]
    %v3560 = vld [vmem:[#allocation2 + $0x98] sm:$0xff]
    %v3561 = vld [vmem:[#allocation2 + $0xa0] sm:$0xff]
    %v3562 = vld [vmem:[#allocation2 + $0xa8] sm:$0xff]
    %v3563 = vld [vmem:[#allocation2 + $0xb0] sm:$0xff]
    %v3564 = vld [vmem:[#allocation2 + $0xb8] sm:$0xff]
    %v3565 = vld [vmem:[#allocation2 + $0xc0] sm:$0xff]
    %v3566 = vld [vmem:[#allocation2 + $0xc8] sm:$0xff]
    %v3567 = vld [vmem:[#allocation2 + $0xd0] sm:$0xff]
    %v3568 = vld [vmem:[#allocation2 + $0xd8] sm:$0xff]
    %v3569 = vld [vmem:[#allocation2 + $0xe0] sm:$0xff]
    %v3570 = vld [vmem:[#allocation2 + $0xe8] sm:$0xff]
    %v3571 = vld [vmem:[#allocation2 + $0xf0] sm:$0xff]
    %v3572 = vld [vmem:[#allocation2 + $0xf8] sm:$0xff]
    %v3573 = vld [vmem:[#allocation2 + $0x100] sm:$0xff]
    %v3574 = vld [vmem:[#allocation2 + $0x108] sm:$0xff]
    %v3575 = vld [vmem:[#allocation2 + $0x110] sm:$0xff]
    %v3576 = vld [vmem:[#allocation2 + $0x118] sm:$0xff]
    %v3577 = vld [vmem:[#allocation2 + $0x120] sm:$0xff]
    %v3578 = vld [vmem:[#allocation2 + $0x128] sm:$0xff]
    %v3579 = vld [vmem:[#allocation2 + $0x130] sm:$0xff]
    %v3580 = vld [vmem:[#allocation2 + $0x138] sm:$0xff]
    %v3581 = vld [vmem:[#allocation2 + $0x140] sm:$0xff]
    %v3582 = vld [vmem:[#allocation2 + $0x148] sm:$0xff]
    %v3583 = vld [vmem:[#allocation2 + $0x150] sm:$0xff]
    %v3584 = vld [vmem:[#allocation2 + $0x158] sm:$0xff]
    %v3585 = vld [vmem:[#allocation2 + $0x160] sm:$0xff]
    %v3586 = vld [vmem:[#allocation2 + $0x168] sm:$0xff]
    %v3587 = vld [vmem:[#allocation2 + $0x170] sm:$0xff]
    %v3588 = vld [vmem:[#allocation2 + $0x178] sm:$0xff]
    %v3589 = vld [vmem:[#allocation2 + $0x180] sm:$0xff]
    %v3590 = vld [vmem:[#allocation2 + $0x188] sm:$0xff]
    %v3591 = vld [vmem:[#allocation2 + $0x190] sm:$0xff]
    %v3592 = vld [vmem:[#allocation2 + $0x198] sm:$0xff]
    %v3593 = vld [vmem:[#allocation2 + $0x1a0] sm:$0xff]
    %v3594 = vld [vmem:[#allocation2 + $0x1a8] sm:$0xff]
    %v3595 = vld [vmem:[#allocation2 + $0x1b0] sm:$0xff]
    %v3596 = vld [vmem:[#allocation2 + $0x1b8] sm:$0xff]
    %v3597 = vld [vmem:[#allocation2 + $0x1c0] sm:$0xff]
    %v3598 = vld [vmem:[#allocation2 + $0x1c8] sm:$0xff]
    %v3599 = vld [vmem:[#allocation2 + $0x1d0] sm:$0xff]
    %v3600 = vld [vmem:[#allocation2 + $0x1d8] sm:$0xff]
    %v3601 = vld [vmem:[#allocation2 + $0x1e0] sm:$0xff]
    %v3602 = vld [vmem:[#allocation2 + $0x1e8] sm:$0xff]
    %v3603 = vld [vmem:[#allocation2 + $0x1f0] sm:$0xff]
    %v3604 = vld [vmem:[#allocation2 + $0x1f8] sm:$0xff]
    %v3605 = vld [vmem:[#allocation2 + $0x200] sm:$0xff]
    %v3606 = vld [vmem:[#allocation2 + $0x208] sm:$0xff]
    %v3607 = vld [vmem:[#allocation2 + $0x210] sm:$0xff]
    %v3608 = vld [vmem:[#allocation2 + $0x218] sm:$0xff]
    %v3609 = vld [vmem:[#allocation2 + $0x220] sm:$0xff]
    %v3610 = vld [vmem:[#allocation2 + $0x228] sm:$0xff]
    %v3611 = vld [vmem:[#allocation2 + $0x230] sm:$0xff]
    %v3612 = vld [vmem:[#allocation2 + $0x238] sm:$0xff]
    %v3613 = vld [vmem:[#allocation2 + $0x240] sm:$0xff]
    %v3614 = vld [vmem:[#allocation2 + $0x248] sm:$0xff]
    %v3615 = vld [vmem:[#allocation2 + $0x250] sm:$0xff]
    %v3616 = vld [vmem:[#allocation2 + $0x258] sm:$0xff]
    %v3617 = vld [vmem:[#allocation2 + $0x260] sm:$0xff]
    %v3618 = vld [vmem:[#allocation2 + $0x268] sm:$0xff]
    %v3619 = vld [vmem:[#allocation2 + $0x270] sm:$0xff]
    %v3620 = vld [vmem:[#allocation2 + $0x278] sm:$0xff]
    %v3621 = vld [vmem:[#allocation2 + $0x280] sm:$0xff]
    %v3622 = vld [vmem:[#allocation2 + $0x288] sm:$0xff]
    %v3623 = vld [vmem:[#allocation2 + $0x290] sm:$0xff]
    %v3624 = vld [vmem:[#allocation2 + $0x298] sm:$0xff]
    %v3625 = vld [vmem:[#allocation2 + $0x2a0] sm:$0xff]
    %v3626 = vld [vmem:[#allocation2 + $0x2a8] sm:$0xff]
    %v3627 = vld [vmem:[#allocation2 + $0x2b0] sm:$0xff]
    %v3628 = vld [vmem:[#allocation2 + $0x2b8] sm:$0xff]
    %v3629 = vld [vmem:[#allocation2 + $0x2c0] sm:$0xff]
    %v3630 = vld [vmem:[#allocation2 + $0x2c8] sm:$0xff]
    %v3631 = vld [vmem:[#allocation2 + $0x2d0] sm:$0xff]
    %v3632 = vld [vmem:[#allocation2 + $0x2d8] sm:$0xff]
    %v3633 = vld [vmem:[#allocation2 + $0x2e0] sm:$0xff]
    %v3634 = vld [vmem:[#allocation2 + $0x2e8] sm:$0xff]
    %v3635 = vld [vmem:[#allocation2 + $0x2f0] sm:$0xff]
    %v3636 = vld [vmem:[#allocation2 + $0x2f8] sm:$0xff]
    %v3637 = vld [vmem:[#allocation2 + $0x300] sm:$0xff]
    %v3638 = vld [vmem:[#allocation2 + $0x308] sm:$0xff]
    %v3639 = vld [vmem:[#allocation2 + $0x310] sm:$0xff]
    %v3640 = vld [vmem:[#allocation2 + $0x318] sm:$0xff]
    %v3641 = vld [vmem:[#allocation2 + $0x320] sm:$0xff]
    %v3642 = vld [vmem:[#allocation2 + $0x328] sm:$0xff]
    %v3643 = vld [vmem:[#allocation2 + $0x330] sm:$0xff]
    %v3644 = vld [vmem:[#allocation2 + $0x338] sm:$0xff]
    %v3645 = vld [vmem:[#allocation2 + $0x340] sm:$0xff]
    %v3646 = vld [vmem:[#allocation2 + $0x348] sm:$0xff]
    %v3647 = vld [vmem:[#allocation2 + $0x350] sm:$0xff]
    %v3648 = vld [vmem:[#allocation2 + $0x358] sm:$0xff]
    %v3649 = vld [vmem:[#allocation2 + $0x360] sm:$0xff]
    %v3650 = vld [vmem:[#allocation2 + $0x368] sm:$0xff]
    %v3651 = vld [vmem:[#allocation2 + $0x370] sm:$0xff]
    %v3652 = vld [vmem:[#allocation2 + $0x378] sm:$0xff]
    %v3653 = vld [vmem:[#allocation2 + $0x380] sm:$0xff]
    %v3654 = vld [vmem:[#allocation2 + $0x388] sm:$0xff]
    %v3655 = vld [vmem:[#allocation2 + $0x390] sm:$0xff]
    %v3656 = vld [vmem:[#allocation2 + $0x398] sm:$0xff]
    %v3657 = vld [vmem:[#allocation2 + $0x3a0] sm:$0xff]
    %v3658 = vld [vmem:[#allocation2 + $0x3a8] sm:$0xff]
    %v3659 = vld [vmem:[#allocation2 + $0x3b0] sm:$0xff]
    %v3660 = vld [vmem:[#allocation2 + $0x3b8] sm:$0xff]
    %v3661 = vld [vmem:[#allocation2 + $0x3c0] sm:$0xff]
    %v3662 = vld [vmem:[#allocation2 + $0x3c8] sm:$0xff]
    %v3663 = vld [vmem:[#allocation2 + $0x3d0] sm:$0xff]
    %v3664 = vld [vmem:[#allocation2 + $0x3d8] sm:$0xff]
    %v3665 = vld [vmem:[#allocation2 + $0x3e0] sm:$0xff]
    %v3666 = vld [vmem:[#allocation2 + $0x3e8] sm:$0xff]
    %v3667 = vld [vmem:[#allocation2 + $0x3f0] sm:$0xff]
    %v3668 = vld [vmem:[#allocation2 + $0x3f8] sm:$0xff]
    %3669 = vmatprep.subr.mxu0 0.0
    %3670 = vmatpush1.msra.mxu0 %v3541
    %3671 = vmatprep.subr.mxu0 0.0
    %3672 = vmatpush1.msra.mxu0 %v3542
    %3673 = vmatprep.subr.mxu0 0.0
    %3674 = vmatpush1.msra.mxu0 %v3543
    %3675 = vmatprep.subr.mxu0 0.0
    %3676 = vmatpush1.msra.mxu0 %v3544
    %3677 = vmatprep.subr.mxu0 0.0
    %3678 = vmatpush1.msra.mxu0 %v3545
    %3679 = vmatprep.subr.mxu0 0.0
    %3680 = vmatpush1.msra.mxu0 %v3546
    %3681 = vmatprep.subr.mxu0 0.0
    %3682 = vmatpush1.msra.mxu0 %v3547
    %3683 = vmatprep.subr.mxu0 0.0
    %3684 = vmatpush1.msra.mxu0 %v3548
    %3685 = vmatprep.subr.mxu0 0.0
    %3686 = vmatpush1.msra.mxu0 %v3549
    %3687 = vmatprep.subr.mxu0 0.0
    %3688 = vmatpush1.msra.mxu0 %v3550
    %3689 = vmatprep.subr.mxu0 0.0
    %3690 = vmatpush1.msra.mxu0 %v3551
    %3691 = vmatprep.subr.mxu0 0.0
    %3692 = vmatpush1.msra.mxu0 %v3552
    %3693 = vmatprep.subr.mxu0 0.0
    %3694 = vmatpush1.msra.mxu0 %v3553
    %3695 = vmatprep.subr.mxu0 0.0
    %3696 = vmatpush1.msra.mxu0 %v3554
    %3697 = vmatprep.subr.mxu0 0.0
    %3698 = vmatpush1.msra.mxu0 %v3555
    %3699 = vmatprep.subr.mxu0 0.0
    %3700 = vmatpush1.msra.mxu0 %v3556
    %3701 = vmatprep.subr.mxu0 0.0
    %3702 = vmatpush1.msra.mxu0 %v3557
    %3703 = vmatprep.subr.mxu0 0.0
    %3704 = vmatpush1.msra.mxu0 %v3558
    %3705 = vmatprep.subr.mxu0 0.0
    %3706 = vmatpush1.msra.mxu0 %v3559
    %3707 = vmatprep.subr.mxu0 0.0
    %3708 = vmatpush1.msra.mxu0 %v3560
    %3709 = vmatprep.subr.mxu0 0.0
    %3710 = vmatpush1.msra.mxu0 %v3561
    %3711 = vmatprep.subr.mxu0 0.0
    %3712 = vmatpush1.msra.mxu0 %v3562
    %3713 = vmatprep.subr.mxu0 0.0
    %3714 = vmatpush1.msra.mxu0 %v3563
    %3715 = vmatprep.subr.mxu0 0.0
    %3716 = vmatpush1.msra.mxu0 %v3564
    %3717 = vmatprep.subr.mxu0 0.0
    %3718 = vmatpush1.msra.mxu0 %v3565
    %3719 = vmatprep.subr.mxu0 0.0
    %3720 = vmatpush1.msra.mxu0 %v3566
    %3721 = vmatprep.subr.mxu0 0.0
    %3722 = vmatpush1.msra.mxu0 %v3567
    %3723 = vmatprep.subr.mxu0 0.0
    %3724 = vmatpush1.msra.mxu0 %v3568
    %3725 = vmatprep.subr.mxu0 0.0
    %3726 = vmatpush1.msra.mxu0 %v3569
    %3727 = vmatprep.subr.mxu0 0.0
    %3728 = vmatpush1.msra.mxu0 %v3570
    %3729 = vmatprep.subr.mxu0 0.0
    %3730 = vmatpush1.msra.mxu0 %v3571
    %3731 = vmatprep.subr.mxu0 0.0
    %3732 = vmatpush1.msra.mxu0 %v3572
    %3733 = vmatprep.mubr.f32.mxu0 %v3534
    %3734 = vmatmul.mubr.f32.gmra.mrb[0].mxu0 %v3533
    %v3735 = vpop.f32.mrb[0].mxu0
    %v3736 = vadd.f32 0.0, %v3735
    %v3737 = vpop.f32.mrb[0].mxu0
    %3738 = vdwg.mxu0
    %3739 = vmatprep.subr.mxu0 0.0
    %3740 = vmatpush1.msra.mxu0 %v3573
    %3741 = vmatprep.subr.mxu0 0.0
    %3742 = vmatpush1.msra.mxu0 %v3574
    %3743 = vmatprep.subr.mxu0 0.0
    %3744 = vmatpush1.msra.mxu0 %v3575
    %3745 = vmatprep.subr.mxu0 0.0
    %3746 = vmatpush1.msra.mxu0 %v3576
    %3747 = vmatprep.subr.mxu0 0.0
    %3748 = vmatpush1.msra.mxu0 %v3577
    %3749 = vmatprep.subr.mxu0 0.0
    %3750 = vmatpush1.msra.mxu0 %v3578
    %3751 = vmatprep.subr.mxu0 0.0
    %3752 = vmatpush1.msra.mxu0 %v3579
    %3753 = vmatprep.subr.mxu0 0.0
    %3754 = vmatpush1.msra.mxu0 %v3580
    %3755 = vmatprep.subr.mxu0 0.0
    %3756 = vmatpush1.msra.mxu0 %v3581
    %3757 = vmatprep.subr.mxu0 0.0
    %3758 = vmatpush1.msra.mxu0 %v3582
    %3759 = vmatprep.subr.mxu0 0.0
    %3760 = vmatpush1.msra.mxu0 %v3583
    %3761 = vmatprep.subr.mxu0 0.0
    %3762 = vmatpush1.msra.mxu0 %v3584
    %3763 = vmatprep.subr.mxu0 0.0
    %3764 = vmatpush1.msra.mxu0 %v3585
    %3765 = vmatprep.subr.mxu0 0.0
    %3766 = vmatpush1.msra.mxu0 %v3586
    %3767 = vmatprep.subr.mxu0 0.0
    %3768 = vmatpush1.msra.mxu0 %v3587
    %3769 = vmatprep.subr.mxu0 0.0
    %3770 = vmatpush1.msra.mxu0 %v3588
    %3771 = vmatprep.subr.mxu0 0.0
    %3772 = vmatpush1.msra.mxu0 %v3589
    %3773 = vmatprep.subr.mxu0 0.0
    %3774 = vmatpush1.msra.mxu0 %v3590
    %3775 = vmatprep.subr.mxu0 0.0
    %3776 = vmatpush1.msra.mxu0 %v3591
    %3777 = vmatprep.subr.mxu0 0.0
    %3778 = vmatpush1.msra.mxu0 %v3592
    %3779 = vmatprep.subr.mxu0 0.0
    %3780 = vmatpush1.msra.mxu0 %v3593
    %3781 = vmatprep.subr.mxu0 0.0
    %3782 = vmatpush1.msra.mxu0 %v3594
    %3783 = vmatprep.subr.mxu0 0.0
    %3784 = vmatpush1.msra.mxu0 %v3595
    %3785 = vmatprep.subr.mxu0 0.0
    %3786 = vmatpush1.msra.mxu0 %v3596
    %3787 = vmatprep.subr.mxu0 0.0
    %3788 = vmatpush1.msra.mxu0 %v3597
    %3789 = vmatprep.subr.mxu0 0.0
    %3790 = vmatpush1.msra.mxu0 %v3598
    %3791 = vmatprep.subr.mxu0 0.0
    %3792 = vmatpush1.msra.mxu0 %v3599
    %3793 = vmatprep.subr.mxu0 0.0
    %3794 = vmatpush1.msra.mxu0 %v3600
    %3795 = vmatprep.subr.mxu0 0.0
    %3796 = vmatpush1.msra.mxu0 %v3601
    %3797 = vmatprep.subr.mxu0 0.0
    %3798 = vmatpush1.msra.mxu0 %v3602
    %3799 = vmatprep.subr.mxu0 0.0
    %3800 = vmatpush1.msra.mxu0 %v3603
    %3801 = vmatprep.subr.mxu0 0.0
    %3802 = vmatpush1.msra.mxu0 %v3604
    %3803 = vmatprep.mubr.f32.mxu0 %v3536
    %3804 = vmatmul.mubr.f32.gmra.mrb[0].mxu0 %v3535
    %v3805 = vpop.f32.mrb[0].mxu0
    %v3806 = vadd.f32 %v3736, %v3805
    %v3807 = vpop.f32.mrb[0].mxu0
    %3808 = vdwg.mxu0
    %3809 = vmatprep.subr.mxu0 0.0
    %3810 = vmatpush1.msra.mxu0 %v3605
    %3811 = vmatprep.subr.mxu0 0.0
    %3812 = vmatpush1.msra.mxu0 %v3606
    %3813 = vmatprep.subr.mxu0 0.0
    %3814 = vmatpush1.msra.mxu0 %v3607
    %3815 = vmatprep.subr.mxu0 0.0
    %3816 = vmatpush1.msra.mxu0 %v3608
    %3817 = vmatprep.subr.mxu0 0.0
    %3818 = vmatpush1.msra.mxu0 %v3609
    %3819 = vmatprep.subr.mxu0 0.0
    %3820 = vmatpush1.msra.mxu0 %v3610
    %3821 = vmatprep.subr.mxu0 0.0
    %3822 = vmatpush1.msra.mxu0 %v3611
    %3823 = vmatprep.subr.mxu0 0.0
    %3824 = vmatpush1.msra.mxu0 %v3612
    %3825 = vmatprep.subr.mxu0 0.0
    %3826 = vmatpush1.msra.mxu0 %v3613
    %3827 = vmatprep.subr.mxu0 0.0
    %3828 = vmatpush1.msra.mxu0 %v3614
    %3829 = vmatprep.subr.mxu0 0.0
    %3830 = vmatpush1.msra.mxu0 %v3615
    %3831 = vmatprep.subr.mxu0 0.0
    %3832 = vmatpush1.msra.mxu0 %v3616
    %3833 = vmatprep.subr.mxu0 0.0
    %3834 = vmatpush1.msra.mxu0 %v3617
    %3835 = vmatprep.subr.mxu0 0.0
    %3836 = vmatpush1.msra.mxu0 %v3618
    %3837 = vmatprep.subr.mxu0 0.0
    %3838 = vmatpush1.msra.mxu0 %v3619
    %3839 = vmatprep.subr.mxu0 0.0
    %3840 = vmatpush1.msra.mxu0 %v3620
    %3841 = vmatprep.subr.mxu0 0.0
    %3842 = vmatpush1.msra.mxu0 %v3621
    %3843 = vmatprep.subr.mxu0 0.0
    %3844 = vmatpush1.msra.mxu0 %v3622
    %3845 = vmatprep.subr.mxu0 0.0
    %3846 = vmatpush1.msra.mxu0 %v3623
    %3847 = vmatprep.subr.mxu0 0.0
    %3848 = vmatpush1.msra.mxu0 %v3624
    %3849 = vmatprep.subr.mxu0 0.0
    %3850 = vmatpush1.msra.mxu0 %v3625
    %3851 = vmatprep.subr.mxu0 0.0
    %3852 = vmatpush1.msra.mxu0 %v3626
    %3853 = vmatprep.subr.mxu0 0.0
    %3854 = vmatpush1.msra.mxu0 %v3627
    %3855 = vmatprep.subr.mxu0 0.0
    %3856 = vmatpush1.msra.mxu0 %v3628
    %3857 = vmatprep.subr.mxu0 0.0
    %3858 = vmatpush1.msra.mxu0 %v3629
    %3859 = vmatprep.subr.mxu0 0.0
    %3860 = vmatpush1.msra.mxu0 %v3630
    %3861 = vmatprep.subr.mxu0 0.0
    %3862 = vmatpush1.msra.mxu0 %v3631
    %3863 = vmatprep.subr.mxu0 0.0
    %3864 = vmatpush1.msra.mxu0 %v3632
    %3865 = vmatprep.subr.mxu0 0.0
    %3866 = vmatpush1.msra.mxu0 %v3633
    %3867 = vmatprep.subr.mxu0 0.0
    %3868 = vmatpush1.msra.mxu0 %v3634
    %3869 = vmatprep.subr.mxu0 0.0
    %3870 = vmatpush1.msra.mxu0 %v3635
    %3871 = vmatprep.subr.mxu0 0.0
    %3872 = vmatpush1.msra.mxu0 %v3636
    %3873 = vmatprep.mubr.f32.mxu0 %v3538
    %3874 = vmatmul.mubr.f32.gmra.mrb[0].mxu0 %v3537
    %v3875 = vpop.f32.mrb[0].mxu0
    %v3876 = vadd.f32 %v3806, %v3875
    %v3877 = vpop.f32.mrb[0].mxu0
    %3878 = vdwg.mxu0
    %3879 = vmatprep.subr.mxu0 0.0
    %3880 = vmatpush1.msra.mxu0 %v3637
    %3881 = vmatprep.subr.mxu0 0.0
    %3882 = vmatpush1.msra.mxu0 %v3638
    %3883 = vmatprep.subr.mxu0 0.0
    %3884 = vmatpush1.msra.mxu0 %v3639
    %3885 = vmatprep.subr.mxu0 0.0
    %3886 = vmatpush1.msra.mxu0 %v3640
    %3887 = vmatprep.subr.mxu0 0.0
    %3888 = vmatpush1.msra.mxu0 %v3641
    %3889 = vmatprep.subr.mxu0 0.0
    %3890 = vmatpush1.msra.mxu0 %v3642
    %3891 = vmatprep.subr.mxu0 0.0
    %3892 = vmatpush1.msra.mxu0 %v3643
    %3893 = vmatprep.subr.mxu0 0.0
    %3894 = vmatpush1.msra.mxu0 %v3644
    %3895 = vmatprep.subr.mxu0 0.0
    %3896 = vmatpush1.msra.mxu0 %v3645
    %3897 = vmatprep.subr.mxu0 0.0
    %3898 = vmatpush1.msra.mxu0 %v3646
    %3899 = vmatprep.subr.mxu0 0.0
    %3900 = vmatpush1.msra.mxu0 %v3647
    %3901 = vmatprep.subr.mxu0 0.0
    %3902 = vmatpush1.msra.mxu0 %v3648
    %3903 = vmatprep.subr.mxu0 0.0
    %3904 = vmatpush1.msra.mxu0 %v3649
    %3905 = vmatprep.subr.mxu0 0.0
    %3906 = vmatpush1.msra.mxu0 %v3650
    %3907 = vmatprep.subr.mxu0 0.0
    %3908 = vmatpush1.msra.mxu0 %v3651
    %3909 = vmatprep.subr.mxu0 0.0
    %3910 = vmatpush1.msra.mxu0 %v3652
    %3911 = vmatprep.subr.mxu0 0.0
    %3912 = vmatpush1.msra.mxu0 %v3653
    %3913 = vmatprep.subr.mxu0 0.0
    %3914 = vmatpush1.msra.mxu0 %v3654
    %3915 = vmatprep.subr.mxu0 0.0
    %3916 = vmatpush1.msra.mxu0 %v3655
    %3917 = vmatprep.subr.mxu0 0.0
    %3918 = vmatpush1.msra.mxu0 %v3656
    %3919 = vmatprep.subr.mxu0 0.0
    %3920 = vmatpush1.msra.mxu0 %v3657
    %3921 = vmatprep.subr.mxu0 0.0
    %3922 = vmatpush1.msra.mxu0 %v3658
    %3923 = vmatprep.subr.mxu0 0.0
    %3924 = vmatpush1.msra.mxu0 %v3659
    %3925 = vmatprep.subr.mxu0 0.0
    %3926 = vmatpush1.msra.mxu0 %v3660
    %3927 = vmatprep.subr.mxu0 0.0
    %3928 = vmatpush1.msra.mxu0 %v3661
    %3929 = vmatprep.subr.mxu0 0.0
    %3930 = vmatpush1.msra.mxu0 %v3662
    %3931 = vmatprep.subr.mxu0 0.0
    %3932 = vmatpush1.msra.mxu0 %v3663
    %3933 = vmatprep.subr.mxu0 0.0
    %3934 = vmatpush1.msra.mxu0 %v3664
    %3935 = vmatprep.subr.mxu0 0.0
    %3936 = vmatpush1.msra.mxu0 %v3665
    %3937 = vmatprep.subr.mxu0 0.0
    %3938 = vmatpush1.msra.mxu0 %v3666
    %3939 = vmatprep.subr.mxu0 0.0
    %3940 = vmatpush1.msra.mxu0 %v3667
    %3941 = vmatprep.subr.mxu0 0.0
    %3942 = vmatpush1.msra.mxu0 %v3668
    %3943 = vmatprep.mubr.f32.mxu0 %v3540
    %3944 = vmatmul.mubr.f32.gmra.mrb[0].mxu0 %v3539
    %v3945 = vpop.f32.mrb[0].mxu0
    %v3946 = vadd.f32 %v3876, %v3945
    %v3947 = vpop.f32.mrb[0].mxu0
    %3948 = vdwg.mxu0
    %v3949 = vadd.f32 %v3532, %v3946
    %v3950 = vld [vmem:[%s1 + $0x40] sm:$0xff]
    %v3951 = vld [vmem:[%s1 + $0x48] sm:$0xff]
    %v3952 = vld [vmem:[%s1 + $0x50] sm:$0xff]
    %v3953 = vld [vmem:[%s1 + $0x58] sm:$0xff]
    %v3954 = vld [vmem:[%s1 + $0x60] sm:$0xff]
    %v3955 = vld [vmem:[%s1 + $0x68] sm:$0xff]
    %v3956 = vld [vmem:[%s1 + $0x70] sm:$0xff]
    %v3957 = vld [vmem:[%s1 + $0x78] sm:$0xff]
    %v3958 = vld [vmem:[#allocation2 + $0x400] sm:$0xff]
    %v3959 = vld [vmem:[#allocation2 + $0x408] sm:$0xff]
    %v3960 = vld [vmem:[#allocation2 + $0x410] sm:$0xff]
    %v3961 = vld [vmem:[#allocation2 + $0x418] sm:$0xff]
    %v3962 = vld [vmem:[#allocation2 + $0x420] sm:$0xff]
    %v3963 = vld [vmem:[#allocation2 + $0x428] sm:$0xff]
    %v3964 = vld [vmem:[#allocation2 + $0x430] sm:$0xff]
    %v3965 = vld [vmem:[#allocation2 + $0x438] sm:$0xff]
    %v3966 = vld [vmem:[#allocation2 + $0x440] sm:$0xff]
    %v3967 = vld [vmem:[#allocation2 + $0x448] sm:$0xff]
    %v3968 = vld [vmem:[#allocation2 + $0x450] sm:$0xff]
    %v3969 = vld [vmem:[#allocation2 + $0x458] sm:$0xff]
    %v3970 = vld [vmem:[#allocation2 + $0x460] sm:$0xff]
    %v3971 = vld [vmem:[#allocation2 + $0x468] sm:$0xff]
    %v3972 = vld [vmem:[#allocation2 + $0x470] sm:$0xff]
    %v3973 = vld [vmem:[#allocation2 + $0x478] sm:$0xff]
    %v3974 = vld [vmem:[#allocation2 + $0x480] sm:$0xff]
    %v3975 = vld [vmem:[#allocation2 + $0x488] sm:$0xff]
    %v3976 = vld [vmem:[#allocation2 + $0x490] sm:$0xff]
    %v3977 = vld [vmem:[#allocation2 + $0x498] sm:$0xff]
    %v3978 = vld [vmem:[#allocation2 + $0x4a0] sm:$0xff]
    %v3979 = vld [vmem:[#allocation2 + $0x4a8] sm:$0xff]
    %v3980 = vld [vmem:[#allocation2 + $0x4b0] sm:$0xff]
    %v3981 = vld [vmem:[#allocation2 + $0x4b8] sm:$0xff]
    %v3982 = vld [vmem:[#allocation2 + $0x4c0] sm:$0xff]
    %v3983 = vld [vmem:[#allocation2 + $0x4c8] sm:$0xff]
    %v3984 = vld [vmem:[#allocation2 + $0x4d0] sm:$0xff]
    %v3985 = vld [vmem:[#allocation2 + $0x4d8] sm:$0xff]
    %v3986 = vld [vmem:[#allocation2 + $0x4e0] sm:$0xff]
    %v3987 = vld [vmem:[#allocation2 + $0x4e8] sm:$0xff]
    %v3988 = vld [vmem:[#allocation2 + $0x4f0] sm:$0xff]
    %v3989 = vld [vmem:[#allocation2 + $0x4f8] sm:$0xff]
    %v3990 = vld [vmem:[#allocation2 + $0x500] sm:$0xff]
    %v3991 = vld [vmem:[#allocation2 + $0x508] sm:$0xff]
    %v3992 = vld [vmem:[#allocation2 + $0x510] sm:$0xff]
    %v3993 = vld [vmem:[#allocation2 + $0x518] sm:$0xff]
    %v3994 = vld [vmem:[#allocation2 + $0x520] sm:$0xff]
    %v3995 = vld [vmem:[#allocation2 + $0x528] sm:$0xff]
    %v3996 = vld [vmem:[#allocation2 + $0x530] sm:$0xff]
    %v3997 = vld [vmem:[#allocation2 + $0x538] sm:$0xff]
    %v3998 = vld [vmem:[#allocation2 + $0x540] sm:$0xff]
    %v3999 = vld [vmem:[#allocation2 + $0x548] sm:$0xff]
    %v4000 = vld [vmem:[#allocation2 + $0x550] sm:$0xff]
    %v4001 = vld [vmem:[#allocation2 + $0x558] sm:$0xff]
    %v4002 = vld [vmem:[#allocation2 + $0x560] sm:$0xff]
    %v4003 = vld [vmem:[#allocation2 + $0x568] sm:$0xff]
    %v4004 = vld [vmem:[#allocation2 + $0x570] sm:$0xff]
    %v4005 = vld [vmem:[#allocation2 + $0x578] sm:$0xff]
    %v4006 = vld [vmem:[#allocation2 + $0x580] sm:$0xff]
    %v4007 = vld [vmem:[#allocation2 + $0x588] sm:$0xff]
    %v4008 = vld [vmem:[#allocation2 + $0x590] sm:$0xff]
    %v4009 = vld [vmem:[#allocation2 + $0x598] sm:$0xff]
    %v4010 = vld [vmem:[#allocation2 + $0x5a0] sm:$0xff]
    %v4011 = vld [vmem:[#allocation2 + $0x5a8] sm:$0xff]
    %v4012 = vld [vmem:[#allocation2 + $0x5b0] sm:$0xff]
    %v4013 = vld [vmem:[#allocation2 + $0x5b8] sm:$0xff]
    %v4014 = vld [vmem:[#allocation2 + $0x5c0] sm:$0xff]
    %v4015 = vld [vmem:[#allocation2 + $0x5c8] sm:$0xff]
    %v4016 = vld [vmem:[#allocation2 + $0x5d0] sm:$0xff]
    %v4017 = vld [vmem:[#allocation2 + $0x5d8] sm:$0xff]
    %v4018 = vld [vmem:[#allocation2 + $0x5e0] sm:$0xff]
    %v4019 = vld [vmem:[#allocation2 + $0x5e8] sm:$0xff]
    %v4020 = vld [vmem:[#allocation2 + $0x5f0] sm:$0xff]
    %v4021 = vld [vmem:[#allocation2 + $0x5f8] sm:$0xff]
    %v4022 = vld [vmem:[#allocation2 + $0x600] sm:$0xff]
    %v4023 = vld [vmem:[#allocation2 + $0x608] sm:$0xff]
    %v4024 = vld [vmem:[#allocation2 + $0x610] sm:$0xff]
    %v4025 = vld [vmem:[#allocation2 + $0x618] sm:$0xff]
    %v4026 = vld [vmem:[#allocation2 + $0x620] sm:$0xff]
    %v4027 = vld [vmem:[#allocation2 + $0x628] sm:$0xff]
    %v4028 = vld [vmem:[#allocation2 + $0x630] sm:$0xff]
    %v4029 = vld [vmem:[#allocation2 + $0x638] sm:$0xff]
    %v4030 = vld [vmem:[#allocation2 + $0x640] sm:$0xff]
    %v4031 = vld [vmem:[#allocation2 + $0x648] sm:$0xff]
    %v4032 = vld [vmem:[#allocation2 + $0x650] sm:$0xff]
    %v4033 = vld [vmem:[#allocation2 + $0x658] sm:$0xff]
    %v4034 = vld [vmem:[#allocation2 + $0x660] sm:$0xff]
    %v4035 = vld [vmem:[#allocation2 + $0x668] sm:$0xff]
    %v4036 = vld [vmem:[#allocation2 + $0x670] sm:$0xff]
    %v4037 = vld [vmem:[#allocation2 + $0x678] sm:$0xff]
    %v4038 = vld [vmem:[#allocation2 + $0x680] sm:$0xff]
    %v4039 = vld [vmem:[#allocation2 + $0x688] sm:$0xff]
    %v4040 = vld [vmem:[#allocation2 + $0x690] sm:$0xff]
    %v4041 = vld [vmem:[#allocation2 + $0x698] sm:$0xff]
    %v4042 = vld [vmem:[#allocation2 + $0x6a0] sm:$0xff]
    %v4043 = vld [vmem:[#allocation2 + $0x6a8] sm:$0xff]
    %v4044 = vld [vmem:[#allocation2 + $0x6b0] sm:$0xff]
    %v4045 = vld [vmem:[#allocation2 + $0x6b8] sm:$0xff]
    %v4046 = vld [vmem:[#allocation2 + $0x6c0] sm:$0xff]
    %v4047 = vld [vmem:[#allocation2 + $0x6c8] sm:$0xff]
    %v4048 = vld [vmem:[#allocation2 + $0x6d0] sm:$0xff]
    %v4049 = vld [vmem:[#allocation2 + $0x6d8] sm:$0xff]
    %v4050 = vld [vmem:[#allocation2 + $0x6e0] sm:$0xff]
    %v4051 = vld [vmem:[#allocation2 + $0x6e8] sm:$0xff]
    %v4052 = vld [vmem:[#allocation2 + $0x6f0] sm:$0xff]
    %v4053 = vld [vmem:[#allocation2 + $0x6f8] sm:$0xff]
    %v4054 = vld [vmem:[#allocation2 + $0x700] sm:$0xff]
    %v4055 = vld [vmem:[#allocation2 + $0x708] sm:$0xff]
    %v4056 = vld [vmem:[#allocation2 + $0x710] sm:$0xff]
    %v4057 = vld [vmem:[#allocation2 + $0x718] sm:$0xff]
    %v4058 = vld [vmem:[#allocation2 + $0x720] sm:$0xff]
    %v4059 = vld [vmem:[#allocation2 + $0x728] sm:$0xff]
    %v4060 = vld [vmem:[#allocation2 + $0x730] sm:$0xff]
    %v4061 = vld [vmem:[#allocation2 + $0x738] sm:$0xff]
    %v4062 = vld [vmem:[#allocation2 + $0x740] sm:$0xff]
    %v4063 = vld [vmem:[#allocation2 + $0x748] sm:$0xff]
    %v4064 = vld [vmem:[#allocation2 + $0x750] sm:$0xff]
    %v4065 = vld [vmem:[#allocation2 + $0x758] sm:$0xff]
    %v4066 = vld [vmem:[#allocation2 + $0x760] sm:$0xff]
    %v4067 = vld [vmem:[#allocation2 + $0x768] sm:$0xff]
    %v4068 = vld [vmem:[#allocation2 + $0x770] sm:$0xff]
    %v4069 = vld [vmem:[#allocation2 + $0x778] sm:$0xff]
    %v4070 = vld [vmem:[#allocation2 + $0x780] sm:$0xff]
    %v4071 = vld [vmem:[#allocation2 + $0x788] sm:$0xff]
    %v4072 = vld [vmem:[#allocation2 + $0x790] sm:$0xff]
    %v4073 = vld [vmem:[#allocation2 + $0x798] sm:$0xff]
    %v4074 = vld [vmem:[#allocation2 + $0x7a0] sm:$0xff]
    %v4075 = vld [vmem:[#allocation2 + $0x7a8] sm:$0xff]
    %v4076 = vld [vmem:[#allocation2 + $0x7b0] sm:$0xff]
    %v4077 = vld [vmem:[#allocation2 + $0x7b8] sm:$0xff]
    %v4078 = vld [vmem:[#allocation2 + $0x7c0] sm:$0xff]
    %v4079 = vld [vmem:[#allocation2 + $0x7c8] sm:$0xff]
    %v4080 = vld [vmem:[#allocation2 + $0x7d0] sm:$0xff]
    %v4081 = vld [vmem:[#allocation2 + $0x7d8] sm:$0xff]
    %v4082 = vld [vmem:[#allocation2 + $0x7e0] sm:$0xff]
    %v4083 = vld [vmem:[#allocation2 + $0x7e8] sm:$0xff]
    %v4084 = vld [vmem:[#allocation2 + $0x7f0] sm:$0xff]
    %v4085 = vld [vmem:[#allocation2 + $0x7f8] sm:$0xff]
    %4086 = vmatprep.subr.mxu0 0.0
    %4087 = vmatpush1.msra.mxu0 %v3958
    %4088 = vmatprep.subr.mxu0 0.0
    %4089 = vmatpush1.msra.mxu0 %v3959
    %4090 = vmatprep.subr.mxu0 0.0
    %4091 = vmatpush1.msra.mxu0 %v3960
    %4092 = vmatprep.subr.mxu0 0.0
    %4093 = vmatpush1.msra.mxu0 %v3961
    %4094 = vmatprep.subr.mxu0 0.0
    %4095 = vmatpush1.msra.mxu0 %v3962
    %4096 = vmatprep.subr.mxu0 0.0
    %4097 = vmatpush1.msra.mxu0 %v3963
    %4098 = vmatprep.subr.mxu0 0.0
    %4099 = vmatpush1.msra.mxu0 %v3964
    %4100 = vmatprep.subr.mxu0 0.0
    %4101 = vmatpush1.msra.mxu0 %v3965
    %4102 = vmatprep.subr.mxu0 0.0
    %4103 = vmatpush1.msra.mxu0 %v3966
    %4104 = vmatprep.subr.mxu0 0.0
    %4105 = vmatpush1.msra.mxu0 %v3967
    %4106 = vmatprep.subr.mxu0 0.0
    %4107 = vmatpush1.msra.mxu0 %v3968
    %4108 = vmatprep.subr.mxu0 0.0
    %4109 = vmatpush1.msra.mxu0 %v3969
    %4110 = vmatprep.subr.mxu0 0.0
    %4111 = vmatpush1.msra.mxu0 %v3970
    %4112 = vmatprep.subr.mxu0 0.0
    %4113 = vmatpush1.msra.mxu0 %v3971
    %4114 = vmatprep.subr.mxu0 0.0
    %4115 = vmatpush1.msra.mxu0 %v3972
    %4116 = vmatprep.subr.mxu0 0.0
    %4117 = vmatpush1.msra.mxu0 %v3973
    %4118 = vmatprep.subr.mxu0 0.0
    %4119 = vmatpush1.msra.mxu0 %v3974
    %4120 = vmatprep.subr.mxu0 0.0
    %4121 = vmatpush1.msra.mxu0 %v3975
    %4122 = vmatprep.subr.mxu0 0.0
    %4123 = vmatpush1.msra.mxu0 %v3976
    %4124 = vmatprep.subr.mxu0 0.0
    %4125 = vmatpush1.msra.mxu0 %v3977
    %4126 = vmatprep.subr.mxu0 0.0
    %4127 = vmatpush1.msra.mxu0 %v3978
    %4128 = vmatprep.subr.mxu0 0.0
    %4129 = vmatpush1.msra.mxu0 %v3979
    %4130 = vmatprep.subr.mxu0 0.0
    %4131 = vmatpush1.msra.mxu0 %v3980
    %4132 = vmatprep.subr.mxu0 0.0
    %4133 = vmatpush1.msra.mxu0 %v3981
    %4134 = vmatprep.subr.mxu0 0.0
    %4135 = vmatpush1.msra.mxu0 %v3982
    %4136 = vmatprep.subr.mxu0 0.0
    %4137 = vmatpush1.msra.mxu0 %v3983
    %4138 = vmatprep.subr.mxu0 0.0
    %4139 = vmatpush1.msra.mxu0 %v3984
    %4140 = vmatprep.subr.mxu0 0.0
    %4141 = vmatpush1.msra.mxu0 %v3985
    %4142 = vmatprep.subr.mxu0 0.0
    %4143 = vmatpush1.msra.mxu0 %v3986
    %4144 = vmatprep.subr.mxu0 0.0
    %4145 = vmatpush1.msra.mxu0 %v3987
    %4146 = vmatprep.subr.mxu0 0.0
    %4147 = vmatpush1.msra.mxu0 %v3988
    %4148 = vmatprep.subr.mxu0 0.0
    %4149 = vmatpush1.msra.mxu0 %v3989
    %4150 = vmatprep.mubr.f32.mxu0 %v3951
    %4151 = vmatmul.mubr.f32.gmra.mrb[0].mxu0 %v3950
    %v4152 = vpop.f32.mrb[0].mxu0
    %v4153 = vadd.f32 0.0, %v4152
    %v4154 = vpop.f32.mrb[0].mxu0
    %4155 = vdwg.mxu0
    %4156 = vmatprep.subr.mxu0 0.0
    %4157 = vmatpush1.msra.mxu0 %v3990
    %4158 = vmatprep.subr.mxu0 0.0
    %4159 = vmatpush1.msra.mxu0 %v3991
    %4160 = vmatprep.subr.mxu0 0.0
    %4161 = vmatpush1.msra.mxu0 %v3992
    %4162 = vmatprep.subr.mxu0 0.0
    %4163 = vmatpush1.msra.mxu0 %v3993
    %4164 = vmatprep.subr.mxu0 0.0
    %4165 = vmatpush1.msra.mxu0 %v3994
    %4166 = vmatprep.subr.mxu0 0.0
    %4167 = vmatpush1.msra.mxu0 %v3995
    %4168 = vmatprep.subr.mxu0 0.0
    %4169 = vmatpush1.msra.mxu0 %v3996
    %4170 = vmatprep.subr.mxu0 0.0
    %4171 = vmatpush1.msra.mxu0 %v3997
    %4172 = vmatprep.subr.mxu0 0.0
    %4173 = vmatpush1.msra.mxu0 %v3998
    %4174 = vmatprep.subr.mxu0 0.0
    %4175 = vmatpush1.msra.mxu0 %v3999
    %4176 = vmatprep.subr.mxu0 0.0
    %4177 = vmatpush1.msra.mxu0 %v4000
    %4178 = vmatprep.subr.mxu0 0.0
    %4179 = vmatpush1.msra.mxu0 %v4001
    %4180 = vmatprep.subr.mxu0 0.0
    %4181 = vmatpush1.msra.mxu0 %v4002
    %4182 = vmatprep.subr.mxu0 0.0
    %4183 = vmatpush1.msra.mxu0 %v4003
    %4184 = vmatprep.subr.mxu0 0.0
    %4185 = vmatpush1.msra.mxu0 %v4004
    %4186 = vmatprep.subr.mxu0 0.0
    %4187 = vmatpush1.msra.mxu0 %v4005
    %4188 = vmatprep.subr.mxu0 0.0
    %4189 = vmatpush1.msra.mxu0 %v4006
    %4190 = vmatprep.subr.mxu0 0.0
    %4191 = vmatpush1.msra.mxu0 %v4007
    %4192 = vmatprep.subr.mxu0 0.0
    %4193 = vmatpush1.msra.mxu0 %v4008
    %4194 = vmatprep.subr.mxu0 0.0
    %4195 = vmatpush1.msra.mxu0 %v4009
    %4196 = vmatprep.subr.mxu0 0.0
    %4197 = vmatpush1.msra.mxu0 %v4010
    %4198 = vmatprep.subr.mxu0 0.0
    %4199 = vmatpush1.msra.mxu0 %v4011
    %4200 = vmatprep.subr.mxu0 0.0
    %4201 = vmatpush1.msra.mxu0 %v4012
    %4202 = vmatprep.subr.mxu0 0.0
    %4203 = vmatpush1.msra.mxu0 %v4013
    %4204 = vmatprep.subr.mxu0 0.0
    %4205 = vmatpush1.msra.mxu0 %v4014
    %4206 = vmatprep.subr.mxu0 0.0
    %4207 = vmatpush1.msra.mxu0 %v4015
    %4208 = vmatprep.subr.mxu0 0.0
    %4209 = vmatpush1.msra.mxu0 %v4016
    %4210 = vmatprep.subr.mxu0 0.0
    %4211 = vmatpush1.msra.mxu0 %v4017
    %4212 = vmatprep.subr.mxu0 0.0
    %4213 = vmatpush1.msra.mxu0 %v4018
    %4214 = vmatprep.subr.mxu0 0.0
    %4215 = vmatpush1.msra.mxu0 %v4019
    %4216 = vmatprep.subr.mxu0 0.0
    %4217 = vmatpush1.msra.mxu0 %v4020
    %4218 = vmatprep.subr.mxu0 0.0
    %4219 = vmatpush1.msra.mxu0 %v4021
    %4220 = vmatprep.mubr.f32.mxu0 %v3953
    %4221 = vmatmul.mubr.f32.gmra.mrb[0].mxu0 %v3952
    %v4222 = vpop.f32.mrb[0].mxu0
    %v4223 = vadd.f32 %v4153, %v4222
    %v4224 = vpop.f32.mrb[0].mxu0
    %4225 = vdwg.mxu0
    %4226 = vmatprep.subr.mxu0 0.0
    %4227 = vmatpush1.msra.mxu0 %v4022
    %4228 = vmatprep.subr.mxu0 0.0
    %4229 = vmatpush1.msra.mxu0 %v4023
    %4230 = vmatprep.subr.mxu0 0.0
    %4231 = vmatpush1.msra.mxu0 %v4024
    %4232 = vmatprep.subr.mxu0 0.0
    %4233 = vmatpush1.msra.mxu0 %v4025
    %4234 = vmatprep.subr.mxu0 0.0
    %4235 = vmatpush1.msra.mxu0 %v4026
    %4236 = vmatprep.subr.mxu0 0.0
    %4237 = vmatpush1.msra.mxu0 %v4027
    %4238 = vmatprep.subr.mxu0 0.0
    %4239 = vmatpush1.msra.mxu0 %v4028
    %4240 = vmatprep.subr.mxu0 0.0
    %4241 = vmatpush1.msra.mxu0 %v4029
    %4242 = vmatprep.subr.mxu0 0.0
    %4243 = vmatpush1.msra.mxu0 %v4030
    %4244 = vmatprep.subr.mxu0 0.0
    %4245 = vmatpush1.msra.mxu0 %v4031
    %4246 = vmatprep.subr.mxu0 0.0
    %4247 = vmatpush1.msra.mxu0 %v4032
    %4248 = vmatprep.subr.mxu0 0.0
    %4249 = vmatpush1.msra.mxu0 %v4033
    %4250 = vmatprep.subr.mxu0 0.0
    %4251 = vmatpush1.msra.mxu0 %v4034
    %4252 = vmatprep.subr.mxu0 0.0
    %4253 = vmatpush1.msra.mxu0 %v4035
    %4254 = vmatprep.subr.mxu0 0.0
    %4255 = vmatpush1.msra.mxu0 %v4036
    %4256 = vmatprep.subr.mxu0 0.0
    %4257 = vmatpush1.msra.mxu0 %v4037
    %4258 = vmatprep.subr.mxu0 0.0
    %4259 = vmatpush1.msra.mxu0 %v4038
    %4260 = vmatprep.subr.mxu0 0.0
    %4261 = vmatpush1.msra.mxu0 %v4039
    %4262 = vmatprep.subr.mxu0 0.0
    %4263 = vmatpush1.msra.mxu0 %v4040
    %4264 = vmatprep.subr.mxu0 0.0
    %4265 = vmatpush1.msra.mxu0 %v4041
    %4266 = vmatprep.subr.mxu0 0.0
    %4267 = vmatpush1.msra.mxu0 %v4042
    %4268 = vmatprep.subr.mxu0 0.0
    %4269 = vmatpush1.msra.mxu0 %v4043
    %4270 = vmatprep.subr.mxu0 0.0
    %4271 = vmatpush1.msra.mxu0 %v4044
    %4272 = vmatprep.subr.mxu0 0.0
    %4273 = vmatpush1.msra.mxu0 %v4045
    %4274 = vmatprep.subr.mxu0 0.0
    %4275 = vmatpush1.msra.mxu0 %v4046
    %4276 = vmatprep.subr.mxu0 0.0
    %4277 = vmatpush1.msra.mxu0 %v4047
    %4278 = vmatprep.subr.mxu0 0.0
    %4279 = vmatpush1.msra.mxu0 %v4048
    %4280 = vmatprep.subr.mxu0 0.0
    %4281 = vmatpush1.msra.mxu0 %v4049
    %4282 = vmatprep.subr.mxu0 0.0
    %4283 = vmatpush1.msra.mxu0 %v4050
    %4284 = vmatprep.subr.mxu0 0.0
    %4285 = vmatpush1.msra.mxu0 %v4051
    %4286 = vmatprep.subr.mxu0 0.0
    %4287 = vmatpush1.msra.mxu0 %v4052
    %4288 = vmatprep.subr.mxu0 0.0
    %4289 = vmatpush1.msra.mxu0 %v4053
    %4290 = vmatprep.mubr.f32.mxu0 %v3955
    %4291 = vmatmul.mubr.f32.gmra.mrb[0].mxu0 %v3954
    %v4292 = vpop.f32.mrb[0].mxu0
    %v4293 = vadd.f32 %v4223, %v4292
    %v4294 = vpop.f32.mrb[0].mxu0
    %4295 = vdwg.mxu0
    %4296 = vmatprep.subr.mxu0 0.0
    %4297 = vmatpush1.msra.mxu0 %v4054
    %4298 = vmatprep.subr.mxu0 0.0
    %4299 = vmatpush1.msra.mxu0 %v4055
    %4300 = vmatprep.subr.mxu0 0.0
    %4301 = vmatpush1.msra.mxu0 %v4056
    %4302 = vmatprep.subr.mxu0 0.0
    %4303 = vmatpush1.msra.mxu0 %v4057
    %4304 = vmatprep.subr.mxu0 0.0
    %4305 = vmatpush1.msra.mxu0 %v4058
    %4306 = vmatprep.subr.mxu0 0.0
    %4307 = vmatpush1.msra.mxu0 %v4059
    %4308 = vmatprep.subr.mxu0 0.0
    %4309 = vmatpush1.msra.mxu0 %v4060
    %4310 = vmatprep.subr.mxu0 0.0
    %4311 = vmatpush1.msra.mxu0 %v4061
    %4312 = vmatprep.subr.mxu0 0.0
    %4313 = vmatpush1.msra.mxu0 %v4062
    %4314 = vmatprep.subr.mxu0 0.0
    %4315 = vmatpush1.msra.mxu0 %v4063
    %4316 = vmatprep.subr.mxu0 0.0
    %4317 = vmatpush1.msra.mxu0 %v4064
    %4318 = vmatprep.subr.mxu0 0.0
    %4319 = vmatpush1.msra.mxu0 %v4065
    %4320 = vmatprep.subr.mxu0 0.0
    %4321 = vmatpush1.msra.mxu0 %v4066
    %4322 = vmatprep.subr.mxu0 0.0
    %4323 = vmatpush1.msra.mxu0 %v4067
    %4324 = vmatprep.subr.mxu0 0.0
    %4325 = vmatpush1.msra.mxu0 %v4068
    %4326 = vmatprep.subr.mxu0 0.0
    %4327 = vmatpush1.msra.mxu0 %v4069
    %4328 = vmatprep.subr.mxu0 0.0
    %4329 = vmatpush1.msra.mxu0 %v4070
    %4330 = vmatprep.subr.mxu0 0.0
    %4331 = vmatpush1.msra.mxu0 %v4071
    %4332 = vmatprep.subr.mxu0 0.0
    %4333 = vmatpush1.msra.mxu0 %v4072
    %4334 = vmatprep.subr.mxu0 0.0
    %4335 = vmatpush1.msra.mxu0 %v4073
    %4336 = vmatprep.subr.mxu0 0.0
    %4337 = vmatpush1.msra.mxu0 %v4074
    %4338 = vmatprep.subr.mxu0 0.0
    %4339 = vmatpush1.msra.mxu0 %v4075
    %4340 = vmatprep.subr.mxu0 0.0
    %4341 = vmatpush1.msra.mxu0 %v4076
    %4342 = vmatprep.subr.mxu0 0.0
    %4343 = vmatpush1.msra.mxu0 %v4077
    %4344 = vmatprep.subr.mxu0 0.0
    %4345 = vmatpush1.msra.mxu0 %v4078
    %4346 = vmatprep.subr.mxu0 0.0
    %4347 = vmatpush1.msra.mxu0 %v4079
    %4348 = vmatprep.subr.mxu0 0.0
    %4349 = vmatpush1.msra.mxu0 %v4080
    %4350 = vmatprep.subr.mxu0 0.0
    %4351 = vmatpush1.msra.mxu0 %v4081
    %4352 = vmatprep.subr.mxu0 0.0
    %4353 = vmatpush1.msra.mxu0 %v4082
    %4354 = vmatprep.subr.mxu0 0.0
    %4355 = vmatpush1.msra.mxu0 %v4083
    %4356 = vmatprep.subr.mxu0 0.0
    %4357 = vmatpush1.msra.mxu0 %v4084
    %4358 = vmatprep.subr.mxu0 0.0
    %4359 = vmatpush1.msra.mxu0 %v4085
    %4360 = vmatprep.mubr.f32.mxu0 %v3957
    %4361 = vmatmul.mubr.f32.gmra.mrb[0].mxu0 %v3956
    %v4362 = vpop.f32.mrb[0].mxu0
    %v4363 = vadd.f32 %v4293, %v4362
    %v4364 = vpop.f32.mrb[0].mxu0
    %4365 = vdwg.mxu0
    %v4366 = vadd.f32 %v3949, %v4363
    %v4367 = vld [vmem:[%s1 + $0x80] sm:$0xff]
    %v4368 = vld [vmem:[%s1 + $0x88] sm:$0xff]
    %v4369 = vld [vmem:[%s1 + $0x90] sm:$0xff]
    %v4370 = vld [vmem:[%s1 + $0x98] sm:$0xff]
    %v4371 = vld [vmem:[%s1 + $0xa0] sm:$0xff]
    %v4372 = vld [vmem:[%s1 + $0xa8] sm:$0xff]
    %v4373 = vld [vmem:[%s1 + $0xb0] sm:$0xff]
    %v4374 = vld [vmem:[%s1 + $0xb8] sm:$0xff]
    %v4375 = vld [vmem:[#allocation2 + $0x800] sm:$0xff]
    %v4376 = vld [vmem:[#allocation2 + $0x808] sm:$0xff]
    %v4377 = vld [vmem:[#allocation2 + $0x810] sm:$0xff]
    %v4378 = vld [vmem:[#allocation2 + $0x818] sm:$0xff]
    %v4379 = vld [vmem:[#allocation2 + $0x820] sm:$0xff]
    %v4380 = vld [vmem:[#allocation2 + $0x828] sm:$0xff]
    %v4381 = vld [vmem:[#allocation2 + $0x830] sm:$0xff]
    %v4382 = vld [vmem:[#allocation2 + $0x838] sm:$0xff]
    %v4383 = vld [vmem:[#allocation2 + $0x840] sm:$0xff]
    %v4384 = vld [vmem:[#allocation2 + $0x848] sm:$0xff]
    %v4385 = vld [vmem:[#allocation2 + $0x850] sm:$0xff]
    %v4386 = vld [vmem:[#allocation2 + $0x858] sm:$0xff]
    %v4387 = vld [vmem:[#allocation2 + $0x860] sm:$0xff]
    %v4388 = vld [vmem:[#allocation2 + $0x868] sm:$0xff]
    %v4389 = vld [vmem:[#allocation2 + $0x870] sm:$0xff]
    %v4390 = vld [vmem:[#allocation2 + $0x878] sm:$0xff]
    %v4391 = vld [vmem:[#allocation2 + $0x880] sm:$0xff]
    %v4392 = vld [vmem:[#allocation2 + $0x888] sm:$0xff]
    %v4393 = vld [vmem:[#allocation2 + $0x890] sm:$0xff]
    %v4394 = vld [vmem:[#allocation2 + $0x898] sm:$0xff]
    %v4395 = vld [vmem:[#allocation2 + $0x8a0] sm:$0xff]
    %v4396 = vld [vmem:[#allocation2 + $0x8a8] sm:$0xff]
    %v4397 = vld [vmem:[#allocation2 + $0x8b0] sm:$0xff]
    %v4398 = vld [vmem:[#allocation2 + $0x8b8] sm:$0xff]
    %v4399 = vld [vmem:[#allocation2 + $0x8c0] sm:$0xff]
    %v4400 = vld [vmem:[#allocation2 + $0x8c8] sm:$0xff]
    %v4401 = vld [vmem:[#allocation2 + $0x8d0] sm:$0xff]
    %v4402 = vld [vmem:[#allocation2 + $0x8d8] sm:$0xff]
    %v4403 = vld [vmem:[#allocation2 + $0x8e0] sm:$0xff]
    %v4404 = vld [vmem:[#allocation2 + $0x8e8] sm:$0xff]
    %v4405 = vld [vmem:[#allocation2 + $0x8f0] sm:$0xff]
    %v4406 = vld [vmem:[#allocation2 + $0x8f8] sm:$0xff]
    %v4407 = vld [vmem:[#allocation2 + $0x900] sm:$0xff]
    %v4408 = vld [vmem:[#allocation2 + $0x908] sm:$0xff]
    %v4409 = vld [vmem:[#allocation2 + $0x910] sm:$0xff]
    %v4410 = vld [vmem:[#allocation2 + $0x918] sm:$0xff]
    %v4411 = vld [vmem:[#allocation2 + $0x920] sm:$0xff]
    %v4412 = vld [vmem:[#allocation2 + $0x928] sm:$0xff]
    %v4413 = vld [vmem:[#allocation2 + $0x930] sm:$0xff]
    %v4414 = vld [vmem:[#allocation2 + $0x938] sm:$0xff]
    %v4415 = vld [vmem:[#allocation2 + $0x940] sm:$0xff]
    %v4416 = vld [vmem:[#allocation2 + $0x948] sm:$0xff]
    %v4417 = vld [vmem:[#allocation2 + $0x950] sm:$0xff]
    %v4418 = vld [vmem:[#allocation2 + $0x958] sm:$0xff]
    %v4419 = vld [vmem:[#allocation2 + $0x960] sm:$0xff]
    %v4420 = vld [vmem:[#allocation2 + $0x968] sm:$0xff]
    %v4421 = vld [vmem:[#allocation2 + $0x970] sm:$0xff]
    %v4422 = vld [vmem:[#allocation2 + $0x978] sm:$0xff]
    %v4423 = vld [vmem:[#allocation2 + $0x980] sm:$0xff]
    %v4424 = vld [vmem:[#allocation2 + $0x988] sm:$0xff]
    %v4425 = vld [vmem:[#allocation2 + $0x990] sm:$0xff]
    %v4426 = vld [vmem:[#allocation2 + $0x998] sm:$0xff]
    %v4427 = vld [vmem:[#allocation2 + $0x9a0] sm:$0xff]
    %v4428 = vld [vmem:[#allocation2 + $0x9a8] sm:$0xff]
    %v4429 = vld [vmem:[#allocation2 + $0x9b0] sm:$0xff]
    %v4430 = vld [vmem:[#allocation2 + $0x9b8] sm:$0xff]
    %v4431 = vld [vmem:[#allocation2 + $0x9c0] sm:$0xff]
    %v4432 = vld [vmem:[#allocation2 + $0x9c8] sm:$0xff]
    %v4433 = vld [vmem:[#allocation2 + $0x9d0] sm:$0xff]
    %v4434 = vld [vmem:[#allocation2 + $0x9d8] sm:$0xff]
    %v4435 = vld [vmem:[#allocation2 + $0x9e0] sm:$0xff]
    %v4436 = vld [vmem:[#allocation2 + $0x9e8] sm:$0xff]
    %v4437 = vld [vmem:[#allocation2 + $0x9f0] sm:$0xff]
    %v4438 = vld [vmem:[#allocation2 + $0x9f8] sm:$0xff]
    %v4439 = vld [vmem:[#allocation2 + $0xa00] sm:$0xff]
    %v4440 = vld [vmem:[#allocation2 + $0xa08] sm:$0xff]
    %v4441 = vld [vmem:[#allocation2 + $0xa10] sm:$0xff]
    %v4442 = vld [vmem:[#allocation2 + $0xa18] sm:$0xff]
    %v4443 = vld [vmem:[#allocation2 + $0xa20] sm:$0xff]
    %v4444 = vld [vmem:[#allocation2 + $0xa28] sm:$0xff]
    %v4445 = vld [vmem:[#allocation2 + $0xa30] sm:$0xff]
    %v4446 = vld [vmem:[#allocation2 + $0xa38] sm:$0xff]
    %v4447 = vld [vmem:[#allocation2 + $0xa40] sm:$0xff]
    %v4448 = vld [vmem:[#allocation2 + $0xa48] sm:$0xff]
    %v4449 = vld [vmem:[#allocation2 + $0xa50] sm:$0xff]
    %v4450 = vld [vmem:[#allocation2 + $0xa58] sm:$0xff]
    %v4451 = vld [vmem:[#allocation2 + $0xa60] sm:$0xff]
    %v4452 = vld [vmem:[#allocation2 + $0xa68] sm:$0xff]
    %v4453 = vld [vmem:[#allocation2 + $0xa70] sm:$0xff]
    %v4454 = vld [vmem:[#allocation2 + $0xa78] sm:$0xff]
    %v4455 = vld [vmem:[#allocation2 + $0xa80] sm:$0xff]
    %v4456 = vld [vmem:[#allocation2 + $0xa88] sm:$0xff]
    %v4457 = vld [vmem:[#allocation2 + $0xa90] sm:$0xff]
    %v4458 = vld [vmem:[#allocation2 + $0xa98] sm:$0xff]
    %v4459 = vld [vmem:[#allocation2 + $0xaa0] sm:$0xff]
    %v4460 = vld [vmem:[#allocation2 + $0xaa8] sm:$0xff]
    %v4461 = vld [vmem:[#allocation2 + $0xab0] sm:$0xff]
    %v4462 = vld [vmem:[#allocation2 + $0xab8] sm:$0xff]
    %v4463 = vld [vmem:[#allocation2 + $0xac0] sm:$0xff]
    %v4464 = vld [vmem:[#allocation2 + $0xac8] sm:$0xff]
    %v4465 = vld [vmem:[#allocation2 + $0xad0] sm:$0xff]
    %v4466 = vld [vmem:[#allocation2 + $0xad8] sm:$0xff]
    %v4467 = vld [vmem:[#allocation2 + $0xae0] sm:$0xff]
    %v4468 = vld [vmem:[#allocation2 + $0xae8] sm:$0xff]
    %v4469 = vld [vmem:[#allocation2 + $0xaf0] sm:$0xff]
    %v4470 = vld [vmem:[#allocation2 + $0xaf8] sm:$0xff]
    %v4471 = vld [vmem:[#allocation2 + $0xb00] sm:$0xff]
    %v4472 = vld [vmem:[#allocation2 + $0xb08] sm:$0xff]
    %v4473 = vld [vmem:[#allocation2 + $0xb10] sm:$0xff]
    %v4474 = vld [vmem:[#allocation2 + $0xb18] sm:$0xff]
    %v4475 = vld [vmem:[#allocation2 + $0xb20] sm:$0xff]
    %v4476 = vld [vmem:[#allocation2 + $0xb28] sm:$0xff]
    %v4477 = vld [vmem:[#allocation2 + $0xb30] sm:$0xff]
    %v4478 = vld [vmem:[#allocation2 + $0xb38] sm:$0xff]
    %v4479 = vld [vmem:[#allocation2 + $0xb40] sm:$0xff]
    %v4480 = vld [vmem:[#allocation2 + $0xb48] sm:$0xff]
    %v4481 = vld [vmem:[#allocation2 + $0xb50] sm:$0xff]
    %v4482 = vld [vmem:[#allocation2 + $0xb58] sm:$0xff]
    %v4483 = vld [vmem:[#allocation2 + $0xb60] sm:$0xff]
    %v4484 = vld [vmem:[#allocation2 + $0xb68] sm:$0xff]
    %v4485 = vld [vmem:[#allocation2 + $0xb70] sm:$0xff]
    %v4486 = vld [vmem:[#allocation2 + $0xb78] sm:$0xff]
    %v4487 = vld [vmem:[#allocation2 + $0xb80] sm:$0xff]
    %v4488 = vld [vmem:[#allocation2 + $0xb88] sm:$0xff]
    %v4489 = vld [vmem:[#allocation2 + $0xb90] sm:$0xff]
    %v4490 = vld [vmem:[#allocation2 + $0xb98] sm:$0xff]
    %v4491 = vld [vmem:[#allocation2 + $0xba0] sm:$0xff]
    %v4492 = vld [vmem:[#allocation2 + $0xba8] sm:$0xff]
    %v4493 = vld [vmem:[#allocation2 + $0xbb0] sm:$0xff]
    %v4494 = vld [vmem:[#allocation2 + $0xbb8] sm:$0xff]
    %v4495 = vld [vmem:[#allocation2 + $0xbc0] sm:$0xff]
    %v4496 = vld [vmem:[#allocation2 + $0xbc8] sm:$0xff]
    %v4497 = vld [vmem:[#allocation2 + $0xbd0] sm:$0xff]
    %v4498 = vld [vmem:[#allocation2 + $0xbd8] sm:$0xff]
    %v4499 = vld [vmem:[#allocation2 + $0xbe0] sm:$0xff]
    %v4500 = vld [vmem:[#allocation2 + $0xbe8] sm:$0xff]
    %v4501 = vld [vmem:[#allocation2 + $0xbf0] sm:$0xff]
    %v4502 = vld [vmem:[#allocation2 + $0xbf8] sm:$0xff]
    %4503 = vmatprep.subr.mxu0 0.0
    %4504 = vmatpush1.msra.mxu0 %v4375
    %4505 = vmatprep.subr.mxu0 0.0
    %4506 = vmatpush1.msra.mxu0 %v4376
    %4507 = vmatprep.subr.mxu0 0.0
    %4508 = vmatpush1.msra.mxu0 %v4377
    %4509 = vmatprep.subr.mxu0 0.0
    %4510 = vmatpush1.msra.mxu0 %v4378
    %4511 = vmatprep.subr.mxu0 0.0
    %4512 = vmatpush1.msra.mxu0 %v4379
    %4513 = vmatprep.subr.mxu0 0.0
    %4514 = vmatpush1.msra.mxu0 %v4380
    %4515 = vmatprep.subr.mxu0 0.0
    %4516 = vmatpush1.msra.mxu0 %v4381
    %4517 = vmatprep.subr.mxu0 0.0
    %4518 = vmatpush1.msra.mxu0 %v4382
    %4519 = vmatprep.subr.mxu0 0.0
    %4520 = vmatpush1.msra.mxu0 %v4383
    %4521 = vmatprep.subr.mxu0 0.0
    %4522 = vmatpush1.msra.mxu0 %v4384
    %4523 = vmatprep.subr.mxu0 0.0
    %4524 = vmatpush1.msra.mxu0 %v4385
    %4525 = vmatprep.subr.mxu0 0.0
    %4526 = vmatpush1.msra.mxu0 %v4386
    %4527 = vmatprep.subr.mxu0 0.0
    %4528 = vmatpush1.msra.mxu0 %v4387
    %4529 = vmatprep.subr.mxu0 0.0
    %4530 = vmatpush1.msra.mxu0 %v4388
    %4531 = vmatprep.subr.mxu0 0.0
    %4532 = vmatpush1.msra.mxu0 %v4389
    %4533 = vmatprep.subr.mxu0 0.0
    %4534 = vmatpush1.msra.mxu0 %v4390
    %4535 = vmatprep.subr.mxu0 0.0
    %4536 = vmatpush1.msra.mxu0 %v4391
    %4537 = vmatprep.subr.mxu0 0.0
    %4538 = vmatpush1.msra.mxu0 %v4392
    %4539 = vmatprep.subr.mxu0 0.0
    %4540 = vmatpush1.msra.mxu0 %v4393
    %4541 = vmatprep.subr.mxu0 0.0
    %4542 = vmatpush1.msra.mxu0 %v4394
    %4543 = vmatprep.subr.mxu0 0.0
    %4544 = vmatpush1.msra.mxu0 %v4395
    %4545 = vmatprep.subr.mxu0 0.0
    %4546 = vmatpush1.msra.mxu0 %v4396
    %4547 = vmatprep.subr.mxu0 0.0
    %4548 = vmatpush1.msra.mxu0 %v4397
    %4549 = vmatprep.subr.mxu0 0.0
    %4550 = vmatpush1.msra.mxu0 %v4398
    %4551 = vmatprep.subr.mxu0 0.0
    %4552 = vmatpush1.msra.mxu0 %v4399
    %4553 = vmatprep.subr.mxu0 0.0
    %4554 = vmatpush1.msra.mxu0 %v4400
    %4555 = vmatprep.subr.mxu0 0.0
    %4556 = vmatpush1.msra.mxu0 %v4401
    %4557 = vmatprep.subr.mxu0 0.0
    %4558 = vmatpush1.msra.mxu0 %v4402
    %4559 = vmatprep.subr.mxu0 0.0
    %4560 = vmatpush1.msra.mxu0 %v4403
    %4561 = vmatprep.subr.mxu0 0.0
    %4562 = vmatpush1.msra.mxu0 %v4404
    %4563 = vmatprep.subr.mxu0 0.0
    %4564 = vmatpush1.msra.mxu0 %v4405
    %4565 = vmatprep.subr.mxu0 0.0
    %4566 = vmatpush1.msra.mxu0 %v4406
    %4567 = vmatprep.mubr.f32.mxu0 %v4368
    %4568 = vmatmul.mubr.f32.gmra.mrb[0].mxu0 %v4367
    %v4569 = vpop.f32.mrb[0].mxu0
    %v4570 = vadd.f32 0.0, %v4569
    %v4571 = vpop.f32.mrb[0].mxu0
    %4572 = vdwg.mxu0
    %4573 = vmatprep.subr.mxu0 0.0
    %4574 = vmatpush1.msra.mxu0 %v4407
    %4575 = vmatprep.subr.mxu0 0.0
    %4576 = vmatpush1.msra.mxu0 %v4408
    %4577 = vmatprep.subr.mxu0 0.0
    %4578 = vmatpush1.msra.mxu0 %v4409
    %4579 = vmatprep.subr.mxu0 0.0
    %4580 = vmatpush1.msra.mxu0 %v4410
    %4581 = vmatprep.subr.mxu0 0.0
    %4582 = vmatpush1.msra.mxu0 %v4411
    %4583 = vmatprep.subr.mxu0 0.0
    %4584 = vmatpush1.msra.mxu0 %v4412
    %4585 = vmatprep.subr.mxu0 0.0
    %4586 = vmatpush1.msra.mxu0 %v4413
    %4587 = vmatprep.subr.mxu0 0.0
    %4588 = vmatpush1.msra.mxu0 %v4414
    %4589 = vmatprep.subr.mxu0 0.0
    %4590 = vmatpush1.msra.mxu0 %v4415
    %4591 = vmatprep.subr.mxu0 0.0
    %4592 = vmatpush1.msra.mxu0 %v4416
    %4593 = vmatprep.subr.mxu0 0.0
    %4594 = vmatpush1.msra.mxu0 %v4417
    %4595 = vmatprep.subr.mxu0 0.0
    %4596 = vmatpush1.msra.mxu0 %v4418
    %4597 = vmatprep.subr.mxu0 0.0
    %4598 = vmatpush1.msra.mxu0 %v4419
    %4599 = vmatprep.subr.mxu0 0.0
    %4600 = vmatpush1.msra.mxu0 %v4420
    %4601 = vmatprep.subr.mxu0 0.0
    %4602 = vmatpush1.msra.mxu0 %v4421
    %4603 = vmatprep.subr.mxu0 0.0
    %4604 = vmatpush1.msra.mxu0 %v4422
    %4605 = vmatprep.subr.mxu0 0.0
    %4606 = vmatpush1.msra.mxu0 %v4423
    %4607 = vmatprep.subr.mxu0 0.0
    %4608 = vmatpush1.msra.mxu0 %v4424
    %4609 = vmatprep.subr.mxu0 0.0
    %4610 = vmatpush1.msra.mxu0 %v4425
    %4611 = vmatprep.subr.mxu0 0.0
    %4612 = vmatpush1.msra.mxu0 %v4426
    %4613 = vmatprep.subr.mxu0 0.0
    %4614 = vmatpush1.msra.mxu0 %v4427
    %4615 = vmatprep.subr.mxu0 0.0
    %4616 = vmatpush1.msra.mxu0 %v4428
    %4617 = vmatprep.subr.mxu0 0.0
    %4618 = vmatpush1.msra.mxu0 %v4429
    %4619 = vmatprep.subr.mxu0 0.0
    %4620 = vmatpush1.msra.mxu0 %v4430
    %4621 = vmatprep.subr.mxu0 0.0
    %4622 = vmatpush1.msra.mxu0 %v4431
    %4623 = vmatprep.subr.mxu0 0.0
    %4624 = vmatpush1.msra.mxu0 %v4432
    %4625 = vmatprep.subr.mxu0 0.0
    %4626 = vmatpush1.msra.mxu0 %v4433
    %4627 = vmatprep.subr.mxu0 0.0
    %4628 = vmatpush1.msra.mxu0 %v4434
    %4629 = vmatprep.subr.mxu0 0.0
    %4630 = vmatpush1.msra.mxu0 %v4435
    %4631 = vmatprep.subr.mxu0 0.0
    %4632 = vmatpush1.msra.mxu0 %v4436
    %4633 = vmatprep.subr.mxu0 0.0
    %4634 = vmatpush1.msra.mxu0 %v4437
    %4635 = vmatprep.subr.mxu0 0.0
    %4636 = vmatpush1.msra.mxu0 %v4438
    %4637 = vmatprep.mubr.f32.mxu0 %v4370
    %4638 = vmatmul.mubr.f32.gmra.mrb[0].mxu0 %v4369
    %v4639 = vpop.f32.mrb[0].mxu0
    %v4640 = vadd.f32 %v4570, %v4639
    %v4641 = vpop.f32.mrb[0].mxu0
    %4642 = vdwg.mxu0
    %4643 = vmatprep.subr.mxu0 0.0
    %4644 = vmatpush1.msra.mxu0 %v4439
    %4645 = vmatprep.subr.mxu0 0.0
    %4646 = vmatpush1.msra.mxu0 %v4440
    %4647 = vmatprep.subr.mxu0 0.0
    %4648 = vmatpush1.msra.mxu0 %v4441
    %4649 = vmatprep.subr.mxu0 0.0
    %4650 = vmatpush1.msra.mxu0 %v4442
    %4651 = vmatprep.subr.mxu0 0.0
    %4652 = vmatpush1.msra.mxu0 %v4443
    %4653 = vmatprep.subr.mxu0 0.0
    %4654 = vmatpush1.msra.mxu0 %v4444
    %4655 = vmatprep.subr.mxu0 0.0
    %4656 = vmatpush1.msra.mxu0 %v4445
    %4657 = vmatprep.subr.mxu0 0.0
    %4658 = vmatpush1.msra.mxu0 %v4446
    %4659 = vmatprep.subr.mxu0 0.0
    %4660 = vmatpush1.msra.mxu0 %v4447
    %4661 = vmatprep.subr.mxu0 0.0
    %4662 = vmatpush1.msra.mxu0 %v4448
    %4663 = vmatprep.subr.mxu0 0.0
    %4664 = vmatpush1.msra.mxu0 %v4449
    %4665 = vmatprep.subr.mxu0 0.0
    %4666 = vmatpush1.msra.mxu0 %v4450
    %4667 = vmatprep.subr.mxu0 0.0
    %4668 = vmatpush1.msra.mxu0 %v4451
    %4669 = vmatprep.subr.mxu0 0.0
    %4670 = vmatpush1.msra.mxu0 %v4452
    %4671 = vmatprep.subr.mxu0 0.0
    %4672 = vmatpush1.msra.mxu0 %v4453
    %4673 = vmatprep.subr.mxu0 0.0
    %4674 = vmatpush1.msra.mxu0 %v4454
    %4675 = vmatprep.subr.mxu0 0.0
    %4676 = vmatpush1.msra.mxu0 %v4455
    %4677 = vmatprep.subr.mxu0 0.0
    %4678 = vmatpush1.msra.mxu0 %v4456
    %4679 = vmatprep.subr.mxu0 0.0
    %4680 = vmatpush1.msra.mxu0 %v4457
    %4681 = vmatprep.subr.mxu0 0.0
    %4682 = vmatpush1.msra.mxu0 %v4458
    %4683 = vmatprep.subr.mxu0 0.0
    %4684 = vmatpush1.msra.mxu0 %v4459
    %4685 = vmatprep.subr.mxu0 0.0
    %4686 = vmatpush1.msra.mxu0 %v4460
    %4687 = vmatprep.subr.mxu0 0.0
    %4688 = vmatpush1.msra.mxu0 %v4461
    %4689 = vmatprep.subr.mxu0 0.0
    %4690 = vmatpush1.msra.mxu0 %v4462
    %4691 = vmatprep.subr.mxu0 0.0
    %4692 = vmatpush1.msra.mxu0 %v4463
    %4693 = vmatprep.subr.mxu0 0.0
    %4694 = vmatpush1.msra.mxu0 %v4464
    %4695 = vmatprep.subr.mxu0 0.0
    %4696 = vmatpush1.msra.mxu0 %v4465
    %4697 = vmatprep.subr.mxu0 0.0
    %4698 = vmatpush1.msra.mxu0 %v4466
    %4699 = vmatprep.subr.mxu0 0.0
    %4700 = vmatpush1.msra.mxu0 %v4467
    %4701 = vmatprep.subr.mxu0 0.0
    %4702 = vmatpush1.msra.mxu0 %v4468
    %4703 = vmatprep.subr.mxu0 0.0
    %4704 = vmatpush1.msra.mxu0 %v4469
    %4705 = vmatprep.subr.mxu0 0.0
    %4706 = vmatpush1.msra.mxu0 %v4470
    %4707 = vmatprep.mubr.f32.mxu0 %v4372
    %4708 = vmatmul.mubr.f32.gmra.mrb[0].mxu0 %v4371
    %v4709 = vpop.f32.mrb[0].mxu0
    %v4710 = vadd.f32 %v4640, %v4709
    %v4711 = vpop.f32.mrb[0].mxu0
    %4712 = vdwg.mxu0
    %4713 = vmatprep.subr.mxu0 0.0
    %4714 = vmatpush1.msra.mxu0 %v4471
    %4715 = vmatprep.subr.mxu0 0.0
    %4716 = vmatpush1.msra.mxu0 %v4472
    %4717 = vmatprep.subr.mxu0 0.0
    %4718 = vmatpush1.msra.mxu0 %v4473
    %4719 = vmatprep.subr.mxu0 0.0
    %4720 = vmatpush1.msra.mxu0 %v4474
    %4721 = vmatprep.subr.mxu0 0.0
    %4722 = vmatpush1.msra.mxu0 %v4475
    %4723 = vmatprep.subr.mxu0 0.0
    %4724 = vmatpush1.msra.mxu0 %v4476
    %4725 = vmatprep.subr.mxu0 0.0
    %4726 = vmatpush1.msra.mxu0 %v4477
    %4727 = vmatprep.subr.mxu0 0.0
    %4728 = vmatpush1.msra.mxu0 %v4478
    %4729 = vmatprep.subr.mxu0 0.0
    %4730 = vmatpush1.msra.mxu0 %v4479
    %4731 = vmatprep.subr.mxu0 0.0
    %4732 = vmatpush1.msra.mxu0 %v4480
    %4733 = vmatprep.subr.mxu0 0.0
    %4734 = vmatpush1.msra.mxu0 %v4481
    %4735 = vmatprep.subr.mxu0 0.0
    %4736 = vmatpush1.msra.mxu0 %v4482
    %4737 = vmatprep.subr.mxu0 0.0
    %4738 = vmatpush1.msra.mxu0 %v4483
    %4739 = vmatprep.subr.mxu0 0.0
    %4740 = vmatpush1.msra.mxu0 %v4484
    %4741 = vmatprep.subr.mxu0 0.0
    %4742 = vmatpush1.msra.mxu0 %v4485
    %4743 = vmatprep.subr.mxu0 0.0
    %4744 = vmatpush1.msra.mxu0 %v4486
    %4745 = vmatprep.subr.mxu0 0.0
    %4746 = vmatpush1.msra.mxu0 %v4487
    %4747 = vmatprep.subr.mxu0 0.0
    %4748 = vmatpush1.msra.mxu0 %v4488
    %4749 = vmatprep.subr.mxu0 0.0
    %4750 = vmatpush1.msra.mxu0 %v4489
    %4751 = vmatprep.subr.mxu0 0.0
    %4752 = vmatpush1.msra.mxu0 %v4490
    %4753 = vmatprep.subr.mxu0 0.0
    %4754 = vmatpush1.msra.mxu0 %v4491
    %4755 = vmatprep.subr.mxu0 0.0
    %4756 = vmatpush1.msra.mxu0 %v4492
    %4757 = vmatprep.subr.mxu0 0.0
    %4758 = vmatpush1.msra.mxu0 %v4493
    %4759 = vmatprep.subr.mxu0 0.0
    %4760 = vmatpush1.msra.mxu0 %v4494
    %4761 = vmatprep.subr.mxu0 0.0
    %4762 = vmatpush1.msra.mxu0 %v4495
    %4763 = vmatprep.subr.mxu0 0.0
    %4764 = vmatpush1.msra.mxu0 %v4496
    %4765 = vmatprep.subr.mxu0 0.0
    %4766 = vmatpush1.msra.mxu0 %v4497
    %4767 = vmatprep.subr.mxu0 0.0
    %4768 = vmatpush1.msra.mxu0 %v4498
    %4769 = vmatprep.subr.mxu0 0.0
    %4770 = vmatpush1.msra.mxu0 %v4499
    %4771 = vmatprep.subr.mxu0 0.0
    %4772 = vmatpush1.msra.mxu0 %v4500
    %4773 = vmatprep.subr.mxu0 0.0
    %4774 = vmatpush1.msra.mxu0 %v4501
    %4775 = vmatprep.subr.mxu0 0.0
    %4776 = vmatpush1.msra.mxu0 %v4502
    %4777 = vmatprep.mubr.f32.mxu0 %v4374
    %4778 = vmatmul.mubr.f32.gmra.mrb[0].mxu0 %v4373
    %v4779 = vpop.f32.mrb[0].mxu0
    %v4780 = vadd.f32 %v4710, %v4779
    %v4781 = vpop.f32.mrb[0].mxu0
    %4782 = vdwg.mxu0
    %v4783 = vadd.f32 %v4366, %v4780
    %v4784 = vld [vmem:[%s1 + $0xc0] sm:$0xff]
    %v4785 = vld [vmem:[%s1 + $0xc8] sm:$0xff]
    %v4786 = vld [vmem:[%s1 + $0xd0] sm:$0xff]
    %v4787 = vld [vmem:[%s1 + $0xd8] sm:$0xff]
    %v4788 = vld [vmem:[%s1 + $0xe0] sm:$0xff]
    %v4789 = vld [vmem:[%s1 + $0xe8] sm:$0xff]
    %v4790 = vld [vmem:[%s1 + $0xf0] sm:$0xff]
    %v4791 = vld [vmem:[%s1 + $0xf8] sm:$0xff]
    %v4792 = vld [vmem:[#allocation2 + $0xc00] sm:$0xff]
    %v4793 = vld [vmem:[#allocation2 + $0xc08] sm:$0xff]
    %v4794 = vld [vmem:[#allocation2 + $0xc10] sm:$0xff]
    %v4795 = vld [vmem:[#allocation2 + $0xc18] sm:$0xff]
    %v4796 = vld [vmem:[#allocation2 + $0xc20] sm:$0xff]
    %v4797 = vld [vmem:[#allocation2 + $0xc28] sm:$0xff]
    %v4798 = vld [vmem:[#allocation2 + $0xc30] sm:$0xff]
    %v4799 = vld [vmem:[#allocation2 + $0xc38] sm:$0xff]
    %v4800 = vld [vmem:[#allocation2 + $0xc40] sm:$0xff]
    %v4801 = vld [vmem:[#allocation2 + $0xc48] sm:$0xff]
    %v4802 = vld [vmem:[#allocation2 + $0xc50] sm:$0xff]
    %v4803 = vld [vmem:[#allocation2 + $0xc58] sm:$0xff]
    %v4804 = vld [vmem:[#allocation2 + $0xc60] sm:$0xff]
    %v4805 = vld [vmem:[#allocation2 + $0xc68] sm:$0xff]
    %v4806 = vld [vmem:[#allocation2 + $0xc70] sm:$0xff]
    %v4807 = vld [vmem:[#allocation2 + $0xc78] sm:$0xff]
    %v4808 = vld [vmem:[#allocation2 + $0xc80] sm:$0xff]
    %v4809 = vld [vmem:[#allocation2 + $0xc88] sm:$0xff]
    %v4810 = vld [vmem:[#allocation2 + $0xc90] sm:$0xff]
    %v4811 = vld [vmem:[#allocation2 + $0xc98] sm:$0xff]
    %v4812 = vld [vmem:[#allocation2 + $0xca0] sm:$0xff]
    %v4813 = vld [vmem:[#allocation2 + $0xca8] sm:$0xff]
    %v4814 = vld [vmem:[#allocation2 + $0xcb0] sm:$0xff]
    %v4815 = vld [vmem:[#allocation2 + $0xcb8] sm:$0xff]
    %v4816 = vld [vmem:[#allocation2 + $0xcc0] sm:$0xff]
    %v4817 = vld [vmem:[#allocation2 + $0xcc8] sm:$0xff]
    %v4818 = vld [vmem:[#allocation2 + $0xcd0] sm:$0xff]
    %v4819 = vld [vmem:[#allocation2 + $0xcd8] sm:$0xff]
    %v4820 = vld [vmem:[#allocation2 + $0xce0] sm:$0xff]
    %v4821 = vld [vmem:[#allocation2 + $0xce8] sm:$0xff]
    %v4822 = vld [vmem:[#allocation2 + $0xcf0] sm:$0xff]
    %v4823 = vld [vmem:[#allocation2 + $0xcf8] sm:$0xff]
    %v4824 = vld [vmem:[#allocation2 + $0xd00] sm:$0xff]
    %v4825 = vld [vmem:[#allocation2 + $0xd08] sm:$0xff]
    %v4826 = vld [vmem:[#allocation2 + $0xd10] sm:$0xff]
    %v4827 = vld [vmem:[#allocation2 + $0xd18] sm:$0xff]
    %v4828 = vld [vmem:[#allocation2 + $0xd20] sm:$0xff]
    %v4829 = vld [vmem:[#allocation2 + $0xd28] sm:$0xff]
    %v4830 = vld [vmem:[#allocation2 + $0xd30] sm:$0xff]
    %v4831 = vld [vmem:[#allocation2 + $0xd38] sm:$0xff]
    %v4832 = vld [vmem:[#allocation2 + $0xd40] sm:$0xff]
    %v4833 = vld [vmem:[#allocation2 + $0xd48] sm:$0xff]
    %v4834 = vld [vmem:[#allocation2 + $0xd50] sm:$0xff]
    %v4835 = vld [vmem:[#allocation2 + $0xd58] sm:$0xff]
    %v4836 = vld [vmem:[#allocation2 + $0xd60] sm:$0xff]
    %v4837 = vld [vmem:[#allocation2 + $0xd68] sm:$0xff]
    %v4838 = vld [vmem:[#allocation2 + $0xd70] sm:$0xff]
    %v4839 = vld [vmem:[#allocation2 + $0xd78] sm:$0xff]
    %v4840 = vld [vmem:[#allocation2 + $0xd80] sm:$0xff]
    %v4841 = vld [vmem:[#allocation2 + $0xd88] sm:$0xff]
    %v4842 = vld [vmem:[#allocation2 + $0xd90] sm:$0xff]
    %v4843 = vld [vmem:[#allocation2 + $0xd98] sm:$0xff]
    %v4844 = vld [vmem:[#allocation2 + $0xda0] sm:$0xff]
    %v4845 = vld [vmem:[#allocation2 + $0xda8] sm:$0xff]
    %v4846 = vld [vmem:[#allocation2 + $0xdb0] sm:$0xff]
    %v4847 = vld [vmem:[#allocation2 + $0xdb8] sm:$0xff]
    %v4848 = vld [vmem:[#allocation2 + $0xdc0] sm:$0xff]
    %v4849 = vld [vmem:[#allocation2 + $0xdc8] sm:$0xff]
    %v4850 = vld [vmem:[#allocation2 + $0xdd0] sm:$0xff]
    %v4851 = vld [vmem:[#allocation2 + $0xdd8] sm:$0xff]
    %v4852 = vld [vmem:[#allocation2 + $0xde0] sm:$0xff]
    %v4853 = vld [vmem:[#allocation2 + $0xde8] sm:$0xff]
    %v4854 = vld [vmem:[#allocation2 + $0xdf0] sm:$0xff]
    %v4855 = vld [vmem:[#allocation2 + $0xdf8] sm:$0xff]
    %v4856 = vld [vmem:[#allocation2 + $0xe00] sm:$0xff]
    %v4857 = vld [vmem:[#allocation2 + $0xe08] sm:$0xff]
    %v4858 = vld [vmem:[#allocation2 + $0xe10] sm:$0xff]
    %v4859 = vld [vmem:[#allocation2 + $0xe18] sm:$0xff]
    %v4860 = vld [vmem:[#allocation2 + $0xe20] sm:$0xff]
    %v4861 = vld [vmem:[#allocation2 + $0xe28] sm:$0xff]
    %v4862 = vld [vmem:[#allocation2 + $0xe30] sm:$0xff]
    %v4863 = vld [vmem:[#allocation2 + $0xe38] sm:$0xff]
    %v4864 = vld [vmem:[#allocation2 + $0xe40] sm:$0xff]
    %v4865 = vld [vmem:[#allocation2 + $0xe48] sm:$0xff]
    %v4866 = vld [vmem:[#allocation2 + $0xe50] sm:$0xff]
    %v4867 = vld [vmem:[#allocation2 + $0xe58] sm:$0xff]
    %v4868 = vld [vmem:[#allocation2 + $0xe60] sm:$0xff]
    %v4869 = vld [vmem:[#allocation2 + $0xe68] sm:$0xff]
    %v4870 = vld [vmem:[#allocation2 + $0xe70] sm:$0xff]
    %v4871 = vld [vmem:[#allocation2 + $0xe78] sm:$0xff]
    %v4872 = vld [vmem:[#allocation2 + $0xe80] sm:$0xff]
    %v4873 = vld [vmem:[#allocation2 + $0xe88] sm:$0xff]
    %v4874 = vld [vmem:[#allocation2 + $0xe90] sm:$0xff]
    %v4875 = vld [vmem:[#allocation2 + $0xe98] sm:$0xff]
    %v4876 = vld [vmem:[#allocation2 + $0xea0] sm:$0xff]
    %v4877 = vld [vmem:[#allocation2 + $0xea8] sm:$0xff]
    %v4878 = vld [vmem:[#allocation2 + $0xeb0] sm:$0xff]
    %v4879 = vld [vmem:[#allocation2 + $0xeb8] sm:$0xff]
    %v4880 = vld [vmem:[#allocation2 + $0xec0] sm:$0xff]
    %v4881 = vld [vmem:[#allocation2 + $0xec8] sm:$0xff]
    %v4882 = vld [vmem:[#allocation2 + $0xed0] sm:$0xff]
    %v4883 = vld [vmem:[#allocation2 + $0xed8] sm:$0xff]
    %v4884 = vld [vmem:[#allocation2 + $0xee0] sm:$0xff]
    %v4885 = vld [vmem:[#allocation2 + $0xee8] sm:$0xff]
    %v4886 = vld [vmem:[#allocation2 + $0xef0] sm:$0xff]
    %v4887 = vld [vmem:[#allocation2 + $0xef8] sm:$0xff]
    %v4888 = vld [vmem:[#allocation2 + $0xf00] sm:$0xff]
    %v4889 = vld [vmem:[#allocation2 + $0xf08] sm:$0xff]
    %v4890 = vld [vmem:[#allocation2 + $0xf10] sm:$0xff]
    %v4891 = vld [vmem:[#allocation2 + $0xf18] sm:$0xff]
    %v4892 = vld [vmem:[#allocation2 + $0xf20] sm:$0xff]
    %v4893 = vld [vmem:[#allocation2 + $0xf28] sm:$0xff]
    %v4894 = vld [vmem:[#allocation2 + $0xf30] sm:$0xff]
    %v4895 = vld [vmem:[#allocation2 + $0xf38] sm:$0xff]
    %v4896 = vld [vmem:[#allocation2 + $0xf40] sm:$0xff]
    %v4897 = vld [vmem:[#allocation2 + $0xf48] sm:$0xff]
    %v4898 = vld [vmem:[#allocation2 + $0xf50] sm:$0xff]
    %v4899 = vld [vmem:[#allocation2 + $0xf58] sm:$0xff]
    %v4900 = vld [vmem:[#allocation2 + $0xf60] sm:$0xff]
    %v4901 = vld [vmem:[#allocation2 + $0xf68] sm:$0xff]
    %v4902 = vld [vmem:[#allocation2 + $0xf70] sm:$0xff]
    %v4903 = vld [vmem:[#allocation2 + $0xf78] sm:$0xff]
    %v4904 = vld [vmem:[#allocation2 + $0xf80] sm:$0xff]
    %v4905 = vld [vmem:[#allocation2 + $0xf88] sm:$0xff]
    %v4906 = vld [vmem:[#allocation2 + $0xf90] sm:$0xff]
    %v4907 = vld [vmem:[#allocation2 + $0xf98] sm:$0xff]
    %v4908 = vld [vmem:[#allocation2 + $0xfa0] sm:$0xff]
    %v4909 = vld [vmem:[#allocation2 + $0xfa8] sm:$0xff]
    %v4910 = vld [vmem:[#allocation2 + $0xfb0] sm:$0xff]
    %v4911 = vld [vmem:[#allocation2 + $0xfb8] sm:$0xff]
    %v4912 = vld [vmem:[#allocation2 + $0xfc0] sm:$0xff]
    %v4913 = vld [vmem:[#allocation2 + $0xfc8] sm:$0xff]
    %v4914 = vld [vmem:[#allocation2 + $0xfd0] sm:$0xff]
    %v4915 = vld [vmem:[#allocation2 + $0xfd8] sm:$0xff]
    %v4916 = vld [vmem:[#allocation2 + $0xfe0] sm:$0xff]
    %v4917 = vld [vmem:[#allocation2 + $0xfe8] sm:$0xff]
    %v4918 = vld [vmem:[#allocation2 + $0xff0] sm:$0xff]
    %v4919 = vld [vmem:[#allocation2 + $0xff8] sm:$0xff]
    %4920 = vmatprep.subr.mxu0 0.0
    %4921 = vmatpush1.msra.mxu0 %v4792
    %4922 = vmatprep.subr.mxu0 0.0
    %4923 = vmatpush1.msra.mxu0 %v4793
    %4924 = vmatprep.subr.mxu0 0.0
    %4925 = vmatpush1.msra.mxu0 %v4794
    %4926 = vmatprep.subr.mxu0 0.0
    %4927 = vmatpush1.msra.mxu0 %v4795
    %4928 = vmatprep.subr.mxu0 0.0
    %4929 = vmatpush1.msra.mxu0 %v4796
    %4930 = vmatprep.subr.mxu0 0.0
    %4931 = vmatpush1.msra.mxu0 %v4797
    %4932 = vmatprep.subr.mxu0 0.0
    %4933 = vmatpush1.msra.mxu0 %v4798
    %4934 = vmatprep.subr.mxu0 0.0
    %4935 = vmatpush1.msra.mxu0 %v4799
    %4936 = vmatprep.subr.mxu0 0.0
    %4937 = vmatpush1.msra.mxu0 %v4800
    %4938 = vmatprep.subr.mxu0 0.0
    %4939 = vmatpush1.msra.mxu0 %v4801
    %4940 = vmatprep.subr.mxu0 0.0
    %4941 = vmatpush1.msra.mxu0 %v4802
    %4942 = vmatprep.subr.mxu0 0.0
    %4943 = vmatpush1.msra.mxu0 %v4803
    %4944 = vmatprep.subr.mxu0 0.0
    %4945 = vmatpush1.msra.mxu0 %v4804
    %4946 = vmatprep.subr.mxu0 0.0
    %4947 = vmatpush1.msra.mxu0 %v4805
    %4948 = vmatprep.subr.mxu0 0.0
    %4949 = vmatpush1.msra.mxu0 %v4806
    %4950 = vmatprep.subr.mxu0 0.0
    %4951 = vmatpush1.msra.mxu0 %v4807
    %4952 = vmatprep.subr.mxu0 0.0
    %4953 = vmatpush1.msra.mxu0 %v4808
    %4954 = vmatprep.subr.mxu0 0.0
    %4955 = vmatpush1.msra.mxu0 %v4809
    %4956 = vmatprep.subr.mxu0 0.0
    %4957 = vmatpush1.msra.mxu0 %v4810
    %4958 = vmatprep.subr.mxu0 0.0
    %4959 = vmatpush1.msra.mxu0 %v4811
    %4960 = vmatprep.subr.mxu0 0.0
    %4961 = vmatpush1.msra.mxu0 %v4812
    %4962 = vmatprep.subr.mxu0 0.0
    %4963 = vmatpush1.msra.mxu0 %v4813
    %4964 = vmatprep.subr.mxu0 0.0
    %4965 = vmatpush1.msra.mxu0 %v4814
    %4966 = vmatprep.subr.mxu0 0.0
    %4967 = vmatpush1.msra.mxu0 %v4815
    %4968 = vmatprep.subr.mxu0 0.0
    %4969 = vmatpush1.msra.mxu0 %v4816
    %4970 = vmatprep.subr.mxu0 0.0
    %4971 = vmatpush1.msra.mxu0 %v4817
    %4972 = vmatprep.subr.mxu0 0.0
    %4973 = vmatpush1.msra.mxu0 %v4818
    %4974 = vmatprep.subr.mxu0 0.0
    %4975 = vmatpush1.msra.mxu0 %v4819
    %4976 = vmatprep.subr.mxu0 0.0
    %4977 = vmatpush1.msra.mxu0 %v4820
    %4978 = vmatprep.subr.mxu0 0.0
    %4979 = vmatpush1.msra.mxu0 %v4821
    %4980 = vmatprep.subr.mxu0 0.0
    %4981 = vmatpush1.msra.mxu0 %v4822
    %4982 = vmatprep.subr.mxu0 0.0
    %4983 = vmatpush1.msra.mxu0 %v4823
    %4984 = vmatprep.mubr.f32.mxu0 %v4785
    %4985 = vmatmul.mubr.f32.gmra.mrb[0].mxu0 %v4784
    %v4986 = vpop.f32.mrb[0].mxu0
    %v4987 = vadd.f32 0.0, %v4986
    %v4988 = vpop.f32.mrb[0].mxu0
    %4989 = vdwg.mxu0
    %4990 = vmatprep.subr.mxu0 0.0
    %4991 = vmatpush1.msra.mxu0 %v4824
    %4992 = vmatprep.subr.mxu0 0.0
    %4993 = vmatpush1.msra.mxu0 %v4825
    %4994 = vmatprep.subr.mxu0 0.0
    %4995 = vmatpush1.msra.mxu0 %v4826
    %4996 = vmatprep.subr.mxu0 0.0
    %4997 = vmatpush1.msra.mxu0 %v4827
    %4998 = vmatprep.subr.mxu0 0.0
    %4999 = vmatpush1.msra.mxu0 %v4828
    %5000 = vmatprep.subr.mxu0 0.0
    %5001 = vmatpush1.msra.mxu0 %v4829
    %5002 = vmatprep.subr.mxu0 0.0
    %5003 = vmatpush1.msra.mxu0 %v4830
    %5004 = vmatprep.subr.mxu0 0.0
    %5005 = vmatpush1.msra.mxu0 %v4831
    %5006 = vmatprep.subr.mxu0 0.0
    %5007 = vmatpush1.msra.mxu0 %v4832
    %5008 = vmatprep.subr.mxu0 0.0
    %5009 = vmatpush1.msra.mxu0 %v4833
    %5010 = vmatprep.subr.mxu0 0.0
    %5011 = vmatpush1.msra.mxu0 %v4834
    %5012 = vmatprep.subr.mxu0 0.0
    %5013 = vmatpush1.msra.mxu0 %v4835
    %5014 = vmatprep.subr.mxu0 0.0
    %5015 = vmatpush1.msra.mxu0 %v4836
    %5016 = vmatprep.subr.mxu0 0.0
    %5017 = vmatpush1.msra.mxu0 %v4837
    %5018 = vmatprep.subr.mxu0 0.0
    %5019 = vmatpush1.msra.mxu0 %v4838
    %5020 = vmatprep.subr.mxu0 0.0
    %5021 = vmatpush1.msra.mxu0 %v4839
    %5022 = vmatprep.subr.mxu0 0.0
    %5023 = vmatpush1.msra.mxu0 %v4840
    %5024 = vmatprep.subr.mxu0 0.0
    %5025 = vmatpush1.msra.mxu0 %v4841
    %5026 = vmatprep.subr.mxu0 0.0
    %5027 = vmatpush1.msra.mxu0 %v4842
    %5028 = vmatprep.subr.mxu0 0.0
    %5029 = vmatpush1.msra.mxu0 %v4843
    %5030 = vmatprep.subr.mxu0 0.0
    %5031 = vmatpush1.msra.mxu0 %v4844
    %5032 = vmatprep.subr.mxu0 0.0
    %5033 = vmatpush1.msra.mxu0 %v4845
    %5034 = vmatprep.subr.mxu0 0.0
    %5035 = vmatpush1.msra.mxu0 %v4846
    %5036 = vmatprep.subr.mxu0 0.0
    %5037 = vmatpush1.msra.mxu0 %v4847
    %5038 = vmatprep.subr.mxu0 0.0
    %5039 = vmatpush1.msra.mxu0 %v4848
    %5040 = vmatprep.subr.mxu0 0.0
    %5041 = vmatpush1.msra.mxu0 %v4849
    %5042 = vmatprep.subr.mxu0 0.0
    %5043 = vmatpush1.msra.mxu0 %v4850
    %5044 = vmatprep.subr.mxu0 0.0
    %5045 = vmatpush1.msra.mxu0 %v4851
    %5046 = vmatprep.subr.mxu0 0.0
    %5047 = vmatpush1.msra.mxu0 %v4852
    %5048 = vmatprep.subr.mxu0 0.0
    %5049 = vmatpush1.msra.mxu0 %v4853
    %5050 = vmatprep.subr.mxu0 0.0
    %5051 = vmatpush1.msra.mxu0 %v4854
    %5052 = vmatprep.subr.mxu0 0.0
    %5053 = vmatpush1.msra.mxu0 %v4855
    %5054 = vmatprep.mubr.f32.mxu0 %v4787
    %5055 = vmatmul.mubr.f32.gmra.mrb[0].mxu0 %v4786
    %v5056 = vpop.f32.mrb[0].mxu0
    %v5057 = vadd.f32 %v4987, %v5056
    %v5058 = vpop.f32.mrb[0].mxu0
    %5059 = vdwg.mxu0
    %5060 = vmatprep.subr.mxu0 0.0
    %5061 = vmatpush1.msra.mxu0 %v4856
    %5062 = vmatprep.subr.mxu0 0.0
    %5063 = vmatpush1.msra.mxu0 %v4857
    %5064 = vmatprep.subr.mxu0 0.0
    %5065 = vmatpush1.msra.mxu0 %v4858
    %5066 = vmatprep.subr.mxu0 0.0
    %5067 = vmatpush1.msra.mxu0 %v4859
    %5068 = vmatprep.subr.mxu0 0.0
    %5069 = vmatpush1.msra.mxu0 %v4860
    %5070 = vmatprep.subr.mxu0 0.0
    %5071 = vmatpush1.msra.mxu0 %v4861
    %5072 = vmatprep.subr.mxu0 0.0
    %5073 = vmatpush1.msra.mxu0 %v4862
    %5074 = vmatprep.subr.mxu0 0.0
    %5075 = vmatpush1.msra.mxu0 %v4863
    %5076 = vmatprep.subr.mxu0 0.0
    %5077 = vmatpush1.msra.mxu0 %v4864
    %5078 = vmatprep.subr.mxu0 0.0
    %5079 = vmatpush1.msra.mxu0 %v4865
    %5080 = vmatprep.subr.mxu0 0.0
    %5081 = vmatpush1.msra.mxu0 %v4866
    %5082 = vmatprep.subr.mxu0 0.0
    %5083 = vmatpush1.msra.mxu0 %v4867
    %5084 = vmatprep.subr.mxu0 0.0
    %5085 = vmatpush1.msra.mxu0 %v4868
    %5086 = vmatprep.subr.mxu0 0.0
    %5087 = vmatpush1.msra.mxu0 %v4869
    %5088 = vmatprep.subr.mxu0 0.0
    %5089 = vmatpush1.msra.mxu0 %v4870
    %5090 = vmatprep.subr.mxu0 0.0
    %5091 = vmatpush1.msra.mxu0 %v4871
    %5092 = vmatprep.subr.mxu0 0.0
    %5093 = vmatpush1.msra.mxu0 %v4872
    %5094 = vmatprep.subr.mxu0 0.0
    %5095 = vmatpush1.msra.mxu0 %v4873
    %5096 = vmatprep.subr.mxu0 0.0
    %5097 = vmatpush1.msra.mxu0 %v4874
    %5098 = vmatprep.subr.mxu0 0.0
    %5099 = vmatpush1.msra.mxu0 %v4875
    %5100 = vmatprep.subr.mxu0 0.0
    %5101 = vmatpush1.msra.mxu0 %v4876
    %5102 = vmatprep.subr.mxu0 0.0
    %5103 = vmatpush1.msra.mxu0 %v4877
    %5104 = vmatprep.subr.mxu0 0.0
    %5105 = vmatpush1.msra.mxu0 %v4878
    %5106 = vmatprep.subr.mxu0 0.0
    %5107 = vmatpush1.msra.mxu0 %v4879
    %5108 = vmatprep.subr.mxu0 0.0
    %5109 = vmatpush1.msra.mxu0 %v4880
    %5110 = vmatprep.subr.mxu0 0.0
    %5111 = vmatpush1.msra.mxu0 %v4881
    %5112 = vmatprep.subr.mxu0 0.0
    %5113 = vmatpush1.msra.mxu0 %v4882
    %5114 = vmatprep.subr.mxu0 0.0
    %5115 = vmatpush1.msra.mxu0 %v4883
    %5116 = vmatprep.subr.mxu0 0.0
    %5117 = vmatpush1.msra.mxu0 %v4884
    %5118 = vmatprep.subr.mxu0 0.0
    %5119 = vmatpush1.msra.mxu0 %v4885
    %5120 = vmatprep.subr.mxu0 0.0
    %5121 = vmatpush1.msra.mxu0 %v4886
    %5122 = vmatprep.subr.mxu0 0.0
    %5123 = vmatpush1.msra.mxu0 %v4887
    %5124 = vmatprep.mubr.f32.mxu0 %v4789
    %5125 = vmatmul.mubr.f32.gmra.mrb[0].mxu0 %v4788
    %v5126 = vpop.f32.mrb[0].mxu0
    %v5127 = vadd.f32 %v5057, %v5126
    %v5128 = vpop.f32.mrb[0].mxu0
    %5129 = vdwg.mxu0
    %5130 = vmatprep.subr.mxu0 0.0
    %5131 = vmatpush1.msra.mxu0 %v4888
    %5132 = vmatprep.subr.mxu0 0.0
    %5133 = vmatpush1.msra.mxu0 %v4889
    %5134 = vmatprep.subr.mxu0 0.0
    %5135 = vmatpush1.msra.mxu0 %v4890
    %5136 = vmatprep.subr.mxu0 0.0
    %5137 = vmatpush1.msra.mxu0 %v4891
    %5138 = vmatprep.subr.mxu0 0.0
    %5139 = vmatpush1.msra.mxu0 %v4892
    %5140 = vmatprep.subr.mxu0 0.0
    %5141 = vmatpush1.msra.mxu0 %v4893
    %5142 = vmatprep.subr.mxu0 0.0
    %5143 = vmatpush1.msra.mxu0 %v4894
    %5144 = vmatprep.subr.mxu0 0.0
    %5145 = vmatpush1.msra.mxu0 %v4895
    %5146 = vmatprep.subr.mxu0 0.0
    %5147 = vmatpush1.msra.mxu0 %v4896
    %5148 = vmatprep.subr.mxu0 0.0
    %5149 = vmatpush1.msra.mxu0 %v4897
    %5150 = vmatprep.subr.mxu0 0.0
    %5151 = vmatpush1.msra.mxu0 %v4898
    %5152 = vmatprep.subr.mxu0 0.0
    %5153 = vmatpush1.msra.mxu0 %v4899
    %5154 = vmatprep.subr.mxu0 0.0
    %5155 = vmatpush1.msra.mxu0 %v4900
    %5156 = vmatprep.subr.mxu0 0.0
    %5157 = vmatpush1.msra.mxu0 %v4901
    %5158 = vmatprep.subr.mxu0 0.0
    %5159 = vmatpush1.msra.mxu0 %v4902
    %5160 = vmatprep.subr.mxu0 0.0
    %5161 = vmatpush1.msra.mxu0 %v4903
    %5162 = vmatprep.subr.mxu0 0.0
    %5163 = vmatpush1.msra.mxu0 %v4904
    %5164 = vmatprep.subr.mxu0 0.0
    %5165 = vmatpush1.msra.mxu0 %v4905
    %5166 = vmatprep.subr.mxu0 0.0
    %5167 = vmatpush1.msra.mxu0 %v4906
    %5168 = vmatprep.subr.mxu0 0.0
    %5169 = vmatpush1.msra.mxu0 %v4907
    %5170 = vmatprep.subr.mxu0 0.0
    %5171 = vmatpush1.msra.mxu0 %v4908
    %5172 = vmatprep.subr.mxu0 0.0
    %5173 = vmatpush1.msra.mxu0 %v4909
    %5174 = vmatprep.subr.mxu0 0.0
    %5175 = vmatpush1.msra.mxu0 %v4910
    %5176 = vmatprep.subr.mxu0 0.0
    %5177 = vmatpush1.msra.mxu0 %v4911
    %5178 = vmatprep.subr.mxu0 0.0
    %5179 = vmatpush1.msra.mxu0 %v4912
    %5180 = vmatprep.subr.mxu0 0.0
    %5181 = vmatpush1.msra.mxu0 %v4913
    %5182 = vmatprep.subr.mxu0 0.0
    %5183 = vmatpush1.msra.mxu0 %v4914
    %5184 = vmatprep.subr.mxu0 0.0
    %5185 = vmatpush1.msra.mxu0 %v4915
    %5186 = vmatprep.subr.mxu0 0.0
    %5187 = vmatpush1.msra.mxu0 %v4916
    %5188 = vmatprep.subr.mxu0 0.0
    %5189 = vmatpush1.msra.mxu0 %v4917
    %5190 = vmatprep.subr.mxu0 0.0
    %5191 = vmatpush1.msra.mxu0 %v4918
    %5192 = vmatprep.subr.mxu0 0.0
    %5193 = vmatpush1.msra.mxu0 %v4919
    %5194 = vmatprep.mubr.f32.mxu0 %v4791
    %5195 = vmatmul.mubr.f32.gmra.mrb[0].mxu0 %v4790
    %v5196 = vpop.f32.mrb[0].mxu0
    %v5197 = vadd.f32 %v5127, %v5196
    %v5198 = vpop.f32.mrb[0].mxu0
    %5199 = vdwg.mxu0
    %v5200 = vadd.f32 %v4783, %v5197
    %v5201 = vld [vmem:[%s1 + $0x100] sm:$0xff]
    %v5202 = vld [vmem:[%s1 + $0x108] sm:$0xff]
    %v5203 = vld [vmem:[%s1 + $0x110] sm:$0xff]
    %v5204 = vld [vmem:[%s1 + $0x118] sm:$0xff]
    %v5205 = vld [vmem:[%s1 + $0x120] sm:$0xff]
    %v5206 = vld [vmem:[%s1 + $0x128] sm:$0xff]
    %v5207 = vld [vmem:[%s1 + $0x130] sm:$0xff]
    %v5208 = vld [vmem:[%s1 + $0x138] sm:$0xff]
    %v5209 = vld [vmem:[#allocation2 + $0x1000] sm:$0xff]
    %v5210 = vld [vmem:[#allocation2 + $0x1008] sm:$0xff]
    %v5211 = vld [vmem:[#allocation2 + $0x1010] sm:$0xff]
    %v5212 = vld [vmem:[#allocation2 + $0x1018] sm:$0xff]
    %v5213 = vld [vmem:[#allocation2 + $0x1020] sm:$0xff]
    %v5214 = vld [vmem:[#allocation2 + $0x1028] sm:$0xff]
    %v5215 = vld [vmem:[#allocation2 + $0x1030] sm:$0xff]
    %v5216 = vld [vmem:[#allocation2 + $0x1038] sm:$0xff]
    %v5217 = vld [vmem:[#allocation2 + $0x1040] sm:$0xff]
    %v5218 = vld [vmem:[#allocation2 + $0x1048] sm:$0xff]
    %v5219 = vld [vmem:[#allocation2 + $0x1050] sm:$0xff]
    %v5220 = vld [vmem:[#allocation2 + $0x1058] sm:$0xff]
    %v5221 = vld [vmem:[#allocation2 + $0x1060] sm:$0xff]
    %v5222 = vld [vmem:[#allocation2 + $0x1068] sm:$0xff]
    %v5223 = vld [vmem:[#allocation2 + $0x1070] sm:$0xff]
    %v5224 = vld [vmem:[#allocation2 + $0x1078] sm:$0xff]
    %v5225 = vld [vmem:[#allocation2 + $0x1080] sm:$0xff]
    %v5226 = vld [vmem:[#allocation2 + $0x1088] sm:$0xff]
    %v5227 = vld [vmem:[#allocation2 + $0x1090] sm:$0xff]
    %v5228 = vld [vmem:[#allocation2 + $0x1098] sm:$0xff]
    %v5229 = vld [vmem:[#allocation2 + $0x10a0] sm:$0xff]
    %v5230 = vld [vmem:[#allocation2 + $0x10a8] sm:$0xff]
    %v5231 = vld [vmem:[#allocation2 + $0x10b0] sm:$0xff]
    %v5232 = vld [vmem:[#allocation2 + $0x10b8] sm:$0xff]
    %v5233 = vld [vmem:[#allocation2 + $0x10c0] sm:$0xff]
    %v5234 = vld [vmem:[#allocation2 + $0x10c8] sm:$0xff]
    %v5235 = vld [vmem:[#allocation2 + $0x10d0] sm:$0xff]
    %v5236 = vld [vmem:[#allocation2 + $0x10d8] sm:$0xff]
    %v5237 = vld [vmem:[#allocation2 + $0x10e0] sm:$0xff]
    %v5238 = vld [vmem:[#allocation2 + $0x10e8] sm:$0xff]
    %v5239 = vld [vmem:[#allocation2 + $0x10f0] sm:$0xff]
    %v5240 = vld [vmem:[#allocation2 + $0x10f8] sm:$0xff]
    %v5241 = vld [vmem:[#allocation2 + $0x1100] sm:$0xff]
    %v5242 = vld [vmem:[#allocation2 + $0x1108] sm:$0xff]
    %v5243 = vld [vmem:[#allocation2 + $0x1110] sm:$0xff]
    %v5244 = vld [vmem:[#allocation2 + $0x1118] sm:$0xff]
    %v5245 = vld [vmem:[#allocation2 + $0x1120] sm:$0xff]
    %v5246 = vld [vmem:[#allocation2 + $0x1128] sm:$0xff]
    %v5247 = vld [vmem:[#allocation2 + $0x1130] sm:$0xff]
    %v5248 = vld [vmem:[#allocation2 + $0x1138] sm:$0xff]
    %v5249 = vld [vmem:[#allocation2 + $0x1140] sm:$0xff]
    %v5250 = vld [vmem:[#allocation2 + $0x1148] sm:$0xff]
    %v5251 = vld [vmem:[#allocation2 + $0x1150] sm:$0xff]
    %v5252 = vld [vmem:[#allocation2 + $0x1158] sm:$0xff]
    %v5253 = vld [vmem:[#allocation2 + $0x1160] sm:$0xff]
    %v5254 = vld [vmem:[#allocation2 + $0x1168] sm:$0xff]
    %v5255 = vld [vmem:[#allocation2 + $0x1170] sm:$0xff]
    %v5256 = vld [vmem:[#allocation2 + $0x1178] sm:$0xff]
    %v5257 = vld [vmem:[#allocation2 + $0x1180] sm:$0xff]
    %v5258 = vld [vmem:[#allocation2 + $0x1188] sm:$0xff]
    %v5259 = vld [vmem:[#allocation2 + $0x1190] sm:$0xff]
    %v5260 = vld [vmem:[#allocation2 + $0x1198] sm:$0xff]
    %v5261 = vld [vmem:[#allocation2 + $0x11a0] sm:$0xff]
    %v5262 = vld [vmem:[#allocation2 + $0x11a8] sm:$0xff]
    %v5263 = vld [vmem:[#allocation2 + $0x11b0] sm:$0xff]
    %v5264 = vld [vmem:[#allocation2 + $0x11b8] sm:$0xff]
    %v5265 = vld [vmem:[#allocation2 + $0x11c0] sm:$0xff]
    %v5266 = vld [vmem:[#allocation2 + $0x11c8] sm:$0xff]
    %v5267 = vld [vmem:[#allocation2 + $0x11d0] sm:$0xff]
    %v5268 = vld [vmem:[#allocation2 + $0x11d8] sm:$0xff]
    %v5269 = vld [vmem:[#allocation2 + $0x11e0] sm:$0xff]
    %v5270 = vld [vmem:[#allocation2 + $0x11e8] sm:$0xff]
    %v5271 = vld [vmem:[#allocation2 + $0x11f0] sm:$0xff]
    %v5272 = vld [vmem:[#allocation2 + $0x11f8] sm:$0xff]
    %v5273 = vld [vmem:[#allocation2 + $0x1200] sm:$0xff]
    %v5274 = vld [vmem:[#allocation2 + $0x1208] sm:$0xff]
    %v5275 = vld [vmem:[#allocation2 + $0x1210] sm:$0xff]
    %v5276 = vld [vmem:[#allocation2 + $0x1218] sm:$0xff]
    %v5277 = vld [vmem:[#allocation2 + $0x1220] sm:$0xff]
    %v5278 = vld [vmem:[#allocation2 + $0x1228] sm:$0xff]
    %v5279 = vld [vmem:[#allocation2 + $0x1230] sm:$0xff]
    %v5280 = vld [vmem:[#allocation2 + $0x1238] sm:$0xff]
    %v5281 = vld [vmem:[#allocation2 + $0x1240] sm:$0xff]
    %v5282 = vld [vmem:[#allocation2 + $0x1248] sm:$0xff]
    %v5283 = vld [vmem:[#allocation2 + $0x1250] sm:$0xff]
    %v5284 = vld [vmem:[#allocation2 + $0x1258] sm:$0xff]
    %v5285 = vld [vmem:[#allocation2 + $0x1260] sm:$0xff]
    %v5286 = vld [vmem:[#allocation2 + $0x1268] sm:$0xff]
    %v5287 = vld [vmem:[#allocation2 + $0x1270] sm:$0xff]
    %v5288 = vld [vmem:[#allocation2 + $0x1278] sm:$0xff]
    %v5289 = vld [vmem:[#allocation2 + $0x1280] sm:$0xff]
    %v5290 = vld [vmem:[#allocation2 + $0x1288] sm:$0xff]
    %v5291 = vld [vmem:[#allocation2 + $0x1290] sm:$0xff]
    %v5292 = vld [vmem:[#allocation2 + $0x1298] sm:$0xff]
    %v5293 = vld [vmem:[#allocation2 + $0x12a0] sm:$0xff]
    %v5294 = vld [vmem:[#allocation2 + $0x12a8] sm:$0xff]
    %v5295 = vld [vmem:[#allocation2 + $0x12b0] sm:$0xff]
    %v5296 = vld [vmem:[#allocation2 + $0x12b8] sm:$0xff]
    %v5297 = vld [vmem:[#allocation2 + $0x12c0] sm:$0xff]
    %v5298 = vld [vmem:[#allocation2 + $0x12c8] sm:$0xff]
    %v5299 = vld [vmem:[#allocation2 + $0x12d0] sm:$0xff]
    %v5300 = vld [vmem:[#allocation2 + $0x12d8] sm:$0xff]
    %v5301 = vld [vmem:[#allocation2 + $0x12e0] sm:$0xff]
    %v5302 = vld [vmem:[#allocation2 + $0x12e8] sm:$0xff]
    %v5303 = vld [vmem:[#allocation2 + $0x12f0] sm:$0xff]
    %v5304 = vld [vmem:[#allocation2 + $0x12f8] sm:$0xff]
    %v5305 = vld [vmem:[#allocation2 + $0x1300] sm:$0xff]
    %v5306 = vld [vmem:[#allocation2 + $0x1308] sm:$0xff]
    %v5307 = vld [vmem:[#allocation2 + $0x1310] sm:$0xff]
    %v5308 = vld [vmem:[#allocation2 + $0x1318] sm:$0xff]
    %v5309 = vld [vmem:[#allocation2 + $0x1320] sm:$0xff]
    %v5310 = vld [vmem:[#allocation2 + $0x1328] sm:$0xff]
    %v5311 = vld [vmem:[#allocation2 + $0x1330] sm:$0xff]
    %v5312 = vld [vmem:[#allocation2 + $0x1338] sm:$0xff]
    %v5313 = vld [vmem:[#allocation2 + $0x1340] sm:$0xff]
    %v5314 = vld [vmem:[#allocation2 + $0x1348] sm:$0xff]
    %v5315 = vld [vmem:[#allocation2 + $0x1350] sm:$0xff]
    %v5316 = vld [vmem:[#allocation2 + $0x1358] sm:$0xff]
    %v5317 = vld [vmem:[#allocation2 + $0x1360] sm:$0xff]
    %v5318 = vld [vmem:[#allocation2 + $0x1368] sm:$0xff]
    %v5319 = vld [vmem:[#allocation2 + $0x1370] sm:$0xff]
    %v5320 = vld [vmem:[#allocation2 + $0x1378] sm:$0xff]
    %v5321 = vld [vmem:[#allocation2 + $0x1380] sm:$0xff]
    %v5322 = vld [vmem:[#allocation2 + $0x1388] sm:$0xff]
    %v5323 = vld [vmem:[#allocation2 + $0x1390] sm:$0xff]
    %v5324 = vld [vmem:[#allocation2 + $0x1398] sm:$0xff]
    %v5325 = vld [vmem:[#allocation2 + $0x13a0] sm:$0xff]
    %v5326 = vld [vmem:[#allocation2 + $0x13a8] sm:$0xff]
    %v5327 = vld [vmem:[#allocation2 + $0x13b0] sm:$0xff]
    %v5328 = vld [vmem:[#allocation2 + $0x13b8] sm:$0xff]
    %v5329 = vld [vmem:[#allocation2 + $0x13c0] sm:$0xff]
    %v5330 = vld [vmem:[#allocation2 + $0x13c8] sm:$0xff]
    %v5331 = vld [vmem:[#allocation2 + $0x13d0] sm:$0xff]
    %v5332 = vld [vmem:[#allocation2 + $0x13d8] sm:$0xff]
    %v5333 = vld [vmem:[#allocation2 + $0x13e0] sm:$0xff]
    %v5334 = vld [vmem:[#allocation2 + $0x13e8] sm:$0xff]
    %v5335 = vld [vmem:[#allocation2 + $0x13f0] sm:$0xff]
    %v5336 = vld [vmem:[#allocation2 + $0x13f8] sm:$0xff]
    %5337 = vmatprep.subr.mxu0 0.0
    %5338 = vmatpush1.msra.mxu0 %v5209
    %5339 = vmatprep.subr.mxu0 0.0
    %5340 = vmatpush1.msra.mxu0 %v5210
    %5341 = vmatprep.subr.mxu0 0.0
    %5342 = vmatpush1.msra.mxu0 %v5211
    %5343 = vmatprep.subr.mxu0 0.0
    %5344 = vmatpush1.msra.mxu0 %v5212
    %5345 = vmatprep.subr.mxu0 0.0
    %5346 = vmatpush1.msra.mxu0 %v5213
    %5347 = vmatprep.subr.mxu0 0.0
    %5348 = vmatpush1.msra.mxu0 %v5214
    %5349 = vmatprep.subr.mxu0 0.0
    %5350 = vmatpush1.msra.mxu0 %v5215
    %5351 = vmatprep.subr.mxu0 0.0
    %5352 = vmatpush1.msra.mxu0 %v5216
    %5353 = vmatprep.subr.mxu0 0.0
    %5354 = vmatpush1.msra.mxu0 %v5217
    %5355 = vmatprep.subr.mxu0 0.0
    %5356 = vmatpush1.msra.mxu0 %v5218
    %5357 = vmatprep.subr.mxu0 0.0
    %5358 = vmatpush1.msra.mxu0 %v5219
    %5359 = vmatprep.subr.mxu0 0.0
    %5360 = vmatpush1.msra.mxu0 %v5220
    %5361 = vmatprep.subr.mxu0 0.0
    %5362 = vmatpush1.msra.mxu0 %v5221
    %5363 = vmatprep.subr.mxu0 0.0
    %5364 = vmatpush1.msra.mxu0 %v5222
    %5365 = vmatprep.subr.mxu0 0.0
    %5366 = vmatpush1.msra.mxu0 %v5223
    %5367 = vmatprep.subr.mxu0 0.0
    %5368 = vmatpush1.msra.mxu0 %v5224
    %5369 = vmatprep.subr.mxu0 0.0
    %5370 = vmatpush1.msra.mxu0 %v5225
    %5371 = vmatprep.subr.mxu0 0.0
    %5372 = vmatpush1.msra.mxu0 %v5226
    %5373 = vmatprep.subr.mxu0 0.0
    %5374 = vmatpush1.msra.mxu0 %v5227
    %5375 = vmatprep.subr.mxu0 0.0
    %5376 = vmatpush1.msra.mxu0 %v5228
    %5377 = vmatprep.subr.mxu0 0.0
    %5378 = vmatpush1.msra.mxu0 %v5229
    %5379 = vmatprep.subr.mxu0 0.0
    %5380 = vmatpush1.msra.mxu0 %v5230
    %5381 = vmatprep.subr.mxu0 0.0
    %5382 = vmatpush1.msra.mxu0 %v5231
    %5383 = vmatprep.subr.mxu0 0.0
    %5384 = vmatpush1.msra.mxu0 %v5232
    %5385 = vmatprep.subr.mxu0 0.0
    %5386 = vmatpush1.msra.mxu0 %v5233
    %5387 = vmatprep.subr.mxu0 0.0
    %5388 = vmatpush1.msra.mxu0 %v5234
    %5389 = vmatprep.subr.mxu0 0.0
    %5390 = vmatpush1.msra.mxu0 %v5235
    %5391 = vmatprep.subr.mxu0 0.0
    %5392 = vmatpush1.msra.mxu0 %v5236
    %5393 = vmatprep.subr.mxu0 0.0
    %5394 = vmatpush1.msra.mxu0 %v5237
    %5395 = vmatprep.subr.mxu0 0.0
    %5396 = vmatpush1.msra.mxu0 %v5238
    %5397 = vmatprep.subr.mxu0 0.0
    %5398 = vmatpush1.msra.mxu0 %v5239
    %5399 = vmatprep.subr.mxu0 0.0
    %5400 = vmatpush1.msra.mxu0 %v5240
    %5401 = vmatprep.mubr.f32.mxu0 %v5202
    %5402 = vmatmul.mubr.f32.gmra.mrb[0].mxu0 %v5201
    %v5403 = vpop.f32.mrb[0].mxu0
    %v5404 = vadd.f32 0.0, %v5403
    %v5405 = vpop.f32.mrb[0].mxu0
    %5406 = vdwg.mxu0
    %5407 = vmatprep.subr.mxu0 0.0
    %5408 = vmatpush1.msra.mxu0 %v5241
    %5409 = vmatprep.subr.mxu0 0.0
    %5410 = vmatpush1.msra.mxu0 %v5242
    %5411 = vmatprep.subr.mxu0 0.0
    %5412 = vmatpush1.msra.mxu0 %v5243
    %5413 = vmatprep.subr.mxu0 0.0
    %5414 = vmatpush1.msra.mxu0 %v5244
    %5415 = vmatprep.subr.mxu0 0.0
    %5416 = vmatpush1.msra.mxu0 %v5245
    %5417 = vmatprep.subr.mxu0 0.0
    %5418 = vmatpush1.msra.mxu0 %v5246
    %5419 = vmatprep.subr.mxu0 0.0
    %5420 = vmatpush1.msra.mxu0 %v5247
    %5421 = vmatprep.subr.mxu0 0.0
    %5422 = vmatpush1.msra.mxu0 %v5248
    %5423 = vmatprep.subr.mxu0 0.0
    %5424 = vmatpush1.msra.mxu0 %v5249
    %5425 = vmatprep.subr.mxu0 0.0
    %5426 = vmatpush1.msra.mxu0 %v5250
    %5427 = vmatprep.subr.mxu0 0.0
    %5428 = vmatpush1.msra.mxu0 %v5251
    %5429 = vmatprep.subr.mxu0 0.0
    %5430 = vmatpush1.msra.mxu0 %v5252
    %5431 = vmatprep.subr.mxu0 0.0
    %5432 = vmatpush1.msra.mxu0 %v5253
    %5433 = vmatprep.subr.mxu0 0.0
    %5434 = vmatpush1.msra.mxu0 %v5254
    %5435 = vmatprep.subr.mxu0 0.0
    %5436 = vmatpush1.msra.mxu0 %v5255
    %5437 = vmatprep.subr.mxu0 0.0
    %5438 = vmatpush1.msra.mxu0 %v5256
    %5439 = vmatprep.subr.mxu0 0.0
    %5440 = vmatpush1.msra.mxu0 %v5257
    %5441 = vmatprep.subr.mxu0 0.0
    %5442 = vmatpush1.msra.mxu0 %v5258
    %5443 = vmatprep.subr.mxu0 0.0
    %5444 = vmatpush1.msra.mxu0 %v5259
    %5445 = vmatprep.subr.mxu0 0.0
    %5446 = vmatpush1.msra.mxu0 %v5260
    %5447 = vmatprep.subr.mxu0 0.0
    %5448 = vmatpush1.msra.mxu0 %v5261
    %5449 = vmatprep.subr.mxu0 0.0
    %5450 = vmatpush1.msra.mxu0 %v5262
    %5451 = vmatprep.subr.mxu0 0.0
    %5452 = vmatpush1.msra.mxu0 %v5263
    %5453 = vmatprep.subr.mxu0 0.0
    %5454 = vmatpush1.msra.mxu0 %v5264
    %5455 = vmatprep.subr.mxu0 0.0
    %5456 = vmatpush1.msra.mxu0 %v5265
    %5457 = vmatprep.subr.mxu0 0.0
    %5458 = vmatpush1.msra.mxu0 %v5266
    %5459 = vmatprep.subr.mxu0 0.0
    %5460 = vmatpush1.msra.mxu0 %v5267
    %5461 = vmatprep.subr.mxu0 0.0
    %5462 = vmatpush1.msra.mxu0 %v5268
    %5463 = vmatprep.subr.mxu0 0.0
    %5464 = vmatpush1.msra.mxu0 %v5269
    %5465 = vmatprep.subr.mxu0 0.0
    %5466 = vmatpush1.msra.mxu0 %v5270
    %5467 = vmatprep.subr.mxu0 0.0
    %5468 = vmatpush1.msra.mxu0 %v5271
    %5469 = vmatprep.subr.mxu0 0.0
    %5470 = vmatpush1.msra.mxu0 %v5272
    %5471 = vmatprep.mubr.f32.mxu0 %v5204
    %5472 = vmatmul.mubr.f32.gmra.mrb[0].mxu0 %v5203
    %v5473 = vpop.f32.mrb[0].mxu0
    %v5474 = vadd.f32 %v5404, %v5473
    %v5475 = vpop.f32.mrb[0].mxu0
    %5476 = vdwg.mxu0
    %5477 = vmatprep.subr.mxu0 0.0
    %5478 = vmatpush1.msra.mxu0 %v5273
    %5479 = vmatprep.subr.mxu0 0.0
    %5480 = vmatpush1.msra.mxu0 %v5274
    %5481 = vmatprep.subr.mxu0 0.0
    %5482 = vmatpush1.msra.mxu0 %v5275
    %5483 = vmatprep.subr.mxu0 0.0
    %5484 = vmatpush1.msra.mxu0 %v5276
    %5485 = vmatprep.subr.mxu0 0.0
    %5486 = vmatpush1.msra.mxu0 %v5277
    %5487 = vmatprep.subr.mxu0 0.0
    %5488 = vmatpush1.msra.mxu0 %v5278
    %5489 = vmatprep.subr.mxu0 0.0
    %5490 = vmatpush1.msra.mxu0 %v5279
    %5491 = vmatprep.subr.mxu0 0.0
    %5492 = vmatpush1.msra.mxu0 %v5280
    %5493 = vmatprep.subr.mxu0 0.0
    %5494 = vmatpush1.msra.mxu0 %v5281
    %5495 = vmatprep.subr.mxu0 0.0
    %5496 = vmatpush1.msra.mxu0 %v5282
    %5497 = vmatprep.subr.mxu0 0.0
    %5498 = vmatpush1.msra.mxu0 %v5283
    %5499 = vmatprep.subr.mxu0 0.0
    %5500 = vmatpush1.msra.mxu0 %v5284
    %5501 = vmatprep.subr.mxu0 0.0
    %5502 = vmatpush1.msra.mxu0 %v5285
    %5503 = vmatprep.subr.mxu0 0.0
    %5504 = vmatpush1.msra.mxu0 %v5286
    %5505 = vmatprep.subr.mxu0 0.0
    %5506 = vmatpush1.msra.mxu0 %v5287
    %5507 = vmatprep.subr.mxu0 0.0
    %5508 = vmatpush1.msra.mxu0 %v5288
    %5509 = vmatprep.subr.mxu0 0.0
    %5510 = vmatpush1.msra.mxu0 %v5289
    %5511 = vmatprep.subr.mxu0 0.0
    %5512 = vmatpush1.msra.mxu0 %v5290
    %5513 = vmatprep.subr.mxu0 0.0
    %5514 = vmatpush1.msra.mxu0 %v5291
    %5515 = vmatprep.subr.mxu0 0.0
    %5516 = vmatpush1.msra.mxu0 %v5292
    %5517 = vmatprep.subr.mxu0 0.0
    %5518 = vmatpush1.msra.mxu0 %v5293
    %5519 = vmatprep.subr.mxu0 0.0
    %5520 = vmatpush1.msra.mxu0 %v5294
    %5521 = vmatprep.subr.mxu0 0.0
    %5522 = vmatpush1.msra.mxu0 %v5295
    %5523 = vmatprep.subr.mxu0 0.0
    %5524 = vmatpush1.msra.mxu0 %v5296
    %5525 = vmatprep.subr.mxu0 0.0
    %5526 = vmatpush1.msra.mxu0 %v5297
    %5527 = vmatprep.subr.mxu0 0.0
    %5528 = vmatpush1.msra.mxu0 %v5298
    %5529 = vmatprep.subr.mxu0 0.0
    %5530 = vmatpush1.msra.mxu0 %v5299
    %5531 = vmatprep.subr.mxu0 0.0
    %5532 = vmatpush1.msra.mxu0 %v5300
    %5533 = vmatprep.subr.mxu0 0.0
    %5534 = vmatpush1.msra.mxu0 %v5301
    %5535 = vmatprep.subr.mxu0 0.0
    %5536 = vmatpush1.msra.mxu0 %v5302
    %5537 = vmatprep.subr.mxu0 0.0
    %5538 = vmatpush1.msra.mxu0 %v5303
    %5539 = vmatprep.subr.mxu0 0.0
    %5540 = vmatpush1.msra.mxu0 %v5304
    %5541 = vmatprep.mubr.f32.mxu0 %v5206
    %5542 = vmatmul.mubr.f32.gmra.mrb[0].mxu0 %v5205
    %v5543 = vpop.f32.mrb[0].mxu0
    %v5544 = vadd.f32 %v5474, %v5543
    %v5545 = vpop.f32.mrb[0].mxu0
    %5546 = vdwg.mxu0
    %5547 = vmatprep.subr.mxu0 0.0
    %5548 = vmatpush1.msra.mxu0 %v5305
    %5549 = vmatprep.subr.mxu0 0.0
    %5550 = vmatpush1.msra.mxu0 %v5306
    %5551 = vmatprep.subr.mxu0 0.0
    %5552 = vmatpush1.msra.mxu0 %v5307
    %5553 = vmatprep.subr.mxu0 0.0
    %5554 = vmatpush1.msra.mxu0 %v5308
    %5555 = vmatprep.subr.mxu0 0.0
    %5556 = vmatpush1.msra.mxu0 %v5309
    %5557 = vmatprep.subr.mxu0 0.0
    %5558 = vmatpush1.msra.mxu0 %v5310
    %5559 = vmatprep.subr.mxu0 0.0
    %5560 = vmatpush1.msra.mxu0 %v5311
    %5561 = vmatprep.subr.mxu0 0.0
    %5562 = vmatpush1.msra.mxu0 %v5312
    %5563 = vmatprep.subr.mxu0 0.0
    %5564 = vmatpush1.msra.mxu0 %v5313
    %5565 = vmatprep.subr.mxu0 0.0
    %5566 = vmatpush1.msra.mxu0 %v5314
    %5567 = vmatprep.subr.mxu0 0.0
    %5568 = vmatpush1.msra.mxu0 %v5315
    %5569 = vmatprep.subr.mxu0 0.0
    %5570 = vmatpush1.msra.mxu0 %v5316
    %5571 = vmatprep.subr.mxu0 0.0
    %5572 = vmatpush1.msra.mxu0 %v5317
    %5573 = vmatprep.subr.mxu0 0.0
    %5574 = vmatpush1.msra.mxu0 %v5318
    %5575 = vmatprep.subr.mxu0 0.0
    %5576 = vmatpush1.msra.mxu0 %v5319
    %5577 = vmatprep.subr.mxu0 0.0
    %5578 = vmatpush1.msra.mxu0 %v5320
    %5579 = vmatprep.subr.mxu0 0.0
    %5580 = vmatpush1.msra.mxu0 %v5321
    %5581 = vmatprep.subr.mxu0 0.0
    %5582 = vmatpush1.msra.mxu0 %v5322
    %5583 = vmatprep.subr.mxu0 0.0
    %5584 = vmatpush1.msra.mxu0 %v5323
    %5585 = vmatprep.subr.mxu0 0.0
    %5586 = vmatpush1.msra.mxu0 %v5324
    %5587 = vmatprep.subr.mxu0 0.0
    %5588 = vmatpush1.msra.mxu0 %v5325
    %5589 = vmatprep.subr.mxu0 0.0
    %5590 = vmatpush1.msra.mxu0 %v5326
    %5591 = vmatprep.subr.mxu0 0.0
    %5592 = vmatpush1.msra.mxu0 %v5327
    %5593 = vmatprep.subr.mxu0 0.0
    %5594 = vmatpush1.msra.mxu0 %v5328
    %5595 = vmatprep.subr.mxu0 0.0
    %5596 = vmatpush1.msra.mxu0 %v5329
    %5597 = vmatprep.subr.mxu0 0.0
    %5598 = vmatpush1.msra.mxu0 %v5330
    %5599 = vmatprep.subr.mxu0 0.0
    %5600 = vmatpush1.msra.mxu0 %v5331
    %5601 = vmatprep.subr.mxu0 0.0
    %5602 = vmatpush1.msra.mxu0 %v5332
    %5603 = vmatprep.subr.mxu0 0.0
    %5604 = vmatpush1.msra.mxu0 %v5333
    %5605 = vmatprep.subr.mxu0 0.0
    %5606 = vmatpush1.msra.mxu0 %v5334
    %5607 = vmatprep.subr.mxu0 0.0
    %5608 = vmatpush1.msra.mxu0 %v5335
    %5609 = vmatprep.subr.mxu0 0.0
    %5610 = vmatpush1.msra.mxu0 %v5336
    %5611 = vmatprep.mubr.f32.mxu0 %v5208
    %5612 = vmatmul.mubr.f32.gmra.mrb[0].mxu0 %v5207
    %v5613 = vpop.f32.mrb[0].mxu0
    %v5614 = vadd.f32 %v5544, %v5613
    %v5615 = vpop.f32.mrb[0].mxu0
    %5616 = vdwg.mxu0
    %v5617 = vadd.f32 %v5200, %v5614
    %v5618 = vld [vmem:[%s1 + $0x140] sm:$0xff]
    %v5619 = vld [vmem:[%s1 + $0x148] sm:$0xff]
    %v5620 = vld [vmem:[%s1 + $0x150] sm:$0xff]
    %v5621 = vld [vmem:[%s1 + $0x158] sm:$0xff]
    %v5622 = vld [vmem:[%s1 + $0x160] sm:$0xff]
    %v5623 = vld [vmem:[%s1 + $0x168] sm:$0xff]
    %v5624 = vld [vmem:[%s1 + $0x170] sm:$0xff]
    %v5625 = vld [vmem:[%s1 + $0x178] sm:$0xff]
    %v5626 = vld [vmem:[#allocation2 + $0x1400] sm:$0xff]
    %v5627 = vld [vmem:[#allocation2 + $0x1408] sm:$0xff]
    %v5628 = vld [vmem:[#allocation2 + $0x1410] sm:$0xff]
    %v5629 = vld [vmem:[#allocation2 + $0x1418] sm:$0xff]
    %v5630 = vld [vmem:[#allocation2 + $0x1420] sm:$0xff]
    %v5631 = vld [vmem:[#allocation2 + $0x1428] sm:$0xff]
    %v5632 = vld [vmem:[#allocation2 + $0x1430] sm:$0xff]
    %v5633 = vld [vmem:[#allocation2 + $0x1438] sm:$0xff]
    %v5634 = vld [vmem:[#allocation2 + $0x1440] sm:$0xff]
    %v5635 = vld [vmem:[#allocation2 + $0x1448] sm:$0xff]
    %v5636 = vld [vmem:[#allocation2 + $0x1450] sm:$0xff]
    %v5637 = vld [vmem:[#allocation2 + $0x1458] sm:$0xff]
    %v5638 = vld [vmem:[#allocation2 + $0x1460] sm:$0xff]
    %v5639 = vld [vmem:[#allocation2 + $0x1468] sm:$0xff]
    %v5640 = vld [vmem:[#allocation2 + $0x1470] sm:$0xff]
    %v5641 = vld [vmem:[#allocation2 + $0x1478] sm:$0xff]
    %v5642 = vld [vmem:[#allocation2 + $0x1480] sm:$0xff]
    %v5643 = vld [vmem:[#allocation2 + $0x1488] sm:$0xff]
    %v5644 = vld [vmem:[#allocation2 + $0x1490] sm:$0xff]
    %v5645 = vld [vmem:[#allocation2 + $0x1498] sm:$0xff]
    %v5646 = vld [vmem:[#allocation2 + $0x14a0] sm:$0xff]
    %v5647 = vld [vmem:[#allocation2 + $0x14a8] sm:$0xff]
    %v5648 = vld [vmem:[#allocation2 + $0x14b0] sm:$0xff]
    %v5649 = vld [vmem:[#allocation2 + $0x14b8] sm:$0xff]
    %v5650 = vld [vmem:[#allocation2 + $0x14c0] sm:$0xff]
    %v5651 = vld [vmem:[#allocation2 + $0x14c8] sm:$0xff]
    %v5652 = vld [vmem:[#allocation2 + $0x14d0] sm:$0xff]
    %v5653 = vld [vmem:[#allocation2 + $0x14d8] sm:$0xff]
    %v5654 = vld [vmem:[#allocation2 + $0x14e0] sm:$0xff]
    %v5655 = vld [vmem:[#allocation2 + $0x14e8] sm:$0xff]
    %v5656 = vld [vmem:[#allocation2 + $0x14f0] sm:$0xff]
    %v5657 = vld [vmem:[#allocation2 + $0x14f8] sm:$0xff]
    %v5658 = vld [vmem:[#allocation2 + $0x1500] sm:$0xff]
    %v5659 = vld [vmem:[#allocation2 + $0x1508] sm:$0xff]
    %v5660 = vld [vmem:[#allocation2 + $0x1510] sm:$0xff]
    %v5661 = vld [vmem:[#allocation2 + $0x1518] sm:$0xff]
    %v5662 = vld [vmem:[#allocation2 + $0x1520] sm:$0xff]
    %v5663 = vld [vmem:[#allocation2 + $0x1528] sm:$0xff]
    %v5664 = vld [vmem:[#allocation2 + $0x1530] sm:$0xff]
    %v5665 = vld [vmem:[#allocation2 + $0x1538] sm:$0xff]
    %v5666 = vld [vmem:[#allocation2 + $0x1540] sm:$0xff]
    %v5667 = vld [vmem:[#allocation2 + $0x1548] sm:$0xff]
    %v5668 = vld [vmem:[#allocation2 + $0x1550] sm:$0xff]
    %v5669 = vld [vmem:[#allocation2 + $0x1558] sm:$0xff]
    %v5670 = vld [vmem:[#allocation2 + $0x1560] sm:$0xff]
    %v5671 = vld [vmem:[#allocation2 + $0x1568] sm:$0xff]
    %v5672 = vld [vmem:[#allocation2 + $0x1570] sm:$0xff]
    %v5673 = vld [vmem:[#allocation2 + $0x1578] sm:$0xff]
    %v5674 = vld [vmem:[#allocation2 + $0x1580] sm:$0xff]
    %v5675 = vld [vmem:[#allocation2 + $0x1588] sm:$0xff]
    %v5676 = vld [vmem:[#allocation2 + $0x1590] sm:$0xff]
    %v5677 = vld [vmem:[#allocation2 + $0x1598] sm:$0xff]
    %v5678 = vld [vmem:[#allocation2 + $0x15a0] sm:$0xff]
    %v5679 = vld [vmem:[#allocation2 + $0x15a8] sm:$0xff]
    %v5680 = vld [vmem:[#allocation2 + $0x15b0] sm:$0xff]
    %v5681 = vld [vmem:[#allocation2 + $0x15b8] sm:$0xff]
    %v5682 = vld [vmem:[#allocation2 + $0x15c0] sm:$0xff]
    %v5683 = vld [vmem:[#allocation2 + $0x15c8] sm:$0xff]
    %v5684 = vld [vmem:[#allocation2 + $0x15d0] sm:$0xff]
    %v5685 = vld [vmem:[#allocation2 + $0x15d8] sm:$0xff]
    %v5686 = vld [vmem:[#allocation2 + $0x15e0] sm:$0xff]
    %v5687 = vld [vmem:[#allocation2 + $0x15e8] sm:$0xff]
    %v5688 = vld [vmem:[#allocation2 + $0x15f0] sm:$0xff]
    %v5689 = vld [vmem:[#allocation2 + $0x15f8] sm:$0xff]
    %v5690 = vld [vmem:[#allocation2 + $0x1600] sm:$0xff]
    %v5691 = vld [vmem:[#allocation2 + $0x1608] sm:$0xff]
    %v5692 = vld [vmem:[#allocation2 + $0x1610] sm:$0xff]
    %v5693 = vld [vmem:[#allocation2 + $0x1618] sm:$0xff]
    %v5694 = vld [vmem:[#allocation2 + $0x1620] sm:$0xff]
    %v5695 = vld [vmem:[#allocation2 + $0x1628] sm:$0xff]
    %v5696 = vld [vmem:[#allocation2 + $0x1630] sm:$0xff]
    %v5697 = vld [vmem:[#allocation2 + $0x1638] sm:$0xff]
    %v5698 = vld [vmem:[#allocation2 + $0x1640] sm:$0xff]
    %v5699 = vld [vmem:[#allocation2 + $0x1648] sm:$0xff]
    %v5700 = vld [vmem:[#allocation2 + $0x1650] sm:$0xff]
    %v5701 = vld [vmem:[#allocation2 + $0x1658] sm:$0xff]
    %v5702 = vld [vmem:[#allocation2 + $0x1660] sm:$0xff]
    %v5703 = vld [vmem:[#allocation2 + $0x1668] sm:$0xff]
    %v5704 = vld [vmem:[#allocation2 + $0x1670] sm:$0xff]
    %v5705 = vld [vmem:[#allocation2 + $0x1678] sm:$0xff]
    %v5706 = vld [vmem:[#allocation2 + $0x1680] sm:$0xff]
    %v5707 = vld [vmem:[#allocation2 + $0x1688] sm:$0xff]
    %v5708 = vld [vmem:[#allocation2 + $0x1690] sm:$0xff]
    %v5709 = vld [vmem:[#allocation2 + $0x1698] sm:$0xff]
    %v5710 = vld [vmem:[#allocation2 + $0x16a0] sm:$0xff]
    %v5711 = vld [vmem:[#allocation2 + $0x16a8] sm:$0xff]
    %v5712 = vld [vmem:[#allocation2 + $0x16b0] sm:$0xff]
    %v5713 = vld [vmem:[#allocation2 + $0x16b8] sm:$0xff]
    %v5714 = vld [vmem:[#allocation2 + $0x16c0] sm:$0xff]
    %v5715 = vld [vmem:[#allocation2 + $0x16c8] sm:$0xff]
    %v5716 = vld [vmem:[#allocation2 + $0x16d0] sm:$0xff]
    %v5717 = vld [vmem:[#allocation2 + $0x16d8] sm:$0xff]
    %v5718 = vld [vmem:[#allocation2 + $0x16e0] sm:$0xff]
    %v5719 = vld [vmem:[#allocation2 + $0x16e8] sm:$0xff]
    %v5720 = vld [vmem:[#allocation2 + $0x16f0] sm:$0xff]
    %v5721 = vld [vmem:[#allocation2 + $0x16f8] sm:$0xff]
    %v5722 = vld [vmem:[#allocation2 + $0x1700] sm:$0xff]
    %v5723 = vld [vmem:[#allocation2 + $0x1708] sm:$0xff]
    %v5724 = vld [vmem:[#allocation2 + $0x1710] sm:$0xff]
    %v5725 = vld [vmem:[#allocation2 + $0x1718] sm:$0xff]
    %v5726 = vld [vmem:[#allocation2 + $0x1720] sm:$0xff]
    %v5727 = vld [vmem:[#allocation2 + $0x1728] sm:$0xff]
    %v5728 = vld [vmem:[#allocation2 + $0x1730] sm:$0xff]
    %v5729 = vld [vmem:[#allocation2 + $0x1738] sm:$0xff]
    %v5730 = vld [vmem:[#allocation2 + $0x1740] sm:$0xff]
    %v5731 = vld [vmem:[#allocation2 + $0x1748] sm:$0xff]
    %v5732 = vld [vmem:[#allocation2 + $0x1750] sm:$0xff]
    %v5733 = vld [vmem:[#allocation2 + $0x1758] sm:$0xff]
    %v5734 = vld [vmem:[#allocation2 + $0x1760] sm:$0xff]
    %v5735 = vld [vmem:[#allocation2 + $0x1768] sm:$0xff]
    %v5736 = vld [vmem:[#allocation2 + $0x1770] sm:$0xff]
    %v5737 = vld [vmem:[#allocation2 + $0x1778] sm:$0xff]
    %v5738 = vld [vmem:[#allocation2 + $0x1780] sm:$0xff]
    %v5739 = vld [vmem:[#allocation2 + $0x1788] sm:$0xff]
    %v5740 = vld [vmem:[#allocation2 + $0x1790] sm:$0xff]
    %v5741 = vld [vmem:[#allocation2 + $0x1798] sm:$0xff]
    %v5742 = vld [vmem:[#allocation2 + $0x17a0] sm:$0xff]
    %v5743 = vld [vmem:[#allocation2 + $0x17a8] sm:$0xff]
    %v5744 = vld [vmem:[#allocation2 + $0x17b0] sm:$0xff]
    %v5745 = vld [vmem:[#allocation2 + $0x17b8] sm:$0xff]
    %v5746 = vld [vmem:[#allocation2 + $0x17c0] sm:$0xff]
    %v5747 = vld [vmem:[#allocation2 + $0x17c8] sm:$0xff]
    %v5748 = vld [vmem:[#allocation2 + $0x17d0] sm:$0xff]
    %v5749 = vld [vmem:[#allocation2 + $0x17d8] sm:$0xff]
    %v5750 = vld [vmem:[#allocation2 + $0x17e0] sm:$0xff]
    %v5751 = vld [vmem:[#allocation2 + $0x17e8] sm:$0xff]
    %v5752 = vld [vmem:[#allocation2 + $0x17f0] sm:$0xff]
    %v5753 = vld [vmem:[#allocation2 + $0x17f8] sm:$0xff]
    %5754 = vmatprep.subr.mxu0 0.0
    %5755 = vmatpush1.msra.mxu0 %v5626
    %5756 = vmatprep.subr.mxu0 0.0
    %5757 = vmatpush1.msra.mxu0 %v5627
    %5758 = vmatprep.subr.mxu0 0.0
    %5759 = vmatpush1.msra.mxu0 %v5628
    %5760 = vmatprep.subr.mxu0 0.0
    %5761 = vmatpush1.msra.mxu0 %v5629
    %5762 = vmatprep.subr.mxu0 0.0
    %5763 = vmatpush1.msra.mxu0 %v5630
    %5764 = vmatprep.subr.mxu0 0.0
    %5765 = vmatpush1.msra.mxu0 %v5631
    %5766 = vmatprep.subr.mxu0 0.0
    %5767 = vmatpush1.msra.mxu0 %v5632
    %5768 = vmatprep.subr.mxu0 0.0
    %5769 = vmatpush1.msra.mxu0 %v5633
    %5770 = vmatprep.subr.mxu0 0.0
    %5771 = vmatpush1.msra.mxu0 %v5634
    %5772 = vmatprep.subr.mxu0 0.0
    %5773 = vmatpush1.msra.mxu0 %v5635
    %5774 = vmatprep.subr.mxu0 0.0
    %5775 = vmatpush1.msra.mxu0 %v5636
    %5776 = vmatprep.subr.mxu0 0.0
    %5777 = vmatpush1.msra.mxu0 %v5637
    %5778 = vmatprep.subr.mxu0 0.0
    %5779 = vmatpush1.msra.mxu0 %v5638
    %5780 = vmatprep.subr.mxu0 0.0
    %5781 = vmatpush1.msra.mxu0 %v5639
    %5782 = vmatprep.subr.mxu0 0.0
    %5783 = vmatpush1.msra.mxu0 %v5640
    %5784 = vmatprep.subr.mxu0 0.0
    %5785 = vmatpush1.msra.mxu0 %v5641
    %5786 = vmatprep.subr.mxu0 0.0
    %5787 = vmatpush1.msra.mxu0 %v5642
    %5788 = vmatprep.subr.mxu0 0.0
    %5789 = vmatpush1.msra.mxu0 %v5643
    %5790 = vmatprep.subr.mxu0 0.0
    %5791 = vmatpush1.msra.mxu0 %v5644
    %5792 = vmatprep.subr.mxu0 0.0
    %5793 = vmatpush1.msra.mxu0 %v5645
    %5794 = vmatprep.subr.mxu0 0.0
    %5795 = vmatpush1.msra.mxu0 %v5646
    %5796 = vmatprep.subr.mxu0 0.0
    %5797 = vmatpush1.msra.mxu0 %v5647
    %5798 = vmatprep.subr.mxu0 0.0
    %5799 = vmatpush1.msra.mxu0 %v5648
    %5800 = vmatprep.subr.mxu0 0.0
    %5801 = vmatpush1.msra.mxu0 %v5649
    %5802 = vmatprep.subr.mxu0 0.0
    %5803 = vmatpush1.msra.mxu0 %v5650
    %5804 = vmatprep.subr.mxu0 0.0
    %5805 = vmatpush1.msra.mxu0 %v5651
    %5806 = vmatprep.subr.mxu0 0.0
    %5807 = vmatpush1.msra.mxu0 %v5652
    %5808 = vmatprep.subr.mxu0 0.0
    %5809 = vmatpush1.msra.mxu0 %v5653
    %5810 = vmatprep.subr.mxu0 0.0
    %5811 = vmatpush1.msra.mxu0 %v5654
    %5812 = vmatprep.subr.mxu0 0.0
    %5813 = vmatpush1.msra.mxu0 %v5655
    %5814 = vmatprep.subr.mxu0 0.0
    %5815 = vmatpush1.msra.mxu0 %v5656
    %5816 = vmatprep.subr.mxu0 0.0
    %5817 = vmatpush1.msra.mxu0 %v5657
    %5818 = vmatprep.mubr.f32.mxu0 %v5619
    %5819 = vmatmul.mubr.f32.gmra.mrb[0].mxu0 %v5618
    %v5820 = vpop.f32.mrb[0].mxu0
    %v5821 = vadd.f32 0.0, %v5820
    %v5822 = vpop.f32.mrb[0].mxu0
    %5823 = vdwg.mxu0
    %5824 = vmatprep.subr.mxu0 0.0
    %5825 = vmatpush1.msra.mxu0 %v5658
    %5826 = vmatprep.subr.mxu0 0.0
    %5827 = vmatpush1.msra.mxu0 %v5659
    %5828 = vmatprep.subr.mxu0 0.0
    %5829 = vmatpush1.msra.mxu0 %v5660
    %5830 = vmatprep.subr.mxu0 0.0
    %5831 = vmatpush1.msra.mxu0 %v5661
    %5832 = vmatprep.subr.mxu0 0.0
    %5833 = vmatpush1.msra.mxu0 %v5662
    %5834 = vmatprep.subr.mxu0 0.0
    %5835 = vmatpush1.msra.mxu0 %v5663
    %5836 = vmatprep.subr.mxu0 0.0
    %5837 = vmatpush1.msra.mxu0 %v5664
    %5838 = vmatprep.subr.mxu0 0.0
    %5839 = vmatpush1.msra.mxu0 %v5665
    %5840 = vmatprep.subr.mxu0 0.0
    %5841 = vmatpush1.msra.mxu0 %v5666
    %5842 = vmatprep.subr.mxu0 0.0
    %5843 = vmatpush1.msra.mxu0 %v5667
    %5844 = vmatprep.subr.mxu0 0.0
    %5845 = vmatpush1.msra.mxu0 %v5668
    %5846 = vmatprep.subr.mxu0 0.0
    %5847 = vmatpush1.msra.mxu0 %v5669
    %5848 = vmatprep.subr.mxu0 0.0
    %5849 = vmatpush1.msra.mxu0 %v5670
    %5850 = vmatprep.subr.mxu0 0.0
    %5851 = vmatpush1.msra.mxu0 %v5671
    %5852 = vmatprep.subr.mxu0 0.0
    %5853 = vmatpush1.msra.mxu0 %v5672
    %5854 = vmatprep.subr.mxu0 0.0
    %5855 = vmatpush1.msra.mxu0 %v5673
    %5856 = vmatprep.subr.mxu0 0.0
    %5857 = vmatpush1.msra.mxu0 %v5674
    %5858 = vmatprep.subr.mxu0 0.0
    %5859 = vmatpush1.msra.mxu0 %v5675
    %5860 = vmatprep.subr.mxu0 0.0
    %5861 = vmatpush1.msra.mxu0 %v5676
    %5862 = vmatprep.subr.mxu0 0.0
    %5863 = vmatpush1.msra.mxu0 %v5677
    %5864 = vmatprep.subr.mxu0 0.0
    %5865 = vmatpush1.msra.mxu0 %v5678
    %5866 = vmatprep.subr.mxu0 0.0
    %5867 = vmatpush1.msra.mxu0 %v5679
    %5868 = vmatprep.subr.mxu0 0.0
    %5869 = vmatpush1.msra.mxu0 %v5680
    %5870 = vmatprep.subr.mxu0 0.0
    %5871 = vmatpush1.msra.mxu0 %v5681
    %5872 = vmatprep.subr.mxu0 0.0
    %5873 = vmatpush1.msra.mxu0 %v5682
    %5874 = vmatprep.subr.mxu0 0.0
    %5875 = vmatpush1.msra.mxu0 %v5683
    %5876 = vmatprep.subr.mxu0 0.0
    %5877 = vmatpush1.msra.mxu0 %v5684
    %5878 = vmatprep.subr.mxu0 0.0
    %5879 = vmatpush1.msra.mxu0 %v5685
    %5880 = vmatprep.subr.mxu0 0.0
    %5881 = vmatpush1.msra.mxu0 %v5686
    %5882 = vmatprep.subr.mxu0 0.0
    %5883 = vmatpush1.msra.mxu0 %v5687
    %5884 = vmatprep.subr.mxu0 0.0
    %5885 = vmatpush1.msra.mxu0 %v5688
    %5886 = vmatprep.subr.mxu0 0.0
    %5887 = vmatpush1.msra.mxu0 %v5689
    %5888 = vmatprep.mubr.f32.mxu0 %v5621
    %5889 = vmatmul.mubr.f32.gmra.mrb[0].mxu0 %v5620
    %v5890 = vpop.f32.mrb[0].mxu0
    %v5891 = vadd.f32 %v5821, %v5890
    %v5892 = vpop.f32.mrb[0].mxu0
    %5893 = vdwg.mxu0
    %5894 = vmatprep.subr.mxu0 0.0
    %5895 = vmatpush1.msra.mxu0 %v5690
    %5896 = vmatprep.subr.mxu0 0.0
    %5897 = vmatpush1.msra.mxu0 %v5691
    %5898 = vmatprep.subr.mxu0 0.0
    %5899 = vmatpush1.msra.mxu0 %v5692
    %5900 = vmatprep.subr.mxu0 0.0
    %5901 = vmatpush1.msra.mxu0 %v5693
    %5902 = vmatprep.subr.mxu0 0.0
    %5903 = vmatpush1.msra.mxu0 %v5694
    %5904 = vmatprep.subr.mxu0 0.0
    %5905 = vmatpush1.msra.mxu0 %v5695
    %5906 = vmatprep.subr.mxu0 0.0
    %5907 = vmatpush1.msra.mxu0 %v5696
    %5908 = vmatprep.subr.mxu0 0.0
    %5909 = vmatpush1.msra.mxu0 %v5697
    %5910 = vmatprep.subr.mxu0 0.0
    %5911 = vmatpush1.msra.mxu0 %v5698
    %5912 = vmatprep.subr.mxu0 0.0
    %5913 = vmatpush1.msra.mxu0 %v5699
    %5914 = vmatprep.subr.mxu0 0.0
    %5915 = vmatpush1.msra.mxu0 %v5700
    %5916 = vmatprep.subr.mxu0 0.0
    %5917 = vmatpush1.msra.mxu0 %v5701
    %5918 = vmatprep.subr.mxu0 0.0
    %5919 = vmatpush1.msra.mxu0 %v5702
    %5920 = vmatprep.subr.mxu0 0.0
    %5921 = vmatpush1.msra.mxu0 %v5703
    %5922 = vmatprep.subr.mxu0 0.0
    %5923 = vmatpush1.msra.mxu0 %v5704
    %5924 = vmatprep.subr.mxu0 0.0
    %5925 = vmatpush1.msra.mxu0 %v5705
    %5926 = vmatprep.subr.mxu0 0.0
    %5927 = vmatpush1.msra.mxu0 %v5706
    %5928 = vmatprep.subr.mxu0 0.0
    %5929 = vmatpush1.msra.mxu0 %v5707
    %5930 = vmatprep.subr.mxu0 0.0
    %5931 = vmatpush1.msra.mxu0 %v5708
    %5932 = vmatprep.subr.mxu0 0.0
    %5933 = vmatpush1.msra.mxu0 %v5709
    %5934 = vmatprep.subr.mxu0 0.0
    %5935 = vmatpush1.msra.mxu0 %v5710
    %5936 = vmatprep.subr.mxu0 0.0
    %5937 = vmatpush1.msra.mxu0 %v5711
    %5938 = vmatprep.subr.mxu0 0.0
    %5939 = vmatpush1.msra.mxu0 %v5712
    %5940 = vmatprep.subr.mxu0 0.0
    %5941 = vmatpush1.msra.mxu0 %v5713
    %5942 = vmatprep.subr.mxu0 0.0
    %5943 = vmatpush1.msra.mxu0 %v5714
    %5944 = vmatprep.subr.mxu0 0.0
    %5945 = vmatpush1.msra.mxu0 %v5715
    %5946 = vmatprep.subr.mxu0 0.0
    %5947 = vmatpush1.msra.mxu0 %v5716
    %5948 = vmatprep.subr.mxu0 0.0
    %5949 = vmatpush1.msra.mxu0 %v5717
    %5950 = vmatprep.subr.mxu0 0.0
    %5951 = vmatpush1.msra.mxu0 %v5718
    %5952 = vmatprep.subr.mxu0 0.0
    %5953 = vmatpush1.msra.mxu0 %v5719
    %5954 = vmatprep.subr.mxu0 0.0
    %5955 = vmatpush1.msra.mxu0 %v5720
    %5956 = vmatprep.subr.mxu0 0.0
    %5957 = vmatpush1.msra.mxu0 %v5721
    %5958 = vmatprep.mubr.f32.mxu0 %v5623
    %5959 = vmatmul.mubr.f32.gmra.mrb[0].mxu0 %v5622
    %v5960 = vpop.f32.mrb[0].mxu0
    %v5961 = vadd.f32 %v5891, %v5960
    %v5962 = vpop.f32.mrb[0].mxu0
    %5963 = vdwg.mxu0
    %5964 = vmatprep.subr.mxu0 0.0
    %5965 = vmatpush1.msra.mxu0 %v5722
    %5966 = vmatprep.subr.mxu0 0.0
    %5967 = vmatpush1.msra.mxu0 %v5723
    %5968 = vmatprep.subr.mxu0 0.0
    %5969 = vmatpush1.msra.mxu0 %v5724
    %5970 = vmatprep.subr.mxu0 0.0
    %5971 = vmatpush1.msra.mxu0 %v5725
    %5972 = vmatprep.subr.mxu0 0.0
    %5973 = vmatpush1.msra.mxu0 %v5726
    %5974 = vmatprep.subr.mxu0 0.0
    %5975 = vmatpush1.msra.mxu0 %v5727
    %5976 = vmatprep.subr.mxu0 0.0
    %5977 = vmatpush1.msra.mxu0 %v5728
    %5978 = vmatprep.subr.mxu0 0.0
    %5979 = vmatpush1.msra.mxu0 %v5729
    %5980 = vmatprep.subr.mxu0 0.0
    %5981 = vmatpush1.msra.mxu0 %v5730
    %5982 = vmatprep.subr.mxu0 0.0
    %5983 = vmatpush1.msra.mxu0 %v5731
    %5984 = vmatprep.subr.mxu0 0.0
    %5985 = vmatpush1.msra.mxu0 %v5732
    %5986 = vmatprep.subr.mxu0 0.0
    %5987 = vmatpush1.msra.mxu0 %v5733
    %5988 = vmatprep.subr.mxu0 0.0
    %5989 = vmatpush1.msra.mxu0 %v5734
    %5990 = vmatprep.subr.mxu0 0.0
    %5991 = vmatpush1.msra.mxu0 %v5735
    %5992 = vmatprep.subr.mxu0 0.0
    %5993 = vmatpush1.msra.mxu0 %v5736
    %5994 = vmatprep.subr.mxu0 0.0
    %5995 = vmatpush1.msra.mxu0 %v5737
    %5996 = vmatprep.subr.mxu0 0.0
    %5997 = vmatpush1.msra.mxu0 %v5738
    %5998 = vmatprep.subr.mxu0 0.0
    %5999 = vmatpush1.msra.mxu0 %v5739
    %6000 = vmatprep.subr.mxu0 0.0
    %6001 = vmatpush1.msra.mxu0 %v5740
    %6002 = vmatprep.subr.mxu0 0.0
    %6003 = vmatpush1.msra.mxu0 %v5741
    %6004 = vmatprep.subr.mxu0 0.0
    %6005 = vmatpush1.msra.mxu0 %v5742
    %6006 = vmatprep.subr.mxu0 0.0
    %6007 = vmatpush1.msra.mxu0 %v5743
    %6008 = vmatprep.subr.mxu0 0.0
    %6009 = vmatpush1.msra.mxu0 %v5744
    %6010 = vmatprep.subr.mxu0 0.0
    %6011 = vmatpush1.msra.mxu0 %v5745
    %6012 = vmatprep.subr.mxu0 0.0
    %6013 = vmatpush1.msra.mxu0 %v5746
    %6014 = vmatprep.subr.mxu0 0.0
    %6015 = vmatpush1.msra.mxu0 %v5747
    %6016 = vmatprep.subr.mxu0 0.0
    %6017 = vmatpush1.msra.mxu0 %v5748
    %6018 = vmatprep.subr.mxu0 0.0
    %6019 = vmatpush1.msra.mxu0 %v5749
    %6020 = vmatprep.subr.mxu0 0.0
    %6021 = vmatpush1.msra.mxu0 %v5750
    %6022 = vmatprep.subr.mxu0 0.0
    %6023 = vmatpush1.msra.mxu0 %v5751
    %6024 = vmatprep.subr.mxu0 0.0
    %6025 = vmatpush1.msra.mxu0 %v5752
    %6026 = vmatprep.subr.mxu0 0.0
    %6027 = vmatpush1.msra.mxu0 %v5753
    %6028 = vmatprep.mubr.f32.mxu0 %v5625
    %6029 = vmatmul.mubr.f32.gmra.mrb[0].mxu0 %v5624
    %v6030 = vpop.f32.mrb[0].mxu0
    %v6031 = vadd.f32 %v5961, %v6030
    %v6032 = vpop.f32.mrb[0].mxu0
    %6033 = vdwg.mxu0
    %v6034 = vadd.f32 %v5617, %v6031
    %v6035 = vld [vmem:[%s1 + $0x180] sm:$0xff]
    %v6036 = vld [vmem:[%s1 + $0x188] sm:$0xff]
    %v6037 = vld [vmem:[%s1 + $0x190] sm:$0xff]
    %v6038 = vld [vmem:[%s1 + $0x198] sm:$0xff]
    %v6039 = vld [vmem:[%s1 + $0x1a0] sm:$0xff]
    %v6040 = vld [vmem:[%s1 + $0x1a8] sm:$0xff]
    %v6041 = vld [vmem:[%s1 + $0x1b0] sm:$0xff]
    %v6042 = vld [vmem:[%s1 + $0x1b8] sm:$0xff]
    %v6043 = vld [vmem:[#allocation2 + $0x1800] sm:$0xff]
    %v6044 = vld [vmem:[#allocation2 + $0x1808] sm:$0xff]
    %v6045 = vld [vmem:[#allocation2 + $0x1810] sm:$0xff]
    %v6046 = vld [vmem:[#allocation2 + $0x1818] sm:$0xff]
    %v6047 = vld [vmem:[#allocation2 + $0x1820] sm:$0xff]
    %v6048 = vld [vmem:[#allocation2 + $0x1828] sm:$0xff]
    %v6049 = vld [vmem:[#allocation2 + $0x1830] sm:$0xff]
    %v6050 = vld [vmem:[#allocation2 + $0x1838] sm:$0xff]
    %v6051 = vld [vmem:[#allocation2 + $0x1840] sm:$0xff]
    %v6052 = vld [vmem:[#allocation2 + $0x1848] sm:$0xff]
    %v6053 = vld [vmem:[#allocation2 + $0x1850] sm:$0xff]
    %v6054 = vld [vmem:[#allocation2 + $0x1858] sm:$0xff]
    %v6055 = vld [vmem:[#allocation2 + $0x1860] sm:$0xff]
    %v6056 = vld [vmem:[#allocation2 + $0x1868] sm:$0xff]
    %v6057 = vld [vmem:[#allocation2 + $0x1870] sm:$0xff]
    %v6058 = vld [vmem:[#allocation2 + $0x1878] sm:$0xff]
    %v6059 = vld [vmem:[#allocation2 + $0x1880] sm:$0xff]
    %v6060 = vld [vmem:[#allocation2 + $0x1888] sm:$0xff]
    %v6061 = vld [vmem:[#allocation2 + $0x1890] sm:$0xff]
    %v6062 = vld [vmem:[#allocation2 + $0x1898] sm:$0xff]
    %v6063 = vld [vmem:[#allocation2 + $0x18a0] sm:$0xff]
    %v6064 = vld [vmem:[#allocation2 + $0x18a8] sm:$0xff]
    %v6065 = vld [vmem:[#allocation2 + $0x18b0] sm:$0xff]
    %v6066 = vld [vmem:[#allocation2 + $0x18b8] sm:$0xff]
    %v6067 = vld [vmem:[#allocation2 + $0x18c0] sm:$0xff]
    %v6068 = vld [vmem:[#allocation2 + $0x18c8] sm:$0xff]
    %v6069 = vld [vmem:[#allocation2 + $0x18d0] sm:$0xff]
    %v6070 = vld [vmem:[#allocation2 + $0x18d8] sm:$0xff]
    %v6071 = vld [vmem:[#allocation2 + $0x18e0] sm:$0xff]
    %v6072 = vld [vmem:[#allocation2 + $0x18e8] sm:$0xff]
    %v6073 = vld [vmem:[#allocation2 + $0x18f0] sm:$0xff]
    %v6074 = vld [vmem:[#allocation2 + $0x18f8] sm:$0xff]
    %v6075 = vld [vmem:[#allocation2 + $0x1900] sm:$0xff]
    %v6076 = vld [vmem:[#allocation2 + $0x1908] sm:$0xff]
    %v6077 = vld [vmem:[#allocation2 + $0x1910] sm:$0xff]
    %v6078 = vld [vmem:[#allocation2 + $0x1918] sm:$0xff]
    %v6079 = vld [vmem:[#allocation2 + $0x1920] sm:$0xff]
    %v6080 = vld [vmem:[#allocation2 + $0x1928] sm:$0xff]
    %v6081 = vld [vmem:[#allocation2 + $0x1930] sm:$0xff]
    %v6082 = vld [vmem:[#allocation2 + $0x1938] sm:$0xff]
    %v6083 = vld [vmem:[#allocation2 + $0x1940] sm:$0xff]
    %v6084 = vld [vmem:[#allocation2 + $0x1948] sm:$0xff]
    %v6085 = vld [vmem:[#allocation2 + $0x1950] sm:$0xff]
    %v6086 = vld [vmem:[#allocation2 + $0x1958] sm:$0xff]
    %v6087 = vld [vmem:[#allocation2 + $0x1960] sm:$0xff]
    %v6088 = vld [vmem:[#allocation2 + $0x1968] sm:$0xff]
    %v6089 = vld [vmem:[#allocation2 + $0x1970] sm:$0xff]
    %v6090 = vld [vmem:[#allocation2 + $0x1978] sm:$0xff]
    %v6091 = vld [vmem:[#allocation2 + $0x1980] sm:$0xff]
    %v6092 = vld [vmem:[#allocation2 + $0x1988] sm:$0xff]
    %v6093 = vld [vmem:[#allocation2 + $0x1990] sm:$0xff]
    %v6094 = vld [vmem:[#allocation2 + $0x1998] sm:$0xff]
    %v6095 = vld [vmem:[#allocation2 + $0x19a0] sm:$0xff]
    %v6096 = vld [vmem:[#allocation2 + $0x19a8] sm:$0xff]
    %v6097 = vld [vmem:[#allocation2 + $0x19b0] sm:$0xff]
    %v6098 = vld [vmem:[#allocation2 + $0x19b8] sm:$0xff]
    %v6099 = vld [vmem:[#allocation2 + $0x19c0] sm:$0xff]
    %v6100 = vld [vmem:[#allocation2 + $0x19c8] sm:$0xff]
    %v6101 = vld [vmem:[#allocation2 + $0x19d0] sm:$0xff]
    %v6102 = vld [vmem:[#allocation2 + $0x19d8] sm:$0xff]
    %v6103 = vld [vmem:[#allocation2 + $0x19e0] sm:$0xff]
    %v6104 = vld [vmem:[#allocation2 + $0x19e8] sm:$0xff]
    %v6105 = vld [vmem:[#allocation2 + $0x19f0] sm:$0xff]
    %v6106 = vld [vmem:[#allocation2 + $0x19f8] sm:$0xff]
    %v6107 = vld [vmem:[#allocation2 + $0x1a00] sm:$0xff]
    %v6108 = vld [vmem:[#allocation2 + $0x1a08] sm:$0xff]
    %v6109 = vld [vmem:[#allocation2 + $0x1a10] sm:$0xff]
    %v6110 = vld [vmem:[#allocation2 + $0x1a18] sm:$0xff]
    %v6111 = vld [vmem:[#allocation2 + $0x1a20] sm:$0xff]
    %v6112 = vld [vmem:[#allocation2 + $0x1a28] sm:$0xff]
    %v6113 = vld [vmem:[#allocation2 + $0x1a30] sm:$0xff]
    %v6114 = vld [vmem:[#allocation2 + $0x1a38] sm:$0xff]
    %v6115 = vld [vmem:[#allocation2 + $0x1a40] sm:$0xff]
    %v6116 = vld [vmem:[#allocation2 + $0x1a48] sm:$0xff]
    %v6117 = vld [vmem:[#allocation2 + $0x1a50] sm:$0xff]
    %v6118 = vld [vmem:[#allocation2 + $0x1a58] sm:$0xff]
    %v6119 = vld [vmem:[#allocation2 + $0x1a60] sm:$0xff]
    %v6120 = vld [vmem:[#allocation2 + $0x1a68] sm:$0xff]
    %v6121 = vld [vmem:[#allocation2 + $0x1a70] sm:$0xff]
    %v6122 = vld [vmem:[#allocation2 + $0x1a78] sm:$0xff]
    %v6123 = vld [vmem:[#allocation2 + $0x1a80] sm:$0xff]
    %v6124 = vld [vmem:[#allocation2 + $0x1a88] sm:$0xff]
    %v6125 = vld [vmem:[#allocation2 + $0x1a90] sm:$0xff]
    %v6126 = vld [vmem:[#allocation2 + $0x1a98] sm:$0xff]
    %v6127 = vld [vmem:[#allocation2 + $0x1aa0] sm:$0xff]
    %v6128 = vld [vmem:[#allocation2 + $0x1aa8] sm:$0xff]
    %v6129 = vld [vmem:[#allocation2 + $0x1ab0] sm:$0xff]
    %v6130 = vld [vmem:[#allocation2 + $0x1ab8] sm:$0xff]
    %v6131 = vld [vmem:[#allocation2 + $0x1ac0] sm:$0xff]
    %v6132 = vld [vmem:[#allocation2 + $0x1ac8] sm:$0xff]
    %v6133 = vld [vmem:[#allocation2 + $0x1ad0] sm:$0xff]
    %v6134 = vld [vmem:[#allocation2 + $0x1ad8] sm:$0xff]
    %v6135 = vld [vmem:[#allocation2 + $0x1ae0] sm:$0xff]
    %v6136 = vld [vmem:[#allocation2 + $0x1ae8] sm:$0xff]
    %v6137 = vld [vmem:[#allocation2 + $0x1af0] sm:$0xff]
    %v6138 = vld [vmem:[#allocation2 + $0x1af8] sm:$0xff]
    %v6139 = vld [vmem:[#allocation2 + $0x1b00] sm:$0xff]
    %v6140 = vld [vmem:[#allocation2 + $0x1b08] sm:$0xff]
    %v6141 = vld [vmem:[#allocation2 + $0x1b10] sm:$0xff]
    %v6142 = vld [vmem:[#allocation2 + $0x1b18] sm:$0xff]
    %v6143 = vld [vmem:[#allocation2 + $0x1b20] sm:$0xff]
    %v6144 = vld [vmem:[#allocation2 + $0x1b28] sm:$0xff]
    %v6145 = vld [vmem:[#allocation2 + $0x1b30] sm:$0xff]
    %v6146 = vld [vmem:[#allocation2 + $0x1b38] sm:$0xff]
    %v6147 = vld [vmem:[#allocation2 + $0x1b40] sm:$0xff]
    %v6148 = vld [vmem:[#allocation2 + $0x1b48] sm:$0xff]
    %v6149 = vld [vmem:[#allocation2 + $0x1b50] sm:$0xff]
    %v6150 = vld [vmem:[#allocation2 + $0x1b58] sm:$0xff]
    %v6151 = vld [vmem:[#allocation2 + $0x1b60] sm:$0xff]
    %v6152 = vld [vmem:[#allocation2 + $0x1b68] sm:$0xff]
    %v6153 = vld [vmem:[#allocation2 + $0x1b70] sm:$0xff]
    %v6154 = vld [vmem:[#allocation2 + $0x1b78] sm:$0xff]
    %v6155 = vld [vmem:[#allocation2 + $0x1b80] sm:$0xff]
    %v6156 = vld [vmem:[#allocation2 + $0x1b88] sm:$0xff]
    %v6157 = vld [vmem:[#allocation2 + $0x1b90] sm:$0xff]
    %v6158 = vld [vmem:[#allocation2 + $0x1b98] sm:$0xff]
    %v6159 = vld [vmem:[#allocation2 + $0x1ba0] sm:$0xff]
    %v6160 = vld [vmem:[#allocation2 + $0x1ba8] sm:$0xff]
    %v6161 = vld [vmem:[#allocation2 + $0x1bb0] sm:$0xff]
    %v6162 = vld [vmem:[#allocation2 + $0x1bb8] sm:$0xff]
    %v6163 = vld [vmem:[#allocation2 + $0x1bc0] sm:$0xff]
    %v6164 = vld [vmem:[#allocation2 + $0x1bc8] sm:$0xff]
    %v6165 = vld [vmem:[#allocation2 + $0x1bd0] sm:$0xff]
    %v6166 = vld [vmem:[#allocation2 + $0x1bd8] sm:$0xff]
    %v6167 = vld [vmem:[#allocation2 + $0x1be0] sm:$0xff]
    %v6168 = vld [vmem:[#allocation2 + $0x1be8] sm:$0xff]
    %v6169 = vld [vmem:[#allocation2 + $0x1bf0] sm:$0xff]
    %v6170 = vld [vmem:[#allocation2 + $0x1bf8] sm:$0xff]
    %6171 = vmatprep.subr.mxu0 0.0
    %6172 = vmatpush1.msra.mxu0 %v6043
    %6173 = vmatprep.subr.mxu0 0.0
    %6174 = vmatpush1.msra.mxu0 %v6044
    %6175 = vmatprep.subr.mxu0 0.0
    %6176 = vmatpush1.msra.mxu0 %v6045
    %6177 = vmatprep.subr.mxu0 0.0
    %6178 = vmatpush1.msra.mxu0 %v6046
    %6179 = vmatprep.subr.mxu0 0.0
    %6180 = vmatpush1.msra.mxu0 %v6047
    %6181 = vmatprep.subr.mxu0 0.0
    %6182 = vmatpush1.msra.mxu0 %v6048
    %6183 = vmatprep.subr.mxu0 0.0
    %6184 = vmatpush1.msra.mxu0 %v6049
    %6185 = vmatprep.subr.mxu0 0.0
    %6186 = vmatpush1.msra.mxu0 %v6050
    %6187 = vmatprep.subr.mxu0 0.0
    %6188 = vmatpush1.msra.mxu0 %v6051
    %6189 = vmatprep.subr.mxu0 0.0
    %6190 = vmatpush1.msra.mxu0 %v6052
    %6191 = vmatprep.subr.mxu0 0.0
    %6192 = vmatpush1.msra.mxu0 %v6053
    %6193 = vmatprep.subr.mxu0 0.0
    %6194 = vmatpush1.msra.mxu0 %v6054
    %6195 = vmatprep.subr.mxu0 0.0
    %6196 = vmatpush1.msra.mxu0 %v6055
    %6197 = vmatprep.subr.mxu0 0.0
    %6198 = vmatpush1.msra.mxu0 %v6056
    %6199 = vmatprep.subr.mxu0 0.0
    %6200 = vmatpush1.msra.mxu0 %v6057
    %6201 = vmatprep.subr.mxu0 0.0
    %6202 = vmatpush1.msra.mxu0 %v6058
    %6203 = vmatprep.subr.mxu0 0.0
    %6204 = vmatpush1.msra.mxu0 %v6059
    %6205 = vmatprep.subr.mxu0 0.0
    %6206 = vmatpush1.msra.mxu0 %v6060
    %6207 = vmatprep.subr.mxu0 0.0
    %6208 = vmatpush1.msra.mxu0 %v6061
    %6209 = vmatprep.subr.mxu0 0.0
    %6210 = vmatpush1.msra.mxu0 %v6062
    %6211 = vmatprep.subr.mxu0 0.0
    %6212 = vmatpush1.msra.mxu0 %v6063
    %6213 = vmatprep.subr.mxu0 0.0
    %6214 = vmatpush1.msra.mxu0 %v6064
    %6215 = vmatprep.subr.mxu0 0.0
    %6216 = vmatpush1.msra.mxu0 %v6065
    %6217 = vmatprep.subr.mxu0 0.0
    %6218 = vmatpush1.msra.mxu0 %v6066
    %6219 = vmatprep.subr.mxu0 0.0
    %6220 = vmatpush1.msra.mxu0 %v6067
    %6221 = vmatprep.subr.mxu0 0.0
    %6222 = vmatpush1.msra.mxu0 %v6068
    %6223 = vmatprep.subr.mxu0 0.0
    %6224 = vmatpush1.msra.mxu0 %v6069
    %6225 = vmatprep.subr.mxu0 0.0
    %6226 = vmatpush1.msra.mxu0 %v6070
    %6227 = vmatprep.subr.mxu0 0.0
    %6228 = vmatpush1.msra.mxu0 %v6071
    %6229 = vmatprep.subr.mxu0 0.0
    %6230 = vmatpush1.msra.mxu0 %v6072
    %6231 = vmatprep.subr.mxu0 0.0
    %6232 = vmatpush1.msra.mxu0 %v6073
    %6233 = vmatprep.subr.mxu0 0.0
    %6234 = vmatpush1.msra.mxu0 %v6074
    %6235 = vmatprep.mubr.f32.mxu0 %v6036
    %6236 = vmatmul.mubr.f32.gmra.mrb[0].mxu0 %v6035
    %v6237 = vpop.f32.mrb[0].mxu0
    %v6238 = vadd.f32 0.0, %v6237
    %v6239 = vpop.f32.mrb[0].mxu0
    %6240 = vdwg.mxu0
    %6241 = vmatprep.subr.mxu0 0.0
    %6242 = vmatpush1.msra.mxu0 %v6075
    %6243 = vmatprep.subr.mxu0 0.0
    %6244 = vmatpush1.msra.mxu0 %v6076
    %6245 = vmatprep.subr.mxu0 0.0
    %6246 = vmatpush1.msra.mxu0 %v6077
    %6247 = vmatprep.subr.mxu0 0.0
    %6248 = vmatpush1.msra.mxu0 %v6078
    %6249 = vmatprep.subr.mxu0 0.0
    %6250 = vmatpush1.msra.mxu0 %v6079
    %6251 = vmatprep.subr.mxu0 0.0
    %6252 = vmatpush1.msra.mxu0 %v6080
    %6253 = vmatprep.subr.mxu0 0.0
    %6254 = vmatpush1.msra.mxu0 %v6081
    %6255 = vmatprep.subr.mxu0 0.0
    %6256 = vmatpush1.msra.mxu0 %v6082
    %6257 = vmatprep.subr.mxu0 0.0
    %6258 = vmatpush1.msra.mxu0 %v6083
    %6259 = vmatprep.subr.mxu0 0.0
    %6260 = vmatpush1.msra.mxu0 %v6084
    %6261 = vmatprep.subr.mxu0 0.0
    %6262 = vmatpush1.msra.mxu0 %v6085
    %6263 = vmatprep.subr.mxu0 0.0
    %6264 = vmatpush1.msra.mxu0 %v6086
    %6265 = vmatprep.subr.mxu0 0.0
    %6266 = vmatpush1.msra.mxu0 %v6087
    %6267 = vmatprep.subr.mxu0 0.0
    %6268 = vmatpush1.msra.mxu0 %v6088
    %6269 = vmatprep.subr.mxu0 0.0
    %6270 = vmatpush1.msra.mxu0 %v6089
    %6271 = vmatprep.subr.mxu0 0.0
    %6272 = vmatpush1.msra.mxu0 %v6090
    %6273 = vmatprep.subr.mxu0 0.0
    %6274 = vmatpush1.msra.mxu0 %v6091
    %6275 = vmatprep.subr.mxu0 0.0
    %6276 = vmatpush1.msra.mxu0 %v6092
    %6277 = vmatprep.subr.mxu0 0.0
    %6278 = vmatpush1.msra.mxu0 %v6093
    %6279 = vmatprep.subr.mxu0 0.0
    %6280 = vmatpush1.msra.mxu0 %v6094
    %6281 = vmatprep.subr.mxu0 0.0
    %6282 = vmatpush1.msra.mxu0 %v6095
    %6283 = vmatprep.subr.mxu0 0.0
    %6284 = vmatpush1.msra.mxu0 %v6096
    %6285 = vmatprep.subr.mxu0 0.0
    %6286 = vmatpush1.msra.mxu0 %v6097
    %6287 = vmatprep.subr.mxu0 0.0
    %6288 = vmatpush1.msra.mxu0 %v6098
    %6289 = vmatprep.subr.mxu0 0.0
    %6290 = vmatpush1.msra.mxu0 %v6099
    %6291 = vmatprep.subr.mxu0 0.0
    %6292 = vmatpush1.msra.mxu0 %v6100
    %6293 = vmatprep.subr.mxu0 0.0
    %6294 = vmatpush1.msra.mxu0 %v6101
    %6295 = vmatprep.subr.mxu0 0.0
    %6296 = vmatpush1.msra.mxu0 %v6102
    %6297 = vmatprep.subr.mxu0 0.0
    %6298 = vmatpush1.msra.mxu0 %v6103
    %6299 = vmatprep.subr.mxu0 0.0
    %6300 = vmatpush1.msra.mxu0 %v6104
    %6301 = vmatprep.subr.mxu0 0.0
    %6302 = vmatpush1.msra.mxu0 %v6105
    %6303 = vmatprep.subr.mxu0 0.0
    %6304 = vmatpush1.msra.mxu0 %v6106
    %6305 = vmatprep.mubr.f32.mxu0 %v6038
    %6306 = vmatmul.mubr.f32.gmra.mrb[0].mxu0 %v6037
    %v6307 = vpop.f32.mrb[0].mxu0
    %v6308 = vadd.f32 %v6238, %v6307
    %v6309 = vpop.f32.mrb[0].mxu0
    %6310 = vdwg.mxu0
    %6311 = vmatprep.subr.mxu0 0.0
    %6312 = vmatpush1.msra.mxu0 %v6107
    %6313 = vmatprep.subr.mxu0 0.0
    %6314 = vmatpush1.msra.mxu0 %v6108
    %6315 = vmatprep.subr.mxu0 0.0
    %6316 = vmatpush1.msra.mxu0 %v6109
    %6317 = vmatprep.subr.mxu0 0.0
    %6318 = vmatpush1.msra.mxu0 %v6110
    %6319 = vmatprep.subr.mxu0 0.0
    %6320 = vmatpush1.msra.mxu0 %v6111
    %6321 = vmatprep.subr.mxu0 0.0
    %6322 = vmatpush1.msra.mxu0 %v6112
    %6323 = vmatprep.subr.mxu0 0.0
    %6324 = vmatpush1.msra.mxu0 %v6113
    %6325 = vmatprep.subr.mxu0 0.0
    %6326 = vmatpush1.msra.mxu0 %v6114
    %6327 = vmatprep.subr.mxu0 0.0
    %6328 = vmatpush1.msra.mxu0 %v6115
    %6329 = vmatprep.subr.mxu0 0.0
    %6330 = vmatpush1.msra.mxu0 %v6116
    %6331 = vmatprep.subr.mxu0 0.0
    %6332 = vmatpush1.msra.mxu0 %v6117
    %6333 = vmatprep.subr.mxu0 0.0
    %6334 = vmatpush1.msra.mxu0 %v6118
    %6335 = vmatprep.subr.mxu0 0.0
    %6336 = vmatpush1.msra.mxu0 %v6119
    %6337 = vmatprep.subr.mxu0 0.0
    %6338 = vmatpush1.msra.mxu0 %v6120
    %6339 = vmatprep.subr.mxu0 0.0
    %6340 = vmatpush1.msra.mxu0 %v6121
    %6341 = vmatprep.subr.mxu0 0.0
    %6342 = vmatpush1.msra.mxu0 %v6122
    %6343 = vmatprep.subr.mxu0 0.0
    %6344 = vmatpush1.msra.mxu0 %v6123
    %6345 = vmatprep.subr.mxu0 0.0
    %6346 = vmatpush1.msra.mxu0 %v6124
    %6347 = vmatprep.subr.mxu0 0.0
    %6348 = vmatpush1.msra.mxu0 %v6125
    %6349 = vmatprep.subr.mxu0 0.0
    %6350 = vmatpush1.msra.mxu0 %v6126
    %6351 = vmatprep.subr.mxu0 0.0
    %6352 = vmatpush1.msra.mxu0 %v6127
    %6353 = vmatprep.subr.mxu0 0.0
    %6354 = vmatpush1.msra.mxu0 %v6128
    %6355 = vmatprep.subr.mxu0 0.0
    %6356 = vmatpush1.msra.mxu0 %v6129
    %6357 = vmatprep.subr.mxu0 0.0
    %6358 = vmatpush1.msra.mxu0 %v6130
    %6359 = vmatprep.subr.mxu0 0.0
    %6360 = vmatpush1.msra.mxu0 %v6131
    %6361 = vmatprep.subr.mxu0 0.0
    %6362 = vmatpush1.msra.mxu0 %v6132
    %6363 = vmatprep.subr.mxu0 0.0
    %6364 = vmatpush1.msra.mxu0 %v6133
    %6365 = vmatprep.subr.mxu0 0.0
    %6366 = vmatpush1.msra.mxu0 %v6134
    %6367 = vmatprep.subr.mxu0 0.0
    %6368 = vmatpush1.msra.mxu0 %v6135
    %6369 = vmatprep.subr.mxu0 0.0
    %6370 = vmatpush1.msra.mxu0 %v6136
    %6371 = vmatprep.subr.mxu0 0.0
    %6372 = vmatpush1.msra.mxu0 %v6137
    %6373 = vmatprep.subr.mxu0 0.0
    %6374 = vmatpush1.msra.mxu0 %v6138
    %6375 = vmatprep.mubr.f32.mxu0 %v6040
    %6376 = vmatmul.mubr.f32.gmra.mrb[0].mxu0 %v6039
    %v6377 = vpop.f32.mrb[0].mxu0
    %v6378 = vadd.f32 %v6308, %v6377
    %v6379 = vpop.f32.mrb[0].mxu0
    %6380 = vdwg.mxu0
    %6381 = vmatprep.subr.mxu0 0.0
    %6382 = vmatpush1.msra.mxu0 %v6139
    %6383 = vmatprep.subr.mxu0 0.0
    %6384 = vmatpush1.msra.mxu0 %v6140
    %6385 = vmatprep.subr.mxu0 0.0
    %6386 = vmatpush1.msra.mxu0 %v6141
    %6387 = vmatprep.subr.mxu0 0.0
    %6388 = vmatpush1.msra.mxu0 %v6142
    %6389 = vmatprep.subr.mxu0 0.0
    %6390 = vmatpush1.msra.mxu0 %v6143
    %6391 = vmatprep.subr.mxu0 0.0
    %6392 = vmatpush1.msra.mxu0 %v6144
    %6393 = vmatprep.subr.mxu0 0.0
    %6394 = vmatpush1.msra.mxu0 %v6145
    %6395 = vmatprep.subr.mxu0 0.0
    %6396 = vmatpush1.msra.mxu0 %v6146
    %6397 = vmatprep.subr.mxu0 0.0
    %6398 = vmatpush1.msra.mxu0 %v6147
    %6399 = vmatprep.subr.mxu0 0.0
    %6400 = vmatpush1.msra.mxu0 %v6148
    %6401 = vmatprep.subr.mxu0 0.0
    %6402 = vmatpush1.msra.mxu0 %v6149
    %6403 = vmatprep.subr.mxu0 0.0
    %6404 = vmatpush1.msra.mxu0 %v6150
    %6405 = vmatprep.subr.mxu0 0.0
    %6406 = vmatpush1.msra.mxu0 %v6151
    %6407 = vmatprep.subr.mxu0 0.0
    %6408 = vmatpush1.msra.mxu0 %v6152
    %6409 = vmatprep.subr.mxu0 0.0
    %6410 = vmatpush1.msra.mxu0 %v6153
    %6411 = vmatprep.subr.mxu0 0.0
    %6412 = vmatpush1.msra.mxu0 %v6154
    %6413 = vmatprep.subr.mxu0 0.0
    %6414 = vmatpush1.msra.mxu0 %v6155
    %6415 = vmatprep.subr.mxu0 0.0
    %6416 = vmatpush1.msra.mxu0 %v6156
    %6417 = vmatprep.subr.mxu0 0.0
    %6418 = vmatpush1.msra.mxu0 %v6157
    %6419 = vmatprep.subr.mxu0 0.0
    %6420 = vmatpush1.msra.mxu0 %v6158
    %6421 = vmatprep.subr.mxu0 0.0
    %6422 = vmatpush1.msra.mxu0 %v6159
    %6423 = vmatprep.subr.mxu0 0.0
    %6424 = vmatpush1.msra.mxu0 %v6160
    %6425 = vmatprep.subr.mxu0 0.0
    %6426 = vmatpush1.msra.mxu0 %v6161
    %6427 = vmatprep.subr.mxu0 0.0
    %6428 = vmatpush1.msra.mxu0 %v6162
    %6429 = vmatprep.subr.mxu0 0.0
    %6430 = vmatpush1.msra.mxu0 %v6163
    %6431 = vmatprep.subr.mxu0 0.0
    %6432 = vmatpush1.msra.mxu0 %v6164
    %6433 = vmatprep.subr.mxu0 0.0
    %6434 = vmatpush1.msra.mxu0 %v6165
    %6435 = vmatprep.subr.mxu0 0.0
    %6436 = vmatpush1.msra.mxu0 %v6166
    %6437 = vmatprep.subr.mxu0 0.0
    %6438 = vmatpush1.msra.mxu0 %v6167
    %6439 = vmatprep.subr.mxu0 0.0
    %6440 = vmatpush1.msra.mxu0 %v6168
    %6441 = vmatprep.subr.mxu0 0.0
    %6442 = vmatpush1.msra.mxu0 %v6169
    %6443 = vmatprep.subr.mxu0 0.0
    %6444 = vmatpush1.msra.mxu0 %v6170
    %6445 = vmatprep.mubr.f32.mxu0 %v6042
    %6446 = vmatmul.mubr.f32.gmra.mrb[0].mxu0 %v6041
    %v6447 = vpop.f32.mrb[0].mxu0
    %v6448 = vadd.f32 %v6378, %v6447
    %v6449 = vpop.f32.mrb[0].mxu0
    %6450 = vdwg.mxu0
    %v6451 = vadd.f32 %v6034, %v6448
    %v6452 = vld [vmem:[%s1 + $0x1c0] sm:$0xff]
    %v6453 = vld [vmem:[%s1 + $0x1c8] sm:$0xff]
    %v6454 = vld [vmem:[%s1 + $0x1d0] sm:$0xff]
    %v6455 = vld [vmem:[%s1 + $0x1d8] sm:$0xff]
    %v6456 = vld [vmem:[%s1 + $0x1e0] sm:$0xff]
    %v6457 = vld [vmem:[%s1 + $0x1e8] sm:$0xff]
    %v6458 = vld [vmem:[%s1 + $0x1f0] sm:$0xff]
    %v6459 = vld [vmem:[%s1 + $0x1f8] sm:$0xff]
    %v6460 = vld [vmem:[#allocation2 + $0x1c00] sm:$0xff]
    %v6461 = vld [vmem:[#allocation2 + $0x1c08] sm:$0xff]
    %v6462 = vld [vmem:[#allocation2 + $0x1c10] sm:$0xff]
    %v6463 = vld [vmem:[#allocation2 + $0x1c18] sm:$0xff]
    %v6464 = vld [vmem:[#allocation2 + $0x1c20] sm:$0xff]
    %v6465 = vld [vmem:[#allocation2 + $0x1c28] sm:$0xff]
    %v6466 = vld [vmem:[#allocation2 + $0x1c30] sm:$0xff]
    %v6467 = vld [vmem:[#allocation2 + $0x1c38] sm:$0xff]
    %v6468 = vld [vmem:[#allocation2 + $0x1c40] sm:$0xff]
    %v6469 = vld [vmem:[#allocation2 + $0x1c48] sm:$0xff]
    %v6470 = vld [vmem:[#allocation2 + $0x1c50] sm:$0xff]
    %v6471 = vld [vmem:[#allocation2 + $0x1c58] sm:$0xff]
    %v6472 = vld [vmem:[#allocation2 + $0x1c60] sm:$0xff]
    %v6473 = vld [vmem:[#allocation2 + $0x1c68] sm:$0xff]
    %v6474 = vld [vmem:[#allocation2 + $0x1c70] sm:$0xff]
    %v6475 = vld [vmem:[#allocation2 + $0x1c78] sm:$0xff]
    %v6476 = vld [vmem:[#allocation2 + $0x1c80] sm:$0xff]
    %v6477 = vld [vmem:[#allocation2 + $0x1c88] sm:$0xff]
    %v6478 = vld [vmem:[#allocation2 + $0x1c90] sm:$0xff]
    %v6479 = vld [vmem:[#allocation2 + $0x1c98] sm:$0xff]
    %v6480 = vld [vmem:[#allocation2 + $0x1ca0] sm:$0xff]
    %v6481 = vld [vmem:[#allocation2 + $0x1ca8] sm:$0xff]
    %v6482 = vld [vmem:[#allocation2 + $0x1cb0] sm:$0xff]
    %v6483 = vld [vmem:[#allocation2 + $0x1cb8] sm:$0xff]
    %v6484 = vld [vmem:[#allocation2 + $0x1cc0] sm:$0xff]
    %v6485 = vld [vmem:[#allocation2 + $0x1cc8] sm:$0xff]
    %v6486 = vld [vmem:[#allocation2 + $0x1cd0] sm:$0xff]
    %v6487 = vld [vmem:[#allocation2 + $0x1cd8] sm:$0xff]
    %v6488 = vld [vmem:[#allocation2 + $0x1ce0] sm:$0xff]
    %v6489 = vld [vmem:[#allocation2 + $0x1ce8] sm:$0xff]
    %v6490 = vld [vmem:[#allocation2 + $0x1cf0] sm:$0xff]
    %v6491 = vld [vmem:[#allocation2 + $0x1cf8] sm:$0xff]
    %v6492 = vld [vmem:[#allocation2 + $0x1d00] sm:$0xff]
    %v6493 = vld [vmem:[#allocation2 + $0x1d08] sm:$0xff]
    %v6494 = vld [vmem:[#allocation2 + $0x1d10] sm:$0xff]
    %v6495 = vld [vmem:[#allocation2 + $0x1d18] sm:$0xff]
    %v6496 = vld [vmem:[#allocation2 + $0x1d20] sm:$0xff]
    %v6497 = vld [vmem:[#allocation2 + $0x1d28] sm:$0xff]
    %v6498 = vld [vmem:[#allocation2 + $0x1d30] sm:$0xff]
    %v6499 = vld [vmem:[#allocation2 + $0x1d38] sm:$0xff]
    %v6500 = vld [vmem:[#allocation2 + $0x1d40] sm:$0xff]
    %v6501 = vld [vmem:[#allocation2 + $0x1d48] sm:$0xff]
    %v6502 = vld [vmem:[#allocation2 + $0x1d50] sm:$0xff]
    %v6503 = vld [vmem:[#allocation2 + $0x1d58] sm:$0xff]
    %v6504 = vld [vmem:[#allocation2 + $0x1d60] sm:$0xff]
    %v6505 = vld [vmem:[#allocation2 + $0x1d68] sm:$0xff]
    %v6506 = vld [vmem:[#allocation2 + $0x1d70] sm:$0xff]
    %v6507 = vld [vmem:[#allocation2 + $0x1d78] sm:$0xff]
    %v6508 = vld [vmem:[#allocation2 + $0x1d80] sm:$0xff]
    %v6509 = vld [vmem:[#allocation2 + $0x1d88] sm:$0xff]
    %v6510 = vld [vmem:[#allocation2 + $0x1d90] sm:$0xff]
    %v6511 = vld [vmem:[#allocation2 + $0x1d98] sm:$0xff]
    %v6512 = vld [vmem:[#allocation2 + $0x1da0] sm:$0xff]
    %v6513 = vld [vmem:[#allocation2 + $0x1da8] sm:$0xff]
    %v6514 = vld [vmem:[#allocation2 + $0x1db0] sm:$0xff]
    %v6515 = vld [vmem:[#allocation2 + $0x1db8] sm:$0xff]
    %v6516 = vld [vmem:[#allocation2 + $0x1dc0] sm:$0xff]
    %v6517 = vld [vmem:[#allocation2 + $0x1dc8] sm:$0xff]
    %v6518 = vld [vmem:[#allocation2 + $0x1dd0] sm:$0xff]
    %v6519 = vld [vmem:[#allocation2 + $0x1dd8] sm:$0xff]
    %v6520 = vld [vmem:[#allocation2 + $0x1de0] sm:$0xff]
    %v6521 = vld [vmem:[#allocation2 + $0x1de8] sm:$0xff]
    %v6522 = vld [vmem:[#allocation2 + $0x1df0] sm:$0xff]
    %v6523 = vld [vmem:[#allocation2 + $0x1df8] sm:$0xff]
    %v6524 = vld [vmem:[#allocation2 + $0x1e00] sm:$0xff]
    %v6525 = vld [vmem:[#allocation2 + $0x1e08] sm:$0xff]
    %v6526 = vld [vmem:[#allocation2 + $0x1e10] sm:$0xff]
    %v6527 = vld [vmem:[#allocation2 + $0x1e18] sm:$0xff]
    %v6528 = vld [vmem:[#allocation2 + $0x1e20] sm:$0xff]
    %v6529 = vld [vmem:[#allocation2 + $0x1e28] sm:$0xff]
    %v6530 = vld [vmem:[#allocation2 + $0x1e30] sm:$0xff]
    %v6531 = vld [vmem:[#allocation2 + $0x1e38] sm:$0xff]
    %v6532 = vld [vmem:[#allocation2 + $0x1e40] sm:$0xff]
    %v6533 = vld [vmem:[#allocation2 + $0x1e48] sm:$0xff]
    %v6534 = vld [vmem:[#allocation2 + $0x1e50] sm:$0xff]
    %v6535 = vld [vmem:[#allocation2 + $0x1e58] sm:$0xff]
    %v6536 = vld [vmem:[#allocation2 + $0x1e60] sm:$0xff]
    %v6537 = vld [vmem:[#allocation2 + $0x1e68] sm:$0xff]
    %v6538 = vld [vmem:[#allocation2 + $0x1e70] sm:$0xff]
    %v6539 = vld [vmem:[#allocation2 + $0x1e78] sm:$0xff]
    %v6540 = vld [vmem:[#allocation2 + $0x1e80] sm:$0xff]
    %v6541 = vld [vmem:[#allocation2 + $0x1e88] sm:$0xff]
    %v6542 = vld [vmem:[#allocation2 + $0x1e90] sm:$0xff]
    %v6543 = vld [vmem:[#allocation2 + $0x1e98] sm:$0xff]
    %v6544 = vld [vmem:[#allocation2 + $0x1ea0] sm:$0xff]
    %v6545 = vld [vmem:[#allocation2 + $0x1ea8] sm:$0xff]
    %v6546 = vld [vmem:[#allocation2 + $0x1eb0] sm:$0xff]
    %v6547 = vld [vmem:[#allocation2 + $0x1eb8] sm:$0xff]
    %v6548 = vld [vmem:[#allocation2 + $0x1ec0] sm:$0xff]
    %v6549 = vld [vmem:[#allocation2 + $0x1ec8] sm:$0xff]
    %v6550 = vld [vmem:[#allocation2 + $0x1ed0] sm:$0xff]
    %v6551 = vld [vmem:[#allocation2 + $0x1ed8] sm:$0xff]
    %v6552 = vld [vmem:[#allocation2 + $0x1ee0] sm:$0xff]
    %v6553 = vld [vmem:[#allocation2 + $0x1ee8] sm:$0xff]
    %v6554 = vld [vmem:[#allocation2 + $0x1ef0] sm:$0xff]
    %v6555 = vld [vmem:[#allocation2 + $0x1ef8] sm:$0xff]
    %v6556 = vld [vmem:[#allocation2 + $0x1f00] sm:$0xff]
    %v6557 = vld [vmem:[#allocation2 + $0x1f08] sm:$0xff]
    %v6558 = vld [vmem:[#allocation2 + $0x1f10] sm:$0xff]
    %v6559 = vld [vmem:[#allocation2 + $0x1f18] sm:$0xff]
    %v6560 = vld [vmem:[#allocation2 + $0x1f20] sm:$0xff]
    %v6561 = vld [vmem:[#allocation2 + $0x1f28] sm:$0xff]
    %v6562 = vld [vmem:[#allocation2 + $0x1f30] sm:$0xff]
    %v6563 = vld [vmem:[#allocation2 + $0x1f38] sm:$0xff]
    %v6564 = vld [vmem:[#allocation2 + $0x1f40] sm:$0xff]
    %v6565 = vld [vmem:[#allocation2 + $0x1f48] sm:$0xff]
    %v6566 = vld [vmem:[#allocation2 + $0x1f50] sm:$0xff]
    %v6567 = vld [vmem:[#allocation2 + $0x1f58] sm:$0xff]
    %v6568 = vld [vmem:[#allocation2 + $0x1f60] sm:$0xff]
    %v6569 = vld [vmem:[#allocation2 + $0x1f68] sm:$0xff]
    %v6570 = vld [vmem:[#allocation2 + $0x1f70] sm:$0xff]
    %v6571 = vld [vmem:[#allocation2 + $0x1f78] sm:$0xff]
    %v6572 = vld [vmem:[#allocation2 + $0x1f80] sm:$0xff]
    %v6573 = vld [vmem:[#allocation2 + $0x1f88] sm:$0xff]
    %v6574 = vld [vmem:[#allocation2 + $0x1f90] sm:$0xff]
    %v6575 = vld [vmem:[#allocation2 + $0x1f98] sm:$0xff]
    %v6576 = vld [vmem:[#allocation2 + $0x1fa0] sm:$0xff]
    %v6577 = vld [vmem:[#allocation2 + $0x1fa8] sm:$0xff]
    %v6578 = vld [vmem:[#allocation2 + $0x1fb0] sm:$0xff]
    %v6579 = vld [vmem:[#allocation2 + $0x1fb8] sm:$0xff]
    %v6580 = vld [vmem:[#allocation2 + $0x1fc0] sm:$0xff]
    %v6581 = vld [vmem:[#allocation2 + $0x1fc8] sm:$0xff]
    %v6582 = vld [vmem:[#allocation2 + $0x1fd0] sm:$0xff]
    %v6583 = vld [vmem:[#allocation2 + $0x1fd8] sm:$0xff]
    %v6584 = vld [vmem:[#allocation2 + $0x1fe0] sm:$0xff]
    %v6585 = vld [vmem:[#allocation2 + $0x1fe8] sm:$0xff]
    %v6586 = vld [vmem:[#allocation2 + $0x1ff0] sm:$0xff]
    %v6587 = vld [vmem:[#allocation2 + $0x1ff8] sm:$0xff]
    %6588 = vmatprep.subr.mxu0 0.0
    %6589 = vmatpush1.msra.mxu0 %v6460
    %6590 = vmatprep.subr.mxu0 0.0
    %6591 = vmatpush1.msra.mxu0 %v6461
    %6592 = vmatprep.subr.mxu0 0.0
    %6593 = vmatpush1.msra.mxu0 %v6462
    %6594 = vmatprep.subr.mxu0 0.0
    %6595 = vmatpush1.msra.mxu0 %v6463
    %6596 = vmatprep.subr.mxu0 0.0
    %6597 = vmatpush1.msra.mxu0 %v6464
    %6598 = vmatprep.subr.mxu0 0.0
    %6599 = vmatpush1.msra.mxu0 %v6465
    %6600 = vmatprep.subr.mxu0 0.0
    %6601 = vmatpush1.msra.mxu0 %v6466
    %6602 = vmatprep.subr.mxu0 0.0
    %6603 = vmatpush1.msra.mxu0 %v6467
    %6604 = vmatprep.subr.mxu0 0.0
    %6605 = vmatpush1.msra.mxu0 %v6468
    %6606 = vmatprep.subr.mxu0 0.0
    %6607 = vmatpush1.msra.mxu0 %v6469
    %6608 = vmatprep.subr.mxu0 0.0
    %6609 = vmatpush1.msra.mxu0 %v6470
    %6610 = vmatprep.subr.mxu0 0.0
    %6611 = vmatpush1.msra.mxu0 %v6471
    %6612 = vmatprep.subr.mxu0 0.0
    %6613 = vmatpush1.msra.mxu0 %v6472
    %6614 = vmatprep.subr.mxu0 0.0
    %6615 = vmatpush1.msra.mxu0 %v6473
    %6616 = vmatprep.subr.mxu0 0.0
    %6617 = vmatpush1.msra.mxu0 %v6474
    %6618 = vmatprep.subr.mxu0 0.0
    %6619 = vmatpush1.msra.mxu0 %v6475
    %6620 = vmatprep.subr.mxu0 0.0
    %6621 = vmatpush1.msra.mxu0 %v6476
    %6622 = vmatprep.subr.mxu0 0.0
    %6623 = vmatpush1.msra.mxu0 %v6477
    %6624 = vmatprep.subr.mxu0 0.0
    %6625 = vmatpush1.msra.mxu0 %v6478
    %6626 = vmatprep.subr.mxu0 0.0
    %6627 = vmatpush1.msra.mxu0 %v6479
    %6628 = vmatprep.subr.mxu0 0.0
    %6629 = vmatpush1.msra.mxu0 %v6480
    %6630 = vmatprep.subr.mxu0 0.0
    %6631 = vmatpush1.msra.mxu0 %v6481
    %6632 = vmatprep.subr.mxu0 0.0
    %6633 = vmatpush1.msra.mxu0 %v6482
    %6634 = vmatprep.subr.mxu0 0.0
    %6635 = vmatpush1.msra.mxu0 %v6483
    %6636 = vmatprep.subr.mxu0 0.0
    %6637 = vmatpush1.msra.mxu0 %v6484
    %6638 = vmatprep.subr.mxu0 0.0
    %6639 = vmatpush1.msra.mxu0 %v6485
    %6640 = vmatprep.subr.mxu0 0.0
    %6641 = vmatpush1.msra.mxu0 %v6486
    %6642 = vmatprep.subr.mxu0 0.0
    %6643 = vmatpush1.msra.mxu0 %v6487
    %6644 = vmatprep.subr.mxu0 0.0
    %6645 = vmatpush1.msra.mxu0 %v6488
    %6646 = vmatprep.subr.mxu0 0.0
    %6647 = vmatpush1.msra.mxu0 %v6489
    %6648 = vmatprep.subr.mxu0 0.0
    %6649 = vmatpush1.msra.mxu0 %v6490
    %6650 = vmatprep.subr.mxu0 0.0
    %6651 = vmatpush1.msra.mxu0 %v6491
    %6652 = vmatprep.mubr.f32.mxu0 %v6453
    %6653 = vmatmul.mubr.f32.gmra.mrb[0].mxu0 %v6452
    %v6654 = vpop.f32.mrb[0].mxu0
    %v6655 = vadd.f32 0.0, %v6654
    %v6656 = vpop.f32.mrb[0].mxu0
    %6657 = vdwg.mxu0
    %6658 = vmatprep.subr.mxu0 0.0
    %6659 = vmatpush1.msra.mxu0 %v6492
    %6660 = vmatprep.subr.mxu0 0.0
    %6661 = vmatpush1.msra.mxu0 %v6493
    %6662 = vmatprep.subr.mxu0 0.0
    %6663 = vmatpush1.msra.mxu0 %v6494
    %6664 = vmatprep.subr.mxu0 0.0
    %6665 = vmatpush1.msra.mxu0 %v6495
    %6666 = vmatprep.subr.mxu0 0.0
    %6667 = vmatpush1.msra.mxu0 %v6496
    %6668 = vmatprep.subr.mxu0 0.0
    %6669 = vmatpush1.msra.mxu0 %v6497
    %6670 = vmatprep.subr.mxu0 0.0
    %6671 = vmatpush1.msra.mxu0 %v6498
    %6672 = vmatprep.subr.mxu0 0.0
    %6673 = vmatpush1.msra.mxu0 %v6499
    %6674 = vmatprep.subr.mxu0 0.0
    %6675 = vmatpush1.msra.mxu0 %v6500
    %6676 = vmatprep.subr.mxu0 0.0
    %6677 = vmatpush1.msra.mxu0 %v6501
    %6678 = vmatprep.subr.mxu0 0.0
    %6679 = vmatpush1.msra.mxu0 %v6502
    %6680 = vmatprep.subr.mxu0 0.0
    %6681 = vmatpush1.msra.mxu0 %v6503
    %6682 = vmatprep.subr.mxu0 0.0
    %6683 = vmatpush1.msra.mxu0 %v6504
    %6684 = vmatprep.subr.mxu0 0.0
    %6685 = vmatpush1.msra.mxu0 %v6505
    %6686 = vmatprep.subr.mxu0 0.0
    %6687 = vmatpush1.msra.mxu0 %v6506
    %6688 = vmatprep.subr.mxu0 0.0
    %6689 = vmatpush1.msra.mxu0 %v6507
    %6690 = vmatprep.subr.mxu0 0.0
    %6691 = vmatpush1.msra.mxu0 %v6508
    %6692 = vmatprep.subr.mxu0 0.0
    %6693 = vmatpush1.msra.mxu0 %v6509
    %6694 = vmatprep.subr.mxu0 0.0
    %6695 = vmatpush1.msra.mxu0 %v6510
    %6696 = vmatprep.subr.mxu0 0.0
    %6697 = vmatpush1.msra.mxu0 %v6511
    %6698 = vmatprep.subr.mxu0 0.0
    %6699 = vmatpush1.msra.mxu0 %v6512
    %6700 = vmatprep.subr.mxu0 0.0
    %6701 = vmatpush1.msra.mxu0 %v6513
    %6702 = vmatprep.subr.mxu0 0.0
    %6703 = vmatpush1.msra.mxu0 %v6514
    %6704 = vmatprep.subr.mxu0 0.0
    %6705 = vmatpush1.msra.mxu0 %v6515
    %6706 = vmatprep.subr.mxu0 0.0
    %6707 = vmatpush1.msra.mxu0 %v6516
    %6708 = vmatprep.subr.mxu0 0.0
    %6709 = vmatpush1.msra.mxu0 %v6517
    %6710 = vmatprep.subr.mxu0 0.0
    %6711 = vmatpush1.msra.mxu0 %v6518
    %6712 = vmatprep.subr.mxu0 0.0
    %6713 = vmatpush1.msra.mxu0 %v6519
    %6714 = vmatprep.subr.mxu0 0.0
    %6715 = vmatpush1.msra.mxu0 %v6520
    %6716 = vmatprep.subr.mxu0 0.0
    %6717 = vmatpush1.msra.mxu0 %v6521
    %6718 = vmatprep.subr.mxu0 0.0
    %6719 = vmatpush1.msra.mxu0 %v6522
    %6720 = vmatprep.subr.mxu0 0.0
    %6721 = vmatpush1.msra.mxu0 %v6523
    %6722 = vmatprep.mubr.f32.mxu0 %v6455
    %6723 = vmatmul.mubr.f32.gmra.mrb[0].mxu0 %v6454
    %v6724 = vpop.f32.mrb[0].mxu0
    %v6725 = vadd.f32 %v6655, %v6724
    %v6726 = vpop.f32.mrb[0].mxu0
    %6727 = vdwg.mxu0
    %6728 = vmatprep.subr.mxu0 0.0
    %6729 = vmatpush1.msra.mxu0 %v6524
    %6730 = vmatprep.subr.mxu0 0.0
    %6731 = vmatpush1.msra.mxu0 %v6525
    %6732 = vmatprep.subr.mxu0 0.0
    %6733 = vmatpush1.msra.mxu0 %v6526
    %6734 = vmatprep.subr.mxu0 0.0
    %6735 = vmatpush1.msra.mxu0 %v6527
    %6736 = vmatprep.subr.mxu0 0.0
    %6737 = vmatpush1.msra.mxu0 %v6528
    %6738 = vmatprep.subr.mxu0 0.0
    %6739 = vmatpush1.msra.mxu0 %v6529
    %6740 = vmatprep.subr.mxu0 0.0
    %6741 = vmatpush1.msra.mxu0 %v6530
    %6742 = vmatprep.subr.mxu0 0.0
    %6743 = vmatpush1.msra.mxu0 %v6531
    %6744 = vmatprep.subr.mxu0 0.0
    %6745 = vmatpush1.msra.mxu0 %v6532
    %6746 = vmatprep.subr.mxu0 0.0
    %6747 = vmatpush1.msra.mxu0 %v6533
    %6748 = vmatprep.subr.mxu0 0.0
    %6749 = vmatpush1.msra.mxu0 %v6534
    %6750 = vmatprep.subr.mxu0 0.0
    %6751 = vmatpush1.msra.mxu0 %v6535
    %6752 = vmatprep.subr.mxu0 0.0
    %6753 = vmatpush1.msra.mxu0 %v6536
    %6754 = vmatprep.subr.mxu0 0.0
    %6755 = vmatpush1.msra.mxu0 %v6537
    %6756 = vmatprep.subr.mxu0 0.0
    %6757 = vmatpush1.msra.mxu0 %v6538
    %6758 = vmatprep.subr.mxu0 0.0
    %6759 = vmatpush1.msra.mxu0 %v6539
    %6760 = vmatprep.subr.mxu0 0.0
    %6761 = vmatpush1.msra.mxu0 %v6540
    %6762 = vmatprep.subr.mxu0 0.0
    %6763 = vmatpush1.msra.mxu0 %v6541
    %6764 = vmatprep.subr.mxu0 0.0
    %6765 = vmatpush1.msra.mxu0 %v6542
    %6766 = vmatprep.subr.mxu0 0.0
    %6767 = vmatpush1.msra.mxu0 %v6543
    %6768 = vmatprep.subr.mxu0 0.0
    %6769 = vmatpush1.msra.mxu0 %v6544
    %6770 = vmatprep.subr.mxu0 0.0
    %6771 = vmatpush1.msra.mxu0 %v6545
    %6772 = vmatprep.subr.mxu0 0.0
    %6773 = vmatpush1.msra.mxu0 %v6546
    %6774 = vmatprep.subr.mxu0 0.0
    %6775 = vmatpush1.msra.mxu0 %v6547
    %6776 = vmatprep.subr.mxu0 0.0
    %6777 = vmatpush1.msra.mxu0 %v6548
    %6778 = vmatprep.subr.mxu0 0.0
    %6779 = vmatpush1.msra.mxu0 %v6549
    %6780 = vmatprep.subr.mxu0 0.0
    %6781 = vmatpush1.msra.mxu0 %v6550
    %6782 = vmatprep.subr.mxu0 0.0
    %6783 = vmatpush1.msra.mxu0 %v6551
    %6784 = vmatprep.subr.mxu0 0.0
    %6785 = vmatpush1.msra.mxu0 %v6552
    %6786 = vmatprep.subr.mxu0 0.0
    %6787 = vmatpush1.msra.mxu0 %v6553
    %6788 = vmatprep.subr.mxu0 0.0
    %6789 = vmatpush1.msra.mxu0 %v6554
    %6790 = vmatprep.subr.mxu0 0.0
    %6791 = vmatpush1.msra.mxu0 %v6555
    %6792 = vmatprep.mubr.f32.mxu0 %v6457
    %6793 = vmatmul.mubr.f32.gmra.mrb[0].mxu0 %v6456
    %v6794 = vpop.f32.mrb[0].mxu0
    %v6795 = vadd.f32 %v6725, %v6794
    %v6796 = vpop.f32.mrb[0].mxu0
    %6797 = vdwg.mxu0
    %6798 = vmatprep.subr.mxu0 0.0
    %6799 = vmatpush1.msra.mxu0 %v6556
    %6800 = vmatprep.subr.mxu0 0.0
    %6801 = vmatpush1.msra.mxu0 %v6557
    %6802 = vmatprep.subr.mxu0 0.0
    %6803 = vmatpush1.msra.mxu0 %v6558
    %6804 = vmatprep.subr.mxu0 0.0
    %6805 = vmatpush1.msra.mxu0 %v6559
    %6806 = vmatprep.subr.mxu0 0.0
    %6807 = vmatpush1.msra.mxu0 %v6560
    %6808 = vmatprep.subr.mxu0 0.0
    %6809 = vmatpush1.msra.mxu0 %v6561
    %6810 = vmatprep.subr.mxu0 0.0
    %6811 = vmatpush1.msra.mxu0 %v6562
    %6812 = vmatprep.subr.mxu0 0.0
    %6813 = vmatpush1.msra.mxu0 %v6563
    %6814 = vmatprep.subr.mxu0 0.0
    %6815 = vmatpush1.msra.mxu0 %v6564
    %6816 = vmatprep.subr.mxu0 0.0
    %6817 = vmatpush1.msra.mxu0 %v6565
    %6818 = vmatprep.subr.mxu0 0.0
    %6819 = vmatpush1.msra.mxu0 %v6566
    %6820 = vmatprep.subr.mxu0 0.0
    %6821 = vmatpush1.msra.mxu0 %v6567
    %6822 = vmatprep.subr.mxu0 0.0
    %6823 = vmatpush1.msra.mxu0 %v6568
    %6824 = vmatprep.subr.mxu0 0.0
    %6825 = vmatpush1.msra.mxu0 %v6569
    %6826 = vmatprep.subr.mxu0 0.0
    %6827 = vmatpush1.msra.mxu0 %v6570
    %6828 = vmatprep.subr.mxu0 0.0
    %6829 = vmatpush1.msra.mxu0 %v6571
    %6830 = vmatprep.subr.mxu0 0.0
    %6831 = vmatpush1.msra.mxu0 %v6572
    %6832 = vmatprep.subr.mxu0 0.0
    %6833 = vmatpush1.msra.mxu0 %v6573
    %6834 = vmatprep.subr.mxu0 0.0
    %6835 = vmatpush1.msra.mxu0 %v6574
    %6836 = vmatprep.subr.mxu0 0.0
    %6837 = vmatpush1.msra.mxu0 %v6575
    %6838 = vmatprep.subr.mxu0 0.0
    %6839 = vmatpush1.msra.mxu0 %v6576
    %6840 = vmatprep.subr.mxu0 0.0
    %6841 = vmatpush1.msra.mxu0 %v6577
    %6842 = vmatprep.subr.mxu0 0.0
    %6843 = vmatpush1.msra.mxu0 %v6578
    %6844 = vmatprep.subr.mxu0 0.0
    %6845 = vmatpush1.msra.mxu0 %v6579
    %6846 = vmatprep.subr.mxu0 0.0
    %6847 = vmatpush1.msra.mxu0 %v6580
    %6848 = vmatprep.subr.mxu0 0.0
    %6849 = vmatpush1.msra.mxu0 %v6581
    %6850 = vmatprep.subr.mxu0 0.0
    %6851 = vmatpush1.msra.mxu0 %v6582
    %6852 = vmatprep.subr.mxu0 0.0
    %6853 = vmatpush1.msra.mxu0 %v6583
    %6854 = vmatprep.subr.mxu0 0.0
    %6855 = vmatpush1.msra.mxu0 %v6584
    %6856 = vmatprep.subr.mxu0 0.0
    %6857 = vmatpush1.msra.mxu0 %v6585
    %6858 = vmatprep.subr.mxu0 0.0
    %6859 = vmatpush1.msra.mxu0 %v6586
    %6860 = vmatprep.subr.mxu0 0.0
    %6861 = vmatpush1.msra.mxu0 %v6587
    %6862 = vmatprep.mubr.f32.mxu0 %v6459
    %6863 = vmatmul.mubr.f32.gmra.mrb[0].mxu0 %v6458
    %v6864 = vpop.f32.mrb[0].mxu0
    %v6865 = vadd.f32 %v6795, %v6864
    %v6866 = vpop.f32.mrb[0].mxu0
    %6867 = vdwg.mxu0
    %v6868 = vadd.f32 %v6451, %v6865
    %v6869 = vld [vmem:[%s1 + $0x200] sm:$0xff]
    %v6870 = vld [vmem:[%s1 + $0x208] sm:$0xff]
    %v6871 = vld [vmem:[%s1 + $0x210] sm:$0xff]
    %v6872 = vld [vmem:[%s1 + $0x218] sm:$0xff]
    %v6873 = vld [vmem:[%s1 + $0x220] sm:$0xff]
    %v6874 = vld [vmem:[%s1 + $0x228] sm:$0xff]
    %v6875 = vld [vmem:[%s1 + $0x230] sm:$0xff]
    %v6876 = vld [vmem:[%s1 + $0x238] sm:$0xff]
    %v6877 = vld [vmem:[#allocation2 + $0x2000] sm:$0xff]
    %v6878 = vld [vmem:[#allocation2 + $0x2008] sm:$0xff]
    %v6879 = vld [vmem:[#allocation2 + $0x2010] sm:$0xff]
    %v6880 = vld [vmem:[#allocation2 + $0x2018] sm:$0xff]
    %v6881 = vld [vmem:[#allocation2 + $0x2020] sm:$0xff]
    %v6882 = vld [vmem:[#allocation2 + $0x2028] sm:$0xff]
    %v6883 = vld [vmem:[#allocation2 + $0x2030] sm:$0xff]
    %v6884 = vld [vmem:[#allocation2 + $0x2038] sm:$0xff]
    %v6885 = vld [vmem:[#allocation2 + $0x2040] sm:$0xff]
    %v6886 = vld [vmem:[#allocation2 + $0x2048] sm:$0xff]
    %v6887 = vld [vmem:[#allocation2 + $0x2050] sm:$0xff]
    %v6888 = vld [vmem:[#allocation2 + $0x2058] sm:$0xff]
    %v6889 = vld [vmem:[#allocation2 + $0x2060] sm:$0xff]
    %v6890 = vld [vmem:[#allocation2 + $0x2068] sm:$0xff]
    %v6891 = vld [vmem:[#allocation2 + $0x2070] sm:$0xff]
    %v6892 = vld [vmem:[#allocation2 + $0x2078] sm:$0xff]
    %v6893 = vld [vmem:[#allocation2 + $0x2080] sm:$0xff]
    %v6894 = vld [vmem:[#allocation2 + $0x2088] sm:$0xff]
    %v6895 = vld [vmem:[#allocation2 + $0x2090] sm:$0xff]
    %v6896 = vld [vmem:[#allocation2 + $0x2098] sm:$0xff]
    %v6897 = vld [vmem:[#allocation2 + $0x20a0] sm:$0xff]
    %v6898 = vld [vmem:[#allocation2 + $0x20a8] sm:$0xff]
    %v6899 = vld [vmem:[#allocation2 + $0x20b0] sm:$0xff]
    %v6900 = vld [vmem:[#allocation2 + $0x20b8] sm:$0xff]
    %v6901 = vld [vmem:[#allocation2 + $0x20c0] sm:$0xff]
    %v6902 = vld [vmem:[#allocation2 + $0x20c8] sm:$0xff]
    %v6903 = vld [vmem:[#allocation2 + $0x20d0] sm:$0xff]
    %v6904 = vld [vmem:[#allocation2 + $0x20d8] sm:$0xff]
    %v6905 = vld [vmem:[#allocation2 + $0x20e0] sm:$0xff]
    %v6906 = vld [vmem:[#allocation2 + $0x20e8] sm:$0xff]
    %v6907 = vld [vmem:[#allocation2 + $0x20f0] sm:$0xff]
    %v6908 = vld [vmem:[#allocation2 + $0x20f8] sm:$0xff]
    %v6909 = vld [vmem:[#allocation2 + $0x2100] sm:$0xff]
    %v6910 = vld [vmem:[#allocation2 + $0x2108] sm:$0xff]
    %v6911 = vld [vmem:[#allocation2 + $0x2110] sm:$0xff]
    %v6912 = vld [vmem:[#allocation2 + $0x2118] sm:$0xff]
    %v6913 = vld [vmem:[#allocation2 + $0x2120] sm:$0xff]
    %v6914 = vld [vmem:[#allocation2 + $0x2128] sm:$0xff]
    %v6915 = vld [vmem:[#allocation2 + $0x2130] sm:$0xff]
    %v6916 = vld [vmem:[#allocation2 + $0x2138] sm:$0xff]
    %v6917 = vld [vmem:[#allocation2 + $0x2140] sm:$0xff]
    %v6918 = vld [vmem:[#allocation2 + $0x2148] sm:$0xff]
    %v6919 = vld [vmem:[#allocation2 + $0x2150] sm:$0xff]
    %v6920 = vld [vmem:[#allocation2 + $0x2158] sm:$0xff]
    %v6921 = vld [vmem:[#allocation2 + $0x2160] sm:$0xff]
    %v6922 = vld [vmem:[#allocation2 + $0x2168] sm:$0xff]
    %v6923 = vld [vmem:[#allocation2 + $0x2170] sm:$0xff]
    %v6924 = vld [vmem:[#allocation2 + $0x2178] sm:$0xff]
    %v6925 = vld [vmem:[#allocation2 + $0x2180] sm:$0xff]
    %v6926 = vld [vmem:[#allocation2 + $0x2188] sm:$0xff]
    %v6927 = vld [vmem:[#allocation2 + $0x2190] sm:$0xff]
    %v6928 = vld [vmem:[#allocation2 + $0x2198] sm:$0xff]
    %v6929 = vld [vmem:[#allocation2 + $0x21a0] sm:$0xff]
    %v6930 = vld [vmem:[#allocation2 + $0x21a8] sm:$0xff]
    %v6931 = vld [vmem:[#allocation2 + $0x21b0] sm:$0xff]
    %v6932 = vld [vmem:[#allocation2 + $0x21b8] sm:$0xff]
    %v6933 = vld [vmem:[#allocation2 + $0x21c0] sm:$0xff]
    %v6934 = vld [vmem:[#allocation2 + $0x21c8] sm:$0xff]
    %v6935 = vld [vmem:[#allocation2 + $0x21d0] sm:$0xff]
    %v6936 = vld [vmem:[#allocation2 + $0x21d8] sm:$0xff]
    %v6937 = vld [vmem:[#allocation2 + $0x21e0] sm:$0xff]
    %v6938 = vld [vmem:[#allocation2 + $0x21e8] sm:$0xff]
    %v6939 = vld [vmem:[#allocation2 + $0x21f0] sm:$0xff]
    %v6940 = vld [vmem:[#allocation2 + $0x21f8] sm:$0xff]
    %v6941 = vld [vmem:[#allocation2 + $0x2200] sm:$0xff]
    %v6942 = vld [vmem:[#allocation2 + $0x2208] sm:$0xff]
    %v6943 = vld [vmem:[#allocation2 + $0x2210] sm:$0xff]
    %v6944 = vld [vmem:[#allocation2 + $0x2218] sm:$0xff]
    %v6945 = vld [vmem:[#allocation2 + $0x2220] sm:$0xff]
    %v6946 = vld [vmem:[#allocation2 + $0x2228] sm:$0xff]
    %v6947 = vld [vmem:[#allocation2 + $0x2230] sm:$0xff]
    %v6948 = vld [vmem:[#allocation2 + $0x2238] sm:$0xff]
    %v6949 = vld [vmem:[#allocation2 + $0x2240] sm:$0xff]
    %v6950 = vld [vmem:[#allocation2 + $0x2248] sm:$0xff]
    %v6951 = vld [vmem:[#allocation2 + $0x2250] sm:$0xff]
    %v6952 = vld [vmem:[#allocation2 + $0x2258] sm:$0xff]
    %v6953 = vld [vmem:[#allocation2 + $0x2260] sm:$0xff]
    %v6954 = vld [vmem:[#allocation2 + $0x2268] sm:$0xff]
    %v6955 = vld [vmem:[#allocation2 + $0x2270] sm:$0xff]
    %v6956 = vld [vmem:[#allocation2 + $0x2278] sm:$0xff]
    %v6957 = vld [vmem:[#allocation2 + $0x2280] sm:$0xff]
    %v6958 = vld [vmem:[#allocation2 + $0x2288] sm:$0xff]
    %v6959 = vld [vmem:[#allocation2 + $0x2290] sm:$0xff]
    %v6960 = vld [vmem:[#allocation2 + $0x2298] sm:$0xff]
    %v6961 = vld [vmem:[#allocation2 + $0x22a0] sm:$0xff]
    %v6962 = vld [vmem:[#allocation2 + $0x22a8] sm:$0xff]
    %v6963 = vld [vmem:[#allocation2 + $0x22b0] sm:$0xff]
    %v6964 = vld [vmem:[#allocation2 + $0x22b8] sm:$0xff]
    %v6965 = vld [vmem:[#allocation2 + $0x22c0] sm:$0xff]
    %v6966 = vld [vmem:[#allocation2 + $0x22c8] sm:$0xff]
    %v6967 = vld [vmem:[#allocation2 + $0x22d0] sm:$0xff]
    %v6968 = vld [vmem:[#allocation2 + $0x22d8] sm:$0xff]
    %v6969 = vld [vmem:[#allocation2 + $0x22e0] sm:$0xff]
    %v6970 = vld [vmem:[#allocation2 + $0x22e8] sm:$0xff]
    %v6971 = vld [vmem:[#allocation2 + $0x22f0] sm:$0xff]
    %v6972 = vld [vmem:[#allocation2 + $0x22f8] sm:$0xff]
    %v6973 = vld [vmem:[#allocation2 + $0x2300] sm:$0xff]
    %v6974 = vld [vmem:[#allocation2 + $0x2308] sm:$0xff]
    %v6975 = vld [vmem:[#allocation2 + $0x2310] sm:$0xff]
    %v6976 = vld [vmem:[#allocation2 + $0x2318] sm:$0xff]
    %v6977 = vld [vmem:[#allocation2 + $0x2320] sm:$0xff]
    %v6978 = vld [vmem:[#allocation2 + $0x2328] sm:$0xff]
    %v6979 = vld [vmem:[#allocation2 + $0x2330] sm:$0xff]
    %v6980 = vld [vmem:[#allocation2 + $0x2338] sm:$0xff]
    %v6981 = vld [vmem:[#allocation2 + $0x2340] sm:$0xff]
    %v6982 = vld [vmem:[#allocation2 + $0x2348] sm:$0xff]
    %v6983 = vld [vmem:[#allocation2 + $0x2350] sm:$0xff]
    %v6984 = vld [vmem:[#allocation2 + $0x2358] sm:$0xff]
    %v6985 = vld [vmem:[#allocation2 + $0x2360] sm:$0xff]
    %v6986 = vld [vmem:[#allocation2 + $0x2368] sm:$0xff]
    %v6987 = vld [vmem:[#allocation2 + $0x2370] sm:$0xff]
    %v6988 = vld [vmem:[#allocation2 + $0x2378] sm:$0xff]
    %v6989 = vld [vmem:[#allocation2 + $0x2380] sm:$0xff]
    %v6990 = vld [vmem:[#allocation2 + $0x2388] sm:$0xff]
    %v6991 = vld [vmem:[#allocation2 + $0x2390] sm:$0xff]
    %v6992 = vld [vmem:[#allocation2 + $0x2398] sm:$0xff]
    %v6993 = vld [vmem:[#allocation2 + $0x23a0] sm:$0xff]
    %v6994 = vld [vmem:[#allocation2 + $0x23a8] sm:$0xff]
    %v6995 = vld [vmem:[#allocation2 + $0x23b0] sm:$0xff]
    %v6996 = vld [vmem:[#allocation2 + $0x23b8] sm:$0xff]
    %v6997 = vld [vmem:[#allocation2 + $0x23c0] sm:$0xff]
    %v6998 = vld [vmem:[#allocation2 + $0x23c8] sm:$0xff]
    %v6999 = vld [vmem:[#allocation2 + $0x23d0] sm:$0xff]
    %v7000 = vld [vmem:[#allocation2 + $0x23d8] sm:$0xff]
    %v7001 = vld [vmem:[#allocation2 + $0x23e0] sm:$0xff]
    %v7002 = vld [vmem:[#allocation2 + $0x23e8] sm:$0xff]
    %v7003 = vld [vmem:[#allocation2 + $0x23f0] sm:$0xff]
    %v7004 = vld [vmem:[#allocation2 + $0x23f8] sm:$0xff]
    %7005 = vmatprep.subr.mxu0 0.0
    %7006 = vmatpush1.msra.mxu0 %v6877
    %7007 = vmatprep.subr.mxu0 0.0
    %7008 = vmatpush1.msra.mxu0 %v6878
    %7009 = vmatprep.subr.mxu0 0.0
    %7010 = vmatpush1.msra.mxu0 %v6879
    %7011 = vmatprep.subr.mxu0 0.0
    %7012 = vmatpush1.msra.mxu0 %v6880
    %7013 = vmatprep.subr.mxu0 0.0
    %7014 = vmatpush1.msra.mxu0 %v6881
    %7015 = vmatprep.subr.mxu0 0.0
    %7016 = vmatpush1.msra.mxu0 %v6882
    %7017 = vmatprep.subr.mxu0 0.0
    %7018 = vmatpush1.msra.mxu0 %v6883
    %7019 = vmatprep.subr.mxu0 0.0
    %7020 = vmatpush1.msra.mxu0 %v6884
    %7021 = vmatprep.subr.mxu0 0.0
    %7022 = vmatpush1.msra.mxu0 %v6885
    %7023 = vmatprep.subr.mxu0 0.0
    %7024 = vmatpush1.msra.mxu0 %v6886
    %7025 = vmatprep.subr.mxu0 0.0
    %7026 = vmatpush1.msra.mxu0 %v6887
    %7027 = vmatprep.subr.mxu0 0.0
    %7028 = vmatpush1.msra.mxu0 %v6888
    %7029 = vmatprep.subr.mxu0 0.0
    %7030 = vmatpush1.msra.mxu0 %v6889
    %7031 = vmatprep.subr.mxu0 0.0
    %7032 = vmatpush1.msra.mxu0 %v6890
    %7033 = vmatprep.subr.mxu0 0.0
    %7034 = vmatpush1.msra.mxu0 %v6891
    %7035 = vmatprep.subr.mxu0 0.0
    %7036 = vmatpush1.msra.mxu0 %v6892
    %7037 = vmatprep.subr.mxu0 0.0
    %7038 = vmatpush1.msra.mxu0 %v6893
    %7039 = vmatprep.subr.mxu0 0.0
    %7040 = vmatpush1.msra.mxu0 %v6894
    %7041 = vmatprep.subr.mxu0 0.0
    %7042 = vmatpush1.msra.mxu0 %v6895
    %7043 = vmatprep.subr.mxu0 0.0
    %7044 = vmatpush1.msra.mxu0 %v6896
    %7045 = vmatprep.subr.mxu0 0.0
    %7046 = vmatpush1.msra.mxu0 %v6897
    %7047 = vmatprep.subr.mxu0 0.0
    %7048 = vmatpush1.msra.mxu0 %v6898
    %7049 = vmatprep.subr.mxu0 0.0
    %7050 = vmatpush1.msra.mxu0 %v6899
    %7051 = vmatprep.subr.mxu0 0.0
    %7052 = vmatpush1.msra.mxu0 %v6900
    %7053 = vmatprep.subr.mxu0 0.0
    %7054 = vmatpush1.msra.mxu0 %v6901
    %7055 = vmatprep.subr.mxu0 0.0
    %7056 = vmatpush1.msra.mxu0 %v6902
    %7057 = vmatprep.subr.mxu0 0.0
    %7058 = vmatpush1.msra.mxu0 %v6903
    %7059 = vmatprep.subr.mxu0 0.0
    %7060 = vmatpush1.msra.mxu0 %v6904
    %7061 = vmatprep.subr.mxu0 0.0
    %7062 = vmatpush1.msra.mxu0 %v6905
    %7063 = vmatprep.subr.mxu0 0.0
    %7064 = vmatpush1.msra.mxu0 %v6906
    %7065 = vmatprep.subr.mxu0 0.0
    %7066 = vmatpush1.msra.mxu0 %v6907
    %7067 = vmatprep.subr.mxu0 0.0
    %7068 = vmatpush1.msra.mxu0 %v6908
    %7069 = vmatprep.mubr.f32.mxu0 %v6870
    %7070 = vmatmul.mubr.f32.gmra.mrb[0].mxu0 %v6869
    %v7071 = vpop.f32.mrb[0].mxu0
    %v7072 = vadd.f32 0.0, %v7071
    %v7073 = vpop.f32.mrb[0].mxu0
    %7074 = vdwg.mxu0
    %7075 = vmatprep.subr.mxu0 0.0
    %7076 = vmatpush1.msra.mxu0 %v6909
    %7077 = vmatprep.subr.mxu0 0.0
    %7078 = vmatpush1.msra.mxu0 %v6910
    %7079 = vmatprep.subr.mxu0 0.0
    %7080 = vmatpush1.msra.mxu0 %v6911
    %7081 = vmatprep.subr.mxu0 0.0
    %7082 = vmatpush1.msra.mxu0 %v6912
    %7083 = vmatprep.subr.mxu0 0.0
    %7084 = vmatpush1.msra.mxu0 %v6913
    %7085 = vmatprep.subr.mxu0 0.0
    %7086 = vmatpush1.msra.mxu0 %v6914
    %7087 = vmatprep.subr.mxu0 0.0
    %7088 = vmatpush1.msra.mxu0 %v6915
    %7089 = vmatprep.subr.mxu0 0.0
    %7090 = vmatpush1.msra.mxu0 %v6916
    %7091 = vmatprep.subr.mxu0 0.0
    %7092 = vmatpush1.msra.mxu0 %v6917
    %7093 = vmatprep.subr.mxu0 0.0
    %7094 = vmatpush1.msra.mxu0 %v6918
    %7095 = vmatprep.subr.mxu0 0.0
    %7096 = vmatpush1.msra.mxu0 %v6919
    %7097 = vmatprep.subr.mxu0 0.0
    %7098 = vmatpush1.msra.mxu0 %v6920
    %7099 = vmatprep.subr.mxu0 0.0
    %7100 = vmatpush1.msra.mxu0 %v6921
    %7101 = vmatprep.subr.mxu0 0.0
    %7102 = vmatpush1.msra.mxu0 %v6922
    %7103 = vmatprep.subr.mxu0 0.0
    %7104 = vmatpush1.msra.mxu0 %v6923
    %7105 = vmatprep.subr.mxu0 0.0
    %7106 = vmatpush1.msra.mxu0 %v6924
    %7107 = vmatprep.subr.mxu0 0.0
    %7108 = vmatpush1.msra.mxu0 %v6925
    %7109 = vmatprep.subr.mxu0 0.0
    %7110 = vmatpush1.msra.mxu0 %v6926
    %7111 = vmatprep.subr.mxu0 0.0
    %7112 = vmatpush1.msra.mxu0 %v6927
    %7113 = vmatprep.subr.mxu0 0.0
    %7114 = vmatpush1.msra.mxu0 %v6928
    %7115 = vmatprep.subr.mxu0 0.0
    %7116 = vmatpush1.msra.mxu0 %v6929
    %7117 = vmatprep.subr.mxu0 0.0
    %7118 = vmatpush1.msra.mxu0 %v6930
    %7119 = vmatprep.subr.mxu0 0.0
    %7120 = vmatpush1.msra.mxu0 %v6931
    %7121 = vmatprep.subr.mxu0 0.0
    %7122 = vmatpush1.msra.mxu0 %v6932
    %7123 = vmatprep.subr.mxu0 0.0
    %7124 = vmatpush1.msra.mxu0 %v6933
    %7125 = vmatprep.subr.mxu0 0.0
    %7126 = vmatpush1.msra.mxu0 %v6934
    %7127 = vmatprep.subr.mxu0 0.0
    %7128 = vmatpush1.msra.mxu0 %v6935
    %7129 = vmatprep.subr.mxu0 0.0
    %7130 = vmatpush1.msra.mxu0 %v6936
    %7131 = vmatprep.subr.mxu0 0.0
    %7132 = vmatpush1.msra.mxu0 %v6937
    %7133 = vmatprep.subr.mxu0 0.0
    %7134 = vmatpush1.msra.mxu0 %v6938
    %7135 = vmatprep.subr.mxu0 0.0
    %7136 = vmatpush1.msra.mxu0 %v6939
    %7137 = vmatprep.subr.mxu0 0.0
    %7138 = vmatpush1.msra.mxu0 %v6940
    %7139 = vmatprep.mubr.f32.mxu0 %v6872
    %7140 = vmatmul.mubr.f32.gmra.mrb[0].mxu0 %v6871
    %v7141 = vpop.f32.mrb[0].mxu0
    %v7142 = vadd.f32 %v7072, %v7141
    %v7143 = vpop.f32.mrb[0].mxu0
    %7144 = vdwg.mxu0
    %7145 = vmatprep.subr.mxu0 0.0
    %7146 = vmatpush1.msra.mxu0 %v6941
    %7147 = vmatprep.subr.mxu0 0.0
    %7148 = vmatpush1.msra.mxu0 %v6942
    %7149 = vmatprep.subr.mxu0 0.0
    %7150 = vmatpush1.msra.mxu0 %v6943
    %7151 = vmatprep.subr.mxu0 0.0
    %7152 = vmatpush1.msra.mxu0 %v6944
    %7153 = vmatprep.subr.mxu0 0.0
    %7154 = vmatpush1.msra.mxu0 %v6945
    %7155 = vmatprep.subr.mxu0 0.0
    %7156 = vmatpush1.msra.mxu0 %v6946
    %7157 = vmatprep.subr.mxu0 0.0
    %7158 = vmatpush1.msra.mxu0 %v6947
    %7159 = vmatprep.subr.mxu0 0.0
    %7160 = vmatpush1.msra.mxu0 %v6948
    %7161 = vmatprep.subr.mxu0 0.0
    %7162 = vmatpush1.msra.mxu0 %v6949
    %7163 = vmatprep.subr.mxu0 0.0
    %7164 = vmatpush1.msra.mxu0 %v6950
    %7165 = vmatprep.subr.mxu0 0.0
    %7166 = vmatpush1.msra.mxu0 %v6951
    %7167 = vmatprep.subr.mxu0 0.0
    %7168 = vmatpush1.msra.mxu0 %v6952
    %7169 = vmatprep.subr.mxu0 0.0
    %7170 = vmatpush1.msra.mxu0 %v6953
    %7171 = vmatprep.subr.mxu0 0.0
    %7172 = vmatpush1.msra.mxu0 %v6954
    %7173 = vmatprep.subr.mxu0 0.0
    %7174 = vmatpush1.msra.mxu0 %v6955
    %7175 = vmatprep.subr.mxu0 0.0
    %7176 = vmatpush1.msra.mxu0 %v6956
    %7177 = vmatprep.subr.mxu0 0.0
    %7178 = vmatpush1.msra.mxu0 %v6957
    %7179 = vmatprep.subr.mxu0 0.0
    %7180 = vmatpush1.msra.mxu0 %v6958
    %7181 = vmatprep.subr.mxu0 0.0
    %7182 = vmatpush1.msra.mxu0 %v6959
    %7183 = vmatprep.subr.mxu0 0.0
    %7184 = vmatpush1.msra.mxu0 %v6960
    %7185 = vmatprep.subr.mxu0 0.0
    %7186 = vmatpush1.msra.mxu0 %v6961
    %7187 = vmatprep.subr.mxu0 0.0
    %7188 = vmatpush1.msra.mxu0 %v6962
    %7189 = vmatprep.subr.mxu0 0.0
    %7190 = vmatpush1.msra.mxu0 %v6963
    %7191 = vmatprep.subr.mxu0 0.0
    %7192 = vmatpush1.msra.mxu0 %v6964
    %7193 = vmatprep.subr.mxu0 0.0
    %7194 = vmatpush1.msra.mxu0 %v6965
    %7195 = vmatprep.subr.mxu0 0.0
    %7196 = vmatpush1.msra.mxu0 %v6966
    %7197 = vmatprep.subr.mxu0 0.0
    %7198 = vmatpush1.msra.mxu0 %v6967
    %7199 = vmatprep.subr.mxu0 0.0
    %7200 = vmatpush1.msra.mxu0 %v6968
    %7201 = vmatprep.subr.mxu0 0.0
    %7202 = vmatpush1.msra.mxu0 %v6969
    %7203 = vmatprep.subr.mxu0 0.0
    %7204 = vmatpush1.msra.mxu0 %v6970
    %7205 = vmatprep.subr.mxu0 0.0
    %7206 = vmatpush1.msra.mxu0 %v6971
    %7207 = vmatprep.subr.mxu0 0.0
    %7208 = vmatpush1.msra.mxu0 %v6972
    %7209 = vmatprep.mubr.f32.mxu0 %v6874
    %7210 = vmatmul.mubr.f32.gmra.mrb[0].mxu0 %v6873
    %v7211 = vpop.f32.mrb[0].mxu0
    %v7212 = vadd.f32 %v7142, %v7211
    %v7213 = vpop.f32.mrb[0].mxu0
    %7214 = vdwg.mxu0
    %7215 = vmatprep.subr.mxu0 0.0
    %7216 = vmatpush1.msra.mxu0 %v6973
    %7217 = vmatprep.subr.mxu0 0.0
    %7218 = vmatpush1.msra.mxu0 %v6974
    %7219 = vmatprep.subr.mxu0 0.0
    %7220 = vmatpush1.msra.mxu0 %v6975
    %7221 = vmatprep.subr.mxu0 0.0
    %7222 = vmatpush1.msra.mxu0 %v6976
    %7223 = vmatprep.subr.mxu0 0.0
    %7224 = vmatpush1.msra.mxu0 %v6977
    %7225 = vmatprep.subr.mxu0 0.0
    %7226 = vmatpush1.msra.mxu0 %v6978
    %7227 = vmatprep.subr.mxu0 0.0
    %7228 = vmatpush1.msra.mxu0 %v6979
    %7229 = vmatprep.subr.mxu0 0.0
    %7230 = vmatpush1.msra.mxu0 %v6980
    %7231 = vmatprep.subr.mxu0 0.0
    %7232 = vmatpush1.msra.mxu0 %v6981
    %7233 = vmatprep.subr.mxu0 0.0
    %7234 = vmatpush1.msra.mxu0 %v6982
    %7235 = vmatprep.subr.mxu0 0.0
    %7236 = vmatpush1.msra.mxu0 %v6983
    %7237 = vmatprep.subr.mxu0 0.0
    %7238 = vmatpush1.msra.mxu0 %v6984
    %7239 = vmatprep.subr.mxu0 0.0
    %7240 = vmatpush1.msra.mxu0 %v6985
    %7241 = vmatprep.subr.mxu0 0.0
    %7242 = vmatpush1.msra.mxu0 %v6986
    %7243 = vmatprep.subr.mxu0 0.0
    %7244 = vmatpush1.msra.mxu0 %v6987
    %7245 = vmatprep.subr.mxu0 0.0
    %7246 = vmatpush1.msra.mxu0 %v6988
    %7247 = vmatprep.subr.mxu0 0.0
    %7248 = vmatpush1.msra.mxu0 %v6989
    %7249 = vmatprep.subr.mxu0 0.0
    %7250 = vmatpush1.msra.mxu0 %v6990
    %7251 = vmatprep.subr.mxu0 0.0
    %7252 = vmatpush1.msra.mxu0 %v6991
    %7253 = vmatprep.subr.mxu0 0.0
    %7254 = vmatpush1.msra.mxu0 %v6992
    %7255 = vmatprep.subr.mxu0 0.0
    %7256 = vmatpush1.msra.mxu0 %v6993
    %7257 = vmatprep.subr.mxu0 0.0
    %7258 = vmatpush1.msra.mxu0 %v6994
    %7259 = vmatprep.subr.mxu0 0.0
    %7260 = vmatpush1.msra.mxu0 %v6995
    %7261 = vmatprep.subr.mxu0 0.0
    %7262 = vmatpush1.msra.mxu0 %v6996
    %7263 = vmatprep.subr.mxu0 0.0
    %7264 = vmatpush1.msra.mxu0 %v6997
    %7265 = vmatprep.subr.mxu0 0.0
    %7266 = vmatpush1.msra.mxu0 %v6998
    %7267 = vmatprep.subr.mxu0 0.0
    %7268 = vmatpush1.msra.mxu0 %v6999
    %7269 = vmatprep.subr.mxu0 0.0
    %7270 = vmatpush1.msra.mxu0 %v7000
    %7271 = vmatprep.subr.mxu0 0.0
    %7272 = vmatpush1.msra.mxu0 %v7001
    %7273 = vmatprep.subr.mxu0 0.0
    %7274 = vmatpush1.msra.mxu0 %v7002
    %7275 = vmatprep.subr.mxu0 0.0
    %7276 = vmatpush1.msra.mxu0 %v7003
    %7277 = vmatprep.subr.mxu0 0.0
    %7278 = vmatpush1.msra.mxu0 %v7004
    %7279 = vmatprep.mubr.f32.mxu0 %v6876
    %7280 = vmatmul.mubr.f32.gmra.mrb[0].mxu0 %v6875
    %v7281 = vpop.f32.mrb[0].mxu0
    %v7282 = vadd.f32 %v7212, %v7281
    %v7283 = vpop.f32.mrb[0].mxu0
    %7284 = vdwg.mxu0
    %v7285 = vadd.f32 %v6868, %v7282
    %v7286 = vld [vmem:[%s1 + $0x240] sm:$0xff]
    %v7287 = vld [vmem:[%s1 + $0x248] sm:$0xff]
    %v7288 = vld [vmem:[%s1 + $0x250] sm:$0xff]
    %v7289 = vld [vmem:[%s1 + $0x258] sm:$0xff]
    %v7290 = vld [vmem:[%s1 + $0x260] sm:$0xff]
    %v7291 = vld [vmem:[%s1 + $0x268] sm:$0xff]
    %v7292 = vld [vmem:[%s1 + $0x270] sm:$0xff]
    %v7293 = vld [vmem:[%s1 + $0x278] sm:$0xff]
    %v7294 = vld [vmem:[#allocation2 + $0x2400] sm:$0xff]
    %v7295 = vld [vmem:[#allocation2 + $0x2408] sm:$0xff]
    %v7296 = vld [vmem:[#allocation2 + $0x2410] sm:$0xff]
    %v7297 = vld [vmem:[#allocation2 + $0x2418] sm:$0xff]
    %v7298 = vld [vmem:[#allocation2 + $0x2420] sm:$0xff]
    %v7299 = vld [vmem:[#allocation2 + $0x2428] sm:$0xff]
    %v7300 = vld [vmem:[#allocation2 + $0x2430] sm:$0xff]
    %v7301 = vld [vmem:[#allocation2 + $0x2438] sm:$0xff]
    %v7302 = vld [vmem:[#allocation2 + $0x2440] sm:$0xff]
    %v7303 = vld [vmem:[#allocation2 + $0x2448] sm:$0xff]
    %v7304 = vld [vmem:[#allocation2 + $0x2450] sm:$0xff]
    %v7305 = vld [vmem:[#allocation2 + $0x2458] sm:$0xff]
    %v7306 = vld [vmem:[#allocation2 + $0x2460] sm:$0xff]
    %v7307 = vld [vmem:[#allocation2 + $0x2468] sm:$0xff]
    %v7308 = vld [vmem:[#allocation2 + $0x2470] sm:$0xff]
    %v7309 = vld [vmem:[#allocation2 + $0x2478] sm:$0xff]
    %v7310 = vld [vmem:[#allocation2 + $0x2480] sm:$0xff]
    %v7311 = vld [vmem:[#allocation2 + $0x2488] sm:$0xff]
    %v7312 = vld [vmem:[#allocation2 + $0x2490] sm:$0xff]
    %v7313 = vld [vmem:[#allocation2 + $0x2498] sm:$0xff]
    %v7314 = vld [vmem:[#allocation2 + $0x24a0] sm:$0xff]
    %v7315 = vld [vmem:[#allocation2 + $0x24a8] sm:$0xff]
    %v7316 = vld [vmem:[#allocation2 + $0x24b0] sm:$0xff]
    %v7317 = vld [vmem:[#allocation2 + $0x24b8] sm:$0xff]
    %v7318 = vld [vmem:[#allocation2 + $0x24c0] sm:$0xff]
    %v7319 = vld [vmem:[#allocation2 + $0x24c8] sm:$0xff]
    %v7320 = vld [vmem:[#allocation2 + $0x24d0] sm:$0xff]
    %v7321 = vld [vmem:[#allocation2 + $0x24d8] sm:$0xff]
    %v7322 = vld [vmem:[#allocation2 + $0x24e0] sm:$0xff]
    %v7323 = vld [vmem:[#allocation2 + $0x24e8] sm:$0xff]
    %v7324 = vld [vmem:[#allocation2 + $0x24f0] sm:$0xff]
    %v7325 = vld [vmem:[#allocation2 + $0x24f8] sm:$0xff]
    %v7326 = vld [vmem:[#allocation2 + $0x2500] sm:$0xff]
    %v7327 = vld [vmem:[#allocation2 + $0x2508] sm:$0xff]
    %v7328 = vld [vmem:[#allocation2 + $0x2510] sm:$0xff]
    %v7329 = vld [vmem:[#allocation2 + $0x2518] sm:$0xff]
    %v7330 = vld [vmem:[#allocation2 + $0x2520] sm:$0xff]
    %v7331 = vld [vmem:[#allocation2 + $0x2528] sm:$0xff]
    %v7332 = vld [vmem:[#allocation2 + $0x2530] sm:$0xff]
    %v7333 = vld [vmem:[#allocation2 + $0x2538] sm:$0xff]
    %v7334 = vld [vmem:[#allocation2 + $0x2540] sm:$0xff]
    %v7335 = vld [vmem:[#allocation2 + $0x2548] sm:$0xff]
    %v7336 = vld [vmem:[#allocation2 + $0x2550] sm:$0xff]
    %v7337 = vld [vmem:[#allocation2 + $0x2558] sm:$0xff]
    %v7338 = vld [vmem:[#allocation2 + $0x2560] sm:$0xff]
    %v7339 = vld [vmem:[#allocation2 + $0x2568] sm:$0xff]
    %v7340 = vld [vmem:[#allocation2 + $0x2570] sm:$0xff]
    %v7341 = vld [vmem:[#allocation2 + $0x2578] sm:$0xff]
    %v7342 = vld [vmem:[#allocation2 + $0x2580] sm:$0xff]
    %v7343 = vld [vmem:[#allocation2 + $0x2588] sm:$0xff]
    %v7344 = vld [vmem:[#allocation2 + $0x2590] sm:$0xff]
    %v7345 = vld [vmem:[#allocation2 + $0x2598] sm:$0xff]
    %v7346 = vld [vmem:[#allocation2 + $0x25a0] sm:$0xff]
    %v7347 = vld [vmem:[#allocation2 + $0x25a8] sm:$0xff]
    %v7348 = vld [vmem:[#allocation2 + $0x25b0] sm:$0xff]
    %v7349 = vld [vmem:[#allocation2 + $0x25b8] sm:$0xff]
    %v7350 = vld [vmem:[#allocation2 + $0x25c0] sm:$0xff]
    %v7351 = vld [vmem:[#allocation2 + $0x25c8] sm:$0xff]
    %v7352 = vld [vmem:[#allocation2 + $0x25d0] sm:$0xff]
    %v7353 = vld [vmem:[#allocation2 + $0x25d8] sm:$0xff]
    %v7354 = vld [vmem:[#allocation2 + $0x25e0] sm:$0xff]
    %v7355 = vld [vmem:[#allocation2 + $0x25e8] sm:$0xff]
    %v7356 = vld [vmem:[#allocation2 + $0x25f0] sm:$0xff]
    %v7357 = vld [vmem:[#allocation2 + $0x25f8] sm:$0xff]
    %v7358 = vld [vmem:[#allocation2 + $0x2600] sm:$0xff]
    %v7359 = vld [vmem:[#allocation2 + $0x2608] sm:$0xff]
    %v7360 = vld [vmem:[#allocation2 + $0x2610] sm:$0xff]
    %v7361 = vld [vmem:[#allocation2 + $0x2618] sm:$0xff]
    %v7362 = vld [vmem:[#allocation2 + $0x2620] sm:$0xff]
    %v7363 = vld [vmem:[#allocation2 + $0x2628] sm:$0xff]
    %v7364 = vld [vmem:[#allocation2 + $0x2630] sm:$0xff]
    %v7365 = vld [vmem:[#allocation2 + $0x2638] sm:$0xff]
    %v7366 = vld [vmem:[#allocation2 + $0x2640] sm:$0xff]
    %v7367 = vld [vmem:[#allocation2 + $0x2648] sm:$0xff]
    %v7368 = vld [vmem:[#allocation2 + $0x2650] sm:$0xff]
    %v7369 = vld [vmem:[#allocation2 + $0x2658] sm:$0xff]
    %v7370 = vld [vmem:[#allocation2 + $0x2660] sm:$0xff]
    %v7371 = vld [vmem:[#allocation2 + $0x2668] sm:$0xff]
    %v7372 = vld [vmem:[#allocation2 + $0x2670] sm:$0xff]
    %v7373 = vld [vmem:[#allocation2 + $0x2678] sm:$0xff]
    %v7374 = vld [vmem:[#allocation2 + $0x2680] sm:$0xff]
    %v7375 = vld [vmem:[#allocation2 + $0x2688] sm:$0xff]
    %v7376 = vld [vmem:[#allocation2 + $0x2690] sm:$0xff]
    %v7377 = vld [vmem:[#allocation2 + $0x2698] sm:$0xff]
    %v7378 = vld [vmem:[#allocation2 + $0x26a0] sm:$0xff]
    %v7379 = vld [vmem:[#allocation2 + $0x26a8] sm:$0xff]
    %v7380 = vld [vmem:[#allocation2 + $0x26b0] sm:$0xff]
    %v7381 = vld [vmem:[#allocation2 + $0x26b8] sm:$0xff]
    %v7382 = vld [vmem:[#allocation2 + $0x26c0] sm:$0xff]
    %v7383 = vld [vmem:[#allocation2 + $0x26c8] sm:$0xff]
    %v7384 = vld [vmem:[#allocation2 + $0x26d0] sm:$0xff]
    %v7385 = vld [vmem:[#allocation2 + $0x26d8] sm:$0xff]
    %v7386 = vld [vmem:[#allocation2 + $0x26e0] sm:$0xff]
    %v7387 = vld [vmem:[#allocation2 + $0x26e8] sm:$0xff]
    %v7388 = vld [vmem:[#allocation2 + $0x26f0] sm:$0xff]
    %v7389 = vld [vmem:[#allocation2 + $0x26f8] sm:$0xff]
    %v7390 = vld [vmem:[#allocation2 + $0x2700] sm:$0xff]
    %v7391 = vld [vmem:[#allocation2 + $0x2708] sm:$0xff]
    %v7392 = vld [vmem:[#allocation2 + $0x2710] sm:$0xff]
    %v7393 = vld [vmem:[#allocation2 + $0x2718] sm:$0xff]
    %v7394 = vld [vmem:[#allocation2 + $0x2720] sm:$0xff]
    %v7395 = vld [vmem:[#allocation2 + $0x2728] sm:$0xff]
    %v7396 = vld [vmem:[#allocation2 + $0x2730] sm:$0xff]
    %v7397 = vld [vmem:[#allocation2 + $0x2738] sm:$0xff]
    %v7398 = vld [vmem:[#allocation2 + $0x2740] sm:$0xff]
    %v7399 = vld [vmem:[#allocation2 + $0x2748] sm:$0xff]
    %v7400 = vld [vmem:[#allocation2 + $0x2750] sm:$0xff]
    %v7401 = vld [vmem:[#allocation2 + $0x2758] sm:$0xff]
    %v7402 = vld [vmem:[#allocation2 + $0x2760] sm:$0xff]
    %v7403 = vld [vmem:[#allocation2 + $0x2768] sm:$0xff]
    %v7404 = vld [vmem:[#allocation2 + $0x2770] sm:$0xff]
    %v7405 = vld [vmem:[#allocation2 + $0x2778] sm:$0xff]
    %v7406 = vld [vmem:[#allocation2 + $0x2780] sm:$0xff]
    %v7407 = vld [vmem:[#allocation2 + $0x2788] sm:$0xff]
    %v7408 = vld [vmem:[#allocation2 + $0x2790] sm:$0xff]
    %v7409 = vld [vmem:[#allocation2 + $0x2798] sm:$0xff]
    %v7410 = vld [vmem:[#allocation2 + $0x27a0] sm:$0xff]
    %v7411 = vld [vmem:[#allocation2 + $0x27a8] sm:$0xff]
    %v7412 = vld [vmem:[#allocation2 + $0x27b0] sm:$0xff]
    %v7413 = vld [vmem:[#allocation2 + $0x27b8] sm:$0xff]
    %v7414 = vld [vmem:[#allocation2 + $0x27c0] sm:$0xff]
    %v7415 = vld [vmem:[#allocation2 + $0x27c8] sm:$0xff]
    %v7416 = vld [vmem:[#allocation2 + $0x27d0] sm:$0xff]
    %v7417 = vld [vmem:[#allocation2 + $0x27d8] sm:$0xff]
    %v7418 = vld [vmem:[#allocation2 + $0x27e0] sm:$0xff]
    %v7419 = vld [vmem:[#allocation2 + $0x27e8] sm:$0xff]
    %v7420 = vld [vmem:[#allocation2 + $0x27f0] sm:$0xff]
    %v7421 = vld [vmem:[#allocation2 + $0x27f8] sm:$0xff]
    %7422 = vmatprep.subr.mxu0 0.0
    %7423 = vmatpush1.msra.mxu0 %v7294
    %7424 = vmatprep.subr.mxu0 0.0
    %7425 = vmatpush1.msra.mxu0 %v7295
    %7426 = vmatprep.subr.mxu0 0.0
    %7427 = vmatpush1.msra.mxu0 %v7296
    %7428 = vmatprep.subr.mxu0 0.0
    %7429 = vmatpush1.msra.mxu0 %v7297
    %7430 = vmatprep.subr.mxu0 0.0
    %7431 = vmatpush1.msra.mxu0 %v7298
    %7432 = vmatprep.subr.mxu0 0.0
    %7433 = vmatpush1.msra.mxu0 %v7299
    %7434 = vmatprep.subr.mxu0 0.0
    %7435 = vmatpush1.msra.mxu0 %v7300
    %7436 = vmatprep.subr.mxu0 0.0
    %7437 = vmatpush1.msra.mxu0 %v7301
    %7438 = vmatprep.subr.mxu0 0.0
    %7439 = vmatpush1.msra.mxu0 %v7302
    %7440 = vmatprep.subr.mxu0 0.0
    %7441 = vmatpush1.msra.mxu0 %v7303
    %7442 = vmatprep.subr.mxu0 0.0
    %7443 = vmatpush1.msra.mxu0 %v7304
    %7444 = vmatprep.subr.mxu0 0.0
    %7445 = vmatpush1.msra.mxu0 %v7305
    %7446 = vmatprep.subr.mxu0 0.0
    %7447 = vmatpush1.msra.mxu0 %v7306
    %7448 = vmatprep.subr.mxu0 0.0
    %7449 = vmatpush1.msra.mxu0 %v7307
    %7450 = vmatprep.subr.mxu0 0.0
    %7451 = vmatpush1.msra.mxu0 %v7308
    %7452 = vmatprep.subr.mxu0 0.0
    %7453 = vmatpush1.msra.mxu0 %v7309
    %7454 = vmatprep.subr.mxu0 0.0
    %7455 = vmatpush1.msra.mxu0 %v7310
    %7456 = vmatprep.subr.mxu0 0.0
    %7457 = vmatpush1.msra.mxu0 %v7311
    %7458 = vmatprep.subr.mxu0 0.0
    %7459 = vmatpush1.msra.mxu0 %v7312
    %7460 = vmatprep.subr.mxu0 0.0
    %7461 = vmatpush1.msra.mxu0 %v7313
    %7462 = vmatprep.subr.mxu0 0.0
    %7463 = vmatpush1.msra.mxu0 %v7314
    %7464 = vmatprep.subr.mxu0 0.0
    %7465 = vmatpush1.msra.mxu0 %v7315
    %7466 = vmatprep.subr.mxu0 0.0
    %7467 = vmatpush1.msra.mxu0 %v7316
    %7468 = vmatprep.subr.mxu0 0.0
    %7469 = vmatpush1.msra.mxu0 %v7317
    %7470 = vmatprep.subr.mxu0 0.0
    %7471 = vmatpush1.msra.mxu0 %v7318
    %7472 = vmatprep.subr.mxu0 0.0
    %7473 = vmatpush1.msra.mxu0 %v7319
    %7474 = vmatprep.subr.mxu0 0.0
    %7475 = vmatpush1.msra.mxu0 %v7320
    %7476 = vmatprep.subr.mxu0 0.0
    %7477 = vmatpush1.msra.mxu0 %v7321
    %7478 = vmatprep.subr.mxu0 0.0
    %7479 = vmatpush1.msra.mxu0 %v7322
    %7480 = vmatprep.subr.mxu0 0.0
    %7481 = vmatpush1.msra.mxu0 %v7323
    %7482 = vmatprep.subr.mxu0 0.0
    %7483 = vmatpush1.msra.mxu0 %v7324
    %7484 = vmatprep.subr.mxu0 0.0
    %7485 = vmatpush1.msra.mxu0 %v7325
    %7486 = vmatprep.mubr.f32.mxu0 %v7287
    %7487 = vmatmul.mubr.f32.gmra.mrb[0].mxu0 %v7286
    %v7488 = vpop.f32.mrb[0].mxu0
    %v7489 = vadd.f32 0.0, %v7488
    %v7490 = vpop.f32.mrb[0].mxu0
    %7491 = vdwg.mxu0
    %7492 = vmatprep.subr.mxu0 0.0
    %7493 = vmatpush1.msra.mxu0 %v7326
    %7494 = vmatprep.subr.mxu0 0.0
    %7495 = vmatpush1.msra.mxu0 %v7327
    %7496 = vmatprep.subr.mxu0 0.0
    %7497 = vmatpush1.msra.mxu0 %v7328
    %7498 = vmatprep.subr.mxu0 0.0
    %7499 = vmatpush1.msra.mxu0 %v7329
    %7500 = vmatprep.subr.mxu0 0.0
    %7501 = vmatpush1.msra.mxu0 %v7330
    %7502 = vmatprep.subr.mxu0 0.0
    %7503 = vmatpush1.msra.mxu0 %v7331
    %7504 = vmatprep.subr.mxu0 0.0
    %7505 = vmatpush1.msra.mxu0 %v7332
    %7506 = vmatprep.subr.mxu0 0.0
    %7507 = vmatpush1.msra.mxu0 %v7333
    %7508 = vmatprep.subr.mxu0 0.0
    %7509 = vmatpush1.msra.mxu0 %v7334
    %7510 = vmatprep.subr.mxu0 0.0
    %7511 = vmatpush1.msra.mxu0 %v7335
    %7512 = vmatprep.subr.mxu0 0.0
    %7513 = vmatpush1.msra.mxu0 %v7336
    %7514 = vmatprep.subr.mxu0 0.0
    %7515 = vmatpush1.msra.mxu0 %v7337
    %7516 = vmatprep.subr.mxu0 0.0
    %7517 = vmatpush1.msra.mxu0 %v7338
    %7518 = vmatprep.subr.mxu0 0.0
    %7519 = vmatpush1.msra.mxu0 %v7339
    %7520 = vmatprep.subr.mxu0 0.0
    %7521 = vmatpush1.msra.mxu0 %v7340
    %7522 = vmatprep.subr.mxu0 0.0
    %7523 = vmatpush1.msra.mxu0 %v7341
    %7524 = vmatprep.subr.mxu0 0.0
    %7525 = vmatpush1.msra.mxu0 %v7342
    %7526 = vmatprep.subr.mxu0 0.0
    %7527 = vmatpush1.msra.mxu0 %v7343
    %7528 = vmatprep.subr.mxu0 0.0
    %7529 = vmatpush1.msra.mxu0 %v7344
    %7530 = vmatprep.subr.mxu0 0.0
    %7531 = vmatpush1.msra.mxu0 %v7345
    %7532 = vmatprep.subr.mxu0 0.0
    %7533 = vmatpush1.msra.mxu0 %v7346
    %7534 = vmatprep.subr.mxu0 0.0
    %7535 = vmatpush1.msra.mxu0 %v7347
    %7536 = vmatprep.subr.mxu0 0.0
    %7537 = vmatpush1.msra.mxu0 %v7348
    %7538 = vmatprep.subr.mxu0 0.0
    %7539 = vmatpush1.msra.mxu0 %v7349
    %7540 = vmatprep.subr.mxu0 0.0
    %7541 = vmatpush1.msra.mxu0 %v7350
    %7542 = vmatprep.subr.mxu0 0.0
    %7543 = vmatpush1.msra.mxu0 %v7351
    %7544 = vmatprep.subr.mxu0 0.0
    %7545 = vmatpush1.msra.mxu0 %v7352
    %7546 = vmatprep.subr.mxu0 0.0
    %7547 = vmatpush1.msra.mxu0 %v7353
    %7548 = vmatprep.subr.mxu0 0.0
    %7549 = vmatpush1.msra.mxu0 %v7354
    %7550 = vmatprep.subr.mxu0 0.0
    %7551 = vmatpush1.msra.mxu0 %v7355
    %7552 = vmatprep.subr.mxu0 0.0
    %7553 = vmatpush1.msra.mxu0 %v7356
    %7554 = vmatprep.subr.mxu0 0.0
    %7555 = vmatpush1.msra.mxu0 %v7357
    %7556 = vmatprep.mubr.f32.mxu0 %v7289
    %7557 = vmatmul.mubr.f32.gmra.mrb[0].mxu0 %v7288
    %v7558 = vpop.f32.mrb[0].mxu0
    %v7559 = vadd.f32 %v7489, %v7558
    %v7560 = vpop.f32.mrb[0].mxu0
    %7561 = vdwg.mxu0
    %7562 = vmatprep.subr.mxu0 0.0
    %7563 = vmatpush1.msra.mxu0 %v7358
    %7564 = vmatprep.subr.mxu0 0.0
    %7565 = vmatpush1.msra.mxu0 %v7359
    %7566 = vmatprep.subr.mxu0 0.0
    %7567 = vmatpush1.msra.mxu0 %v7360
    %7568 = vmatprep.subr.mxu0 0.0
    %7569 = vmatpush1.msra.mxu0 %v7361
    %7570 = vmatprep.subr.mxu0 0.0
    %7571 = vmatpush1.msra.mxu0 %v7362
    %7572 = vmatprep.subr.mxu0 0.0
    %7573 = vmatpush1.msra.mxu0 %v7363
    %7574 = vmatprep.subr.mxu0 0.0
    %7575 = vmatpush1.msra.mxu0 %v7364
    %7576 = vmatprep.subr.mxu0 0.0
    %7577 = vmatpush1.msra.mxu0 %v7365
    %7578 = vmatprep.subr.mxu0 0.0
    %7579 = vmatpush1.msra.mxu0 %v7366
    %7580 = vmatprep.subr.mxu0 0.0
    %7581 = vmatpush1.msra.mxu0 %v7367
    %7582 = vmatprep.subr.mxu0 0.0
    %7583 = vmatpush1.msra.mxu0 %v7368
    %7584 = vmatprep.subr.mxu0 0.0
    %7585 = vmatpush1.msra.mxu0 %v7369
    %7586 = vmatprep.subr.mxu0 0.0
    %7587 = vmatpush1.msra.mxu0 %v7370
    %7588 = vmatprep.subr.mxu0 0.0
    %7589 = vmatpush1.msra.mxu0 %v7371
    %7590 = vmatprep.subr.mxu0 0.0
    %7591 = vmatpush1.msra.mxu0 %v7372
    %7592 = vmatprep.subr.mxu0 0.0
    %7593 = vmatpush1.msra.mxu0 %v7373
    %7594 = vmatprep.subr.mxu0 0.0
    %7595 = vmatpush1.msra.mxu0 %v7374
    %7596 = vmatprep.subr.mxu0 0.0
    %7597 = vmatpush1.msra.mxu0 %v7375
    %7598 = vmatprep.subr.mxu0 0.0
    %7599 = vmatpush1.msra.mxu0 %v7376
    %7600 = vmatprep.subr.mxu0 0.0
    %7601 = vmatpush1.msra.mxu0 %v7377
    %7602 = vmatprep.subr.mxu0 0.0
    %7603 = vmatpush1.msra.mxu0 %v7378
    %7604 = vmatprep.subr.mxu0 0.0
    %7605 = vmatpush1.msra.mxu0 %v7379
    %7606 = vmatprep.subr.mxu0 0.0
    %7607 = vmatpush1.msra.mxu0 %v7380
    %7608 = vmatprep.subr.mxu0 0.0
    %7609 = vmatpush1.msra.mxu0 %v7381
    %7610 = vmatprep.subr.mxu0 0.0
    %7611 = vmatpush1.msra.mxu0 %v7382
    %7612 = vmatprep.subr.mxu0 0.0
    %7613 = vmatpush1.msra.mxu0 %v7383
    %7614 = vmatprep.subr.mxu0 0.0
    %7615 = vmatpush1.msra.mxu0 %v7384
    %7616 = vmatprep.subr.mxu0 0.0
    %7617 = vmatpush1.msra.mxu0 %v7385
    %7618 = vmatprep.subr.mxu0 0.0
    %7619 = vmatpush1.msra.mxu0 %v7386
    %7620 = vmatprep.subr.mxu0 0.0
    %7621 = vmatpush1.msra.mxu0 %v7387
    %7622 = vmatprep.subr.mxu0 0.0
    %7623 = vmatpush1.msra.mxu0 %v7388
    %7624 = vmatprep.subr.mxu0 0.0
    %7625 = vmatpush1.msra.mxu0 %v7389
    %7626 = vmatprep.mubr.f32.mxu0 %v7291
    %7627 = vmatmul.mubr.f32.gmra.mrb[0].mxu0 %v7290
    %v7628 = vpop.f32.mrb[0].mxu0
    %v7629 = vadd.f32 %v7559, %v7628
    %v7630 = vpop.f32.mrb[0].mxu0
    %7631 = vdwg.mxu0
    %7632 = vmatprep.subr.mxu0 0.0
    %7633 = vmatpush1.msra.mxu0 %v7390
    %7634 = vmatprep.subr.mxu0 0.0
    %7635 = vmatpush1.msra.mxu0 %v7391
    %7636 = vmatprep.subr.mxu0 0.0
    %7637 = vmatpush1.msra.mxu0 %v7392
    %7638 = vmatprep.subr.mxu0 0.0
    %7639 = vmatpush1.msra.mxu0 %v7393
    %7640 = vmatprep.subr.mxu0 0.0
    %7641 = vmatpush1.msra.mxu0 %v7394
    %7642 = vmatprep.subr.mxu0 0.0
    %7643 = vmatpush1.msra.mxu0 %v7395
    %7644 = vmatprep.subr.mxu0 0.0
    %7645 = vmatpush1.msra.mxu0 %v7396
    %7646 = vmatprep.subr.mxu0 0.0
    %7647 = vmatpush1.msra.mxu0 %v7397
    %7648 = vmatprep.subr.mxu0 0.0
    %7649 = vmatpush1.msra.mxu0 %v7398
    %7650 = vmatprep.subr.mxu0 0.0
    %7651 = vmatpush1.msra.mxu0 %v7399
    %7652 = vmatprep.subr.mxu0 0.0
    %7653 = vmatpush1.msra.mxu0 %v7400
    %7654 = vmatprep.subr.mxu0 0.0
    %7655 = vmatpush1.msra.mxu0 %v7401
    %7656 = vmatprep.subr.mxu0 0.0
    %7657 = vmatpush1.msra.mxu0 %v7402
    %7658 = vmatprep.subr.mxu0 0.0
    %7659 = vmatpush1.msra.mxu0 %v7403
    %7660 = vmatprep.subr.mxu0 0.0
    %7661 = vmatpush1.msra.mxu0 %v7404
    %7662 = vmatprep.subr.mxu0 0.0
    %7663 = vmatpush1.msra.mxu0 %v7405
    %7664 = vmatprep.subr.mxu0 0.0
    %7665 = vmatpush1.msra.mxu0 %v7406
    %7666 = vmatprep.subr.mxu0 0.0
    %7667 = vmatpush1.msra.mxu0 %v7407
    %7668 = vmatprep.subr.mxu0 0.0
    %7669 = vmatpush1.msra.mxu0 %v7408
    %7670 = vmatprep.subr.mxu0 0.0
    %7671 = vmatpush1.msra.mxu0 %v7409
    %7672 = vmatprep.subr.mxu0 0.0
    %7673 = vmatpush1.msra.mxu0 %v7410
    %7674 = vmatprep.subr.mxu0 0.0
    %7675 = vmatpush1.msra.mxu0 %v7411
    %7676 = vmatprep.subr.mxu0 0.0
    %7677 = vmatpush1.msra.mxu0 %v7412
    %7678 = vmatprep.subr.mxu0 0.0
    %7679 = vmatpush1.msra.mxu0 %v7413
    %7680 = vmatprep.subr.mxu0 0.0
    %7681 = vmatpush1.msra.mxu0 %v7414
    %7682 = vmatprep.subr.mxu0 0.0
    %7683 = vmatpush1.msra.mxu0 %v7415
    %7684 = vmatprep.subr.mxu0 0.0
    %7685 = vmatpush1.msra.mxu0 %v7416
    %7686 = vmatprep.subr.mxu0 0.0
    %7687 = vmatpush1.msra.mxu0 %v7417
    %7688 = vmatprep.subr.mxu0 0.0
    %7689 = vmatpush1.msra.mxu0 %v7418
    %7690 = vmatprep.subr.mxu0 0.0
    %7691 = vmatpush1.msra.mxu0 %v7419
    %7692 = vmatprep.subr.mxu0 0.0
    %7693 = vmatpush1.msra.mxu0 %v7420
    %7694 = vmatprep.subr.mxu0 0.0
    %7695 = vmatpush1.msra.mxu0 %v7421
    %7696 = vmatprep.mubr.f32.mxu0 %v7293
    %7697 = vmatmul.mubr.f32.gmra.mrb[0].mxu0 %v7292
    %v7698 = vpop.f32.mrb[0].mxu0
    %v7699 = vadd.f32 %v7629, %v7698
    %v7700 = vpop.f32.mrb[0].mxu0
    %7701 = vdwg.mxu0
    %v7702 = vadd.f32 %v7285, %v7699
    %v7703 = vld [vmem:[%s1 + $0x280] sm:$0xff]
    %v7704 = vld [vmem:[%s1 + $0x288] sm:$0xff]
    %v7705 = vld [vmem:[%s1 + $0x290] sm:$0xff]
    %v7706 = vld [vmem:[%s1 + $0x298] sm:$0xff]
    %v7707 = vld [vmem:[%s1 + $0x2a0] sm:$0xff]
    %v7708 = vld [vmem:[%s1 + $0x2a8] sm:$0xff]
    %v7709 = vld [vmem:[%s1 + $0x2b0] sm:$0xff]
    %v7710 = vld [vmem:[%s1 + $0x2b8] sm:$0xff]
    %v7711 = vld [vmem:[#allocation2 + $0x2800] sm:$0xff]
    %v7712 = vld [vmem:[#allocation2 + $0x2808] sm:$0xff]
    %v7713 = vld [vmem:[#allocation2 + $0x2810] sm:$0xff]
    %v7714 = vld [vmem:[#allocation2 + $0x2818] sm:$0xff]
    %v7715 = vld [vmem:[#allocation2 + $0x2820] sm:$0xff]
    %v7716 = vld [vmem:[#allocation2 + $0x2828] sm:$0xff]
    %v7717 = vld [vmem:[#allocation2 + $0x2830] sm:$0xff]
    %v7718 = vld [vmem:[#allocation2 + $0x2838] sm:$0xff]
    %v7719 = vld [vmem:[#allocation2 + $0x2840] sm:$0xff]
    %v7720 = vld [vmem:[#allocation2 + $0x2848] sm:$0xff]
    %v7721 = vld [vmem:[#allocation2 + $0x2850] sm:$0xff]
    %v7722 = vld [vmem:[#allocation2 + $0x2858] sm:$0xff]
    %v7723 = vld [vmem:[#allocation2 + $0x2860] sm:$0xff]
    %v7724 = vld [vmem:[#allocation2 + $0x2868] sm:$0xff]
    %v7725 = vld [vmem:[#allocation2 + $0x2870] sm:$0xff]
    %v7726 = vld [vmem:[#allocation2 + $0x2878] sm:$0xff]
    %v7727 = vld [vmem:[#allocation2 + $0x2880] sm:$0xff]
    %v7728 = vld [vmem:[#allocation2 + $0x2888] sm:$0xff]
    %v7729 = vld [vmem:[#allocation2 + $0x2890] sm:$0xff]
    %v7730 = vld [vmem:[#allocation2 + $0x2898] sm:$0xff]
    %v7731 = vld [vmem:[#allocation2 + $0x28a0] sm:$0xff]
    %v7732 = vld [vmem:[#allocation2 + $0x28a8] sm:$0xff]
    %v7733 = vld [vmem:[#allocation2 + $0x28b0] sm:$0xff]
    %v7734 = vld [vmem:[#allocation2 + $0x28b8] sm:$0xff]
    %v7735 = vld [vmem:[#allocation2 + $0x28c0] sm:$0xff]
    %v7736 = vld [vmem:[#allocation2 + $0x28c8] sm:$0xff]
    %v7737 = vld [vmem:[#allocation2 + $0x28d0] sm:$0xff]
    %v7738 = vld [vmem:[#allocation2 + $0x28d8] sm:$0xff]
    %v7739 = vld [vmem:[#allocation2 + $0x28e0] sm:$0xff]
    %v7740 = vld [vmem:[#allocation2 + $0x28e8] sm:$0xff]
    %v7741 = vld [vmem:[#allocation2 + $0x28f0] sm:$0xff]
    %v7742 = vld [vmem:[#allocation2 + $0x28f8] sm:$0xff]
    %v7743 = vld [vmem:[#allocation2 + $0x2900] sm:$0xff]
    %v7744 = vld [vmem:[#allocation2 + $0x2908] sm:$0xff]
    %v7745 = vld [vmem:[#allocation2 + $0x2910] sm:$0xff]
    %v7746 = vld [vmem:[#allocation2 + $0x2918] sm:$0xff]
    %v7747 = vld [vmem:[#allocation2 + $0x2920] sm:$0xff]
    %v7748 = vld [vmem:[#allocation2 + $0x2928] sm:$0xff]
    %v7749 = vld [vmem:[#allocation2 + $0x2930] sm:$0xff]
    %v7750 = vld [vmem:[#allocation2 + $0x2938] sm:$0xff]
    %v7751 = vld [vmem:[#allocation2 + $0x2940] sm:$0xff]
    %v7752 = vld [vmem:[#allocation2 + $0x2948] sm:$0xff]
    %v7753 = vld [vmem:[#allocation2 + $0x2950] sm:$0xff]
    %v7754 = vld [vmem:[#allocation2 + $0x2958] sm:$0xff]
    %v7755 = vld [vmem:[#allocation2 + $0x2960] sm:$0xff]
    %v7756 = vld [vmem:[#allocation2 + $0x2968] sm:$0xff]
    %v7757 = vld [vmem:[#allocation2 + $0x2970] sm:$0xff]
    %v7758 = vld [vmem:[#allocation2 + $0x2978] sm:$0xff]
    %v7759 = vld [vmem:[#allocation2 + $0x2980] sm:$0xff]
    %v7760 = vld [vmem:[#allocation2 + $0x2988] sm:$0xff]
    %v7761 = vld [vmem:[#allocation2 + $0x2990] sm:$0xff]
    %v7762 = vld [vmem:[#allocation2 + $0x2998] sm:$0xff]
    %v7763 = vld [vmem:[#allocation2 + $0x29a0] sm:$0xff]
    %v7764 = vld [vmem:[#allocation2 + $0x29a8] sm:$0xff]
    %v7765 = vld [vmem:[#allocation2 + $0x29b0] sm:$0xff]
    %v7766 = vld [vmem:[#allocation2 + $0x29b8] sm:$0xff]
    %v7767 = vld [vmem:[#allocation2 + $0x29c0] sm:$0xff]
    %v7768 = vld [vmem:[#allocation2 + $0x29c8] sm:$0xff]
    %v7769 = vld [vmem:[#allocation2 + $0x29d0] sm:$0xff]
    %v7770 = vld [vmem:[#allocation2 + $0x29d8] sm:$0xff]
    %v7771 = vld [vmem:[#allocation2 + $0x29e0] sm:$0xff]
    %v7772 = vld [vmem:[#allocation2 + $0x29e8] sm:$0xff]
    %v7773 = vld [vmem:[#allocation2 + $0x29f0] sm:$0xff]
    %v7774 = vld [vmem:[#allocation2 + $0x29f8] sm:$0xff]
    %v7775 = vld [vmem:[#allocation2 + $0x2a00] sm:$0xff]
    %v7776 = vld [vmem:[#allocation2 + $0x2a08] sm:$0xff]
    %v7777 = vld [vmem:[#allocation2 + $0x2a10] sm:$0xff]
    %v7778 = vld [vmem:[#allocation2 + $0x2a18] sm:$0xff]
    %v7779 = vld [vmem:[#allocation2 + $0x2a20] sm:$0xff]
    %v7780 = vld [vmem:[#allocation2 + $0x2a28] sm:$0xff]
    %v7781 = vld [vmem:[#allocation2 + $0x2a30] sm:$0xff]
    %v7782 = vld [vmem:[#allocation2 + $0x2a38] sm:$0xff]
    %v7783 = vld [vmem:[#allocation2 + $0x2a40] sm:$0xff]
    %v7784 = vld [vmem:[#allocation2 + $0x2a48] sm:$0xff]
    %v7785 = vld [vmem:[#allocation2 + $0x2a50] sm:$0xff]
    %v7786 = vld [vmem:[#allocation2 + $0x2a58] sm:$0xff]
    %v7787 = vld [vmem:[#allocation2 + $0x2a60] sm:$0xff]
    %v7788 = vld [vmem:[#allocation2 + $0x2a68] sm:$0xff]
    %v7789 = vld [vmem:[#allocation2 + $0x2a70] sm:$0xff]
    %v7790 = vld [vmem:[#allocation2 + $0x2a78] sm:$0xff]
    %v7791 = vld [vmem:[#allocation2 + $0x2a80] sm:$0xff]
    %v7792 = vld [vmem:[#allocation2 + $0x2a88] sm:$0xff]
    %v7793 = vld [vmem:[#allocation2 + $0x2a90] sm:$0xff]
    %v7794 = vld [vmem:[#allocation2 + $0x2a98] sm:$0xff]
    %v7795 = vld [vmem:[#allocation2 + $0x2aa0] sm:$0xff]
    %v7796 = vld [vmem:[#allocation2 + $0x2aa8] sm:$0xff]
    %v7797 = vld [vmem:[#allocation2 + $0x2ab0] sm:$0xff]
    %v7798 = vld [vmem:[#allocation2 + $0x2ab8] sm:$0xff]
    %v7799 = vld [vmem:[#allocation2 + $0x2ac0] sm:$0xff]
    %v7800 = vld [vmem:[#allocation2 + $0x2ac8] sm:$0xff]
    %v7801 = vld [vmem:[#allocation2 + $0x2ad0] sm:$0xff]
    %v7802 = vld [vmem:[#allocation2 + $0x2ad8] sm:$0xff]
    %v7803 = vld [vmem:[#allocation2 + $0x2ae0] sm:$0xff]
    %v7804 = vld [vmem:[#allocation2 + $0x2ae8] sm:$0xff]
    %v7805 = vld [vmem:[#allocation2 + $0x2af0] sm:$0xff]
    %v7806 = vld [vmem:[#allocation2 + $0x2af8] sm:$0xff]
    %v7807 = vld [vmem:[#allocation2 + $0x2b00] sm:$0xff]
    %v7808 = vld [vmem:[#allocation2 + $0x2b08] sm:$0xff]
    %v7809 = vld [vmem:[#allocation2 + $0x2b10] sm:$0xff]
    %v7810 = vld [vmem:[#allocation2 + $0x2b18] sm:$0xff]
    %v7811 = vld [vmem:[#allocation2 + $0x2b20] sm:$0xff]
    %v7812 = vld [vmem:[#allocation2 + $0x2b28] sm:$0xff]
    %v7813 = vld [vmem:[#allocation2 + $0x2b30] sm:$0xff]
    %v7814 = vld [vmem:[#allocation2 + $0x2b38] sm:$0xff]
    %v7815 = vld [vmem:[#allocation2 + $0x2b40] sm:$0xff]
    %v7816 = vld [vmem:[#allocation2 + $0x2b48] sm:$0xff]
    %v7817 = vld [vmem:[#allocation2 + $0x2b50] sm:$0xff]
    %v7818 = vld [vmem:[#allocation2 + $0x2b58] sm:$0xff]
    %v7819 = vld [vmem:[#allocation2 + $0x2b60] sm:$0xff]
    %v7820 = vld [vmem:[#allocation2 + $0x2b68] sm:$0xff]
    %v7821 = vld [vmem:[#allocation2 + $0x2b70] sm:$0xff]
    %v7822 = vld [vmem:[#allocation2 + $0x2b78] sm:$0xff]
    %v7823 = vld [vmem:[#allocation2 + $0x2b80] sm:$0xff]
    %v7824 = vld [vmem:[#allocation2 + $0x2b88] sm:$0xff]
    %v7825 = vld [vmem:[#allocation2 + $0x2b90] sm:$0xff]
    %v7826 = vld [vmem:[#allocation2 + $0x2b98] sm:$0xff]
    %v7827 = vld [vmem:[#allocation2 + $0x2ba0] sm:$0xff]
    %v7828 = vld [vmem:[#allocation2 + $0x2ba8] sm:$0xff]
    %v7829 = vld [vmem:[#allocation2 + $0x2bb0] sm:$0xff]
    %v7830 = vld [vmem:[#allocation2 + $0x2bb8] sm:$0xff]
    %v7831 = vld [vmem:[#allocation2 + $0x2bc0] sm:$0xff]
    %v7832 = vld [vmem:[#allocation2 + $0x2bc8] sm:$0xff]
    %v7833 = vld [vmem:[#allocation2 + $0x2bd0] sm:$0xff]
    %v7834 = vld [vmem:[#allocation2 + $0x2bd8] sm:$0xff]
    %v7835 = vld [vmem:[#allocation2 + $0x2be0] sm:$0xff]
    %v7836 = vld [vmem:[#allocation2 + $0x2be8] sm:$0xff]
    %v7837 = vld [vmem:[#allocation2 + $0x2bf0] sm:$0xff]
    %v7838 = vld [vmem:[#allocation2 + $0x2bf8] sm:$0xff]
    %7839 = vmatprep.subr.mxu0 0.0
    %7840 = vmatpush1.msra.mxu0 %v7711
    %7841 = vmatprep.subr.mxu0 0.0
    %7842 = vmatpush1.msra.mxu0 %v7712
    %7843 = vmatprep.subr.mxu0 0.0
    %7844 = vmatpush1.msra.mxu0 %v7713
    %7845 = vmatprep.subr.mxu0 0.0
    %7846 = vmatpush1.msra.mxu0 %v7714
    %7847 = vmatprep.subr.mxu0 0.0
    %7848 = vmatpush1.msra.mxu0 %v7715
    %7849 = vmatprep.subr.mxu0 0.0
    %7850 = vmatpush1.msra.mxu0 %v7716
    %7851 = vmatprep.subr.mxu0 0.0
    %7852 = vmatpush1.msra.mxu0 %v7717
    %7853 = vmatprep.subr.mxu0 0.0
    %7854 = vmatpush1.msra.mxu0 %v7718
    %7855 = vmatprep.subr.mxu0 0.0
    %7856 = vmatpush1.msra.mxu0 %v7719
    %7857 = vmatprep.subr.mxu0 0.0
    %7858 = vmatpush1.msra.mxu0 %v7720
    %7859 = vmatprep.subr.mxu0 0.0
    %7860 = vmatpush1.msra.mxu0 %v7721
    %7861 = vmatprep.subr.mxu0 0.0
    %7862 = vmatpush1.msra.mxu0 %v7722
    %7863 = vmatprep.subr.mxu0 0.0
    %7864 = vmatpush1.msra.mxu0 %v7723
    %7865 = vmatprep.subr.mxu0 0.0
    %7866 = vmatpush1.msra.mxu0 %v7724
    %7867 = vmatprep.subr.mxu0 0.0
    %7868 = vmatpush1.msra.mxu0 %v7725
    %7869 = vmatprep.subr.mxu0 0.0
    %7870 = vmatpush1.msra.mxu0 %v7726
    %7871 = vmatprep.subr.mxu0 0.0
    %7872 = vmatpush1.msra.mxu0 %v7727
    %7873 = vmatprep.subr.mxu0 0.0
    %7874 = vmatpush1.msra.mxu0 %v7728
    %7875 = vmatprep.subr.mxu0 0.0
    %7876 = vmatpush1.msra.mxu0 %v7729
    %7877 = vmatprep.subr.mxu0 0.0
    %7878 = vmatpush1.msra.mxu0 %v7730
    %7879 = vmatprep.subr.mxu0 0.0
    %7880 = vmatpush1.msra.mxu0 %v7731
    %7881 = vmatprep.subr.mxu0 0.0
    %7882 = vmatpush1.msra.mxu0 %v7732
    %7883 = vmatprep.subr.mxu0 0.0
    %7884 = vmatpush1.msra.mxu0 %v7733
    %7885 = vmatprep.subr.mxu0 0.0
    %7886 = vmatpush1.msra.mxu0 %v7734
    %7887 = vmatprep.subr.mxu0 0.0
    %7888 = vmatpush1.msra.mxu0 %v7735
    %7889 = vmatprep.subr.mxu0 0.0
    %7890 = vmatpush1.msra.mxu0 %v7736
    %7891 = vmatprep.subr.mxu0 0.0
    %7892 = vmatpush1.msra.mxu0 %v7737
    %7893 = vmatprep.subr.mxu0 0.0
    %7894 = vmatpush1.msra.mxu0 %v7738
    %7895 = vmatprep.subr.mxu0 0.0
    %7896 = vmatpush1.msra.mxu0 %v7739
    %7897 = vmatprep.subr.mxu0 0.0
    %7898 = vmatpush1.msra.mxu0 %v7740
    %7899 = vmatprep.subr.mxu0 0.0
    %7900 = vmatpush1.msra.mxu0 %v7741
    %7901 = vmatprep.subr.mxu0 0.0
    %7902 = vmatpush1.msra.mxu0 %v7742
    %7903 = vmatprep.mubr.f32.mxu0 %v7704
    %7904 = vmatmul.mubr.f32.gmra.mrb[0].mxu0 %v7703
    %v7905 = vpop.f32.mrb[0].mxu0
    %v7906 = vadd.f32 0.0, %v7905
    %v7907 = vpop.f32.mrb[0].mxu0
    %7908 = vdwg.mxu0
    %7909 = vmatprep.subr.mxu0 0.0
    %7910 = vmatpush1.msra.mxu0 %v7743
    %7911 = vmatprep.subr.mxu0 0.0
    %7912 = vmatpush1.msra.mxu0 %v7744
    %7913 = vmatprep.subr.mxu0 0.0
    %7914 = vmatpush1.msra.mxu0 %v7745
    %7915 = vmatprep.subr.mxu0 0.0
    %7916 = vmatpush1.msra.mxu0 %v7746
    %7917 = vmatprep.subr.mxu0 0.0
    %7918 = vmatpush1.msra.mxu0 %v7747
    %7919 = vmatprep.subr.mxu0 0.0
    %7920 = vmatpush1.msra.mxu0 %v7748
    %7921 = vmatprep.subr.mxu0 0.0
    %7922 = vmatpush1.msra.mxu0 %v7749
    %7923 = vmatprep.subr.mxu0 0.0
    %7924 = vmatpush1.msra.mxu0 %v7750
    %7925 = vmatprep.subr.mxu0 0.0
    %7926 = vmatpush1.msra.mxu0 %v7751
    %7927 = vmatprep.subr.mxu0 0.0
    %7928 = vmatpush1.msra.mxu0 %v7752
    %7929 = vmatprep.subr.mxu0 0.0
    %7930 = vmatpush1.msra.mxu0 %v7753
    %7931 = vmatprep.subr.mxu0 0.0
    %7932 = vmatpush1.msra.mxu0 %v7754
    %7933 = vmatprep.subr.mxu0 0.0
    %7934 = vmatpush1.msra.mxu0 %v7755
    %7935 = vmatprep.subr.mxu0 0.0
    %7936 = vmatpush1.msra.mxu0 %v7756
    %7937 = vmatprep.subr.mxu0 0.0
    %7938 = vmatpush1.msra.mxu0 %v7757
    %7939 = vmatprep.subr.mxu0 0.0
    %7940 = vmatpush1.msra.mxu0 %v7758
    %7941 = vmatprep.subr.mxu0 0.0
    %7942 = vmatpush1.msra.mxu0 %v7759
    %7943 = vmatprep.subr.mxu0 0.0
    %7944 = vmatpush1.msra.mxu0 %v7760
    %7945 = vmatprep.subr.mxu0 0.0
    %7946 = vmatpush1.msra.mxu0 %v7761
    %7947 = vmatprep.subr.mxu0 0.0
    %7948 = vmatpush1.msra.mxu0 %v7762
    %7949 = vmatprep.subr.mxu0 0.0
    %7950 = vmatpush1.msra.mxu0 %v7763
    %7951 = vmatprep.subr.mxu0 0.0
    %7952 = vmatpush1.msra.mxu0 %v7764
    %7953 = vmatprep.subr.mxu0 0.0
    %7954 = vmatpush1.msra.mxu0 %v7765
    %7955 = vmatprep.subr.mxu0 0.0
    %7956 = vmatpush1.msra.mxu0 %v7766
    %7957 = vmatprep.subr.mxu0 0.0
    %7958 = vmatpush1.msra.mxu0 %v7767
    %7959 = vmatprep.subr.mxu0 0.0
    %7960 = vmatpush1.msra.mxu0 %v7768
    %7961 = vmatprep.subr.mxu0 0.0
    %7962 = vmatpush1.msra.mxu0 %v7769
    %7963 = vmatprep.subr.mxu0 0.0
    %7964 = vmatpush1.msra.mxu0 %v7770
    %7965 = vmatprep.subr.mxu0 0.0
    %7966 = vmatpush1.msra.mxu0 %v7771
    %7967 = vmatprep.subr.mxu0 0.0
    %7968 = vmatpush1.msra.mxu0 %v7772
    %7969 = vmatprep.subr.mxu0 0.0
    %7970 = vmatpush1.msra.mxu0 %v7773
    %7971 = vmatprep.subr.mxu0 0.0
    %7972 = vmatpush1.msra.mxu0 %v7774
    %7973 = vmatprep.mubr.f32.mxu0 %v7706
    %7974 = vmatmul.mubr.f32.gmra.mrb[0].mxu0 %v7705
    %v7975 = vpop.f32.mrb[0].mxu0
    %v7976 = vadd.f32 %v7906, %v7975
    %v7977 = vpop.f32.mrb[0].mxu0
    %7978 = vdwg.mxu0
    %7979 = vmatprep.subr.mxu0 0.0
    %7980 = vmatpush1.msra.mxu0 %v7775
    %7981 = vmatprep.subr.mxu0 0.0
    %7982 = vmatpush1.msra.mxu0 %v7776
    %7983 = vmatprep.subr.mxu0 0.0
    %7984 = vmatpush1.msra.mxu0 %v7777
    %7985 = vmatprep.subr.mxu0 0.0
    %7986 = vmatpush1.msra.mxu0 %v7778
    %7987 = vmatprep.subr.mxu0 0.0
    %7988 = vmatpush1.msra.mxu0 %v7779
    %7989 = vmatprep.subr.mxu0 0.0
    %7990 = vmatpush1.msra.mxu0 %v7780
    %7991 = vmatprep.subr.mxu0 0.0
    %7992 = vmatpush1.msra.mxu0 %v7781
    %7993 = vmatprep.subr.mxu0 0.0
    %7994 = vmatpush1.msra.mxu0 %v7782
    %7995 = vmatprep.subr.mxu0 0.0
    %7996 = vmatpush1.msra.mxu0 %v7783
    %7997 = vmatprep.subr.mxu0 0.0
    %7998 = vmatpush1.msra.mxu0 %v7784
    %7999 = vmatprep.subr.mxu0 0.0
    %8000 = vmatpush1.msra.mxu0 %v7785
    %8001 = vmatprep.subr.mxu0 0.0
    %8002 = vmatpush1.msra.mxu0 %v7786
    %8003 = vmatprep.subr.mxu0 0.0
    %8004 = vmatpush1.msra.mxu0 %v7787
    %8005 = vmatprep.subr.mxu0 0.0
    %8006 = vmatpush1.msra.mxu0 %v7788
    %8007 = vmatprep.subr.mxu0 0.0
    %8008 = vmatpush1.msra.mxu0 %v7789
    %8009 = vmatprep.subr.mxu0 0.0
    %8010 = vmatpush1.msra.mxu0 %v7790
    %8011 = vmatprep.subr.mxu0 0.0
    %8012 = vmatpush1.msra.mxu0 %v7791
    %8013 = vmatprep.subr.mxu0 0.0
    %8014 = vmatpush1.msra.mxu0 %v7792
    %8015 = vmatprep.subr.mxu0 0.0
    %8016 = vmatpush1.msra.mxu0 %v7793
    %8017 = vmatprep.subr.mxu0 0.0
    %8018 = vmatpush1.msra.mxu0 %v7794
    %8019 = vmatprep.subr.mxu0 0.0
    %8020 = vmatpush1.msra.mxu0 %v7795
    %8021 = vmatprep.subr.mxu0 0.0
    %8022 = vmatpush1.msra.mxu0 %v7796
    %8023 = vmatprep.subr.mxu0 0.0
    %8024 = vmatpush1.msra.mxu0 %v7797
    %8025 = vmatprep.subr.mxu0 0.0
    %8026 = vmatpush1.msra.mxu0 %v7798
    %8027 = vmatprep.subr.mxu0 0.0
    %8028 = vmatpush1.msra.mxu0 %v7799
    %8029 = vmatprep.subr.mxu0 0.0
    %8030 = vmatpush1.msra.mxu0 %v7800
    %8031 = vmatprep.subr.mxu0 0.0
    %8032 = vmatpush1.msra.mxu0 %v7801
    %8033 = vmatprep.subr.mxu0 0.0
    %8034 = vmatpush1.msra.mxu0 %v7802
    %8035 = vmatprep.subr.mxu0 0.0
    %8036 = vmatpush1.msra.mxu0 %v7803
    %8037 = vmatprep.subr.mxu0 0.0
    %8038 = vmatpush1.msra.mxu0 %v7804
    %8039 = vmatprep.subr.mxu0 0.0
    %8040 = vmatpush1.msra.mxu0 %v7805
    %8041 = vmatprep.subr.mxu0 0.0
    %8042 = vmatpush1.msra.mxu0 %v7806
    %8043 = vmatprep.mubr.f32.mxu0 %v7708
    %8044 = vmatmul.mubr.f32.gmra.mrb[0].mxu0 %v7707
    %v8045 = vpop.f32.mrb[0].mxu0
    %v8046 = vadd.f32 %v7976, %v8045
    %v8047 = vpop.f32.mrb[0].mxu0
    %8048 = vdwg.mxu0
    %8049 = vmatprep.subr.mxu0 0.0
    %8050 = vmatpush1.msra.mxu0 %v7807
    %8051 = vmatprep.subr.mxu0 0.0
    %8052 = vmatpush1.msra.mxu0 %v7808
    %8053 = vmatprep.subr.mxu0 0.0
    %8054 = vmatpush1.msra.mxu0 %v7809
    %8055 = vmatprep.subr.mxu0 0.0
    %8056 = vmatpush1.msra.mxu0 %v7810
    %8057 = vmatprep.subr.mxu0 0.0
    %8058 = vmatpush1.msra.mxu0 %v7811
    %8059 = vmatprep.subr.mxu0 0.0
    %8060 = vmatpush1.msra.mxu0 %v7812
    %8061 = vmatprep.subr.mxu0 0.0
    %8062 = vmatpush1.msra.mxu0 %v7813
    %8063 = vmatprep.subr.mxu0 0.0
    %8064 = vmatpush1.msra.mxu0 %v7814
    %8065 = vmatprep.subr.mxu0 0.0
    %8066 = vmatpush1.msra.mxu0 %v7815
    %8067 = vmatprep.subr.mxu0 0.0
    %8068 = vmatpush1.msra.mxu0 %v7816
    %8069 = vmatprep.subr.mxu0 0.0
    %8070 = vmatpush1.msra.mxu0 %v7817
    %8071 = vmatprep.subr.mxu0 0.0
    %8072 = vmatpush1.msra.mxu0 %v7818
    %8073 = vmatprep.subr.mxu0 0.0
    %8074 = vmatpush1.msra.mxu0 %v7819
    %8075 = vmatprep.subr.mxu0 0.0
    %8076 = vmatpush1.msra.mxu0 %v7820
    %8077 = vmatprep.subr.mxu0 0.0
    %8078 = vmatpush1.msra.mxu0 %v7821
    %8079 = vmatprep.subr.mxu0 0.0
    %8080 = vmatpush1.msra.mxu0 %v7822
    %8081 = vmatprep.subr.mxu0 0.0
    %8082 = vmatpush1.msra.mxu0 %v7823
    %8083 = vmatprep.subr.mxu0 0.0
    %8084 = vmatpush1.msra.mxu0 %v7824
    %8085 = vmatprep.subr.mxu0 0.0
    %8086 = vmatpush1.msra.mxu0 %v7825
    %8087 = vmatprep.subr.mxu0 0.0
    %8088 = vmatpush1.msra.mxu0 %v7826
    %8089 = vmatprep.subr.mxu0 0.0
    %8090 = vmatpush1.msra.mxu0 %v7827
    %8091 = vmatprep.subr.mxu0 0.0
    %8092 = vmatpush1.msra.mxu0 %v7828
    %8093 = vmatprep.subr.mxu0 0.0
    %8094 = vmatpush1.msra.mxu0 %v7829
    %8095 = vmatprep.subr.mxu0 0.0
    %8096 = vmatpush1.msra.mxu0 %v7830
    %8097 = vmatprep.subr.mxu0 0.0
    %8098 = vmatpush1.msra.mxu0 %v7831
    %8099 = vmatprep.subr.mxu0 0.0
    %8100 = vmatpush1.msra.mxu0 %v7832
    %8101 = vmatprep.subr.mxu0 0.0
    %8102 = vmatpush1.msra.mxu0 %v7833
    %8103 = vmatprep.subr.mxu0 0.0
    %8104 = vmatpush1.msra.mxu0 %v7834
    %8105 = vmatprep.subr.mxu0 0.0
    %8106 = vmatpush1.msra.mxu0 %v7835
    %8107 = vmatprep.subr.mxu0 0.0
    %8108 = vmatpush1.msra.mxu0 %v7836
    %8109 = vmatprep.subr.mxu0 0.0
    %8110 = vmatpush1.msra.mxu0 %v7837
    %8111 = vmatprep.subr.mxu0 0.0
    %8112 = vmatpush1.msra.mxu0 %v7838
    %8113 = vmatprep.mubr.f32.mxu0 %v7710
    %8114 = vmatmul.mubr.f32.gmra.mrb[0].mxu0 %v7709
    %v8115 = vpop.f32.mrb[0].mxu0
    %v8116 = vadd.f32 %v8046, %v8115
    %v8117 = vpop.f32.mrb[0].mxu0
    %8118 = vdwg.mxu0
    %v8119 = vadd.f32 %v7702, %v8116
    %v8120 = vld [vmem:[%s1 + $0x2c0] sm:$0xff]
    %v8121 = vld [vmem:[%s1 + $0x2c8] sm:$0xff]
    %v8122 = vld [vmem:[%s1 + $0x2d0] sm:$0xff]
    %v8123 = vld [vmem:[%s1 + $0x2d8] sm:$0xff]
    %v8124 = vld [vmem:[%s1 + $0x2e0] sm:$0xff]
    %v8125 = vld [vmem:[%s1 + $0x2e8] sm:$0xff]
    %v8126 = vld [vmem:[%s1 + $0x2f0] sm:$0xff]
    %v8127 = vld [vmem:[%s1 + $0x2f8] sm:$0xff]
    %v8128 = vld [vmem:[#allocation2 + $0x2c00] sm:$0xff]
    %v8129 = vld [vmem:[#allocation2 + $0x2c08] sm:$0xff]
    %v8130 = vld [vmem:[#allocation2 + $0x2c10] sm:$0xff]
    %v8131 = vld [vmem:[#allocation2 + $0x2c18] sm:$0xff]
    %v8132 = vld [vmem:[#allocation2 + $0x2c20] sm:$0xff]
    %v8133 = vld [vmem:[#allocation2 + $0x2c28] sm:$0xff]
    %v8134 = vld [vmem:[#allocation2 + $0x2c30] sm:$0xff]
    %v8135 = vld [vmem:[#allocation2 + $0x2c38] sm:$0xff]
    %v8136 = vld [vmem:[#allocation2 + $0x2c40] sm:$0xff]
    %v8137 = vld [vmem:[#allocation2 + $0x2c48] sm:$0xff]
    %v8138 = vld [vmem:[#allocation2 + $0x2c50] sm:$0xff]
    %v8139 = vld [vmem:[#allocation2 + $0x2c58] sm:$0xff]
    %v8140 = vld [vmem:[#allocation2 + $0x2c60] sm:$0xff]
    %v8141 = vld [vmem:[#allocation2 + $0x2c68] sm:$0xff]
    %v8142 = vld [vmem:[#allocation2 + $0x2c70] sm:$0xff]
    %v8143 = vld [vmem:[#allocation2 + $0x2c78] sm:$0xff]
    %v8144 = vld [vmem:[#allocation2 + $0x2c80] sm:$0xff]
    %v8145 = vld [vmem:[#allocation2 + $0x2c88] sm:$0xff]
    %v8146 = vld [vmem:[#allocation2 + $0x2c90] sm:$0xff]
    %v8147 = vld [vmem:[#allocation2 + $0x2c98] sm:$0xff]
    %v8148 = vld [vmem:[#allocation2 + $0x2ca0] sm:$0xff]
    %v8149 = vld [vmem:[#allocation2 + $0x2ca8] sm:$0xff]
    %v8150 = vld [vmem:[#allocation2 + $0x2cb0] sm:$0xff]
    %v8151 = vld [vmem:[#allocation2 + $0x2cb8] sm:$0xff]
    %v8152 = vld [vmem:[#allocation2 + $0x2cc0] sm:$0xff]
    %v8153 = vld [vmem:[#allocation2 + $0x2cc8] sm:$0xff]
    %v8154 = vld [vmem:[#allocation2 + $0x2cd0] sm:$0xff]
    %v8155 = vld [vmem:[#allocation2 + $0x2cd8] sm:$0xff]
    %v8156 = vld [vmem:[#allocation2 + $0x2ce0] sm:$0xff]
    %v8157 = vld [vmem:[#allocation2 + $0x2ce8] sm:$0xff]
    %v8158 = vld [vmem:[#allocation2 + $0x2cf0] sm:$0xff]
    %v8159 = vld [vmem:[#allocation2 + $0x2cf8] sm:$0xff]
    %v8160 = vld [vmem:[#allocation2 + $0x2d00] sm:$0xff]
    %v8161 = vld [vmem:[#allocation2 + $0x2d08] sm:$0xff]
    %v8162 = vld [vmem:[#allocation2 + $0x2d10] sm:$0xff]
    %v8163 = vld [vmem:[#allocation2 + $0x2d18] sm:$0xff]
    %v8164 = vld [vmem:[#allocation2 + $0x2d20] sm:$0xff]
    %v8165 = vld [vmem:[#allocation2 + $0x2d28] sm:$0xff]
    %v8166 = vld [vmem:[#allocation2 + $0x2d30] sm:$0xff]
    %v8167 = vld [vmem:[#allocation2 + $0x2d38] sm:$0xff]
    %v8168 = vld [vmem:[#allocation2 + $0x2d40] sm:$0xff]
    %v8169 = vld [vmem:[#allocation2 + $0x2d48] sm:$0xff]
    %v8170 = vld [vmem:[#allocation2 + $0x2d50] sm:$0xff]
    %v8171 = vld [vmem:[#allocation2 + $0x2d58] sm:$0xff]
    %v8172 = vld [vmem:[#allocation2 + $0x2d60] sm:$0xff]
    %v8173 = vld [vmem:[#allocation2 + $0x2d68] sm:$0xff]
    %v8174 = vld [vmem:[#allocation2 + $0x2d70] sm:$0xff]
    %v8175 = vld [vmem:[#allocation2 + $0x2d78] sm:$0xff]
    %v8176 = vld [vmem:[#allocation2 + $0x2d80] sm:$0xff]
    %v8177 = vld [vmem:[#allocation2 + $0x2d88] sm:$0xff]
    %v8178 = vld [vmem:[#allocation2 + $0x2d90] sm:$0xff]
    %v8179 = vld [vmem:[#allocation2 + $0x2d98] sm:$0xff]
    %v8180 = vld [vmem:[#allocation2 + $0x2da0] sm:$0xff]
    %v8181 = vld [vmem:[#allocation2 + $0x2da8] sm:$0xff]
    %v8182 = vld [vmem:[#allocation2 + $0x2db0] sm:$0xff]
    %v8183 = vld [vmem:[#allocation2 + $0x2db8] sm:$0xff]
    %v8184 = vld [vmem:[#allocation2 + $0x2dc0] sm:$0xff]
    %v8185 = vld [vmem:[#allocation2 + $0x2dc8] sm:$0xff]
    %v8186 = vld [vmem:[#allocation2 + $0x2dd0] sm:$0xff]
    %v8187 = vld [vmem:[#allocation2 + $0x2dd8] sm:$0xff]
    %v8188 = vld [vmem:[#allocation2 + $0x2de0] sm:$0xff]
    %v8189 = vld [vmem:[#allocation2 + $0x2de8] sm:$0xff]
    %v8190 = vld [vmem:[#allocation2 + $0x2df0] sm:$0xff]
    %v8191 = vld [vmem:[#allocation2 + $0x2df8] sm:$0xff]
    %v8192 = vld [vmem:[#allocation2 + $0x2e00] sm:$0xff]
    %v8193 = vld [vmem:[#allocation2 + $0x2e08] sm:$0xff]
    %v8194 = vld [vmem:[#allocation2 + $0x2e10] sm:$0xff]
    %v8195 = vld [vmem:[#allocation2 + $0x2e18] sm:$0xff]
    %v8196 = vld [vmem:[#allocation2 + $0x2e20] sm:$0xff]
    %v8197 = vld [vmem:[#allocation2 + $0x2e28] sm:$0xff]
    %v8198 = vld [vmem:[#allocation2 + $0x2e30] sm:$0xff]
    %v8199 = vld [vmem:[#allocation2 + $0x2e38] sm:$0xff]
    %v8200 = vld [vmem:[#allocation2 + $0x2e40] sm:$0xff]
    %v8201 = vld [vmem:[#allocation2 + $0x2e48] sm:$0xff]
    %v8202 = vld [vmem:[#allocation2 + $0x2e50] sm:$0xff]
    %v8203 = vld [vmem:[#allocation2 + $0x2e58] sm:$0xff]
    %v8204 = vld [vmem:[#allocation2 + $0x2e60] sm:$0xff]
    %v8205 = vld [vmem:[#allocation2 + $0x2e68] sm:$0xff]
    %v8206 = vld [vmem:[#allocation2 + $0x2e70] sm:$0xff]
    %v8207 = vld [vmem:[#allocation2 + $0x2e78] sm:$0xff]
    %v8208 = vld [vmem:[#allocation2 + $0x2e80] sm:$0xff]
    %v8209 = vld [vmem:[#allocation2 + $0x2e88] sm:$0xff]
    %v8210 = vld [vmem:[#allocation2 + $0x2e90] sm:$0xff]
    %v8211 = vld [vmem:[#allocation2 + $0x2e98] sm:$0xff]
    %v8212 = vld [vmem:[#allocation2 + $0x2ea0] sm:$0xff]
    %v8213 = vld [vmem:[#allocation2 + $0x2ea8] sm:$0xff]
    %v8214 = vld [vmem:[#allocation2 + $0x2eb0] sm:$0xff]
    %v8215 = vld [vmem:[#allocation2 + $0x2eb8] sm:$0xff]
    %v8216 = vld [vmem:[#allocation2 + $0x2ec0] sm:$0xff]
    %v8217 = vld [vmem:[#allocation2 + $0x2ec8] sm:$0xff]
    %v8218 = vld [vmem:[#allocation2 + $0x2ed0] sm:$0xff]
    %v8219 = vld [vmem:[#allocation2 + $0x2ed8] sm:$0xff]
    %v8220 = vld [vmem:[#allocation2 + $0x2ee0] sm:$0xff]
    %v8221 = vld [vmem:[#allocation2 + $0x2ee8] sm:$0xff]
    %v8222 = vld [vmem:[#allocation2 + $0x2ef0] sm:$0xff]
    %v8223 = vld [vmem:[#allocation2 + $0x2ef8] sm:$0xff]
    %v8224 = vld [vmem:[#allocation2 + $0x2f00] sm:$0xff]
    %v8225 = vld [vmem:[#allocation2 + $0x2f08] sm:$0xff]
    %v8226 = vld [vmem:[#allocation2 + $0x2f10] sm:$0xff]
    %v8227 = vld [vmem:[#allocation2 + $0x2f18] sm:$0xff]
    %v8228 = vld [vmem:[#allocation2 + $0x2f20] sm:$0xff]
    %v8229 = vld [vmem:[#allocation2 + $0x2f28] sm:$0xff]
    %v8230 = vld [vmem:[#allocation2 + $0x2f30] sm:$0xff]
    %v8231 = vld [vmem:[#allocation2 + $0x2f38] sm:$0xff]
    %v8232 = vld [vmem:[#allocation2 + $0x2f40] sm:$0xff]
    %v8233 = vld [vmem:[#allocation2 + $0x2f48] sm:$0xff]
    %v8234 = vld [vmem:[#allocation2 + $0x2f50] sm:$0xff]
    %v8235 = vld [vmem:[#allocation2 + $0x2f58] sm:$0xff]
    %v8236 = vld [vmem:[#allocation2 + $0x2f60] sm:$0xff]
    %v8237 = vld [vmem:[#allocation2 + $0x2f68] sm:$0xff]
    %v8238 = vld [vmem:[#allocation2 + $0x2f70] sm:$0xff]
    %v8239 = vld [vmem:[#allocation2 + $0x2f78] sm:$0xff]
    %v8240 = vld [vmem:[#allocation2 + $0x2f80] sm:$0xff]
    %v8241 = vld [vmem:[#allocation2 + $0x2f88] sm:$0xff]
    %v8242 = vld [vmem:[#allocation2 + $0x2f90] sm:$0xff]
    %v8243 = vld [vmem:[#allocation2 + $0x2f98] sm:$0xff]
    %v8244 = vld [vmem:[#allocation2 + $0x2fa0] sm:$0xff]
    %v8245 = vld [vmem:[#allocation2 + $0x2fa8] sm:$0xff]
    %v8246 = vld [vmem:[#allocation2 + $0x2fb0] sm:$0xff]
    %v8247 = vld [vmem:[#allocation2 + $0x2fb8] sm:$0xff]
    %v8248 = vld [vmem:[#allocation2 + $0x2fc0] sm:$0xff]
    %v8249 = vld [vmem:[#allocation2 + $0x2fc8] sm:$0xff]
    %v8250 = vld [vmem:[#allocation2 + $0x2fd0] sm:$0xff]
    %v8251 = vld [vmem:[#allocation2 + $0x2fd8] sm:$0xff]
    %v8252 = vld [vmem:[#allocation2 + $0x2fe0] sm:$0xff]
    %v8253 = vld [vmem:[#allocation2 + $0x2fe8] sm:$0xff]
    %v8254 = vld [vmem:[#allocation2 + $0x2ff0] sm:$0xff]
    %v8255 = vld [vmem:[#allocation2 + $0x2ff8] sm:$0xff]
    %8256 = vmatprep.subr.mxu0 0.0
    %8257 = vmatpush1.msra.mxu0 %v8128
    %8258 = vmatprep.subr.mxu0 0.0
    %8259 = vmatpush1.msra.mxu0 %v8129
    %8260 = vmatprep.subr.mxu0 0.0
    %8261 = vmatpush1.msra.mxu0 %v8130
    %8262 = vmatprep.subr.mxu0 0.0
    %8263 = vmatpush1.msra.mxu0 %v8131
    %8264 = vmatprep.subr.mxu0 0.0
    %8265 = vmatpush1.msra.mxu0 %v8132
    %8266 = vmatprep.subr.mxu0 0.0
    %8267 = vmatpush1.msra.mxu0 %v8133
    %8268 = vmatprep.subr.mxu0 0.0
    %8269 = vmatpush1.msra.mxu0 %v8134
    %8270 = vmatprep.subr.mxu0 0.0
    %8271 = vmatpush1.msra.mxu0 %v8135
    %8272 = vmatprep.subr.mxu0 0.0
    %8273 = vmatpush1.msra.mxu0 %v8136
    %8274 = vmatprep.subr.mxu0 0.0
    %8275 = vmatpush1.msra.mxu0 %v8137
    %8276 = vmatprep.subr.mxu0 0.0
    %8277 = vmatpush1.msra.mxu0 %v8138
    %8278 = vmatprep.subr.mxu0 0.0
    %8279 = vmatpush1.msra.mxu0 %v8139
    %8280 = vmatprep.subr.mxu0 0.0
    %8281 = vmatpush1.msra.mxu0 %v8140
    %8282 = vmatprep.subr.mxu0 0.0
    %8283 = vmatpush1.msra.mxu0 %v8141
    %8284 = vmatprep.subr.mxu0 0.0
    %8285 = vmatpush1.msra.mxu0 %v8142
    %8286 = vmatprep.subr.mxu0 0.0
    %8287 = vmatpush1.msra.mxu0 %v8143
    %8288 = vmatprep.subr.mxu0 0.0
    %8289 = vmatpush1.msra.mxu0 %v8144
    %8290 = vmatprep.subr.mxu0 0.0
    %8291 = vmatpush1.msra.mxu0 %v8145
    %8292 = vmatprep.subr.mxu0 0.0
    %8293 = vmatpush1.msra.mxu0 %v8146
    %8294 = vmatprep.subr.mxu0 0.0
    %8295 = vmatpush1.msra.mxu0 %v8147
    %8296 = vmatprep.subr.mxu0 0.0
    %8297 = vmatpush1.msra.mxu0 %v8148
    %8298 = vmatprep.subr.mxu0 0.0
    %8299 = vmatpush1.msra.mxu0 %v8149
    %8300 = vmatprep.subr.mxu0 0.0
    %8301 = vmatpush1.msra.mxu0 %v8150
    %8302 = vmatprep.subr.mxu0 0.0
    %8303 = vmatpush1.msra.mxu0 %v8151
    %8304 = vmatprep.subr.mxu0 0.0
    %8305 = vmatpush1.msra.mxu0 %v8152
    %8306 = vmatprep.subr.mxu0 0.0
    %8307 = vmatpush1.msra.mxu0 %v8153
    %8308 = vmatprep.subr.mxu0 0.0
    %8309 = vmatpush1.msra.mxu0 %v8154
    %8310 = vmatprep.subr.mxu0 0.0
    %8311 = vmatpush1.msra.mxu0 %v8155
    %8312 = vmatprep.subr.mxu0 0.0
    %8313 = vmatpush1.msra.mxu0 %v8156
    %8314 = vmatprep.subr.mxu0 0.0
    %8315 = vmatpush1.msra.mxu0 %v8157
    %8316 = vmatprep.subr.mxu0 0.0
    %8317 = vmatpush1.msra.mxu0 %v8158
    %8318 = vmatprep.subr.mxu0 0.0
    %8319 = vmatpush1.msra.mxu0 %v8159
    %8320 = vmatprep.mubr.f32.mxu0 %v8121
    %8321 = vmatmul.mubr.f32.gmra.mrb[0].mxu0 %v8120
    %v8322 = vpop.f32.mrb[0].mxu0
    %v8323 = vadd.f32 0.0, %v8322
    %v8324 = vpop.f32.mrb[0].mxu0
    %8325 = vdwg.mxu0
    %8326 = vmatprep.subr.mxu0 0.0
    %8327 = vmatpush1.msra.mxu0 %v8160
    %8328 = vmatprep.subr.mxu0 0.0
    %8329 = vmatpush1.msra.mxu0 %v8161
    %8330 = vmatprep.subr.mxu0 0.0
    %8331 = vmatpush1.msra.mxu0 %v8162
    %8332 = vmatprep.subr.mxu0 0.0
    %8333 = vmatpush1.msra.mxu0 %v8163
    %8334 = vmatprep.subr.mxu0 0.0
    %8335 = vmatpush1.msra.mxu0 %v8164
    %8336 = vmatprep.subr.mxu0 0.0
    %8337 = vmatpush1.msra.mxu0 %v8165
    %8338 = vmatprep.subr.mxu0 0.0
    %8339 = vmatpush1.msra.mxu0 %v8166
    %8340 = vmatprep.subr.mxu0 0.0
    %8341 = vmatpush1.msra.mxu0 %v8167
    %8342 = vmatprep.subr.mxu0 0.0
    %8343 = vmatpush1.msra.mxu0 %v8168
    %8344 = vmatprep.subr.mxu0 0.0
    %8345 = vmatpush1.msra.mxu0 %v8169
    %8346 = vmatprep.subr.mxu0 0.0
    %8347 = vmatpush1.msra.mxu0 %v8170
    %8348 = vmatprep.subr.mxu0 0.0
    %8349 = vmatpush1.msra.mxu0 %v8171
    %8350 = vmatprep.subr.mxu0 0.0
    %8351 = vmatpush1.msra.mxu0 %v8172
    %8352 = vmatprep.subr.mxu0 0.0
    %8353 = vmatpush1.msra.mxu0 %v8173
    %8354 = vmatprep.subr.mxu0 0.0
    %8355 = vmatpush1.msra.mxu0 %v8174
    %8356 = vmatprep.subr.mxu0 0.0
    %8357 = vmatpush1.msra.mxu0 %v8175
    %8358 = vmatprep.subr.mxu0 0.0
    %8359 = vmatpush1.msra.mxu0 %v8176
    %8360 = vmatprep.subr.mxu0 0.0
    %8361 = vmatpush1.msra.mxu0 %v8177
    %8362 = vmatprep.subr.mxu0 0.0
    %8363 = vmatpush1.msra.mxu0 %v8178
    %8364 = vmatprep.subr.mxu0 0.0
    %8365 = vmatpush1.msra.mxu0 %v8179
    %8366 = vmatprep.subr.mxu0 0.0
    %8367 = vmatpush1.msra.mxu0 %v8180
    %8368 = vmatprep.subr.mxu0 0.0
    %8369 = vmatpush1.msra.mxu0 %v8181
    %8370 = vmatprep.subr.mxu0 0.0
    %8371 = vmatpush1.msra.mxu0 %v8182
    %8372 = vmatprep.subr.mxu0 0.0
    %8373 = vmatpush1.msra.mxu0 %v8183
    %8374 = vmatprep.subr.mxu0 0.0
    %8375 = vmatpush1.msra.mxu0 %v8184
    %8376 = vmatprep.subr.mxu0 0.0
    %8377 = vmatpush1.msra.mxu0 %v8185
    %8378 = vmatprep.subr.mxu0 0.0
    %8379 = vmatpush1.msra.mxu0 %v8186
    %8380 = vmatprep.subr.mxu0 0.0
    %8381 = vmatpush1.msra.mxu0 %v8187
    %8382 = vmatprep.subr.mxu0 0.0
    %8383 = vmatpush1.msra.mxu0 %v8188
    %8384 = vmatprep.subr.mxu0 0.0
    %8385 = vmatpush1.msra.mxu0 %v8189
    %8386 = vmatprep.subr.mxu0 0.0
    %8387 = vmatpush1.msra.mxu0 %v8190
    %8388 = vmatprep.subr.mxu0 0.0
    %8389 = vmatpush1.msra.mxu0 %v8191
    %8390 = vmatprep.mubr.f32.mxu0 %v8123
    %8391 = vmatmul.mubr.f32.gmra.mrb[0].mxu0 %v8122
    %v8392 = vpop.f32.mrb[0].mxu0
    %v8393 = vadd.f32 %v8323, %v8392
    %v8394 = vpop.f32.mrb[0].mxu0
    %8395 = vdwg.mxu0
    %8396 = vmatprep.subr.mxu0 0.0
    %8397 = vmatpush1.msra.mxu0 %v8192
    %8398 = vmatprep.subr.mxu0 0.0
    %8399 = vmatpush1.msra.mxu0 %v8193
    %8400 = vmatprep.subr.mxu0 0.0
    %8401 = vmatpush1.msra.mxu0 %v8194
    %8402 = vmatprep.subr.mxu0 0.0
    %8403 = vmatpush1.msra.mxu0 %v8195
    %8404 = vmatprep.subr.mxu0 0.0
    %8405 = vmatpush1.msra.mxu0 %v8196
    %8406 = vmatprep.subr.mxu0 0.0
    %8407 = vmatpush1.msra.mxu0 %v8197
    %8408 = vmatprep.subr.mxu0 0.0
    %8409 = vmatpush1.msra.mxu0 %v8198
    %8410 = vmatprep.subr.mxu0 0.0
    %8411 = vmatpush1.msra.mxu0 %v8199
    %8412 = vmatprep.subr.mxu0 0.0
    %8413 = vmatpush1.msra.mxu0 %v8200
    %8414 = vmatprep.subr.mxu0 0.0
    %8415 = vmatpush1.msra.mxu0 %v8201
    %8416 = vmatprep.subr.mxu0 0.0
    %8417 = vmatpush1.msra.mxu0 %v8202
    %8418 = vmatprep.subr.mxu0 0.0
    %8419 = vmatpush1.msra.mxu0 %v8203
    %8420 = vmatprep.subr.mxu0 0.0
    %8421 = vmatpush1.msra.mxu0 %v8204
    %8422 = vmatprep.subr.mxu0 0.0
    %8423 = vmatpush1.msra.mxu0 %v8205
    %8424 = vmatprep.subr.mxu0 0.0
    %8425 = vmatpush1.msra.mxu0 %v8206
    %8426 = vmatprep.subr.mxu0 0.0
    %8427 = vmatpush1.msra.mxu0 %v8207
    %8428 = vmatprep.subr.mxu0 0.0
    %8429 = vmatpush1.msra.mxu0 %v8208
    %8430 = vmatprep.subr.mxu0 0.0
    %8431 = vmatpush1.msra.mxu0 %v8209
    %8432 = vmatprep.subr.mxu0 0.0
    %8433 = vmatpush1.msra.mxu0 %v8210
    %8434 = vmatprep.subr.mxu0 0.0
    %8435 = vmatpush1.msra.mxu0 %v8211
    %8436 = vmatprep.subr.mxu0 0.0
    %8437 = vmatpush1.msra.mxu0 %v8212
    %8438 = vmatprep.subr.mxu0 0.0
    %8439 = vmatpush1.msra.mxu0 %v8213
    %8440 = vmatprep.subr.mxu0 0.0
    %8441 = vmatpush1.msra.mxu0 %v8214
    %8442 = vmatprep.subr.mxu0 0.0
    %8443 = vmatpush1.msra.mxu0 %v8215
    %8444 = vmatprep.subr.mxu0 0.0
    %8445 = vmatpush1.msra.mxu0 %v8216
    %8446 = vmatprep.subr.mxu0 0.0
    %8447 = vmatpush1.msra.mxu0 %v8217
    %8448 = vmatprep.subr.mxu0 0.0
    %8449 = vmatpush1.msra.mxu0 %v8218
    %8450 = vmatprep.subr.mxu0 0.0
    %8451 = vmatpush1.msra.mxu0 %v8219
    %8452 = vmatprep.subr.mxu0 0.0
    %8453 = vmatpush1.msra.mxu0 %v8220
    %8454 = vmatprep.subr.mxu0 0.0
    %8455 = vmatpush1.msra.mxu0 %v8221
    %8456 = vmatprep.subr.mxu0 0.0
    %8457 = vmatpush1.msra.mxu0 %v8222
    %8458 = vmatprep.subr.mxu0 0.0
    %8459 = vmatpush1.msra.mxu0 %v8223
    %8460 = vmatprep.mubr.f32.mxu0 %v8125
    %8461 = vmatmul.mubr.f32.gmra.mrb[0].mxu0 %v8124
    %v8462 = vpop.f32.mrb[0].mxu0
    %v8463 = vadd.f32 %v8393, %v8462
    %v8464 = vpop.f32.mrb[0].mxu0
    %8465 = vdwg.mxu0
    %8466 = vmatprep.subr.mxu0 0.0
    %8467 = vmatpush1.msra.mxu0 %v8224
    %8468 = vmatprep.subr.mxu0 0.0
    %8469 = vmatpush1.msra.mxu0 %v8225
    %8470 = vmatprep.subr.mxu0 0.0
    %8471 = vmatpush1.msra.mxu0 %v8226
    %8472 = vmatprep.subr.mxu0 0.0
    %8473 = vmatpush1.msra.mxu0 %v8227
    %8474 = vmatprep.subr.mxu0 0.0
    %8475 = vmatpush1.msra.mxu0 %v8228
    %8476 = vmatprep.subr.mxu0 0.0
    %8477 = vmatpush1.msra.mxu0 %v8229
    %8478 = vmatprep.subr.mxu0 0.0
    %8479 = vmatpush1.msra.mxu0 %v8230
    %8480 = vmatprep.subr.mxu0 0.0
    %8481 = vmatpush1.msra.mxu0 %v8231
    %8482 = vmatprep.subr.mxu0 0.0
    %8483 = vmatpush1.msra.mxu0 %v8232
    %8484 = vmatprep.subr.mxu0 0.0
    %8485 = vmatpush1.msra.mxu0 %v8233
    %8486 = vmatprep.subr.mxu0 0.0
    %8487 = vmatpush1.msra.mxu0 %v8234
    %8488 = vmatprep.subr.mxu0 0.0
    %8489 = vmatpush1.msra.mxu0 %v8235
    %8490 = vmatprep.subr.mxu0 0.0
    %8491 = vmatpush1.msra.mxu0 %v8236
    %8492 = vmatprep.subr.mxu0 0.0
    %8493 = vmatpush1.msra.mxu0 %v8237
    %8494 = vmatprep.subr.mxu0 0.0
    %8495 = vmatpush1.msra.mxu0 %v8238
    %8496 = vmatprep.subr.mxu0 0.0
    %8497 = vmatpush1.msra.mxu0 %v8239
    %8498 = vmatprep.subr.mxu0 0.0
    %8499 = vmatpush1.msra.mxu0 %v8240
    %8500 = vmatprep.subr.mxu0 0.0
    %8501 = vmatpush1.msra.mxu0 %v8241
    %8502 = vmatprep.subr.mxu0 0.0
    %8503 = vmatpush1.msra.mxu0 %v8242
    %8504 = vmatprep.subr.mxu0 0.0
    %8505 = vmatpush1.msra.mxu0 %v8243
    %8506 = vmatprep.subr.mxu0 0.0
    %8507 = vmatpush1.msra.mxu0 %v8244
    %8508 = vmatprep.subr.mxu0 0.0
    %8509 = vmatpush1.msra.mxu0 %v8245
    %8510 = vmatprep.subr.mxu0 0.0
    %8511 = vmatpush1.msra.mxu0 %v8246
    %8512 = vmatprep.subr.mxu0 0.0
    %8513 = vmatpush1.msra.mxu0 %v8247
    %8514 = vmatprep.subr.mxu0 0.0
    %8515 = vmatpush1.msra.mxu0 %v8248
    %8516 = vmatprep.subr.mxu0 0.0
    %8517 = vmatpush1.msra.mxu0 %v8249
    %8518 = vmatprep.subr.mxu0 0.0
    %8519 = vmatpush1.msra.mxu0 %v8250
    %8520 = vmatprep.subr.mxu0 0.0
    %8521 = vmatpush1.msra.mxu0 %v8251
    %8522 = vmatprep.subr.mxu0 0.0
    %8523 = vmatpush1.msra.mxu0 %v8252
    %8524 = vmatprep.subr.mxu0 0.0
    %8525 = vmatpush1.msra.mxu0 %v8253
    %8526 = vmatprep.subr.mxu0 0.0
    %8527 = vmatpush1.msra.mxu0 %v8254
    %8528 = vmatprep.subr.mxu0 0.0
    %8529 = vmatpush1.msra.mxu0 %v8255
    %8530 = vmatprep.mubr.f32.mxu0 %v8127
    %8531 = vmatmul.mubr.f32.gmra.mrb[0].mxu0 %v8126
    %v8532 = vpop.f32.mrb[0].mxu0
    %v8533 = vadd.f32 %v8463, %v8532
    %v8534 = vpop.f32.mrb[0].mxu0
    %8535 = vdwg.mxu0
    %v8536 = vadd.f32 %v8119, %v8533
    %v8537 = vld [vmem:[%s1 + $0x300] sm:$0xff]
    %v8538 = vld [vmem:[%s1 + $0x308] sm:$0xff]
    %v8539 = vld [vmem:[%s1 + $0x310] sm:$0xff]
    %v8540 = vld [vmem:[%s1 + $0x318] sm:$0xff]
    %v8541 = vld [vmem:[%s1 + $0x320] sm:$0xff]
    %v8542 = vld [vmem:[%s1 + $0x328] sm:$0xff]
    %v8543 = vld [vmem:[%s1 + $0x330] sm:$0xff]
    %v8544 = vld [vmem:[%s1 + $0x338] sm:$0xff]
    %v8545 = vld [vmem:[#allocation2 + $0x3000] sm:$0xff]
    %v8546 = vld [vmem:[#allocation2 + $0x3008] sm:$0xff]
    %v8547 = vld [vmem:[#allocation2 + $0x3010] sm:$0xff]
    %v8548 = vld [vmem:[#allocation2 + $0x3018] sm:$0xff]
    %v8549 = vld [vmem:[#allocation2 + $0x3020] sm:$0xff]
    %v8550 = vld [vmem:[#allocation2 + $0x3028] sm:$0xff]
    %v8551 = vld [vmem:[#allocation2 + $0x3030] sm:$0xff]
    %v8552 = vld [vmem:[#allocation2 + $0x3038] sm:$0xff]
    %v8553 = vld [vmem:[#allocation2 + $0x3040] sm:$0xff]
    %v8554 = vld [vmem:[#allocation2 + $0x3048] sm:$0xff]
    %v8555 = vld [vmem:[#allocation2 + $0x3050] sm:$0xff]
    %v8556 = vld [vmem:[#allocation2 + $0x3058] sm:$0xff]
    %v8557 = vld [vmem:[#allocation2 + $0x3060] sm:$0xff]
    %v8558 = vld [vmem:[#allocation2 + $0x3068] sm:$0xff]
    %v8559 = vld [vmem:[#allocation2 + $0x3070] sm:$0xff]
    %v8560 = vld [vmem:[#allocation2 + $0x3078] sm:$0xff]
    %v8561 = vld [vmem:[#allocation2 + $0x3080] sm:$0xff]
    %v8562 = vld [vmem:[#allocation2 + $0x3088] sm:$0xff]
    %v8563 = vld [vmem:[#allocation2 + $0x3090] sm:$0xff]
    %v8564 = vld [vmem:[#allocation2 + $0x3098] sm:$0xff]
    %v8565 = vld [vmem:[#allocation2 + $0x30a0] sm:$0xff]
    %v8566 = vld [vmem:[#allocation2 + $0x30a8] sm:$0xff]
    %v8567 = vld [vmem:[#allocation2 + $0x30b0] sm:$0xff]
    %v8568 = vld [vmem:[#allocation2 + $0x30b8] sm:$0xff]
    %v8569 = vld [vmem:[#allocation2 + $0x30c0] sm:$0xff]
    %v8570 = vld [vmem:[#allocation2 + $0x30c8] sm:$0xff]
    %v8571 = vld [vmem:[#allocation2 + $0x30d0] sm:$0xff]
    %v8572 = vld [vmem:[#allocation2 + $0x30d8] sm:$0xff]
    %v8573 = vld [vmem:[#allocation2 + $0x30e0] sm:$0xff]
    %v8574 = vld [vmem:[#allocation2 + $0x30e8] sm:$0xff]
    %v8575 = vld [vmem:[#allocation2 + $0x30f0] sm:$0xff]
    %v8576 = vld [vmem:[#allocation2 + $0x30f8] sm:$0xff]
    %v8577 = vld [vmem:[#allocation2 + $0x3100] sm:$0xff]
    %v8578 = vld [vmem:[#allocation2 + $0x3108] sm:$0xff]
    %v8579 = vld [vmem:[#allocation2 + $0x3110] sm:$0xff]
    %v8580 = vld [vmem:[#allocation2 + $0x3118] sm:$0xff]
    %v8581 = vld [vmem:[#allocation2 + $0x3120] sm:$0xff]
    %v8582 = vld [vmem:[#allocation2 + $0x3128] sm:$0xff]
    %v8583 = vld [vmem:[#allocation2 + $0x3130] sm:$0xff]
    %v8584 = vld [vmem:[#allocation2 + $0x3138] sm:$0xff]
    %v8585 = vld [vmem:[#allocation2 + $0x3140] sm:$0xff]
    %v8586 = vld [vmem:[#allocation2 + $0x3148] sm:$0xff]
    %v8587 = vld [vmem:[#allocation2 + $0x3150] sm:$0xff]
    %v8588 = vld [vmem:[#allocation2 + $0x3158] sm:$0xff]
    %v8589 = vld [vmem:[#allocation2 + $0x3160] sm:$0xff]
    %v8590 = vld [vmem:[#allocation2 + $0x3168] sm:$0xff]
    %v8591 = vld [vmem:[#allocation2 + $0x3170] sm:$0xff]
    %v8592 = vld [vmem:[#allocation2 + $0x3178] sm:$0xff]
    %v8593 = vld [vmem:[#allocation2 + $0x3180] sm:$0xff]
    %v8594 = vld [vmem:[#allocation2 + $0x3188] sm:$0xff]
    %v8595 = vld [vmem:[#allocation2 + $0x3190] sm:$0xff]
    %v8596 = vld [vmem:[#allocation2 + $0x3198] sm:$0xff]
    %v8597 = vld [vmem:[#allocation2 + $0x31a0] sm:$0xff]
    %v8598 = vld [vmem:[#allocation2 + $0x31a8] sm:$0xff]
    %v8599 = vld [vmem:[#allocation2 + $0x31b0] sm:$0xff]
    %v8600 = vld [vmem:[#allocation2 + $0x31b8] sm:$0xff]
    %v8601 = vld [vmem:[#allocation2 + $0x31c0] sm:$0xff]
    %v8602 = vld [vmem:[#allocation2 + $0x31c8] sm:$0xff]
    %v8603 = vld [vmem:[#allocation2 + $0x31d0] sm:$0xff]
    %v8604 = vld [vmem:[#allocation2 + $0x31d8] sm:$0xff]
    %v8605 = vld [vmem:[#allocation2 + $0x31e0] sm:$0xff]
    %v8606 = vld [vmem:[#allocation2 + $0x31e8] sm:$0xff]
    %v8607 = vld [vmem:[#allocation2 + $0x31f0] sm:$0xff]
    %v8608 = vld [vmem:[#allocation2 + $0x31f8] sm:$0xff]
    %v8609 = vld [vmem:[#allocation2 + $0x3200] sm:$0xff]
    %v8610 = vld [vmem:[#allocation2 + $0x3208] sm:$0xff]
    %v8611 = vld [vmem:[#allocation2 + $0x3210] sm:$0xff]
    %v8612 = vld [vmem:[#allocation2 + $0x3218] sm:$0xff]
    %v8613 = vld [vmem:[#allocation2 + $0x3220] sm:$0xff]
    %v8614 = vld [vmem:[#allocation2 + $0x3228] sm:$0xff]
    %v8615 = vld [vmem:[#allocation2 + $0x3230] sm:$0xff]
    %v8616 = vld [vmem:[#allocation2 + $0x3238] sm:$0xff]
    %v8617 = vld [vmem:[#allocation2 + $0x3240] sm:$0xff]
    %v8618 = vld [vmem:[#allocation2 + $0x3248] sm:$0xff]
    %v8619 = vld [vmem:[#allocation2 + $0x3250] sm:$0xff]
    %v8620 = vld [vmem:[#allocation2 + $0x3258] sm:$0xff]
    %v8621 = vld [vmem:[#allocation2 + $0x3260] sm:$0xff]
    %v8622 = vld [vmem:[#allocation2 + $0x3268] sm:$0xff]
    %v8623 = vld [vmem:[#allocation2 + $0x3270] sm:$0xff]
    %v8624 = vld [vmem:[#allocation2 + $0x3278] sm:$0xff]
    %v8625 = vld [vmem:[#allocation2 + $0x3280] sm:$0xff]
    %v8626 = vld [vmem:[#allocation2 + $0x3288] sm:$0xff]
    %v8627 = vld [vmem:[#allocation2 + $0x3290] sm:$0xff]
    %v8628 = vld [vmem:[#allocation2 + $0x3298] sm:$0xff]
    %v8629 = vld [vmem:[#allocation2 + $0x32a0] sm:$0xff]
    %v8630 = vld [vmem:[#allocation2 + $0x32a8] sm:$0xff]
    %v8631 = vld [vmem:[#allocation2 + $0x32b0] sm:$0xff]
    %v8632 = vld [vmem:[#allocation2 + $0x32b8] sm:$0xff]
    %v8633 = vld [vmem:[#allocation2 + $0x32c0] sm:$0xff]
    %v8634 = vld [vmem:[#allocation2 + $0x32c8] sm:$0xff]
    %v8635 = vld [vmem:[#allocation2 + $0x32d0] sm:$0xff]
    %v8636 = vld [vmem:[#allocation2 + $0x32d8] sm:$0xff]
    %v8637 = vld [vmem:[#allocation2 + $0x32e0] sm:$0xff]
    %v8638 = vld [vmem:[#allocation2 + $0x32e8] sm:$0xff]
    %v8639 = vld [vmem:[#allocation2 + $0x32f0] sm:$0xff]
    %v8640 = vld [vmem:[#allocation2 + $0x32f8] sm:$0xff]
    %v8641 = vld [vmem:[#allocation2 + $0x3300] sm:$0xff]
    %v8642 = vld [vmem:[#allocation2 + $0x3308] sm:$0xff]
    %v8643 = vld [vmem:[#allocation2 + $0x3310] sm:$0xff]
    %v8644 = vld [vmem:[#allocation2 + $0x3318] sm:$0xff]
    %v8645 = vld [vmem:[#allocation2 + $0x3320] sm:$0xff]
    %v8646 = vld [vmem:[#allocation2 + $0x3328] sm:$0xff]
    %v8647 = vld [vmem:[#allocation2 + $0x3330] sm:$0xff]
    %v8648 = vld [vmem:[#allocation2 + $0x3338] sm:$0xff]
    %v8649 = vld [vmem:[#allocation2 + $0x3340] sm:$0xff]
    %v8650 = vld [vmem:[#allocation2 + $0x3348] sm:$0xff]
    %v8651 = vld [vmem:[#allocation2 + $0x3350] sm:$0xff]
    %v8652 = vld [vmem:[#allocation2 + $0x3358] sm:$0xff]
    %v8653 = vld [vmem:[#allocation2 + $0x3360] sm:$0xff]
    %v8654 = vld [vmem:[#allocation2 + $0x3368] sm:$0xff]
    %v8655 = vld [vmem:[#allocation2 + $0x3370] sm:$0xff]
    %v8656 = vld [vmem:[#allocation2 + $0x3378] sm:$0xff]
    %v8657 = vld [vmem:[#allocation2 + $0x3380] sm:$0xff]
    %v8658 = vld [vmem:[#allocation2 + $0x3388] sm:$0xff]
    %v8659 = vld [vmem:[#allocation2 + $0x3390] sm:$0xff]
    %v8660 = vld [vmem:[#allocation2 + $0x3398] sm:$0xff]
    %v8661 = vld [vmem:[#allocation2 + $0x33a0] sm:$0xff]
    %v8662 = vld [vmem:[#allocation2 + $0x33a8] sm:$0xff]
    %v8663 = vld [vmem:[#allocation2 + $0x33b0] sm:$0xff]
    %v8664 = vld [vmem:[#allocation2 + $0x33b8] sm:$0xff]
    %v8665 = vld [vmem:[#allocation2 + $0x33c0] sm:$0xff]
    %v8666 = vld [vmem:[#allocation2 + $0x33c8] sm:$0xff]
    %v8667 = vld [vmem:[#allocation2 + $0x33d0] sm:$0xff]
    %v8668 = vld [vmem:[#allocation2 + $0x33d8] sm:$0xff]
    %v8669 = vld [vmem:[#allocation2 + $0x33e0] sm:$0xff]
    %v8670 = vld [vmem:[#allocation2 + $0x33e8] sm:$0xff]
    %v8671 = vld [vmem:[#allocation2 + $0x33f0] sm:$0xff]
    %v8672 = vld [vmem:[#allocation2 + $0x33f8] sm:$0xff]
    %8673 = vmatprep.subr.mxu0 0.0
    %8674 = vmatpush1.msra.mxu0 %v8545
    %8675 = vmatprep.subr.mxu0 0.0
    %8676 = vmatpush1.msra.mxu0 %v8546
    %8677 = vmatprep.subr.mxu0 0.0
    %8678 = vmatpush1.msra.mxu0 %v8547
    %8679 = vmatprep.subr.mxu0 0.0
    %8680 = vmatpush1.msra.mxu0 %v8548
    %8681 = vmatprep.subr.mxu0 0.0
    %8682 = vmatpush1.msra.mxu0 %v8549
    %8683 = vmatprep.subr.mxu0 0.0
    %8684 = vmatpush1.msra.mxu0 %v8550
    %8685 = vmatprep.subr.mxu0 0.0
    %8686 = vmatpush1.msra.mxu0 %v8551
    %8687 = vmatprep.subr.mxu0 0.0
    %8688 = vmatpush1.msra.mxu0 %v8552
    %8689 = vmatprep.subr.mxu0 0.0
    %8690 = vmatpush1.msra.mxu0 %v8553
    %8691 = vmatprep.subr.mxu0 0.0
    %8692 = vmatpush1.msra.mxu0 %v8554
    %8693 = vmatprep.subr.mxu0 0.0
    %8694 = vmatpush1.msra.mxu0 %v8555
    %8695 = vmatprep.subr.mxu0 0.0
    %8696 = vmatpush1.msra.mxu0 %v8556
    %8697 = vmatprep.subr.mxu0 0.0
    %8698 = vmatpush1.msra.mxu0 %v8557
    %8699 = vmatprep.subr.mxu0 0.0
    %8700 = vmatpush1.msra.mxu0 %v8558
    %8701 = vmatprep.subr.mxu0 0.0
    %8702 = vmatpush1.msra.mxu0 %v8559
    %8703 = vmatprep.subr.mxu0 0.0
    %8704 = vmatpush1.msra.mxu0 %v8560
    %8705 = vmatprep.subr.mxu0 0.0
    %8706 = vmatpush1.msra.mxu0 %v8561
    %8707 = vmatprep.subr.mxu0 0.0
    %8708 = vmatpush1.msra.mxu0 %v8562
    %8709 = vmatprep.subr.mxu0 0.0
    %8710 = vmatpush1.msra.mxu0 %v8563
    %8711 = vmatprep.subr.mxu0 0.0
    %8712 = vmatpush1.msra.mxu0 %v8564
    %8713 = vmatprep.subr.mxu0 0.0
    %8714 = vmatpush1.msra.mxu0 %v8565
    %8715 = vmatprep.subr.mxu0 0.0
    %8716 = vmatpush1.msra.mxu0 %v8566
    %8717 = vmatprep.subr.mxu0 0.0
    %8718 = vmatpush1.msra.mxu0 %v8567
    %8719 = vmatprep.subr.mxu0 0.0
    %8720 = vmatpush1.msra.mxu0 %v8568
    %8721 = vmatprep.subr.mxu0 0.0
    %8722 = vmatpush1.msra.mxu0 %v8569
    %8723 = vmatprep.subr.mxu0 0.0
    %8724 = vmatpush1.msra.mxu0 %v8570
    %8725 = vmatprep.subr.mxu0 0.0
    %8726 = vmatpush1.msra.mxu0 %v8571
    %8727 = vmatprep.subr.mxu0 0.0
    %8728 = vmatpush1.msra.mxu0 %v8572
    %8729 = vmatprep.subr.mxu0 0.0
    %8730 = vmatpush1.msra.mxu0 %v8573
    %8731 = vmatprep.subr.mxu0 0.0
    %8732 = vmatpush1.msra.mxu0 %v8574
    %8733 = vmatprep.subr.mxu0 0.0
    %8734 = vmatpush1.msra.mxu0 %v8575
    %8735 = vmatprep.subr.mxu0 0.0
    %8736 = vmatpush1.msra.mxu0 %v8576
    %8737 = vmatprep.mubr.f32.mxu0 %v8538
    %8738 = vmatmul.mubr.f32.gmra.mrb[0].mxu0 %v8537
    %v8739 = vpop.f32.mrb[0].mxu0
    %v8740 = vadd.f32 0.0, %v8739
    %v8741 = vpop.f32.mrb[0].mxu0
    %8742 = vdwg.mxu0
    %8743 = vmatprep.subr.mxu0 0.0
    %8744 = vmatpush1.msra.mxu0 %v8577
    %8745 = vmatprep.subr.mxu0 0.0
    %8746 = vmatpush1.msra.mxu0 %v8578
    %8747 = vmatprep.subr.mxu0 0.0
    %8748 = vmatpush1.msra.mxu0 %v8579
    %8749 = vmatprep.subr.mxu0 0.0
    %8750 = vmatpush1.msra.mxu0 %v8580
    %8751 = vmatprep.subr.mxu0 0.0
    %8752 = vmatpush1.msra.mxu0 %v8581
    %8753 = vmatprep.subr.mxu0 0.0
    %8754 = vmatpush1.msra.mxu0 %v8582
    %8755 = vmatprep.subr.mxu0 0.0
    %8756 = vmatpush1.msra.mxu0 %v8583
    %8757 = vmatprep.subr.mxu0 0.0
    %8758 = vmatpush1.msra.mxu0 %v8584
    %8759 = vmatprep.subr.mxu0 0.0
    %8760 = vmatpush1.msra.mxu0 %v8585
    %8761 = vmatprep.subr.mxu0 0.0
    %8762 = vmatpush1.msra.mxu0 %v8586
    %8763 = vmatprep.subr.mxu0 0.0
    %8764 = vmatpush1.msra.mxu0 %v8587
    %8765 = vmatprep.subr.mxu0 0.0
    %8766 = vmatpush1.msra.mxu0 %v8588
    %8767 = vmatprep.subr.mxu0 0.0
    %8768 = vmatpush1.msra.mxu0 %v8589
    %8769 = vmatprep.subr.mxu0 0.0
    %8770 = vmatpush1.msra.mxu0 %v8590
    %8771 = vmatprep.subr.mxu0 0.0
    %8772 = vmatpush1.msra.mxu0 %v8591
    %8773 = vmatprep.subr.mxu0 0.0
    %8774 = vmatpush1.msra.mxu0 %v8592
    %8775 = vmatprep.subr.mxu0 0.0
    %8776 = vmatpush1.msra.mxu0 %v8593
    %8777 = vmatprep.subr.mxu0 0.0
    %8778 = vmatpush1.msra.mxu0 %v8594
    %8779 = vmatprep.subr.mxu0 0.0
    %8780 = vmatpush1.msra.mxu0 %v8595
    %8781 = vmatprep.subr.mxu0 0.0
    %8782 = vmatpush1.msra.mxu0 %v8596
    %8783 = vmatprep.subr.mxu0 0.0
    %8784 = vmatpush1.msra.mxu0 %v8597
    %8785 = vmatprep.subr.mxu0 0.0
    %8786 = vmatpush1.msra.mxu0 %v8598
    %8787 = vmatprep.subr.mxu0 0.0
    %8788 = vmatpush1.msra.mxu0 %v8599
    %8789 = vmatprep.subr.mxu0 0.0
    %8790 = vmatpush1.msra.mxu0 %v8600
    %8791 = vmatprep.subr.mxu0 0.0
    %8792 = vmatpush1.msra.mxu0 %v8601
    %8793 = vmatprep.subr.mxu0 0.0
    %8794 = vmatpush1.msra.mxu0 %v8602
    %8795 = vmatprep.subr.mxu0 0.0
    %8796 = vmatpush1.msra.mxu0 %v8603
    %8797 = vmatprep.subr.mxu0 0.0
    %8798 = vmatpush1.msra.mxu0 %v8604
    %8799 = vmatprep.subr.mxu0 0.0
    %8800 = vmatpush1.msra.mxu0 %v8605
    %8801 = vmatprep.subr.mxu0 0.0
    %8802 = vmatpush1.msra.mxu0 %v8606
    %8803 = vmatprep.subr.mxu0 0.0
    %8804 = vmatpush1.msra.mxu0 %v8607
    %8805 = vmatprep.subr.mxu0 0.0
    %8806 = vmatpush1.msra.mxu0 %v8608
    %8807 = vmatprep.mubr.f32.mxu0 %v8540
    %8808 = vmatmul.mubr.f32.gmra.mrb[0].mxu0 %v8539
    %v8809 = vpop.f32.mrb[0].mxu0
    %v8810 = vadd.f32 %v8740, %v8809
    %v8811 = vpop.f32.mrb[0].mxu0
    %8812 = vdwg.mxu0
    %8813 = vmatprep.subr.mxu0 0.0
    %8814 = vmatpush1.msra.mxu0 %v8609
    %8815 = vmatprep.subr.mxu0 0.0
    %8816 = vmatpush1.msra.mxu0 %v8610
    %8817 = vmatprep.subr.mxu0 0.0
    %8818 = vmatpush1.msra.mxu0 %v8611
    %8819 = vmatprep.subr.mxu0 0.0
    %8820 = vmatpush1.msra.mxu0 %v8612
    %8821 = vmatprep.subr.mxu0 0.0
    %8822 = vmatpush1.msra.mxu0 %v8613
    %8823 = vmatprep.subr.mxu0 0.0
    %8824 = vmatpush1.msra.mxu0 %v8614
    %8825 = vmatprep.subr.mxu0 0.0
    %8826 = vmatpush1.msra.mxu0 %v8615
    %8827 = vmatprep.subr.mxu0 0.0
    %8828 = vmatpush1.msra.mxu0 %v8616
    %8829 = vmatprep.subr.mxu0 0.0
    %8830 = vmatpush1.msra.mxu0 %v8617
    %8831 = vmatprep.subr.mxu0 0.0
    %8832 = vmatpush1.msra.mxu0 %v8618
    %8833 = vmatprep.subr.mxu0 0.0
    %8834 = vmatpush1.msra.mxu0 %v8619
    %8835 = vmatprep.subr.mxu0 0.0
    %8836 = vmatpush1.msra.mxu0 %v8620
    %8837 = vmatprep.subr.mxu0 0.0
    %8838 = vmatpush1.msra.mxu0 %v8621
    %8839 = vmatprep.subr.mxu0 0.0
    %8840 = vmatpush1.msra.mxu0 %v8622
    %8841 = vmatprep.subr.mxu0 0.0
    %8842 = vmatpush1.msra.mxu0 %v8623
    %8843 = vmatprep.subr.mxu0 0.0
    %8844 = vmatpush1.msra.mxu0 %v8624
    %8845 = vmatprep.subr.mxu0 0.0
    %8846 = vmatpush1.msra.mxu0 %v8625
    %8847 = vmatprep.subr.mxu0 0.0
    %8848 = vmatpush1.msra.mxu0 %v8626
    %8849 = vmatprep.subr.mxu0 0.0
    %8850 = vmatpush1.msra.mxu0 %v8627
    %8851 = vmatprep.subr.mxu0 0.0
    %8852 = vmatpush1.msra.mxu0 %v8628
    %8853 = vmatprep.subr.mxu0 0.0
    %8854 = vmatpush1.msra.mxu0 %v8629
    %8855 = vmatprep.subr.mxu0 0.0
    %8856 = vmatpush1.msra.mxu0 %v8630
    %8857 = vmatprep.subr.mxu0 0.0
    %8858 = vmatpush1.msra.mxu0 %v8631
    %8859 = vmatprep.subr.mxu0 0.0
    %8860 = vmatpush1.msra.mxu0 %v8632
    %8861 = vmatprep.subr.mxu0 0.0
    %8862 = vmatpush1.msra.mxu0 %v8633
    %8863 = vmatprep.subr.mxu0 0.0
    %8864 = vmatpush1.msra.mxu0 %v8634
    %8865 = vmatprep.subr.mxu0 0.0
    %8866 = vmatpush1.msra.mxu0 %v8635
    %8867 = vmatprep.subr.mxu0 0.0
    %8868 = vmatpush1.msra.mxu0 %v8636
    %8869 = vmatprep.subr.mxu0 0.0
    %8870 = vmatpush1.msra.mxu0 %v8637
    %8871 = vmatprep.subr.mxu0 0.0
    %8872 = vmatpush1.msra.mxu0 %v8638
    %8873 = vmatprep.subr.mxu0 0.0
    %8874 = vmatpush1.msra.mxu0 %v8639
    %8875 = vmatprep.subr.mxu0 0.0
    %8876 = vmatpush1.msra.mxu0 %v8640
    %8877 = vmatprep.mubr.f32.mxu0 %v8542
    %8878 = vmatmul.mubr.f32.gmra.mrb[0].mxu0 %v8541
    %v8879 = vpop.f32.mrb[0].mxu0
    %v8880 = vadd.f32 %v8810, %v8879
    %v8881 = vpop.f32.mrb[0].mxu0
    %8882 = vdwg.mxu0
    %8883 = vmatprep.subr.mxu0 0.0
    %8884 = vmatpush1.msra.mxu0 %v8641
    %8885 = vmatprep.subr.mxu0 0.0
    %8886 = vmatpush1.msra.mxu0 %v8642
    %8887 = vmatprep.subr.mxu0 0.0
    %8888 = vmatpush1.msra.mxu0 %v8643
    %8889 = vmatprep.subr.mxu0 0.0
    %8890 = vmatpush1.msra.mxu0 %v8644
    %8891 = vmatprep.subr.mxu0 0.0
    %8892 = vmatpush1.msra.mxu0 %v8645
    %8893 = vmatprep.subr.mxu0 0.0
    %8894 = vmatpush1.msra.mxu0 %v8646
    %8895 = vmatprep.subr.mxu0 0.0
    %8896 = vmatpush1.msra.mxu0 %v8647
    %8897 = vmatprep.subr.mxu0 0.0
    %8898 = vmatpush1.msra.mxu0 %v8648
    %8899 = vmatprep.subr.mxu0 0.0
    %8900 = vmatpush1.msra.mxu0 %v8649
    %8901 = vmatprep.subr.mxu0 0.0
    %8902 = vmatpush1.msra.mxu0 %v8650
    %8903 = vmatprep.subr.mxu0 0.0
    %8904 = vmatpush1.msra.mxu0 %v8651
    %8905 = vmatprep.subr.mxu0 0.0
    %8906 = vmatpush1.msra.mxu0 %v8652
    %8907 = vmatprep.subr.mxu0 0.0
    %8908 = vmatpush1.msra.mxu0 %v8653
    %8909 = vmatprep.subr.mxu0 0.0
    %8910 = vmatpush1.msra.mxu0 %v8654
    %8911 = vmatprep.subr.mxu0 0.0
    %8912 = vmatpush1.msra.mxu0 %v8655
    %8913 = vmatprep.subr.mxu0 0.0
    %8914 = vmatpush1.msra.mxu0 %v8656
    %8915 = vmatprep.subr.mxu0 0.0
    %8916 = vmatpush1.msra.mxu0 %v8657
    %8917 = vmatprep.subr.mxu0 0.0
    %8918 = vmatpush1.msra.mxu0 %v8658
    %8919 = vmatprep.subr.mxu0 0.0
    %8920 = vmatpush1.msra.mxu0 %v8659
    %8921 = vmatprep.subr.mxu0 0.0
    %8922 = vmatpush1.msra.mxu0 %v8660
    %8923 = vmatprep.subr.mxu0 0.0
    %8924 = vmatpush1.msra.mxu0 %v8661
    %8925 = vmatprep.subr.mxu0 0.0
    %8926 = vmatpush1.msra.mxu0 %v8662
    %8927 = vmatprep.subr.mxu0 0.0
    %8928 = vmatpush1.msra.mxu0 %v8663
    %8929 = vmatprep.subr.mxu0 0.0
    %8930 = vmatpush1.msra.mxu0 %v8664
    %8931 = vmatprep.subr.mxu0 0.0
    %8932 = vmatpush1.msra.mxu0 %v8665
    %8933 = vmatprep.subr.mxu0 0.0
    %8934 = vmatpush1.msra.mxu0 %v8666
    %8935 = vmatprep.subr.mxu0 0.0
    %8936 = vmatpush1.msra.mxu0 %v8667
    %8937 = vmatprep.subr.mxu0 0.0
    %8938 = vmatpush1.msra.mxu0 %v8668
    %8939 = vmatprep.subr.mxu0 0.0
    %8940 = vmatpush1.msra.mxu0 %v8669
    %8941 = vmatprep.subr.mxu0 0.0
    %8942 = vmatpush1.msra.mxu0 %v8670
    %8943 = vmatprep.subr.mxu0 0.0
    %8944 = vmatpush1.msra.mxu0 %v8671
    %8945 = vmatprep.subr.mxu0 0.0
    %8946 = vmatpush1.msra.mxu0 %v8672
    %8947 = vmatprep.mubr.f32.mxu0 %v8544
    %8948 = vmatmul.mubr.f32.gmra.mrb[0].mxu0 %v8543
    %v8949 = vpop.f32.mrb[0].mxu0
    %v8950 = vadd.f32 %v8880, %v8949
    %v8951 = vpop.f32.mrb[0].mxu0
    %8952 = vdwg.mxu0
    %v8953 = vadd.f32 %v8536, %v8950
    %v8954 = vld [vmem:[%s1 + $0x340] sm:$0xff]
    %v8955 = vld [vmem:[%s1 + $0x348] sm:$0xff]
    %v8956 = vld [vmem:[%s1 + $0x350] sm:$0xff]
    %v8957 = vld [vmem:[%s1 + $0x358] sm:$0xff]
    %v8958 = vld [vmem:[%s1 + $0x360] sm:$0xff]
    %v8959 = vld [vmem:[%s1 + $0x368] sm:$0xff]
    %v8960 = vld [vmem:[%s1 + $0x370] sm:$0xff]
    %v8961 = vld [vmem:[%s1 + $0x378] sm:$0xff]
    %v8962 = vld [vmem:[#allocation2 + $0x3400] sm:$0xff]
    %v8963 = vld [vmem:[#allocation2 + $0x3408] sm:$0xff]
    %v8964 = vld [vmem:[#allocation2 + $0x3410] sm:$0xff]
    %v8965 = vld [vmem:[#allocation2 + $0x3418] sm:$0xff]
    %v8966 = vld [vmem:[#allocation2 + $0x3420] sm:$0xff]
    %v8967 = vld [vmem:[#allocation2 + $0x3428] sm:$0xff]
    %v8968 = vld [vmem:[#allocation2 + $0x3430] sm:$0xff]
    %v8969 = vld [vmem:[#allocation2 + $0x3438] sm:$0xff]
    %v8970 = vld [vmem:[#allocation2 + $0x3440] sm:$0xff]
    %v8971 = vld [vmem:[#allocation2 + $0x3448] sm:$0xff]
    %v8972 = vld [vmem:[#allocation2 + $0x3450] sm:$0xff]
    %v8973 = vld [vmem:[#allocation2 + $0x3458] sm:$0xff]
    %v8974 = vld [vmem:[#allocation2 + $0x3460] sm:$0xff]
    %v8975 = vld [vmem:[#allocation2 + $0x3468] sm:$0xff]
    %v8976 = vld [vmem:[#allocation2 + $0x3470] sm:$0xff]
    %v8977 = vld [vmem:[#allocation2 + $0x3478] sm:$0xff]
    %v8978 = vld [vmem:[#allocation2 + $0x3480] sm:$0xff]
    %v8979 = vld [vmem:[#allocation2 + $0x3488] sm:$0xff]
    %v8980 = vld [vmem:[#allocation2 + $0x3490] sm:$0xff]
    %v8981 = vld [vmem:[#allocation2 + $0x3498] sm:$0xff]
    %v8982 = vld [vmem:[#allocation2 + $0x34a0] sm:$0xff]
    %v8983 = vld [vmem:[#allocation2 + $0x34a8] sm:$0xff]
    %v8984 = vld [vmem:[#allocation2 + $0x34b0] sm:$0xff]
    %v8985 = vld [vmem:[#allocation2 + $0x34b8] sm:$0xff]
    %v8986 = vld [vmem:[#allocation2 + $0x34c0] sm:$0xff]
    %v8987 = vld [vmem:[#allocation2 + $0x34c8] sm:$0xff]
    %v8988 = vld [vmem:[#allocation2 + $0x34d0] sm:$0xff]
    %v8989 = vld [vmem:[#allocation2 + $0x34d8] sm:$0xff]
    %v8990 = vld [vmem:[#allocation2 + $0x34e0] sm:$0xff]
    %v8991 = vld [vmem:[#allocation2 + $0x34e8] sm:$0xff]
    %v8992 = vld [vmem:[#allocation2 + $0x34f0] sm:$0xff]
    %v8993 = vld [vmem:[#allocation2 + $0x34f8] sm:$0xff]
    %v8994 = vld [vmem:[#allocation2 + $0x3500] sm:$0xff]
    %v8995 = vld [vmem:[#allocation2 + $0x3508] sm:$0xff]
    %v8996 = vld [vmem:[#allocation2 + $0x3510] sm:$0xff]
    %v8997 = vld [vmem:[#allocation2 + $0x3518] sm:$0xff]
    %v8998 = vld [vmem:[#allocation2 + $0x3520] sm:$0xff]
    %v8999 = vld [vmem:[#allocation2 + $0x3528] sm:$0xff]
    %v9000 = vld [vmem:[#allocation2 + $0x3530] sm:$0xff]
    %v9001 = vld [vmem:[#allocation2 + $0x3538] sm:$0xff]
    %v9002 = vld [vmem:[#allocation2 + $0x3540] sm:$0xff]
    %v9003 = vld [vmem:[#allocation2 + $0x3548] sm:$0xff]
    %v9004 = vld [vmem:[#allocation2 + $0x3550] sm:$0xff]
    %v9005 = vld [vmem:[#allocation2 + $0x3558] sm:$0xff]
    %v9006 = vld [vmem:[#allocation2 + $0x3560] sm:$0xff]
    %v9007 = vld [vmem:[#allocation2 + $0x3568] sm:$0xff]
    %v9008 = vld [vmem:[#allocation2 + $0x3570] sm:$0xff]
    %v9009 = vld [vmem:[#allocation2 + $0x3578] sm:$0xff]
    %v9010 = vld [vmem:[#allocation2 + $0x3580] sm:$0xff]
    %v9011 = vld [vmem:[#allocation2 + $0x3588] sm:$0xff]
    %v9012 = vld [vmem:[#allocation2 + $0x3590] sm:$0xff]
    %v9013 = vld [vmem:[#allocation2 + $0x3598] sm:$0xff]
    %v9014 = vld [vmem:[#allocation2 + $0x35a0] sm:$0xff]
    %v9015 = vld [vmem:[#allocation2 + $0x35a8] sm:$0xff]
    %v9016 = vld [vmem:[#allocation2 + $0x35b0] sm:$0xff]
    %v9017 = vld [vmem:[#allocation2 + $0x35b8] sm:$0xff]
    %v9018 = vld [vmem:[#allocation2 + $0x35c0] sm:$0xff]
    %v9019 = vld [vmem:[#allocation2 + $0x35c8] sm:$0xff]
    %v9020 = vld [vmem:[#allocation2 + $0x35d0] sm:$0xff]
    %v9021 = vld [vmem:[#allocation2 + $0x35d8] sm:$0xff]
    %v9022 = vld [vmem:[#allocation2 + $0x35e0] sm:$0xff]
    %v9023 = vld [vmem:[#allocation2 + $0x35e8] sm:$0xff]
    %v9024 = vld [vmem:[#allocation2 + $0x35f0] sm:$0xff]
    %v9025 = vld [vmem:[#allocation2 + $0x35f8] sm:$0xff]
    %v9026 = vld [vmem:[#allocation2 + $0x3600] sm:$0xff]
    %v9027 = vld [vmem:[#allocation2 + $0x3608] sm:$0xff]
    %v9028 = vld [vmem:[#allocation2 + $0x3610] sm:$0xff]
    %v9029 = vld [vmem:[#allocation2 + $0x3618] sm:$0xff]
    %v9030 = vld [vmem:[#allocation2 + $0x3620] sm:$0xff]
    %v9031 = vld [vmem:[#allocation2 + $0x3628] sm:$0xff]
    %v9032 = vld [vmem:[#allocation2 + $0x3630] sm:$0xff]
    %v9033 = vld [vmem:[#allocation2 + $0x3638] sm:$0xff]
    %v9034 = vld [vmem:[#allocation2 + $0x3640] sm:$0xff]
    %v9035 = vld [vmem:[#allocation2 + $0x3648] sm:$0xff]
    %v9036 = vld [vmem:[#allocation2 + $0x3650] sm:$0xff]
    %v9037 = vld [vmem:[#allocation2 + $0x3658] sm:$0xff]
    %v9038 = vld [vmem:[#allocation2 + $0x3660] sm:$0xff]
    %v9039 = vld [vmem:[#allocation2 + $0x3668] sm:$0xff]
    %v9040 = vld [vmem:[#allocation2 + $0x3670] sm:$0xff]
    %v9041 = vld [vmem:[#allocation2 + $0x3678] sm:$0xff]
    %v9042 = vld [vmem:[#allocation2 + $0x3680] sm:$0xff]
    %v9043 = vld [vmem:[#allocation2 + $0x3688] sm:$0xff]
    %v9044 = vld [vmem:[#allocation2 + $0x3690] sm:$0xff]
    %v9045 = vld [vmem:[#allocation2 + $0x3698] sm:$0xff]
    %v9046 = vld [vmem:[#allocation2 + $0x36a0] sm:$0xff]
    %v9047 = vld [vmem:[#allocation2 + $0x36a8] sm:$0xff]
    %v9048 = vld [vmem:[#allocation2 + $0x36b0] sm:$0xff]
    %v9049 = vld [vmem:[#allocation2 + $0x36b8] sm:$0xff]
    %v9050 = vld [vmem:[#allocation2 + $0x36c0] sm:$0xff]
    %v9051 = vld [vmem:[#allocation2 + $0x36c8] sm:$0xff]
    %v9052 = vld [vmem:[#allocation2 + $0x36d0] sm:$0xff]
    %v9053 = vld [vmem:[#allocation2 + $0x36d8] sm:$0xff]
    %v9054 = vld [vmem:[#allocation2 + $0x36e0] sm:$0xff]
    %v9055 = vld [vmem:[#allocation2 + $0x36e8] sm:$0xff]
    %v9056 = vld [vmem:[#allocation2 + $0x36f0] sm:$0xff]
    %v9057 = vld [vmem:[#allocation2 + $0x36f8] sm:$0xff]
    %v9058 = vld [vmem:[#allocation2 + $0x3700] sm:$0xff]
    %v9059 = vld [vmem:[#allocation2 + $0x3708] sm:$0xff]
    %v9060 = vld [vmem:[#allocation2 + $0x3710] sm:$0xff]
    %v9061 = vld [vmem:[#allocation2 + $0x3718] sm:$0xff]
    %v9062 = vld [vmem:[#allocation2 + $0x3720] sm:$0xff]
    %v9063 = vld [vmem:[#allocation2 + $0x3728] sm:$0xff]
    %v9064 = vld [vmem:[#allocation2 + $0x3730] sm:$0xff]
    %v9065 = vld [vmem:[#allocation2 + $0x3738] sm:$0xff]
    %v9066 = vld [vmem:[#allocation2 + $0x3740] sm:$0xff]
    %v9067 = vld [vmem:[#allocation2 + $0x3748] sm:$0xff]
    %v9068 = vld [vmem:[#allocation2 + $0x3750] sm:$0xff]
    %v9069 = vld [vmem:[#allocation2 + $0x3758] sm:$0xff]
    %v9070 = vld [vmem:[#allocation2 + $0x3760] sm:$0xff]
    %v9071 = vld [vmem:[#allocation2 + $0x3768] sm:$0xff]
    %v9072 = vld [vmem:[#allocation2 + $0x3770] sm:$0xff]
    %v9073 = vld [vmem:[#allocation2 + $0x3778] sm:$0xff]
    %v9074 = vld [vmem:[#allocation2 + $0x3780] sm:$0xff]
    %v9075 = vld [vmem:[#allocation2 + $0x3788] sm:$0xff]
    %v9076 = vld [vmem:[#allocation2 + $0x3790] sm:$0xff]
    %v9077 = vld [vmem:[#allocation2 + $0x3798] sm:$0xff]
    %v9078 = vld [vmem:[#allocation2 + $0x37a0] sm:$0xff]
    %v9079 = vld [vmem:[#allocation2 + $0x37a8] sm:$0xff]
    %v9080 = vld [vmem:[#allocation2 + $0x37b0] sm:$0xff]
    %v9081 = vld [vmem:[#allocation2 + $0x37b8] sm:$0xff]
    %v9082 = vld [vmem:[#allocation2 + $0x37c0] sm:$0xff]
    %v9083 = vld [vmem:[#allocation2 + $0x37c8] sm:$0xff]
    %v9084 = vld [vmem:[#allocation2 + $0x37d0] sm:$0xff]
    %v9085 = vld [vmem:[#allocation2 + $0x37d8] sm:$0xff]
    %v9086 = vld [vmem:[#allocation2 + $0x37e0] sm:$0xff]
    %v9087 = vld [vmem:[#allocation2 + $0x37e8] sm:$0xff]
    %v9088 = vld [vmem:[#allocation2 + $0x37f0] sm:$0xff]
    %v9089 = vld [vmem:[#allocation2 + $0x37f8] sm:$0xff]
    %9090 = vmatprep.subr.mxu0 0.0
    %9091 = vmatpush1.msra.mxu0 %v8962
    %9092 = vmatprep.subr.mxu0 0.0
    %9093 = vmatpush1.msra.mxu0 %v8963
    %9094 = vmatprep.subr.mxu0 0.0
    %9095 = vmatpush1.msra.mxu0 %v8964
    %9096 = vmatprep.subr.mxu0 0.0
    %9097 = vmatpush1.msra.mxu0 %v8965
    %9098 = vmatprep.subr.mxu0 0.0
    %9099 = vmatpush1.msra.mxu0 %v8966
    %9100 = vmatprep.subr.mxu0 0.0
    %9101 = vmatpush1.msra.mxu0 %v8967
    %9102 = vmatprep.subr.mxu0 0.0
    %9103 = vmatpush1.msra.mxu0 %v8968
    %9104 = vmatprep.subr.mxu0 0.0
    %9105 = vmatpush1.msra.mxu0 %v8969
    %9106 = vmatprep.subr.mxu0 0.0
    %9107 = vmatpush1.msra.mxu0 %v8970
    %9108 = vmatprep.subr.mxu0 0.0
    %9109 = vmatpush1.msra.mxu0 %v8971
    %9110 = vmatprep.subr.mxu0 0.0
    %9111 = vmatpush1.msra.mxu0 %v8972
    %9112 = vmatprep.subr.mxu0 0.0
    %9113 = vmatpush1.msra.mxu0 %v8973
    %9114 = vmatprep.subr.mxu0 0.0
    %9115 = vmatpush1.msra.mxu0 %v8974
    %9116 = vmatprep.subr.mxu0 0.0
    %9117 = vmatpush1.msra.mxu0 %v8975
    %9118 = vmatprep.subr.mxu0 0.0
    %9119 = vmatpush1.msra.mxu0 %v8976
    %9120 = vmatprep.subr.mxu0 0.0
    %9121 = vmatpush1.msra.mxu0 %v8977
    %9122 = vmatprep.subr.mxu0 0.0
    %9123 = vmatpush1.msra.mxu0 %v8978
    %9124 = vmatprep.subr.mxu0 0.0
    %9125 = vmatpush1.msra.mxu0 %v8979
    %9126 = vmatprep.subr.mxu0 0.0
    %9127 = vmatpush1.msra.mxu0 %v8980
    %9128 = vmatprep.subr.mxu0 0.0
    %9129 = vmatpush1.msra.mxu0 %v8981
    %9130 = vmatprep.subr.mxu0 0.0
    %9131 = vmatpush1.msra.mxu0 %v8982
    %9132 = vmatprep.subr.mxu0 0.0
    %9133 = vmatpush1.msra.mxu0 %v8983
    %9134 = vmatprep.subr.mxu0 0.0
    %9135 = vmatpush1.msra.mxu0 %v8984
    %9136 = vmatprep.subr.mxu0 0.0
    %9137 = vmatpush1.msra.mxu0 %v8985
    %9138 = vmatprep.subr.mxu0 0.0
    %9139 = vmatpush1.msra.mxu0 %v8986
    %9140 = vmatprep.subr.mxu0 0.0
    %9141 = vmatpush1.msra.mxu0 %v8987
    %9142 = vmatprep.subr.mxu0 0.0
    %9143 = vmatpush1.msra.mxu0 %v8988
    %9144 = vmatprep.subr.mxu0 0.0
    %9145 = vmatpush1.msra.mxu0 %v8989
    %9146 = vmatprep.subr.mxu0 0.0
    %9147 = vmatpush1.msra.mxu0 %v8990
    %9148 = vmatprep.subr.mxu0 0.0
    %9149 = vmatpush1.msra.mxu0 %v8991
    %9150 = vmatprep.subr.mxu0 0.0
    %9151 = vmatpush1.msra.mxu0 %v8992
    %9152 = vmatprep.subr.mxu0 0.0
    %9153 = vmatpush1.msra.mxu0 %v8993
    %9154 = vmatprep.mubr.f32.mxu0 %v8955
    %9155 = vmatmul.mubr.f32.gmra.mrb[0].mxu0 %v8954
    %v9156 = vpop.f32.mrb[0].mxu0
    %v9157 = vadd.f32 0.0, %v9156
    %v9158 = vpop.f32.mrb[0].mxu0
    %9159 = vdwg.mxu0
    %9160 = vmatprep.subr.mxu0 0.0
    %9161 = vmatpush1.msra.mxu0 %v8994
    %9162 = vmatprep.subr.mxu0 0.0
    %9163 = vmatpush1.msra.mxu0 %v8995
    %9164 = vmatprep.subr.mxu0 0.0
    %9165 = vmatpush1.msra.mxu0 %v8996
    %9166 = vmatprep.subr.mxu0 0.0
    %9167 = vmatpush1.msra.mxu0 %v8997
    %9168 = vmatprep.subr.mxu0 0.0
    %9169 = vmatpush1.msra.mxu0 %v8998
    %9170 = vmatprep.subr.mxu0 0.0
    %9171 = vmatpush1.msra.mxu0 %v8999
    %9172 = vmatprep.subr.mxu0 0.0
    %9173 = vmatpush1.msra.mxu0 %v9000
    %9174 = vmatprep.subr.mxu0 0.0
    %9175 = vmatpush1.msra.mxu0 %v9001
    %9176 = vmatprep.subr.mxu0 0.0
    %9177 = vmatpush1.msra.mxu0 %v9002
    %9178 = vmatprep.subr.mxu0 0.0
    %9179 = vmatpush1.msra.mxu0 %v9003
    %9180 = vmatprep.subr.mxu0 0.0
    %9181 = vmatpush1.msra.mxu0 %v9004
    %9182 = vmatprep.subr.mxu0 0.0
    %9183 = vmatpush1.msra.mxu0 %v9005
    %9184 = vmatprep.subr.mxu0 0.0
    %9185 = vmatpush1.msra.mxu0 %v9006
    %9186 = vmatprep.subr.mxu0 0.0
    %9187 = vmatpush1.msra.mxu0 %v9007
    %9188 = vmatprep.subr.mxu0 0.0
    %9189 = vmatpush1.msra.mxu0 %v9008
    %9190 = vmatprep.subr.mxu0 0.0
    %9191 = vmatpush1.msra.mxu0 %v9009
    %9192 = vmatprep.subr.mxu0 0.0
    %9193 = vmatpush1.msra.mxu0 %v9010
    %9194 = vmatprep.subr.mxu0 0.0
    %9195 = vmatpush1.msra.mxu0 %v9011
    %9196 = vmatprep.subr.mxu0 0.0
    %9197 = vmatpush1.msra.mxu0 %v9012
    %9198 = vmatprep.subr.mxu0 0.0
    %9199 = vmatpush1.msra.mxu0 %v9013
    %9200 = vmatprep.subr.mxu0 0.0
    %9201 = vmatpush1.msra.mxu0 %v9014
    %9202 = vmatprep.subr.mxu0 0.0
    %9203 = vmatpush1.msra.mxu0 %v9015
    %9204 = vmatprep.subr.mxu0 0.0
    %9205 = vmatpush1.msra.mxu0 %v9016
    %9206 = vmatprep.subr.mxu0 0.0
    %9207 = vmatpush1.msra.mxu0 %v9017
    %9208 = vmatprep.subr.mxu0 0.0
    %9209 = vmatpush1.msra.mxu0 %v9018
    %9210 = vmatprep.subr.mxu0 0.0
    %9211 = vmatpush1.msra.mxu0 %v9019
    %9212 = vmatprep.subr.mxu0 0.0
    %9213 = vmatpush1.msra.mxu0 %v9020
    %9214 = vmatprep.subr.mxu0 0.0
    %9215 = vmatpush1.msra.mxu0 %v9021
    %9216 = vmatprep.subr.mxu0 0.0
    %9217 = vmatpush1.msra.mxu0 %v9022
    %9218 = vmatprep.subr.mxu0 0.0
    %9219 = vmatpush1.msra.mxu0 %v9023
    %9220 = vmatprep.subr.mxu0 0.0
    %9221 = vmatpush1.msra.mxu0 %v9024
    %9222 = vmatprep.subr.mxu0 0.0
    %9223 = vmatpush1.msra.mxu0 %v9025
    %9224 = vmatprep.mubr.f32.mxu0 %v8957
    %9225 = vmatmul.mubr.f32.gmra.mrb[0].mxu0 %v8956
    %v9226 = vpop.f32.mrb[0].mxu0
    %v9227 = vadd.f32 %v9157, %v9226
    %v9228 = vpop.f32.mrb[0].mxu0
    %9229 = vdwg.mxu0
    %9230 = vmatprep.subr.mxu0 0.0
    %9231 = vmatpush1.msra.mxu0 %v9026
    %9232 = vmatprep.subr.mxu0 0.0
    %9233 = vmatpush1.msra.mxu0 %v9027
    %9234 = vmatprep.subr.mxu0 0.0
    %9235 = vmatpush1.msra.mxu0 %v9028
    %9236 = vmatprep.subr.mxu0 0.0
    %9237 = vmatpush1.msra.mxu0 %v9029
    %9238 = vmatprep.subr.mxu0 0.0
    %9239 = vmatpush1.msra.mxu0 %v9030
    %9240 = vmatprep.subr.mxu0 0.0
    %9241 = vmatpush1.msra.mxu0 %v9031
    %9242 = vmatprep.subr.mxu0 0.0
    %9243 = vmatpush1.msra.mxu0 %v9032
    %9244 = vmatprep.subr.mxu0 0.0
    %9245 = vmatpush1.msra.mxu0 %v9033
    %9246 = vmatprep.subr.mxu0 0.0
    %9247 = vmatpush1.msra.mxu0 %v9034
    %9248 = vmatprep.subr.mxu0 0.0
    %9249 = vmatpush1.msra.mxu0 %v9035
    %9250 = vmatprep.subr.mxu0 0.0
    %9251 = vmatpush1.msra.mxu0 %v9036
    %9252 = vmatprep.subr.mxu0 0.0
    %9253 = vmatpush1.msra.mxu0 %v9037
    %9254 = vmatprep.subr.mxu0 0.0
    %9255 = vmatpush1.msra.mxu0 %v9038
    %9256 = vmatprep.subr.mxu0 0.0
    %9257 = vmatpush1.msra.mxu0 %v9039
    %9258 = vmatprep.subr.mxu0 0.0
    %9259 = vmatpush1.msra.mxu0 %v9040
    %9260 = vmatprep.subr.mxu0 0.0
    %9261 = vmatpush1.msra.mxu0 %v9041
    %9262 = vmatprep.subr.mxu0 0.0
    %9263 = vmatpush1.msra.mxu0 %v9042
    %9264 = vmatprep.subr.mxu0 0.0
    %9265 = vmatpush1.msra.mxu0 %v9043
    %9266 = vmatprep.subr.mxu0 0.0
    %9267 = vmatpush1.msra.mxu0 %v9044
    %9268 = vmatprep.subr.mxu0 0.0
    %9269 = vmatpush1.msra.mxu0 %v9045
    %9270 = vmatprep.subr.mxu0 0.0
    %9271 = vmatpush1.msra.mxu0 %v9046
    %9272 = vmatprep.subr.mxu0 0.0
    %9273 = vmatpush1.msra.mxu0 %v9047
    %9274 = vmatprep.subr.mxu0 0.0
    %9275 = vmatpush1.msra.mxu0 %v9048
    %9276 = vmatprep.subr.mxu0 0.0
    %9277 = vmatpush1.msra.mxu0 %v9049
    %9278 = vmatprep.subr.mxu0 0.0
    %9279 = vmatpush1.msra.mxu0 %v9050
    %9280 = vmatprep.subr.mxu0 0.0
    %9281 = vmatpush1.msra.mxu0 %v9051
    %9282 = vmatprep.subr.mxu0 0.0
    %9283 = vmatpush1.msra.mxu0 %v9052
    %9284 = vmatprep.subr.mxu0 0.0
    %9285 = vmatpush1.msra.mxu0 %v9053
    %9286 = vmatprep.subr.mxu0 0.0
    %9287 = vmatpush1.msra.mxu0 %v9054
    %9288 = vmatprep.subr.mxu0 0.0
    %9289 = vmatpush1.msra.mxu0 %v9055
    %9290 = vmatprep.subr.mxu0 0.0
    %9291 = vmatpush1.msra.mxu0 %v9056
    %9292 = vmatprep.subr.mxu0 0.0
    %9293 = vmatpush1.msra.mxu0 %v9057
    %9294 = vmatprep.mubr.f32.mxu0 %v8959
    %9295 = vmatmul.mubr.f32.gmra.mrb[0].mxu0 %v8958
    %v9296 = vpop.f32.mrb[0].mxu0
    %v9297 = vadd.f32 %v9227, %v9296
    %v9298 = vpop.f32.mrb[0].mxu0
    %9299 = vdwg.mxu0
    %9300 = vmatprep.subr.mxu0 0.0
    %9301 = vmatpush1.msra.mxu0 %v9058
    %9302 = vmatprep.subr.mxu0 0.0
    %9303 = vmatpush1.msra.mxu0 %v9059
    %9304 = vmatprep.subr.mxu0 0.0
    %9305 = vmatpush1.msra.mxu0 %v9060
    %9306 = vmatprep.subr.mxu0 0.0
    %9307 = vmatpush1.msra.mxu0 %v9061
    %9308 = vmatprep.subr.mxu0 0.0
    %9309 = vmatpush1.msra.mxu0 %v9062
    %9310 = vmatprep.subr.mxu0 0.0
    %9311 = vmatpush1.msra.mxu0 %v9063
    %9312 = vmatprep.subr.mxu0 0.0
    %9313 = vmatpush1.msra.mxu0 %v9064
    %9314 = vmatprep.subr.mxu0 0.0
    %9315 = vmatpush1.msra.mxu0 %v9065
    %9316 = vmatprep.subr.mxu0 0.0
    %9317 = vmatpush1.msra.mxu0 %v9066
    %9318 = vmatprep.subr.mxu0 0.0
    %9319 = vmatpush1.msra.mxu0 %v9067
    %9320 = vmatprep.subr.mxu0 0.0
    %9321 = vmatpush1.msra.mxu0 %v9068
    %9322 = vmatprep.subr.mxu0 0.0
    %9323 = vmatpush1.msra.mxu0 %v9069
    %9324 = vmatprep.subr.mxu0 0.0
    %9325 = vmatpush1.msra.mxu0 %v9070
    %9326 = vmatprep.subr.mxu0 0.0
    %9327 = vmatpush1.msra.mxu0 %v9071
    %9328 = vmatprep.subr.mxu0 0.0
    %9329 = vmatpush1.msra.mxu0 %v9072
    %9330 = vmatprep.subr.mxu0 0.0
    %9331 = vmatpush1.msra.mxu0 %v9073
    %9332 = vmatprep.subr.mxu0 0.0
    %9333 = vmatpush1.msra.mxu0 %v9074
    %9334 = vmatprep.subr.mxu0 0.0
    %9335 = vmatpush1.msra.mxu0 %v9075
    %9336 = vmatprep.subr.mxu0 0.0
    %9337 = vmatpush1.msra.mxu0 %v9076
    %9338 = vmatprep.subr.mxu0 0.0
    %9339 = vmatpush1.msra.mxu0 %v9077
    %9340 = vmatprep.subr.mxu0 0.0
    %9341 = vmatpush1.msra.mxu0 %v9078
    %9342 = vmatprep.subr.mxu0 0.0
    %9343 = vmatpush1.msra.mxu0 %v9079
    %9344 = vmatprep.subr.mxu0 0.0
    %9345 = vmatpush1.msra.mxu0 %v9080
    %9346 = vmatprep.subr.mxu0 0.0
    %9347 = vmatpush1.msra.mxu0 %v9081
    %9348 = vmatprep.subr.mxu0 0.0
    %9349 = vmatpush1.msra.mxu0 %v9082
    %9350 = vmatprep.subr.mxu0 0.0
    %9351 = vmatpush1.msra.mxu0 %v9083
    %9352 = vmatprep.subr.mxu0 0.0
    %9353 = vmatpush1.msra.mxu0 %v9084
    %9354 = vmatprep.subr.mxu0 0.0
    %9355 = vmatpush1.msra.mxu0 %v9085
    %9356 = vmatprep.subr.mxu0 0.0
    %9357 = vmatpush1.msra.mxu0 %v9086
    %9358 = vmatprep.subr.mxu0 0.0
    %9359 = vmatpush1.msra.mxu0 %v9087
    %9360 = vmatprep.subr.mxu0 0.0
    %9361 = vmatpush1.msra.mxu0 %v9088
    %9362 = vmatprep.subr.mxu0 0.0
    %9363 = vmatpush1.msra.mxu0 %v9089
    %9364 = vmatprep.mubr.f32.mxu0 %v8961
    %9365 = vmatmul.mubr.f32.gmra.mrb[0].mxu0 %v8960
    %v9366 = vpop.f32.mrb[0].mxu0
    %v9367 = vadd.f32 %v9297, %v9366
    %v9368 = vpop.f32.mrb[0].mxu0
    %9369 = vdwg.mxu0
    %v9370 = vadd.f32 %v8953, %v9367
    %v9371 = vld [vmem:[%s1 + $0x380] sm:$0xff]
    %v9372 = vld [vmem:[%s1 + $0x388] sm:$0xff]
    %v9373 = vld [vmem:[%s1 + $0x390] sm:$0xff]
    %v9374 = vld [vmem:[%s1 + $0x398] sm:$0xff]
    %v9375 = vld [vmem:[%s1 + $0x3a0] sm:$0xff]
    %v9376 = vld [vmem:[%s1 + $0x3a8] sm:$0xff]
    %v9377 = vld [vmem:[%s1 + $0x3b0] sm:$0xff]
    %v9378 = vld [vmem:[%s1 + $0x3b8] sm:$0xff]
    %v9379 = vld [vmem:[#allocation2 + $0x3800] sm:$0xff]
    %v9380 = vld [vmem:[#allocation2 + $0x3808] sm:$0xff]
    %v9381 = vld [vmem:[#allocation2 + $0x3810] sm:$0xff]
    %v9382 = vld [vmem:[#allocation2 + $0x3818] sm:$0xff]
    %v9383 = vld [vmem:[#allocation2 + $0x3820] sm:$0xff]
    %v9384 = vld [vmem:[#allocation2 + $0x3828] sm:$0xff]
    %v9385 = vld [vmem:[#allocation2 + $0x3830] sm:$0xff]
    %v9386 = vld [vmem:[#allocation2 + $0x3838] sm:$0xff]
    %v9387 = vld [vmem:[#allocation2 + $0x3840] sm:$0xff]
    %v9388 = vld [vmem:[#allocation2 + $0x3848] sm:$0xff]
    %v9389 = vld [vmem:[#allocation2 + $0x3850] sm:$0xff]
    %v9390 = vld [vmem:[#allocation2 + $0x3858] sm:$0xff]
    %v9391 = vld [vmem:[#allocation2 + $0x3860] sm:$0xff]
    %v9392 = vld [vmem:[#allocation2 + $0x3868] sm:$0xff]
    %v9393 = vld [vmem:[#allocation2 + $0x3870] sm:$0xff]
    %v9394 = vld [vmem:[#allocation2 + $0x3878] sm:$0xff]
    %v9395 = vld [vmem:[#allocation2 + $0x3880] sm:$0xff]
    %v9396 = vld [vmem:[#allocation2 + $0x3888] sm:$0xff]
    %v9397 = vld [vmem:[#allocation2 + $0x3890] sm:$0xff]
    %v9398 = vld [vmem:[#allocation2 + $0x3898] sm:$0xff]
    %v9399 = vld [vmem:[#allocation2 + $0x38a0] sm:$0xff]
    %v9400 = vld [vmem:[#allocation2 + $0x38a8] sm:$0xff]
    %v9401 = vld [vmem:[#allocation2 + $0x38b0] sm:$0xff]
    %v9402 = vld [vmem:[#allocation2 + $0x38b8] sm:$0xff]
    %v9403 = vld [vmem:[#allocation2 + $0x38c0] sm:$0xff]
    %v9404 = vld [vmem:[#allocation2 + $0x38c8] sm:$0xff]
    %v9405 = vld [vmem:[#allocation2 + $0x38d0] sm:$0xff]
    %v9406 = vld [vmem:[#allocation2 + $0x38d8] sm:$0xff]
    %v9407 = vld [vmem:[#allocation2 + $0x38e0] sm:$0xff]
    %v9408 = vld [vmem:[#allocation2 + $0x38e8] sm:$0xff]
    %v9409 = vld [vmem:[#allocation2 + $0x38f0] sm:$0xff]
    %v9410 = vld [vmem:[#allocation2 + $0x38f8] sm:$0xff]
    %v9411 = vld [vmem:[#allocation2 + $0x3900] sm:$0xff]
    %v9412 = vld [vmem:[#allocation2 + $0x3908] sm:$0xff]
    %v9413 = vld [vmem:[#allocation2 + $0x3910] sm:$0xff]
    %v9414 = vld [vmem:[#allocation2 + $0x3918] sm:$0xff]
    %v9415 = vld [vmem:[#allocation2 + $0x3920] sm:$0xff]
    %v9416 = vld [vmem:[#allocation2 + $0x3928] sm:$0xff]
    %v9417 = vld [vmem:[#allocation2 + $0x3930] sm:$0xff]
    %v9418 = vld [vmem:[#allocation2 + $0x3938] sm:$0xff]
    %v9419 = vld [vmem:[#allocation2 + $0x3940] sm:$0xff]
    %v9420 = vld [vmem:[#allocation2 + $0x3948] sm:$0xff]
    %v9421 = vld [vmem:[#allocation2 + $0x3950] sm:$0xff]
    %v9422 = vld [vmem:[#allocation2 + $0x3958] sm:$0xff]
    %v9423 = vld [vmem:[#allocation2 + $0x3960] sm:$0xff]
    %v9424 = vld [vmem:[#allocation2 + $0x3968] sm:$0xff]
    %v9425 = vld [vmem:[#allocation2 + $0x3970] sm:$0xff]
    %v9426 = vld [vmem:[#allocation2 + $0x3978] sm:$0xff]
    %v9427 = vld [vmem:[#allocation2 + $0x3980] sm:$0xff]
    %v9428 = vld [vmem:[#allocation2 + $0x3988] sm:$0xff]
    %v9429 = vld [vmem:[#allocation2 + $0x3990] sm:$0xff]
    %v9430 = vld [vmem:[#allocation2 + $0x3998] sm:$0xff]
    %v9431 = vld [vmem:[#allocation2 + $0x39a0] sm:$0xff]
    %v9432 = vld [vmem:[#allocation2 + $0x39a8] sm:$0xff]
    %v9433 = vld [vmem:[#allocation2 + $0x39b0] sm:$0xff]
    %v9434 = vld [vmem:[#allocation2 + $0x39b8] sm:$0xff]
    %v9435 = vld [vmem:[#allocation2 + $0x39c0] sm:$0xff]
    %v9436 = vld [vmem:[#allocation2 + $0x39c8] sm:$0xff]
    %v9437 = vld [vmem:[#allocation2 + $0x39d0] sm:$0xff]
    %v9438 = vld [vmem:[#allocation2 + $0x39d8] sm:$0xff]
    %v9439 = vld [vmem:[#allocation2 + $0x39e0] sm:$0xff]
    %v9440 = vld [vmem:[#allocation2 + $0x39e8] sm:$0xff]
    %v9441 = vld [vmem:[#allocation2 + $0x39f0] sm:$0xff]
    %v9442 = vld [vmem:[#allocation2 + $0x39f8] sm:$0xff]
    %v9443 = vld [vmem:[#allocation2 + $0x3a00] sm:$0xff]
    %v9444 = vld [vmem:[#allocation2 + $0x3a08] sm:$0xff]
    %v9445 = vld [vmem:[#allocation2 + $0x3a10] sm:$0xff]
    %v9446 = vld [vmem:[#allocation2 + $0x3a18] sm:$0xff]
    %v9447 = vld [vmem:[#allocation2 + $0x3a20] sm:$0xff]
    %v9448 = vld [vmem:[#allocation2 + $0x3a28] sm:$0xff]
    %v9449 = vld [vmem:[#allocation2 + $0x3a30] sm:$0xff]
    %v9450 = vld [vmem:[#allocation2 + $0x3a38] sm:$0xff]
    %v9451 = vld [vmem:[#allocation2 + $0x3a40] sm:$0xff]
    %v9452 = vld [vmem:[#allocation2 + $0x3a48] sm:$0xff]
    %v9453 = vld [vmem:[#allocation2 + $0x3a50] sm:$0xff]
    %v9454 = vld [vmem:[#allocation2 + $0x3a58] sm:$0xff]
    %v9455 = vld [vmem:[#allocation2 + $0x3a60] sm:$0xff]
    %v9456 = vld [vmem:[#allocation2 + $0x3a68] sm:$0xff]
    %v9457 = vld [vmem:[#allocation2 + $0x3a70] sm:$0xff]
    %v9458 = vld [vmem:[#allocation2 + $0x3a78] sm:$0xff]
    %v9459 = vld [vmem:[#allocation2 + $0x3a80] sm:$0xff]
    %v9460 = vld [vmem:[#allocation2 + $0x3a88] sm:$0xff]
    %v9461 = vld [vmem:[#allocation2 + $0x3a90] sm:$0xff]
    %v9462 = vld [vmem:[#allocation2 + $0x3a98] sm:$0xff]
    %v9463 = vld [vmem:[#allocation2 + $0x3aa0] sm:$0xff]
    %v9464 = vld [vmem:[#allocation2 + $0x3aa8] sm:$0xff]
    %v9465 = vld [vmem:[#allocation2 + $0x3ab0] sm:$0xff]
    %v9466 = vld [vmem:[#allocation2 + $0x3ab8] sm:$0xff]
    %v9467 = vld [vmem:[#allocation2 + $0x3ac0] sm:$0xff]
    %v9468 = vld [vmem:[#allocation2 + $0x3ac8] sm:$0xff]
    %v9469 = vld [vmem:[#allocation2 + $0x3ad0] sm:$0xff]
    %v9470 = vld [vmem:[#allocation2 + $0x3ad8] sm:$0xff]
    %v9471 = vld [vmem:[#allocation2 + $0x3ae0] sm:$0xff]
    %v9472 = vld [vmem:[#allocation2 + $0x3ae8] sm:$0xff]
    %v9473 = vld [vmem:[#allocation2 + $0x3af0] sm:$0xff]
    %v9474 = vld [vmem:[#allocation2 + $0x3af8] sm:$0xff]
    %v9475 = vld [vmem:[#allocation2 + $0x3b00] sm:$0xff]
    %v9476 = vld [vmem:[#allocation2 + $0x3b08] sm:$0xff]
    %v9477 = vld [vmem:[#allocation2 + $0x3b10] sm:$0xff]
    %v9478 = vld [vmem:[#allocation2 + $0x3b18] sm:$0xff]
    %v9479 = vld [vmem:[#allocation2 + $0x3b20] sm:$0xff]
    %v9480 = vld [vmem:[#allocation2 + $0x3b28] sm:$0xff]
    %v9481 = vld [vmem:[#allocation2 + $0x3b30] sm:$0xff]
    %v9482 = vld [vmem:[#allocation2 + $0x3b38] sm:$0xff]
    %v9483 = vld [vmem:[#allocation2 + $0x3b40] sm:$0xff]
    %v9484 = vld [vmem:[#allocation2 + $0x3b48] sm:$0xff]
    %v9485 = vld [vmem:[#allocation2 + $0x3b50] sm:$0xff]
    %v9486 = vld [vmem:[#allocation2 + $0x3b58] sm:$0xff]
    %v9487 = vld [vmem:[#allocation2 + $0x3b60] sm:$0xff]
    %v9488 = vld [vmem:[#allocation2 + $0x3b68] sm:$0xff]
    %v9489 = vld [vmem:[#allocation2 + $0x3b70] sm:$0xff]
    %v9490 = vld [vmem:[#allocation2 + $0x3b78] sm:$0xff]
    %v9491 = vld [vmem:[#allocation2 + $0x3b80] sm:$0xff]
    %v9492 = vld [vmem:[#allocation2 + $0x3b88] sm:$0xff]
    %v9493 = vld [vmem:[#allocation2 + $0x3b90] sm:$0xff]
    %v9494 = vld [vmem:[#allocation2 + $0x3b98] sm:$0xff]
    %v9495 = vld [vmem:[#allocation2 + $0x3ba0] sm:$0xff]
    %v9496 = vld [vmem:[#allocation2 + $0x3ba8] sm:$0xff]
    %v9497 = vld [vmem:[#allocation2 + $0x3bb0] sm:$0xff]
    %v9498 = vld [vmem:[#allocation2 + $0x3bb8] sm:$0xff]
    %v9499 = vld [vmem:[#allocation2 + $0x3bc0] sm:$0xff]
    %v9500 = vld [vmem:[#allocation2 + $0x3bc8] sm:$0xff]
    %v9501 = vld [vmem:[#allocation2 + $0x3bd0] sm:$0xff]
    %v9502 = vld [vmem:[#allocation2 + $0x3bd8] sm:$0xff]
    %v9503 = vld [vmem:[#allocation2 + $0x3be0] sm:$0xff]
    %v9504 = vld [vmem:[#allocation2 + $0x3be8] sm:$0xff]
    %v9505 = vld [vmem:[#allocation2 + $0x3bf0] sm:$0xff]
    %v9506 = vld [vmem:[#allocation2 + $0x3bf8] sm:$0xff]
    %9507 = vmatprep.subr.mxu0 0.0
    %9508 = vmatpush1.msra.mxu0 %v9379
    %9509 = vmatprep.subr.mxu0 0.0
    %9510 = vmatpush1.msra.mxu0 %v9380
    %9511 = vmatprep.subr.mxu0 0.0
    %9512 = vmatpush1.msra.mxu0 %v9381
    %9513 = vmatprep.subr.mxu0 0.0
    %9514 = vmatpush1.msra.mxu0 %v9382
    %9515 = vmatprep.subr.mxu0 0.0
    %9516 = vmatpush1.msra.mxu0 %v9383
    %9517 = vmatprep.subr.mxu0 0.0
    %9518 = vmatpush1.msra.mxu0 %v9384
    %9519 = vmatprep.subr.mxu0 0.0
    %9520 = vmatpush1.msra.mxu0 %v9385
    %9521 = vmatprep.subr.mxu0 0.0
    %9522 = vmatpush1.msra.mxu0 %v9386
    %9523 = vmatprep.subr.mxu0 0.0
    %9524 = vmatpush1.msra.mxu0 %v9387
    %9525 = vmatprep.subr.mxu0 0.0
    %9526 = vmatpush1.msra.mxu0 %v9388
    %9527 = vmatprep.subr.mxu0 0.0
    %9528 = vmatpush1.msra.mxu0 %v9389
    %9529 = vmatprep.subr.mxu0 0.0
    %9530 = vmatpush1.msra.mxu0 %v9390
    %9531 = vmatprep.subr.mxu0 0.0
    %9532 = vmatpush1.msra.mxu0 %v9391
    %9533 = vmatprep.subr.mxu0 0.0
    %9534 = vmatpush1.msra.mxu0 %v9392
    %9535 = vmatprep.subr.mxu0 0.0
    %9536 = vmatpush1.msra.mxu0 %v9393
    %9537 = vmatprep.subr.mxu0 0.0
    %9538 = vmatpush1.msra.mxu0 %v9394
    %9539 = vmatprep.subr.mxu0 0.0
    %9540 = vmatpush1.msra.mxu0 %v9395
    %9541 = vmatprep.subr.mxu0 0.0
    %9542 = vmatpush1.msra.mxu0 %v9396
    %9543 = vmatprep.subr.mxu0 0.0
    %9544 = vmatpush1.msra.mxu0 %v9397
    %9545 = vmatprep.subr.mxu0 0.0
    %9546 = vmatpush1.msra.mxu0 %v9398
    %9547 = vmatprep.subr.mxu0 0.0
    %9548 = vmatpush1.msra.mxu0 %v9399
    %9549 = vmatprep.subr.mxu0 0.0
    %9550 = vmatpush1.msra.mxu0 %v9400
    %9551 = vmatprep.subr.mxu0 0.0
    %9552 = vmatpush1.msra.mxu0 %v9401
    %9553 = vmatprep.subr.mxu0 0.0
    %9554 = vmatpush1.msra.mxu0 %v9402
    %9555 = vmatprep.subr.mxu0 0.0
    %9556 = vmatpush1.msra.mxu0 %v9403
    %9557 = vmatprep.subr.mxu0 0.0
    %9558 = vmatpush1.msra.mxu0 %v9404
    %9559 = vmatprep.subr.mxu0 0.0
    %9560 = vmatpush1.msra.mxu0 %v9405
    %9561 = vmatprep.subr.mxu0 0.0
    %9562 = vmatpush1.msra.mxu0 %v9406
    %9563 = vmatprep.subr.mxu0 0.0
    %9564 = vmatpush1.msra.mxu0 %v9407
    %9565 = vmatprep.subr.mxu0 0.0
    %9566 = vmatpush1.msra.mxu0 %v9408
    %9567 = vmatprep.subr.mxu0 0.0
    %9568 = vmatpush1.msra.mxu0 %v9409
    %9569 = vmatprep.subr.mxu0 0.0
    %9570 = vmatpush1.msra.mxu0 %v9410
    %9571 = vmatprep.mubr.f32.mxu0 %v9372
    %9572 = vmatmul.mubr.f32.gmra.mrb[0].mxu0 %v9371
    %v9573 = vpop.f32.mrb[0].mxu0
    %v9574 = vadd.f32 0.0, %v9573
    %v9575 = vpop.f32.mrb[0].mxu0
    %9576 = vdwg.mxu0
    %9577 = vmatprep.subr.mxu0 0.0
    %9578 = vmatpush1.msra.mxu0 %v9411
    %9579 = vmatprep.subr.mxu0 0.0
    %9580 = vmatpush1.msra.mxu0 %v9412
    %9581 = vmatprep.subr.mxu0 0.0
    %9582 = vmatpush1.msra.mxu0 %v9413
    %9583 = vmatprep.subr.mxu0 0.0
    %9584 = vmatpush1.msra.mxu0 %v9414
    %9585 = vmatprep.subr.mxu0 0.0
    %9586 = vmatpush1.msra.mxu0 %v9415
    %9587 = vmatprep.subr.mxu0 0.0
    %9588 = vmatpush1.msra.mxu0 %v9416
    %9589 = vmatprep.subr.mxu0 0.0
    %9590 = vmatpush1.msra.mxu0 %v9417
    %9591 = vmatprep.subr.mxu0 0.0
    %9592 = vmatpush1.msra.mxu0 %v9418
    %9593 = vmatprep.subr.mxu0 0.0
    %9594 = vmatpush1.msra.mxu0 %v9419
    %9595 = vmatprep.subr.mxu0 0.0
    %9596 = vmatpush1.msra.mxu0 %v9420
    %9597 = vmatprep.subr.mxu0 0.0
    %9598 = vmatpush1.msra.mxu0 %v9421
    %9599 = vmatprep.subr.mxu0 0.0
    %9600 = vmatpush1.msra.mxu0 %v9422
    %9601 = vmatprep.subr.mxu0 0.0
    %9602 = vmatpush1.msra.mxu0 %v9423
    %9603 = vmatprep.subr.mxu0 0.0
    %9604 = vmatpush1.msra.mxu0 %v9424
    %9605 = vmatprep.subr.mxu0 0.0
    %9606 = vmatpush1.msra.mxu0 %v9425
    %9607 = vmatprep.subr.mxu0 0.0
    %9608 = vmatpush1.msra.mxu0 %v9426
    %9609 = vmatprep.subr.mxu0 0.0
    %9610 = vmatpush1.msra.mxu0 %v9427
    %9611 = vmatprep.subr.mxu0 0.0
    %9612 = vmatpush1.msra.mxu0 %v9428
    %9613 = vmatprep.subr.mxu0 0.0
    %9614 = vmatpush1.msra.mxu0 %v9429
    %9615 = vmatprep.subr.mxu0 0.0
    %9616 = vmatpush1.msra.mxu0 %v9430
    %9617 = vmatprep.subr.mxu0 0.0
    %9618 = vmatpush1.msra.mxu0 %v9431
    %9619 = vmatprep.subr.mxu0 0.0
    %9620 = vmatpush1.msra.mxu0 %v9432
    %9621 = vmatprep.subr.mxu0 0.0
    %9622 = vmatpush1.msra.mxu0 %v9433
    %9623 = vmatprep.subr.mxu0 0.0
    %9624 = vmatpush1.msra.mxu0 %v9434
    %9625 = vmatprep.subr.mxu0 0.0
    %9626 = vmatpush1.msra.mxu0 %v9435
    %9627 = vmatprep.subr.mxu0 0.0
    %9628 = vmatpush1.msra.mxu0 %v9436
    %9629 = vmatprep.subr.mxu0 0.0
    %9630 = vmatpush1.msra.mxu0 %v9437
    %9631 = vmatprep.subr.mxu0 0.0
    %9632 = vmatpush1.msra.mxu0 %v9438
    %9633 = vmatprep.subr.mxu0 0.0
    %9634 = vmatpush1.msra.mxu0 %v9439
    %9635 = vmatprep.subr.mxu0 0.0
    %9636 = vmatpush1.msra.mxu0 %v9440
    %9637 = vmatprep.subr.mxu0 0.0
    %9638 = vmatpush1.msra.mxu0 %v9441
    %9639 = vmatprep.subr.mxu0 0.0
    %9640 = vmatpush1.msra.mxu0 %v9442
    %9641 = vmatprep.mubr.f32.mxu0 %v9374
    %9642 = vmatmul.mubr.f32.gmra.mrb[0].mxu0 %v9373
    %v9643 = vpop.f32.mrb[0].mxu0
    %v9644 = vadd.f32 %v9574, %v9643
    %v9645 = vpop.f32.mrb[0].mxu0
    %9646 = vdwg.mxu0
    %9647 = vmatprep.subr.mxu0 0.0
    %9648 = vmatpush1.msra.mxu0 %v9443
    %9649 = vmatprep.subr.mxu0 0.0
    %9650 = vmatpush1.msra.mxu0 %v9444
    %9651 = vmatprep.subr.mxu0 0.0
    %9652 = vmatpush1.msra.mxu0 %v9445
    %9653 = vmatprep.subr.mxu0 0.0
    %9654 = vmatpush1.msra.mxu0 %v9446
    %9655 = vmatprep.subr.mxu0 0.0
    %9656 = vmatpush1.msra.mxu0 %v9447
    %9657 = vmatprep.subr.mxu0 0.0
    %9658 = vmatpush1.msra.mxu0 %v9448
    %9659 = vmatprep.subr.mxu0 0.0
    %9660 = vmatpush1.msra.mxu0 %v9449
    %9661 = vmatprep.subr.mxu0 0.0
    %9662 = vmatpush1.msra.mxu0 %v9450
    %9663 = vmatprep.subr.mxu0 0.0
    %9664 = vmatpush1.msra.mxu0 %v9451
    %9665 = vmatprep.subr.mxu0 0.0
    %9666 = vmatpush1.msra.mxu0 %v9452
    %9667 = vmatprep.subr.mxu0 0.0
    %9668 = vmatpush1.msra.mxu0 %v9453
    %9669 = vmatprep.subr.mxu0 0.0
    %9670 = vmatpush1.msra.mxu0 %v9454
    %9671 = vmatprep.subr.mxu0 0.0
    %9672 = vmatpush1.msra.mxu0 %v9455
    %9673 = vmatprep.subr.mxu0 0.0
    %9674 = vmatpush1.msra.mxu0 %v9456
    %9675 = vmatprep.subr.mxu0 0.0
    %9676 = vmatpush1.msra.mxu0 %v9457
    %9677 = vmatprep.subr.mxu0 0.0
    %9678 = vmatpush1.msra.mxu0 %v9458
    %9679 = vmatprep.subr.mxu0 0.0
    %9680 = vmatpush1.msra.mxu0 %v9459
    %9681 = vmatprep.subr.mxu0 0.0
    %9682 = vmatpush1.msra.mxu0 %v9460
    %9683 = vmatprep.subr.mxu0 0.0
    %9684 = vmatpush1.msra.mxu0 %v9461
    %9685 = vmatprep.subr.mxu0 0.0
    %9686 = vmatpush1.msra.mxu0 %v9462
    %9687 = vmatprep.subr.mxu0 0.0
    %9688 = vmatpush1.msra.mxu0 %v9463
    %9689 = vmatprep.subr.mxu0 0.0
    %9690 = vmatpush1.msra.mxu0 %v9464
    %9691 = vmatprep.subr.mxu0 0.0
    %9692 = vmatpush1.msra.mxu0 %v9465
    %9693 = vmatprep.subr.mxu0 0.0
    %9694 = vmatpush1.msra.mxu0 %v9466
    %9695 = vmatprep.subr.mxu0 0.0
    %9696 = vmatpush1.msra.mxu0 %v9467
    %9697 = vmatprep.subr.mxu0 0.0
    %9698 = vmatpush1.msra.mxu0 %v9468
    %9699 = vmatprep.subr.mxu0 0.0
    %9700 = vmatpush1.msra.mxu0 %v9469
    %9701 = vmatprep.subr.mxu0 0.0
    %9702 = vmatpush1.msra.mxu0 %v9470
    %9703 = vmatprep.subr.mxu0 0.0
    %9704 = vmatpush1.msra.mxu0 %v9471
    %9705 = vmatprep.subr.mxu0 0.0
    %9706 = vmatpush1.msra.mxu0 %v9472
    %9707 = vmatprep.subr.mxu0 0.0
    %9708 = vmatpush1.msra.mxu0 %v9473
    %9709 = vmatprep.subr.mxu0 0.0
    %9710 = vmatpush1.msra.mxu0 %v9474
    %9711 = vmatprep.mubr.f32.mxu0 %v9376
    %9712 = vmatmul.mubr.f32.gmra.mrb[0].mxu0 %v9375
    %v9713 = vpop.f32.mrb[0].mxu0
    %v9714 = vadd.f32 %v9644, %v9713
    %v9715 = vpop.f32.mrb[0].mxu0
    %9716 = vdwg.mxu0
    %9717 = vmatprep.subr.mxu0 0.0
    %9718 = vmatpush1.msra.mxu0 %v9475
    %9719 = vmatprep.subr.mxu0 0.0
    %9720 = vmatpush1.msra.mxu0 %v9476
    %9721 = vmatprep.subr.mxu0 0.0
    %9722 = vmatpush1.msra.mxu0 %v9477
    %9723 = vmatprep.subr.mxu0 0.0
    %9724 = vmatpush1.msra.mxu0 %v9478
    %9725 = vmatprep.subr.mxu0 0.0
    %9726 = vmatpush1.msra.mxu0 %v9479
    %9727 = vmatprep.subr.mxu0 0.0
    %9728 = vmatpush1.msra.mxu0 %v9480
    %9729 = vmatprep.subr.mxu0 0.0
    %9730 = vmatpush1.msra.mxu0 %v9481
    %9731 = vmatprep.subr.mxu0 0.0
    %9732 = vmatpush1.msra.mxu0 %v9482
    %9733 = vmatprep.subr.mxu0 0.0
    %9734 = vmatpush1.msra.mxu0 %v9483
    %9735 = vmatprep.subr.mxu0 0.0
    %9736 = vmatpush1.msra.mxu0 %v9484
    %9737 = vmatprep.subr.mxu0 0.0
    %9738 = vmatpush1.msra.mxu0 %v9485
    %9739 = vmatprep.subr.mxu0 0.0
    %9740 = vmatpush1.msra.mxu0 %v9486
    %9741 = vmatprep.subr.mxu0 0.0
    %9742 = vmatpush1.msra.mxu0 %v9487
    %9743 = vmatprep.subr.mxu0 0.0
    %9744 = vmatpush1.msra.mxu0 %v9488
    %9745 = vmatprep.subr.mxu0 0.0
    %9746 = vmatpush1.msra.mxu0 %v9489
    %9747 = vmatprep.subr.mxu0 0.0
    %9748 = vmatpush1.msra.mxu0 %v9490
    %9749 = vmatprep.subr.mxu0 0.0
    %9750 = vmatpush1.msra.mxu0 %v9491
    %9751 = vmatprep.subr.mxu0 0.0
    %9752 = vmatpush1.msra.mxu0 %v9492
    %9753 = vmatprep.subr.mxu0 0.0
    %9754 = vmatpush1.msra.mxu0 %v9493
    %9755 = vmatprep.subr.mxu0 0.0
    %9756 = vmatpush1.msra.mxu0 %v9494
    %9757 = vmatprep.subr.mxu0 0.0
    %9758 = vmatpush1.msra.mxu0 %v9495
    %9759 = vmatprep.subr.mxu0 0.0
    %9760 = vmatpush1.msra.mxu0 %v9496
    %9761 = vmatprep.subr.mxu0 0.0
    %9762 = vmatpush1.msra.mxu0 %v9497
    %9763 = vmatprep.subr.mxu0 0.0
    %9764 = vmatpush1.msra.mxu0 %v9498
    %9765 = vmatprep.subr.mxu0 0.0
    %9766 = vmatpush1.msra.mxu0 %v9499
    %9767 = vmatprep.subr.mxu0 0.0
    %9768 = vmatpush1.msra.mxu0 %v9500
    %9769 = vmatprep.subr.mxu0 0.0
    %9770 = vmatpush1.msra.mxu0 %v9501
    %9771 = vmatprep.subr.mxu0 0.0
    %9772 = vmatpush1.msra.mxu0 %v9502
    %9773 = vmatprep.subr.mxu0 0.0
    %9774 = vmatpush1.msra.mxu0 %v9503
    %9775 = vmatprep.subr.mxu0 0.0
    %9776 = vmatpush1.msra.mxu0 %v9504
    %9777 = vmatprep.subr.mxu0 0.0
    %9778 = vmatpush1.msra.mxu0 %v9505
    %9779 = vmatprep.subr.mxu0 0.0
    %9780 = vmatpush1.msra.mxu0 %v9506
    %9781 = vmatprep.mubr.f32.mxu0 %v9378
    %9782 = vmatmul.mubr.f32.gmra.mrb[0].mxu0 %v9377
    %v9783 = vpop.f32.mrb[0].mxu0
    %v9784 = vadd.f32 %v9714, %v9783
    %v9785 = vpop.f32.mrb[0].mxu0
    %9786 = vdwg.mxu0
    %v9787 = vadd.f32 %v9370, %v9784
    %v9788 = vld [vmem:[%s1 + $0x3c0] sm:$0xff]
    %v9789 = vld [vmem:[%s1 + $0x3c8] sm:$0xff]
    %v9790 = vld [vmem:[%s1 + $0x3d0] sm:$0xff]
    %v9791 = vld [vmem:[%s1 + $0x3d8] sm:$0xff]
    %v9792 = vld [vmem:[%s1 + $0x3e0] sm:$0xff]
    %v9793 = vld [vmem:[%s1 + $0x3e8] sm:$0xff]
    %v9794 = vld [vmem:[%s1 + $0x3f0] sm:$0xff]
    %v9795 = vld [vmem:[%s1 + $0x3f8] sm:$0xff]
    %v9796 = vld [vmem:[#allocation2 + $0x3c00] sm:$0xff]
    %v9797 = vld [vmem:[#allocation2 + $0x3c08] sm:$0xff]
    %v9798 = vld [vmem:[#allocation2 + $0x3c10] sm:$0xff]
    %v9799 = vld [vmem:[#allocation2 + $0x3c18] sm:$0xff]
    %v9800 = vld [vmem:[#allocation2 + $0x3c20] sm:$0xff]
    %v9801 = vld [vmem:[#allocation2 + $0x3c28] sm:$0xff]
    %v9802 = vld [vmem:[#allocation2 + $0x3c30] sm:$0xff]
    %v9803 = vld [vmem:[#allocation2 + $0x3c38] sm:$0xff]
    %v9804 = vld [vmem:[#allocation2 + $0x3c40] sm:$0xff]
    %v9805 = vld [vmem:[#allocation2 + $0x3c48] sm:$0xff]
    %v9806 = vld [vmem:[#allocation2 + $0x3c50] sm:$0xff]
    %v9807 = vld [vmem:[#allocation2 + $0x3c58] sm:$0xff]
    %v9808 = vld [vmem:[#allocation2 + $0x3c60] sm:$0xff]
    %v9809 = vld [vmem:[#allocation2 + $0x3c68] sm:$0xff]
    %v9810 = vld [vmem:[#allocation2 + $0x3c70] sm:$0xff]
    %v9811 = vld [vmem:[#allocation2 + $0x3c78] sm:$0xff]
    %v9812 = vld [vmem:[#allocation2 + $0x3c80] sm:$0xff]
    %v9813 = vld [vmem:[#allocation2 + $0x3c88] sm:$0xff]
    %v9814 = vld [vmem:[#allocation2 + $0x3c90] sm:$0xff]
    %v9815 = vld [vmem:[#allocation2 + $0x3c98] sm:$0xff]
    %v9816 = vld [vmem:[#allocation2 + $0x3ca0] sm:$0xff]
    %v9817 = vld [vmem:[#allocation2 + $0x3ca8] sm:$0xff]
    %v9818 = vld [vmem:[#allocation2 + $0x3cb0] sm:$0xff]
    %v9819 = vld [vmem:[#allocation2 + $0x3cb8] sm:$0xff]
    %v9820 = vld [vmem:[#allocation2 + $0x3cc0] sm:$0xff]
    %v9821 = vld [vmem:[#allocation2 + $0x3cc8] sm:$0xff]
    %v9822 = vld [vmem:[#allocation2 + $0x3cd0] sm:$0xff]
    %v9823 = vld [vmem:[#allocation2 + $0x3cd8] sm:$0xff]
    %v9824 = vld [vmem:[#allocation2 + $0x3ce0] sm:$0xff]
    %v9825 = vld [vmem:[#allocation2 + $0x3ce8] sm:$0xff]
    %v9826 = vld [vmem:[#allocation2 + $0x3cf0] sm:$0xff]
    %v9827 = vld [vmem:[#allocation2 + $0x3cf8] sm:$0xff]
    %v9828 = vld [vmem:[#allocation2 + $0x3d00] sm:$0xff]
    %v9829 = vld [vmem:[#allocation2 + $0x3d08] sm:$0xff]
    %v9830 = vld [vmem:[#allocation2 + $0x3d10] sm:$0xff]
    %v9831 = vld [vmem:[#allocation2 + $0x3d18] sm:$0xff]
    %v9832 = vld [vmem:[#allocation2 + $0x3d20] sm:$0xff]
    %v9833 = vld [vmem:[#allocation2 + $0x3d28] sm:$0xff]
    %v9834 = vld [vmem:[#allocation2 + $0x3d30] sm:$0xff]
    %v9835 = vld [vmem:[#allocation2 + $0x3d38] sm:$0xff]
    %v9836 = vld [vmem:[#allocation2 + $0x3d40] sm:$0xff]
    %v9837 = vld [vmem:[#allocation2 + $0x3d48] sm:$0xff]
    %v9838 = vld [vmem:[#allocation2 + $0x3d50] sm:$0xff]
    %v9839 = vld [vmem:[#allocation2 + $0x3d58] sm:$0xff]
    %v9840 = vld [vmem:[#allocation2 + $0x3d60] sm:$0xff]
    %v9841 = vld [vmem:[#allocation2 + $0x3d68] sm:$0xff]
    %v9842 = vld [vmem:[#allocation2 + $0x3d70] sm:$0xff]
    %v9843 = vld [vmem:[#allocation2 + $0x3d78] sm:$0xff]
    %v9844 = vld [vmem:[#allocation2 + $0x3d80] sm:$0xff]
    %v9845 = vld [vmem:[#allocation2 + $0x3d88] sm:$0xff]
    %v9846 = vld [vmem:[#allocation2 + $0x3d90] sm:$0xff]
    %v9847 = vld [vmem:[#allocation2 + $0x3d98] sm:$0xff]
    %v9848 = vld [vmem:[#allocation2 + $0x3da0] sm:$0xff]
    %v9849 = vld [vmem:[#allocation2 + $0x3da8] sm:$0xff]
    %v9850 = vld [vmem:[#allocation2 + $0x3db0] sm:$0xff]
    %v9851 = vld [vmem:[#allocation2 + $0x3db8] sm:$0xff]
    %v9852 = vld [vmem:[#allocation2 + $0x3dc0] sm:$0xff]
    %v9853 = vld [vmem:[#allocation2 + $0x3dc8] sm:$0xff]
    %v9854 = vld [vmem:[#allocation2 + $0x3dd0] sm:$0xff]
    %v9855 = vld [vmem:[#allocation2 + $0x3dd8] sm:$0xff]
    %v9856 = vld [vmem:[#allocation2 + $0x3de0] sm:$0xff]
    %v9857 = vld [vmem:[#allocation2 + $0x3de8] sm:$0xff]
    %v9858 = vld [vmem:[#allocation2 + $0x3df0] sm:$0xff]
    %v9859 = vld [vmem:[#allocation2 + $0x3df8] sm:$0xff]
    %v9860 = vld [vmem:[#allocation2 + $0x3e00] sm:$0xff]
    %v9861 = vld [vmem:[#allocation2 + $0x3e08] sm:$0xff]
    %v9862 = vld [vmem:[#allocation2 + $0x3e10] sm:$0xff]
    %v9863 = vld [vmem:[#allocation2 + $0x3e18] sm:$0xff]
    %v9864 = vld [vmem:[#allocation2 + $0x3e20] sm:$0xff]
    %v9865 = vld [vmem:[#allocation2 + $0x3e28] sm:$0xff]
    %v9866 = vld [vmem:[#allocation2 + $0x3e30] sm:$0xff]
    %v9867 = vld [vmem:[#allocation2 + $0x3e38] sm:$0xff]
    %v9868 = vld [vmem:[#allocation2 + $0x3e40] sm:$0xff]
    %v9869 = vld [vmem:[#allocation2 + $0x3e48] sm:$0xff]
    %v9870 = vld [vmem:[#allocation2 + $0x3e50] sm:$0xff]
    %v9871 = vld [vmem:[#allocation2 + $0x3e58] sm:$0xff]
    %v9872 = vld [vmem:[#allocation2 + $0x3e60] sm:$0xff]
    %v9873 = vld [vmem:[#allocation2 + $0x3e68] sm:$0xff]
    %v9874 = vld [vmem:[#allocation2 + $0x3e70] sm:$0xff]
    %v9875 = vld [vmem:[#allocation2 + $0x3e78] sm:$0xff]
    %v9876 = vld [vmem:[#allocation2 + $0x3e80] sm:$0xff]
    %v9877 = vld [vmem:[#allocation2 + $0x3e88] sm:$0xff]
    %v9878 = vld [vmem:[#allocation2 + $0x3e90] sm:$0xff]
    %v9879 = vld [vmem:[#allocation2 + $0x3e98] sm:$0xff]
    %v9880 = vld [vmem:[#allocation2 + $0x3ea0] sm:$0xff]
    %v9881 = vld [vmem:[#allocation2 + $0x3ea8] sm:$0xff]
    %v9882 = vld [vmem:[#allocation2 + $0x3eb0] sm:$0xff]
    %v9883 = vld [vmem:[#allocation2 + $0x3eb8] sm:$0xff]
    %v9884 = vld [vmem:[#allocation2 + $0x3ec0] sm:$0xff]
    %v9885 = vld [vmem:[#allocation2 + $0x3ec8] sm:$0xff]
    %v9886 = vld [vmem:[#allocation2 + $0x3ed0] sm:$0xff]
    %v9887 = vld [vmem:[#allocation2 + $0x3ed8] sm:$0xff]
    %v9888 = vld [vmem:[#allocation2 + $0x3ee0] sm:$0xff]
    %v9889 = vld [vmem:[#allocation2 + $0x3ee8] sm:$0xff]
    %v9890 = vld [vmem:[#allocation2 + $0x3ef0] sm:$0xff]
    %v9891 = vld [vmem:[#allocation2 + $0x3ef8] sm:$0xff]
    %v9892 = vld [vmem:[#allocation2 + $0x3f00] sm:$0xff]
    %v9893 = vld [vmem:[#allocation2 + $0x3f08] sm:$0xff]
    %v9894 = vld [vmem:[#allocation2 + $0x3f10] sm:$0xff]
    %v9895 = vld [vmem:[#allocation2 + $0x3f18] sm:$0xff]
    %v9896 = vld [vmem:[#allocation2 + $0x3f20] sm:$0xff]
    %v9897 = vld [vmem:[#allocation2 + $0x3f28] sm:$0xff]
    %v9898 = vld [vmem:[#allocation2 + $0x3f30] sm:$0xff]
    %v9899 = vld [vmem:[#allocation2 + $0x3f38] sm:$0xff]
    %v9900 = vld [vmem:[#allocation2 + $0x3f40] sm:$0xff]
    %v9901 = vld [vmem:[#allocation2 + $0x3f48] sm:$0xff]
    %v9902 = vld [vmem:[#allocation2 + $0x3f50] sm:$0xff]
    %v9903 = vld [vmem:[#allocation2 + $0x3f58] sm:$0xff]
    %v9904 = vld [vmem:[#allocation2 + $0x3f60] sm:$0xff]
    %v9905 = vld [vmem:[#allocation2 + $0x3f68] sm:$0xff]
    %v9906 = vld [vmem:[#allocation2 + $0x3f70] sm:$0xff]
    %v9907 = vld [vmem:[#allocation2 + $0x3f78] sm:$0xff]
    %v9908 = vld [vmem:[#allocation2 + $0x3f80] sm:$0xff]
    %v9909 = vld [vmem:[#allocation2 + $0x3f88] sm:$0xff]
    %v9910 = vld [vmem:[#allocation2 + $0x3f90] sm:$0xff]
    %v9911 = vld [vmem:[#allocation2 + $0x3f98] sm:$0xff]
    %v9912 = vld [vmem:[#allocation2 + $0x3fa0] sm:$0xff]
    %v9913 = vld [vmem:[#allocation2 + $0x3fa8] sm:$0xff]
    %v9914 = vld [vmem:[#allocation2 + $0x3fb0] sm:$0xff]
    %v9915 = vld [vmem:[#allocation2 + $0x3fb8] sm:$0xff]
    %v9916 = vld [vmem:[#allocation2 + $0x3fc0] sm:$0xff]
    %v9917 = vld [vmem:[#allocation2 + $0x3fc8] sm:$0xff]
    %v9918 = vld [vmem:[#allocation2 + $0x3fd0] sm:$0xff]
    %v9919 = vld [vmem:[#allocation2 + $0x3fd8] sm:$0xff]
    %v9920 = vld [vmem:[#allocation2 + $0x3fe0] sm:$0xff]
    %v9921 = vld [vmem:[#allocation2 + $0x3fe8] sm:$0xff]
    %v9922 = vld [vmem:[#allocation2 + $0x3ff0] sm:$0xff]
    %v9923 = vld [vmem:[#allocation2 + $0x3ff8] sm:$0xff]
    %9924 = vmatprep.subr.mxu0 0.0
    %9925 = vmatpush1.msra.mxu0 %v9796
    %9926 = vmatprep.subr.mxu0 0.0
    %9927 = vmatpush1.msra.mxu0 %v9797
    %9928 = vmatprep.subr.mxu0 0.0
    %9929 = vmatpush1.msra.mxu0 %v9798
    %9930 = vmatprep.subr.mxu0 0.0
    %9931 = vmatpush1.msra.mxu0 %v9799
    %9932 = vmatprep.subr.mxu0 0.0
    %9933 = vmatpush1.msra.mxu0 %v9800
    %9934 = vmatprep.subr.mxu0 0.0
    %9935 = vmatpush1.msra.mxu0 %v9801
    %9936 = vmatprep.subr.mxu0 0.0
    %9937 = vmatpush1.msra.mxu0 %v9802
    %9938 = vmatprep.subr.mxu0 0.0
    %9939 = vmatpush1.msra.mxu0 %v9803
    %9940 = vmatprep.subr.mxu0 0.0
    %9941 = vmatpush1.msra.mxu0 %v9804
    %9942 = vmatprep.subr.mxu0 0.0
    %9943 = vmatpush1.msra.mxu0 %v9805
    %9944 = vmatprep.subr.mxu0 0.0
    %9945 = vmatpush1.msra.mxu0 %v9806
    %9946 = vmatprep.subr.mxu0 0.0
    %9947 = vmatpush1.msra.mxu0 %v9807
    %9948 = vmatprep.subr.mxu0 0.0
    %9949 = vmatpush1.msra.mxu0 %v9808
    %9950 = vmatprep.subr.mxu0 0.0
    %9951 = vmatpush1.msra.mxu0 %v9809
    %9952 = vmatprep.subr.mxu0 0.0
    %9953 = vmatpush1.msra.mxu0 %v9810
    %9954 = vmatprep.subr.mxu0 0.0
    %9955 = vmatpush1.msra.mxu0 %v9811
    %9956 = vmatprep.subr.mxu0 0.0
    %9957 = vmatpush1.msra.mxu0 %v9812
    %9958 = vmatprep.subr.mxu0 0.0
    %9959 = vmatpush1.msra.mxu0 %v9813
    %9960 = vmatprep.subr.mxu0 0.0
    %9961 = vmatpush1.msra.mxu0 %v9814
    %9962 = vmatprep.subr.mxu0 0.0
    %9963 = vmatpush1.msra.mxu0 %v9815
    %9964 = vmatprep.subr.mxu0 0.0
    %9965 = vmatpush1.msra.mxu0 %v9816
    %9966 = vmatprep.subr.mxu0 0.0
    %9967 = vmatpush1.msra.mxu0 %v9817
    %9968 = vmatprep.subr.mxu0 0.0
    %9969 = vmatpush1.msra.mxu0 %v9818
    %9970 = vmatprep.subr.mxu0 0.0
    %9971 = vmatpush1.msra.mxu0 %v9819
    %9972 = vmatprep.subr.mxu0 0.0
    %9973 = vmatpush1.msra.mxu0 %v9820
    %9974 = vmatprep.subr.mxu0 0.0
    %9975 = vmatpush1.msra.mxu0 %v9821
    %9976 = vmatprep.subr.mxu0 0.0
    %9977 = vmatpush1.msra.mxu0 %v9822
    %9978 = vmatprep.subr.mxu0 0.0
    %9979 = vmatpush1.msra.mxu0 %v9823
    %9980 = vmatprep.subr.mxu0 0.0
    %9981 = vmatpush1.msra.mxu0 %v9824
    %9982 = vmatprep.subr.mxu0 0.0
    %9983 = vmatpush1.msra.mxu0 %v9825
    %9984 = vmatprep.subr.mxu0 0.0
    %9985 = vmatpush1.msra.mxu0 %v9826
    %9986 = vmatprep.subr.mxu0 0.0
    %9987 = vmatpush1.msra.mxu0 %v9827
    %9988 = vmatprep.mubr.f32.mxu0 %v9789
    %9989 = vmatmul.mubr.f32.gmra.mrb[0].mxu0 %v9788
    %v9990 = vpop.f32.mrb[0].mxu0
    %v9991 = vadd.f32 0.0, %v9990
    %v9992 = vpop.f32.mrb[0].mxu0
    %9993 = vdwg.mxu0
    %9994 = vmatprep.subr.mxu0 0.0
    %9995 = vmatpush1.msra.mxu0 %v9828
    %9996 = vmatprep.subr.mxu0 0.0
    %9997 = vmatpush1.msra.mxu0 %v9829
    %9998 = vmatprep.subr.mxu0 0.0
    %9999 = vmatpush1.msra.mxu0 %v9830
    %10000 = vmatprep.subr.mxu0 0.0
    %10001 = vmatpush1.msra.mxu0 %v9831
    %10002 = vmatprep.subr.mxu0 0.0
    %10003 = vmatpush1.msra.mxu0 %v9832
    %10004 = vmatprep.subr.mxu0 0.0
    %10005 = vmatpush1.msra.mxu0 %v9833
    %10006 = vmatprep.subr.mxu0 0.0
    %10007 = vmatpush1.msra.mxu0 %v9834
    %10008 = vmatprep.subr.mxu0 0.0
    %10009 = vmatpush1.msra.mxu0 %v9835
    %10010 = vmatprep.subr.mxu0 0.0
    %10011 = vmatpush1.msra.mxu0 %v9836
    %10012 = vmatprep.subr.mxu0 0.0
    %10013 = vmatpush1.msra.mxu0 %v9837
    %10014 = vmatprep.subr.mxu0 0.0
    %10015 = vmatpush1.msra.mxu0 %v9838
    %10016 = vmatprep.subr.mxu0 0.0
    %10017 = vmatpush1.msra.mxu0 %v9839
    %10018 = vmatprep.subr.mxu0 0.0
    %10019 = vmatpush1.msra.mxu0 %v9840
    %10020 = vmatprep.subr.mxu0 0.0
    %10021 = vmatpush1.msra.mxu0 %v9841
    %10022 = vmatprep.subr.mxu0 0.0
    %10023 = vmatpush1.msra.mxu0 %v9842
    %10024 = vmatprep.subr.mxu0 0.0
    %10025 = vmatpush1.msra.mxu0 %v9843
    %10026 = vmatprep.subr.mxu0 0.0
    %10027 = vmatpush1.msra.mxu0 %v9844
    %10028 = vmatprep.subr.mxu0 0.0
    %10029 = vmatpush1.msra.mxu0 %v9845
    %10030 = vmatprep.subr.mxu0 0.0
    %10031 = vmatpush1.msra.mxu0 %v9846
    %10032 = vmatprep.subr.mxu0 0.0
    %10033 = vmatpush1.msra.mxu0 %v9847
    %10034 = vmatprep.subr.mxu0 0.0
    %10035 = vmatpush1.msra.mxu0 %v9848
    %10036 = vmatprep.subr.mxu0 0.0
    %10037 = vmatpush1.msra.mxu0 %v9849
    %10038 = vmatprep.subr.mxu0 0.0
    %10039 = vmatpush1.msra.mxu0 %v9850
    %10040 = vmatprep.subr.mxu0 0.0
    %10041 = vmatpush1.msra.mxu0 %v9851
    %10042 = vmatprep.subr.mxu0 0.0
    %10043 = vmatpush1.msra.mxu0 %v9852
    %10044 = vmatprep.subr.mxu0 0.0
    %10045 = vmatpush1.msra.mxu0 %v9853
    %10046 = vmatprep.subr.mxu0 0.0
    %10047 = vmatpush1.msra.mxu0 %v9854
    %10048 = vmatprep.subr.mxu0 0.0
    %10049 = vmatpush1.msra.mxu0 %v9855
    %10050 = vmatprep.subr.mxu0 0.0
    %10051 = vmatpush1.msra.mxu0 %v9856
    %10052 = vmatprep.subr.mxu0 0.0
    %10053 = vmatpush1.msra.mxu0 %v9857
    %10054 = vmatprep.subr.mxu0 0.0
    %10055 = vmatpush1.msra.mxu0 %v9858
    %10056 = vmatprep.subr.mxu0 0.0
    %10057 = vmatpush1.msra.mxu0 %v9859
    %10058 = vmatprep.mubr.f32.mxu0 %v9791
    %10059 = vmatmul.mubr.f32.gmra.mrb[0].mxu0 %v9790
    %v10060 = vpop.f32.mrb[0].mxu0
    %v10061 = vadd.f32 %v9991, %v10060
    %v10062 = vpop.f32.mrb[0].mxu0
    %10063 = vdwg.mxu0
    %10064 = vmatprep.subr.mxu0 0.0
    %10065 = vmatpush1.msra.mxu0 %v9860
    %10066 = vmatprep.subr.mxu0 0.0
    %10067 = vmatpush1.msra.mxu0 %v9861
    %10068 = vmatprep.subr.mxu0 0.0
    %10069 = vmatpush1.msra.mxu0 %v9862
    %10070 = vmatprep.subr.mxu0 0.0
    %10071 = vmatpush1.msra.mxu0 %v9863
    %10072 = vmatprep.subr.mxu0 0.0
    %10073 = vmatpush1.msra.mxu0 %v9864
    %10074 = vmatprep.subr.mxu0 0.0
    %10075 = vmatpush1.msra.mxu0 %v9865
    %10076 = vmatprep.subr.mxu0 0.0
    %10077 = vmatpush1.msra.mxu0 %v9866
    %10078 = vmatprep.subr.mxu0 0.0
    %10079 = vmatpush1.msra.mxu0 %v9867
    %10080 = vmatprep.subr.mxu0 0.0
    %10081 = vmatpush1.msra.mxu0 %v9868
    %10082 = vmatprep.subr.mxu0 0.0
    %10083 = vmatpush1.msra.mxu0 %v9869
    %10084 = vmatprep.subr.mxu0 0.0
    %10085 = vmatpush1.msra.mxu0 %v9870
    %10086 = vmatprep.subr.mxu0 0.0
    %10087 = vmatpush1.msra.mxu0 %v9871
    %10088 = vmatprep.subr.mxu0 0.0
    %10089 = vmatpush1.msra.mxu0 %v9872
    %10090 = vmatprep.subr.mxu0 0.0
    %10091 = vmatpush1.msra.mxu0 %v9873
    %10092 = vmatprep.subr.mxu0 0.0
    %10093 = vmatpush1.msra.mxu0 %v9874
    %10094 = vmatprep.subr.mxu0 0.0
    %10095 = vmatpush1.msra.mxu0 %v9875
    %10096 = vmatprep.subr.mxu0 0.0
    %10097 = vmatpush1.msra.mxu0 %v9876
    %10098 = vmatprep.subr.mxu0 0.0
    %10099 = vmatpush1.msra.mxu0 %v9877
    %10100 = vmatprep.subr.mxu0 0.0
    %10101 = vmatpush1.msra.mxu0 %v9878
    %10102 = vmatprep.subr.mxu0 0.0
    %10103 = vmatpush1.msra.mxu0 %v9879
    %10104 = vmatprep.subr.mxu0 0.0
    %10105 = vmatpush1.msra.mxu0 %v9880
    %10106 = vmatprep.subr.mxu0 0.0
    %10107 = vmatpush1.msra.mxu0 %v9881
    %10108 = vmatprep.subr.mxu0 0.0
    %10109 = vmatpush1.msra.mxu0 %v9882
    %10110 = vmatprep.subr.mxu0 0.0
    %10111 = vmatpush1.msra.mxu0 %v9883
    %10112 = vmatprep.subr.mxu0 0.0
    %10113 = vmatpush1.msra.mxu0 %v9884
    %10114 = vmatprep.subr.mxu0 0.0
    %10115 = vmatpush1.msra.mxu0 %v9885
    %10116 = vmatprep.subr.mxu0 0.0
    %10117 = vmatpush1.msra.mxu0 %v9886
    %10118 = vmatprep.subr.mxu0 0.0
    %10119 = vmatpush1.msra.mxu0 %v9887
    %10120 = vmatprep.subr.mxu0 0.0
    %10121 = vmatpush1.msra.mxu0 %v9888
    %10122 = vmatprep.subr.mxu0 0.0
    %10123 = vmatpush1.msra.mxu0 %v9889
    %10124 = vmatprep.subr.mxu0 0.0
    %10125 = vmatpush1.msra.mxu0 %v9890
    %10126 = vmatprep.subr.mxu0 0.0
    %10127 = vmatpush1.msra.mxu0 %v9891
    %10128 = vmatprep.mubr.f32.mxu0 %v9793
    %10129 = vmatmul.mubr.f32.gmra.mrb[0].mxu0 %v9792
    %v10130 = vpop.f32.mrb[0].mxu0
    %v10131 = vadd.f32 %v10061, %v10130
    %v10132 = vpop.f32.mrb[0].mxu0
    %10133 = vdwg.mxu0
    %10134 = vmatprep.subr.mxu0 0.0
    %10135 = vmatpush1.msra.mxu0 %v9892
    %10136 = vmatprep.subr.mxu0 0.0
    %10137 = vmatpush1.msra.mxu0 %v9893
    %10138 = vmatprep.subr.mxu0 0.0
    %10139 = vmatpush1.msra.mxu0 %v9894
    %10140 = vmatprep.subr.mxu0 0.0
    %10141 = vmatpush1.msra.mxu0 %v9895
    %10142 = vmatprep.subr.mxu0 0.0
    %10143 = vmatpush1.msra.mxu0 %v9896
    %10144 = vmatprep.subr.mxu0 0.0
    %10145 = vmatpush1.msra.mxu0 %v9897
    %10146 = vmatprep.subr.mxu0 0.0
    %10147 = vmatpush1.msra.mxu0 %v9898
    %10148 = vmatprep.subr.mxu0 0.0
    %10149 = vmatpush1.msra.mxu0 %v9899
    %10150 = vmatprep.subr.mxu0 0.0
    %10151 = vmatpush1.msra.mxu0 %v9900
    %10152 = vmatprep.subr.mxu0 0.0
    %10153 = vmatpush1.msra.mxu0 %v9901
    %10154 = vmatprep.subr.mxu0 0.0
    %10155 = vmatpush1.msra.mxu0 %v9902
    %10156 = vmatprep.subr.mxu0 0.0
    %10157 = vmatpush1.msra.mxu0 %v9903
    %10158 = vmatprep.subr.mxu0 0.0
    %10159 = vmatpush1.msra.mxu0 %v9904
    %10160 = vmatprep.subr.mxu0 0.0
    %10161 = vmatpush1.msra.mxu0 %v9905
    %10162 = vmatprep.subr.mxu0 0.0
    %10163 = vmatpush1.msra.mxu0 %v9906
    %10164 = vmatprep.subr.mxu0 0.0
    %10165 = vmatpush1.msra.mxu0 %v9907
    %10166 = vmatprep.subr.mxu0 0.0
    %10167 = vmatpush1.msra.mxu0 %v9908
    %10168 = vmatprep.subr.mxu0 0.0
    %10169 = vmatpush1.msra.mxu0 %v9909
    %10170 = vmatprep.subr.mxu0 0.0
    %10171 = vmatpush1.msra.mxu0 %v9910
    %10172 = vmatprep.subr.mxu0 0.0
    %10173 = vmatpush1.msra.mxu0 %v9911
    %10174 = vmatprep.subr.mxu0 0.0
    %10175 = vmatpush1.msra.mxu0 %v9912
    %10176 = vmatprep.subr.mxu0 0.0
    %10177 = vmatpush1.msra.mxu0 %v9913
    %10178 = vmatprep.subr.mxu0 0.0
    %10179 = vmatpush1.msra.mxu0 %v9914
    %10180 = vmatprep.subr.mxu0 0.0
    %10181 = vmatpush1.msra.mxu0 %v9915
    %10182 = vmatprep.subr.mxu0 0.0
    %10183 = vmatpush1.msra.mxu0 %v9916
    %10184 = vmatprep.subr.mxu0 0.0
    %10185 = vmatpush1.msra.mxu0 %v9917
    %10186 = vmatprep.subr.mxu0 0.0
    %10187 = vmatpush1.msra.mxu0 %v9918
    %10188 = vmatprep.subr.mxu0 0.0
    %10189 = vmatpush1.msra.mxu0 %v9919
    %10190 = vmatprep.subr.mxu0 0.0
    %10191 = vmatpush1.msra.mxu0 %v9920
    %10192 = vmatprep.subr.mxu0 0.0
    %10193 = vmatpush1.msra.mxu0 %v9921
    %10194 = vmatprep.subr.mxu0 0.0
    %10195 = vmatpush1.msra.mxu0 %v9922
    %10196 = vmatprep.subr.mxu0 0.0
    %10197 = vmatpush1.msra.mxu0 %v9923
    %10198 = vmatprep.mubr.f32.mxu0 %v9795
    %10199 = vmatmul.mubr.f32.gmra.mrb[0].mxu0 %v9794
    %v10200 = vpop.f32.mrb[0].mxu0
    %v10201 = vadd.f32 %v10131, %v10200
    %v10202 = vpop.f32.mrb[0].mxu0
    %10203 = vdwg.mxu0
    %v10204 = vadd.f32 %v9787, %v10201
    %10205 = vst [vmem:[%s5] sm:$0xff] %v10204
    // Predicated region
    $region37: #{simple_nn_forward.1} parent=1 // pred_check
      _
    $region38: #{simple_nn_forward.1} parent=1 // pred_check_branch
      %10207 = sbr.rel (0) target = $region40
    $region39: #{simple_nn_forward.1} parent=1 // pred_region
      _
    $region40: #{simple_nn_forward.1} parent=1 // pred_fallthru
      _
    // Predicated region
    $region41: #{simple_nn_forward.1} parent=1 // pred_check
      _
    $region42: #{simple_nn_forward.1} parent=1 // pred_check_branch
      %10209 = sbr.rel (0) target = $region44
    $region43: #{simple_nn_forward.1} parent=1 // pred_region
      _
    $region44: #{simple_nn_forward.1} parent=1 // pred_fallthru
      _
    %10210 = vsyncpa [#allocation4], 1
    %10211 = vsyncpa [#allocation6], 1

</llo_original>
